<compile_context>
chip_gen: v5e
topology: v5e:2x2
jax: 0.10.0
libtpu: 0.0.40
codegen_flags: <defaults>
</compile_context>

<pallas_src>
import math

import numpy as np
import jax
import jax.numpy as jnp
from jax import lax
from jax.experimental import pallas as pl
from jax.experimental.pallas import tpu as pltpu

# ---- hyperparameters (DisentangledTransformer defaults, small input_dim) ----
INPUT_DIM = 16
HIDDEN = 64
N_HEADS = 4
HEAD_DIM = HIDDEN // N_HEADS
N_LAYERS = 2
FF_DIM = HIDDEN * 4
ORTHO_PENALTY = 0.1
LN_EPS = 1e-5

NSC = N_HEADS * N_HEADS            # 16 scores per example (heads x heads)
EXP = NSC * HEAD_DIM               # 256 = expanded (h, g, d) axis

# ------------------- constant index / indicator matrices ---------------------
# expanded lane index e = (h*N_HEADS + g)*HEAD_DIM + d
_e = np.arange(EXP)
_h = _e // (N_HEADS * HEAD_DIM)
_g = (_e // HEAD_DIM) % N_HEADS
_d = _e % HEAD_DIM
_f = _e // HEAD_DIM                                    # = h*N_HEADS + g

ROWMAP_Q = (_h * HEAD_DIM + _d).astype(np.int32)       # q row feeding lane e
ROWMAP_KV = (_g * HEAD_DIM + _d).astype(np.int32)      # k/v row feeding lane e

_SCALE = 1.0 / math.sqrt(HEAD_DIM)                     # 0.25 (exact in bf16)
SRED = np.zeros((EXP, NSC), np.float32)
SRED[_e, _f] = _SCALE                                  # sum over d (+ scale) -> score (h,g)
PEXP = np.zeros((NSC, EXP), np.float32)
PEXP[_f, _e] = 1.0                                     # expand prob (h,g) -> lane e
_ff = np.arange(NSC)
GSUM = ((_ff[:, None] // N_HEADS) ==
        (_ff[None, :] // N_HEADS)).astype(np.float32)  # group-sum broadcast
CRED = np.zeros((EXP, HIDDEN), np.float32)
CRED[_e, ROWMAP_Q] = 1.0                               # sum over g -> attn[h*D+d]


# ----------------------------- kernel helpers --------------------------------
_DN = (((1,), (0,)), ((), ()))          # plain A @ B
_DNT = (((1,), (1,)), ((), ()))         # A @ B^T (PyTorch weight layout)


def _linear_bf16(x_f32, w_bf16, b_f32):
    # x: (B, in) f32, w: (out, in) bf16 [PyTorch layout], b: (1, out) f32
    y = lax.dot_general(x_f32.astype(jnp.bfloat16), w_bf16, _DNT,
                        preferred_element_type=jnp.float32)
    return y + b_f32


def _layer_norm(x, gamma, beta):
    mu = jnp.mean(x, axis=-1, keepdims=True)
    xc = x - mu
    var = jnp.mean(xc * xc, axis=-1, keepdims=True)
    return xc * lax.rsqrt(var + LN_EPS) * gamma + beta


def _gelu_tanh(x):
    # tanh-approx GELU: transcendental goes to the EUP slot instead of a
    # ~25-op erf polynomial on the VPU.  Max deviation from exact GELU ~3e-4.
    c = math.sqrt(2.0 / math.pi)
    return 0.5 * x * (1.0 + jnp.tanh(c * (x + 0.044715 * x * x * x)))


# ----------------------------- forward kernel --------------------------------
def fwd_kernel(x_ref, w_in_ref, b_in_ref, qkv_w_ref, qkv_b_ref,
               out_w_ref, out_b_ref, ln_g_ref, ln_b_ref,
               ff1_w_ref, ff1_b_ref, ff2_w_ref, ff2_b_ref,
               w_out_ref, b_out_ref,
               sred_ref, gsum_ref, pexp_ref, cred_ref,
               pred_ref):
    f32 = jnp.float32
    bf16 = jnp.bfloat16

    sred = sred_ref[...]                    # (EXP, NSC) bf16, softmax scale folded in
    gsum = gsum_ref[...]                    # (NSC, NSC) f32
    pexp = pexp_ref[...]                    # (NSC, EXP) bf16
    cred = cred_ref[...]                    # (EXP, HIDDEN) bf16

    x = x_ref[...]                          # (TB, INPUT_DIM) f32
    h = _linear_bf16(x, w_in_ref[...], b_in_ref[...])            # (TB, HIDDEN)

    for l in range(N_LAYERS):
        # fused q|k|v projection, already row-expanded to the (h, g, d) axis
        qkv = _linear_bf16(h, qkv_w_ref[l], qkv_b_ref[l])         # (TB, 3*EXP)
        qe = qkv[:, 0:EXP]            # q[b, h*D+d] at lane (h, g, d)
        kt = qkv[:, EXP:2 * EXP]      # k[b, g*D+d] at lane (h, g, d)
        vt = qkv[:, 2 * EXP:3 * EXP]  # v[b, g*D+d] at lane (h, g, d)

        # scores[b, h*H+g] = sum_d q k / sqrt(D)    (MXU reduce, scale in SRED)
        s = lax.dot_general((qe * kt).astype(bf16), sred, _DN,
                            preferred_element_type=f32)           # (TB, 16)
        m = jnp.max(s, axis=-1, keepdims=True)   # uniform shift, softmax-invariant
        es = jnp.exp(s - m)                      # one wide exp per layer
        denom = lax.dot_general(es, gsum, _DN, preferred_element_type=f32)
        p = es * pl.reciprocal(denom, approx=True)     # softmax over g per head

        # attn[b, h*D+d] = sum_g p[b,h,g] * v[b,gD+d]   (MXU expand + reduce)
        pe = lax.dot_general(p.astype(bf16), pexp, _DN,
                             preferred_element_type=f32)          # (TB, 256)
        attn = lax.dot_general((pe * vt).astype(bf16), cred, _DN,
                               preferred_element_type=f32)        # (TB, 64)
        attn = _linear_bf16(attn, out_w_ref[l], out_b_ref[l])

        h = _layer_norm(h + attn, ln_g_ref[l, 0], ln_b_ref[l, 0])

        ff = _gelu_tanh(_linear_bf16(h, ff1_w_ref[l], ff1_b_ref[l]))
        ff = _linear_bf16(ff, ff2_w_ref[l], ff2_b_ref[l])

        h = _layer_norm(h + ff, ln_g_ref[l, 1], ln_b_ref[l, 1])

    # lane-dense logits (1, TB) with batch on lanes.  x.mean(dim=1) is an
    # identity since seq_len == 1 in the reference forward.
    logits = lax.dot_general(w_out_ref[...], h, _DNT,
                             preferred_element_type=f32) + b_out_ref[...]
    pred_ref[...] = jax.nn.sigmoid(logits)


# --------------------------- orthogonality loss ------------------------------
def ortho_loss_kernel(w_in_ref, attn_w_ref, ff1_w_ref, ff2_w_ref, loss_ref):
    def term(w_bf16):
        # mse(W W^T, I) = (sum(G*G) - 2*tr(G) + n) / n^2  -- no eye materialized.
        # Gram matmul rides the native bf16 MXU path; tr(G) = sum(W*W) is the
        # only piece done elementwise in f32.
        n = w_bf16.shape[0]
        g = lax.dot_general(w_bf16, w_bf16, _DNT,
                            preferred_element_type=jnp.float32)   # (n, n) f32
        gg = jnp.sum(jnp.sum(g * g, axis=1, keepdims=True), axis=0, keepdims=True)
        wf = w_bf16.astype(jnp.float32)
        ww = jnp.sum(jnp.sum(wf * wf, axis=1, keepdims=True), axis=0, keepdims=True)
        return (gg - 2.0 * ww + float(n)) * (1.0 / float(n * n))

    total = term(w_in_ref[...])
    for l in range(N_LAYERS):
        for i in range(4):                       # q, k, v, out projections
            total = total + term(attn_w_ref[l, i])
        total = total + term(ff1_w_ref[l]) + term(ff2_w_ref[l])
    loss_ref[...] = total * ORTHO_PENALTY


# -------------------------------- wrapper -------------------------------------
def _round_up(n, m):
    return ((n + m - 1) // m) * m


def _full_spec(a):
    nd = a.ndim
    return pl.BlockSpec(a.shape, lambda *_, _nd=nd: (0,) * _nd)


def _pick_tiles(B):
    # Up to 1024 rows per tile (fits v5e's 16 MiB default scoped VMEM with
    # margin); for large batches force >= 2 grid steps so v7x's two
    # TensorCores can split the "parallel" grid.
    TB_MAX = 1024
    nb = max(1, -(-B // TB_MAX))
    if nb < 2 and B >= 512:
        nb = 2
    if nb == 1:
        TB = _round_up(B, 8)           # block == full array, no 128 constraint
    else:
        TB = _round_up(-(-B // nb), 128)   # lane-dim of output block needs /128
    return TB, nb * TB, nb


@jax.jit
def disentangled_transformer(x, params):
    f32 = jnp.float32
    bf16 = jnp.bfloat16
    B = x.shape[0]
    TB, PB, nb = _pick_tiles(B)
    x_p = jnp.pad(x.astype(f32), ((0, PB - B), (0, 0)))

    # fold q/k/v projection + head expansion into one (3*EXP, HIDDEN) matmul
    attn_w, attn_b = params["attn_w"], params["attn_b"]
    wq_e = jnp.take(attn_w[:, 0], ROWMAP_Q, axis=1)      # (L, 256, 64) bf16
    wk_e = jnp.take(attn_w[:, 1], ROWMAP_KV, axis=1)
    wv_e = jnp.take(attn_w[:, 2], ROWMAP_KV, axis=1)
    qkv_w = jnp.concatenate([wq_e, wk_e, wv_e], axis=1)  # (L, 768, 64) bf16
    bq_e = jnp.take(attn_b[:, 0], ROWMAP_Q, axis=2)      # (L, 1, 256) f32
    bk_e = jnp.take(attn_b[:, 1], ROWMAP_KV, axis=2)
    bv_e = jnp.take(attn_b[:, 2], ROWMAP_KV, axis=2)
    qkv_b = jnp.concatenate([bq_e, bk_e, bv_e], axis=2)  # (L, 1, 768) f32
    out_w = attn_w[:, 3]                                 # (L, 64, 64) bf16
    out_b = attn_b[:, 3]                                 # (L, 1, 64) f32

    operands = [
        x_p,
        params["w_in"], params["b_in"],
        qkv_w, qkv_b, out_w, out_b,
        params["ln_g"], params["ln_b"],
        params["ff1_w"], params["ff1_b"],
        params["ff2_w"], params["ff2_b"],
        params["w_out"], params["b_out"],
        jnp.asarray(SRED, bf16), jnp.asarray(GSUM, f32),
        jnp.asarray(PEXP, bf16), jnp.asarray(CRED, bf16),
    ]
    in_specs = [pl.BlockSpec((TB, INPUT_DIM), lambda i: (i, 0))]
    in_specs += [_full_spec(a) for a in operands[1:]]

    # rough advisory cost estimate for the surrounding XLA scheduler
    flops_row = 2 * INPUT_DIM * HIDDEN + 2 * HIDDEN + N_LAYERS * (
        2 * HIDDEN * 3 * EXP + 2 * EXP * NSC + 2 * NSC * NSC + 2 * NSC * EXP
        + 2 * EXP * HIDDEN + 2 * HIDDEN * HIDDEN + 4 * HIDDEN * FF_DIM)
    bytes_io = sum(int(np.prod(a.shape)) * jnp.dtype(a.dtype).itemsize
                   for a in operands) + PB * 4
    cost = pl.CostEstimate(
        flops=int(PB * flops_row),
        transcendentals=int(PB * (N_LAYERS * (2 * NSC + FF_DIM) + 1)),
        bytes_accessed=int(bytes_io))

    pred_row = pl.pallas_call(
        fwd_kernel,
        out_shape=jax.ShapeDtypeStruct((1, PB), f32),
        grid=(nb,),
        in_specs=in_specs,
        out_specs=pl.BlockSpec((1, TB), lambda i: (0, i)),
        compiler_params=pltpu.CompilerParams(
            dimension_semantics=("parallel",)),
        cost_estimate=cost,
    )(*operands)

    # weight-only orthogonality loss: separate tiny kernel, out of the data path
    vmem = pl.BlockSpec(memory_space=pltpu.MemorySpace.VMEM)
    loss = pl.pallas_call(
        ortho_loss_kernel,
        out_shape=jax.ShapeDtypeStruct((1, 1), f32),
        in_specs=[vmem] * 4,
        out_specs=vmem,
    )(params["w_in"], params["attn_w"], params["ff1_w"], params["ff2_w"])

    return pred_row[0, :B], loss[0, 0]


# ---------------------------- parameter init ----------------------------------
def init_params(key):
    keys = jax.random.split(key, 10)

    def w(k, shape, scale=0.05):
        return jax.random.normal(k, shape, jnp.float32) * scale

    bf16 = jnp.bfloat16
    return {
        "w_in":   w(keys[0], (HIDDEN, INPUT_DIM)).astype(bf16),
        "b_in":   w(keys[1], (1, HIDDEN)),
        "attn_w": w(keys[2], (N_LAYERS, 4, HIDDEN, HIDDEN)).astype(bf16),  # q,k,v,out
        "attn_b": w(keys[3], (N_LAYERS, 4, 1, HIDDEN)),
        "ln_g":   jnp.ones((N_LAYERS, 2, 1, HIDDEN), jnp.float32),
        "ln_b":   jnp.zeros((N_LAYERS, 2, 1, HIDDEN), jnp.float32),
        "ff1_w":  w(keys[4], (N_LAYERS, FF_DIM, HIDDEN)).astype(bf16),
        "ff1_b":  w(keys[5], (N_LAYERS, 1, FF_DIM)),
        "ff2_w":  w(keys[6], (N_LAYERS, HIDDEN, FF_DIM)).astype(bf16),
        "ff2_b":  w(keys[7], (N_LAYERS, 1, HIDDEN)),
        "w_out":  w(keys[8], (1, HIDDEN)),
        "b_out":  w(keys[9], (1, 1)),
    }


# -------------------------- plain-JAX reference -------------------------------
# (exact erf GELU, all-f32 math — mirrors the PyTorch module)
def _ref_ln(x, g, b):
    mu = jnp.mean(x, axis=-1, keepdims=True)
    var = jnp.mean((x - mu) ** 2, axis=-1, keepdims=True)
    return (x - mu) / jnp.sqrt(var + LN_EPS) * g + b


def _mse_eye(w):
    g = w @ w.T
    return jnp.mean((g - jnp.eye(w.shape[0], dtype=jnp.float32)) ** 2)


def reference_forward(x, params):
    P = jax.tree_util.tree_map(lambda a: jnp.asarray(a, jnp.float32), params)
    B = x.shape[0]
    h = x @ P["w_in"].T + P["b_in"][0]
    loss = _mse_eye(P["w_in"])
    scale = 1.0 / math.sqrt(HEAD_DIM)
    for l in range(N_LAYERS):
        wq, wk, wv, wo = (P["attn_w"][l, i] for i in range(4))
        bq, bk, bv, bo = (P["attn_b"][l, i, 0] for i in range(4))
        q = (h @ wq.T + bq).reshape(B, N_HEADS, HEAD_DIM)
        k = (h @ wk.T + bk).reshape(B, N_HEADS, HEAD_DIM)
        v = (h @ wv.T + bv).reshape(B, N_HEADS, HEAD_DIM)
        s = jnp.einsum("bhd,bgd->bhg", q, k) * scale
        p = jax.nn.softmax(s, axis=-1)
        attn = jnp.einsum("bhg,bgd->bhd", p, v).reshape(B, HIDDEN)
        attn = attn @ wo.T + bo
        loss = loss + _mse_eye(wq) + _mse_eye(wk) + _mse_eye(wv) + _mse_eye(wo)
        h = _ref_ln(h + attn, P["ln_g"][l, 0, 0], P["ln_b"][l, 0, 0])
        w1, w2 = P["ff1_w"][l], P["ff2_w"][l]
        ff = h @ w1.T + P["ff1_b"][l, 0]
        ff = 0.5 * ff * (1.0 + lax.erf(ff / math.sqrt(2.0)))
        ff = ff @ w2.T + P["ff2_b"][l, 0]
        loss = loss + _mse_eye(w1) + _mse_eye(w2)
        h = _ref_ln(h + ff, P["ln_g"][l, 1, 0], P["ln_b"][l, 1, 0])
    logits = h @ P["w_out"].T + P["b_out"][0]
    return jax.nn.sigmoid(logits)[:, 0], loss * ORTHO_PENALTY


if __name__ == "__main__":
    key = jax.random.PRNGKey(0)
    k_x, k_p = jax.random.split(key)
    batch = 2
    x = jax.random.normal(k_x, (batch, INPUT_DIM), jnp.float32)
    params = init_params(k_p)

    pred, ortho_loss = disentangled_transformer(x, params)
    jax.block_until_ready((pred, ortho_loss))

    assert pred.shape == (batch,)
    assert ortho_loss.shape == ()
    assert bool(jnp.all(jnp.isfinite(pred))) and bool(jnp.isfinite(ortho_loss))

    ref_pred, ref_loss = reference_forward(x, params)
    # bf16 activation matmuls + tanh-approx GELU: verify against f32/erf reference
    assert bool(jnp.allclose(pred, ref_pred, rtol=5e-3, atol=5e-3)), (pred, ref_pred)
    assert bool(jnp.allclose(ortho_loss, ref_loss, rtol=5e-3, atol=5e-3)), (
        ortho_loss, ref_loss)

    print("KERNEL_OK")
</pallas_src>

<mosaic_0001>
module attributes {stable_mosaic.version = 11 : i64} {
  func.func @ortho_loss_kernel(%arg0: memref<64x16xbf16, #tpu.memory_space<vmem>>, %arg1: memref<2x4x64x64xbf16, #tpu.memory_space<vmem>>, %arg2: memref<2x256x64xbf16, #tpu.memory_space<vmem>>, %arg3: memref<2x64x256xbf16, #tpu.memory_space<vmem>>, %arg4: memref<1x1xf32, #tpu.memory_space<vmem>>) attributes {dimension_semantics = [], scalar_prefetch = 0 : i64, scratch_operands = 0 : i64, tpu.core_type = #tpu.core_type<tc>} {
    %c0 = arith.constant 0 : index
    %c0_0 = arith.constant 0 : index
    %0 = vector.load %arg0[%c0, %c0_0] : memref<64x16xbf16, #tpu.memory_space<vmem>>, vector<64x16xbf16>
    %cst = arith.constant dense<0.000000e+00> : vector<64x64xf32>
    %1 = tpu.matmul %0, %0, %cst {dimension_numbers = #tpu.dot_dimension_numbers<[1], [1], [0], [0], [0, 0, 1, 0], [], []>} : vector<64x16xbf16>, vector<64x16xbf16>, vector<64x64xf32> -> vector<64x64xf32>
    %2 = arith.mulf %1, %1 : vector<64x64xf32>
    %cst_1 = arith.constant dense<0.000000e+00> : vector<64xf32>
    %3 = vector.multi_reduction <add>, %2, %cst_1 [1] : vector<64x64xf32> to vector<64xf32>
    %4 = vector.shape_cast %3 : vector<64xf32> to vector<64x1xf32>
    %cst_2 = arith.constant dense<0.000000e+00> : vector<1xf32>
    %5 = vector.multi_reduction <add>, %4, %cst_2 [0] : vector<64x1xf32> to vector<1xf32>
    %6 = vector.shape_cast %5 : vector<1xf32> to vector<1x1xf32>
    %7 = arith.extf %0 : vector<64x16xbf16> to vector<64x16xf32>
    %8 = arith.mulf %7, %7 : vector<64x16xf32>
    %cst_3 = arith.constant dense<0.000000e+00> : vector<64xf32>
    %9 = vector.multi_reduction <add>, %8, %cst_3 [1] : vector<64x16xf32> to vector<64xf32>
    %10 = vector.shape_cast %9 : vector<64xf32> to vector<64x1xf32>
    %cst_4 = arith.constant dense<0.000000e+00> : vector<1xf32>
    %11 = vector.multi_reduction <add>, %10, %cst_4 [0] : vector<64x1xf32> to vector<1xf32>
    %12 = vector.shape_cast %11 : vector<1xf32> to vector<1x1xf32>
    %cst_5 = arith.constant 2.000000e+00 : f32
    %13 = vector.broadcast %cst_5 : f32 to vector<1x1xf32>
    %14 = arith.mulf %13, %12 : vector<1x1xf32>
    %15 = arith.subf %6, %14 : vector<1x1xf32>
    %cst_6 = arith.constant 6.400000e+01 : f32
    %16 = vector.broadcast %cst_6 : f32 to vector<1x1xf32>
    %17 = arith.addf %15, %16 : vector<1x1xf32>
    %cst_7 = arith.constant 2.44140625E-4 : f32
    %18 = vector.broadcast %cst_7 : f32 to vector<1x1xf32>
    %19 = arith.mulf %17, %18 : vector<1x1xf32>
    %c0_8 = arith.constant 0 : index
    %c0_9 = arith.constant 0 : index
    %c0_10 = arith.constant 0 : index
    %c0_11 = arith.constant 0 : index
    %20 = vector.load %arg1[%c0_8, %c0_9, %c0_10, %c0_11] : memref<2x4x64x64xbf16, #tpu.memory_space<vmem>>, vector<1x1x64x64xbf16>
    %21 = vector.shape_cast %20 : vector<1x1x64x64xbf16> to vector<64x64xbf16>
    %cst_12 = arith.constant dense<0.000000e+00> : vector<64x64xf32>
    %22 = tpu.matmul %21, %21, %cst_12 {dimension_numbers = #tpu.dot_dimension_numbers<[1], [1], [0], [0], [0, 0, 1, 0], [], []>} : vector<64x64xbf16>, vector<64x64xbf16>, vector<64x64xf32> -> vector<64x64xf32>
    %23 = arith.mulf %22, %22 : vector<64x64xf32>
    %cst_13 = arith.constant dense<0.000000e+00> : vector<64xf32>
    %24 = vector.multi_reduction <add>, %23, %cst_13 [1] : vector<64x64xf32> to vector<64xf32>
    %25 = vector.shape_cast %24 : vector<64xf32> to vector<64x1xf32>
    %cst_14 = arith.constant dense<0.000000e+00> : vector<1xf32>
    %26 = vector.multi_reduction <add>, %25, %cst_14 [0] : vector<64x1xf32> to vector<1xf32>
    %27 = vector.shape_cast %26 : vector<1xf32> to vector<1x1xf32>
    %28 = arith.extf %21 : vector<64x64xbf16> to vector<64x64xf32>
    %29 = arith.mulf %28, %28 : vector<64x64xf32>
    %cst_15 = arith.constant dense<0.000000e+00> : vector<64xf32>
    %30 = vector.multi_reduction <add>, %29, %cst_15 [1] : vector<64x64xf32> to vector<64xf32>
    %31 = vector.shape_cast %30 : vector<64xf32> to vector<64x1xf32>
    %cst_16 = arith.constant dense<0.000000e+00> : vector<1xf32>
    %32 = vector.multi_reduction <add>, %31, %cst_16 [0] : vector<64x1xf32> to vector<1xf32>
    %33 = vector.shape_cast %32 : vector<1xf32> to vector<1x1xf32>
    %cst_17 = arith.constant 2.000000e+00 : f32
    %34 = vector.broadcast %cst_17 : f32 to vector<1x1xf32>
    %35 = arith.mulf %34, %33 : vector<1x1xf32>
    %36 = arith.subf %27, %35 : vector<1x1xf32>
    %cst_18 = arith.constant 6.400000e+01 : f32
    %37 = vector.broadcast %cst_18 : f32 to vector<1x1xf32>
    %38 = arith.addf %36, %37 : vector<1x1xf32>
    %cst_19 = arith.constant 2.44140625E-4 : f32
    %39 = vector.broadcast %cst_19 : f32 to vector<1x1xf32>
    %40 = arith.mulf %38, %39 : vector<1x1xf32>
    %41 = arith.addf %19, %40 : vector<1x1xf32>
    %c0_20 = arith.constant 0 : index
    %c1 = arith.constant 1 : index
    %c0_21 = arith.constant 0 : index
    %c0_22 = arith.constant 0 : index
    %42 = vector.load %arg1[%c0_20, %c1, %c0_21, %c0_22] : memref<2x4x64x64xbf16, #tpu.memory_space<vmem>>, vector<1x1x64x64xbf16>
    %43 = vector.shape_cast %42 : vector<1x1x64x64xbf16> to vector<64x64xbf16>
    %cst_23 = arith.constant dense<0.000000e+00> : vector<64x64xf32>
    %44 = tpu.matmul %43, %43, %cst_23 {dimension_numbers = #tpu.dot_dimension_numbers<[1], [1], [0], [0], [0, 0, 1, 0], [], []>} : vector<64x64xbf16>, vector<64x64xbf16>, vector<64x64xf32> -> vector<64x64xf32>
    %45 = arith.mulf %44, %44 : vector<64x64xf32>
    %cst_24 = arith.constant dense<0.000000e+00> : vector<64xf32>
    %46 = vector.multi_reduction <add>, %45, %cst_24 [1] : vector<64x64xf32> to vector<64xf32>
    %47 = vector.shape_cast %46 : vector<64xf32> to vector<64x1xf32>
    %cst_25 = arith.constant dense<0.000000e+00> : vector<1xf32>
    %48 = vector.multi_reduction <add>, %47, %cst_25 [0] : vector<64x1xf32> to vector<1xf32>
    %49 = vector.shape_cast %48 : vector<1xf32> to vector<1x1xf32>
    %50 = arith.extf %43 : vector<64x64xbf16> to vector<64x64xf32>
    %51 = arith.mulf %50, %50 : vector<64x64xf32>
    %cst_26 = arith.constant dense<0.000000e+00> : vector<64xf32>
    %52 = vector.multi_reduction <add>, %51, %cst_26 [1] : vector<64x64xf32> to vector<64xf32>
    %53 = vector.shape_cast %52 : vector<64xf32> to vector<64x1xf32>
    %cst_27 = arith.constant dense<0.000000e+00> : vector<1xf32>
    %54 = vector.multi_reduction <add>, %53, %cst_27 [0] : vector<64x1xf32> to vector<1xf32>
    %55 = vector.shape_cast %54 : vector<1xf32> to vector<1x1xf32>
    %cst_28 = arith.constant 2.000000e+00 : f32
    %56 = vector.broadcast %cst_28 : f32 to vector<1x1xf32>
    %57 = arith.mulf %56, %55 : vector<1x1xf32>
    %58 = arith.subf %49, %57 : vector<1x1xf32>
    %cst_29 = arith.constant 6.400000e+01 : f32
    %59 = vector.broadcast %cst_29 : f32 to vector<1x1xf32>
    %60 = arith.addf %58, %59 : vector<1x1xf32>
    %cst_30 = arith.constant 2.44140625E-4 : f32
    %61 = vector.broadcast %cst_30 : f32 to vector<1x1xf32>
    %62 = arith.mulf %60, %61 : vector<1x1xf32>
    %63 = arith.addf %41, %62 : vector<1x1xf32>
    %c0_31 = arith.constant 0 : index
    %c2 = arith.constant 2 : index
    %c0_32 = arith.constant 0 : index
    %c0_33 = arith.constant 0 : index
    %64 = vector.load %arg1[%c0_31, %c2, %c0_32, %c0_33] : memref<2x4x64x64xbf16, #tpu.memory_space<vmem>>, vector<1x1x64x64xbf16>
    %65 = vector.shape_cast %64 : vector<1x1x64x64xbf16> to vector<64x64xbf16>
    %cst_34 = arith.constant dense<0.000000e+00> : vector<64x64xf32>
    %66 = tpu.matmul %65, %65, %cst_34 {dimension_numbers = #tpu.dot_dimension_numbers<[1], [1], [0], [0], [0, 0, 1, 0], [], []>} : vector<64x64xbf16>, vector<64x64xbf16>, vector<64x64xf32> -> vector<64x64xf32>
    %67 = arith.mulf %66, %66 : vector<64x64xf32>
    %cst_35 = arith.constant dense<0.000000e+00> : vector<64xf32>
    %68 = vector.multi_reduction <add>, %67, %cst_35 [1] : vector<64x64xf32> to vector<64xf32>
    %69 = vector.shape_cast %68 : vector<64xf32> to vector<64x1xf32>
    %cst_36 = arith.constant dense<0.000000e+00> : vector<1xf32>
    %70 = vector.multi_reduction <add>, %69, %cst_36 [0] : vector<64x1xf32> to vector<1xf32>
    %71 = vector.shape_cast %70 : vector<1xf32> to vector<1x1xf32>
    %72 = arith.extf %65 : vector<64x64xbf16> to vector<64x64xf32>
    %73 = arith.mulf %72, %72 : vector<64x64xf32>
    %cst_37 = arith.constant dense<0.000000e+00> : vector<64xf32>
    %74 = vector.multi_reduction <add>, %73, %cst_37 [1] : vector<64x64xf32> to vector<64xf32>
    %75 = vector.shape_cast %74 : vector<64xf32> to vector<64x1xf32>
    %cst_38 = arith.constant dense<0.000000e+00> : vector<1xf32>
    %76 = vector.multi_reduction <add>, %75, %cst_38 [0] : vector<64x1xf32> to vector<1xf32>
    %77 = vector.shape_cast %76 : vector<1xf32> to vector<1x1xf32>
    %cst_39 = arith.constant 2.000000e+00 : f32
    %78 = vector.broadcast %cst_39 : f32 to vector<1x1xf32>
    %79 = arith.mulf %78, %77 : vector<1x1xf32>
    %80 = arith.subf %71, %79 : vector<1x1xf32>
    %cst_40 = arith.constant 6.400000e+01 : f32
    %81 = vector.broadcast %cst_40 : f32 to vector<1x1xf32>
    %82 = arith.addf %80, %81 : vector<1x1xf32>
    %cst_41 = arith.constant 2.44140625E-4 : f32
    %83 = vector.broadcast %cst_41 : f32 to vector<1x1xf32>
    %84 = arith.mulf %82, %83 : vector<1x1xf32>
    %85 = arith.addf %63, %84 : vector<1x1xf32>
    %c0_42 = arith.constant 0 : index
    %c3 = arith.constant 3 : index
    %c0_43 = arith.constant 0 : index
    %c0_44 = arith.constant 0 : index
    %86 = vector.load %arg1[%c0_42, %c3, %c0_43, %c0_44] : memref<2x4x64x64xbf16, #tpu.memory_space<vmem>>, vector<1x1x64x64xbf16>
    %87 = vector.shape_cast %86 : vector<1x1x64x64xbf16> to vector<64x64xbf16>
    %cst_45 = arith.constant dense<0.000000e+00> : vector<64x64xf32>
    %88 = tpu.matmul %87, %87, %cst_45 {dimension_numbers = #tpu.dot_dimension_numbers<[1], [1], [0], [0], [0, 0, 1, 0], [], []>} : vector<64x64xbf16>, vector<64x64xbf16>, vector<64x64xf32> -> vector<64x64xf32>
    %89 = arith.mulf %88, %88 : vector<64x64xf32>
    %cst_46 = arith.constant dense<0.000000e+00> : vector<64xf32>
    %90 = vector.multi_reduction <add>, %89, %cst_46 [1] : vector<64x64xf32> to vector<64xf32>
    %91 = vector.shape_cast %90 : vector<64xf32> to vector<64x1xf32>
    %cst_47 = arith.constant dense<0.000000e+00> : vector<1xf32>
    %92 = vector.multi_reduction <add>, %91, %cst_47 [0] : vector<64x1xf32> to vector<1xf32>
    %93 = vector.shape_cast %92 : vector<1xf32> to vector<1x1xf32>
    %94 = arith.extf %87 : vector<64x64xbf16> to vector<64x64xf32>
    %95 = arith.mulf %94, %94 : vector<64x64xf32>
    %cst_48 = arith.constant dense<0.000000e+00> : vector<64xf32>
    %96 = vector.multi_reduction <add>, %95, %cst_48 [1] : vector<64x64xf32> to vector<64xf32>
    %97 = vector.shape_cast %96 : vector<64xf32> to vector<64x1xf32>
    %cst_49 = arith.constant dense<0.000000e+00> : vector<1xf32>
    %98 = vector.multi_reduction <add>, %97, %cst_49 [0] : vector<64x1xf32> to vector<1xf32>
    %99 = vector.shape_cast %98 : vector<1xf32> to vector<1x1xf32>
    %cst_50 = arith.constant 2.000000e+00 : f32
    %100 = vector.broadcast %cst_50 : f32 to vector<1x1xf32>
    %101 = arith.mulf %100, %99 : vector<1x1xf32>
    %102 = arith.subf %93, %101 : vector<1x1xf32>
    %cst_51 = arith.constant 6.400000e+01 : f32
    %103 = vector.broadcast %cst_51 : f32 to vector<1x1xf32>
    %104 = arith.addf %102, %103 : vector<1x1xf32>
    %cst_52 = arith.constant 2.44140625E-4 : f32
    %105 = vector.broadcast %cst_52 : f32 to vector<1x1xf32>
    %106 = arith.mulf %104, %105 : vector<1x1xf32>
    %107 = arith.addf %85, %106 : vector<1x1xf32>
    %c0_53 = arith.constant 0 : index
    %c0_54 = arith.constant 0 : index
    %c0_55 = arith.constant 0 : index
    %108 = vector.load %arg2[%c0_53, %c0_54, %c0_55] : memref<2x256x64xbf16, #tpu.memory_space<vmem>>, vector<1x256x64xbf16>
    %109 = vector.shape_cast %108 : vector<1x256x64xbf16> to vector<256x64xbf16>
    %cst_56 = arith.constant dense<0.000000e+00> : vector<256x256xf32>
    %110 = tpu.matmul %109, %109, %cst_56 {dimension_numbers = #tpu.dot_dimension_numbers<[1], [1], [0], [0], [0, 0, 1, 0], [], []>} : vector<256x64xbf16>, vector<256x64xbf16>, vector<256x256xf32> -> vector<256x256xf32>
    %111 = arith.mulf %110, %110 : vector<256x256xf32>
    %cst_57 = arith.constant dense<0.000000e+00> : vector<256xf32>
    %112 = vector.multi_reduction <add>, %111, %cst_57 [1] : vector<256x256xf32> to vector<256xf32>
    %113 = vector.shape_cast %112 : vector<256xf32> to vector<256x1xf32>
    %cst_58 = arith.constant dense<0.000000e+00> : vector<1xf32>
    %114 = vector.multi_reduction <add>, %113, %cst_58 [0] : vector<256x1xf32> to vector<1xf32>
    %115 = vector.shape_cast %114 : vector<1xf32> to vector<1x1xf32>
    %116 = arith.extf %109 : vector<256x64xbf16> to vector<256x64xf32>
    %117 = arith.mulf %116, %116 : vector<256x64xf32>
    %cst_59 = arith.constant dense<0.000000e+00> : vector<256xf32>
    %118 = vector.multi_reduction <add>, %117, %cst_59 [1] : vector<256x64xf32> to vector<256xf32>
    %119 = vector.shape_cast %118 : vector<256xf32> to vector<256x1xf32>
    %cst_60 = arith.constant dense<0.000000e+00> : vector<1xf32>
    %120 = vector.multi_reduction <add>, %119, %cst_60 [0] : vector<256x1xf32> to vector<1xf32>
    %121 = vector.shape_cast %120 : vector<1xf32> to vector<1x1xf32>
    %cst_61 = arith.constant 2.000000e+00 : f32
    %122 = vector.broadcast %cst_61 : f32 to vector<1x1xf32>
    %123 = arith.mulf %122, %121 : vector<1x1xf32>
    %124 = arith.subf %115, %123 : vector<1x1xf32>
    %cst_62 = arith.constant 2.560000e+02 : f32
    %125 = vector.broadcast %cst_62 : f32 to vector<1x1xf32>
    %126 = arith.addf %124, %125 : vector<1x1xf32>
    %cst_63 = arith.constant 1.52587891E-5 : f32
    %127 = vector.broadcast %cst_63 : f32 to vector<1x1xf32>
    %128 = arith.mulf %126, %127 : vector<1x1xf32>
    %129 = arith.addf %107, %128 : vector<1x1xf32>
    %c0_64 = arith.constant 0 : index
    %c0_65 = arith.constant 0 : index
    %c0_66 = arith.constant 0 : index
    %130 = vector.load %arg3[%c0_64, %c0_65, %c0_66] : memref<2x64x256xbf16, #tpu.memory_space<vmem>>, vector<1x64x256xbf16>
    %131 = vector.shape_cast %130 : vector<1x64x256xbf16> to vector<64x256xbf16>
    %cst_67 = arith.constant dense<0.000000e+00> : vector<64x64xf32>
    %132 = tpu.matmul %131, %131, %cst_67 {dimension_numbers = #tpu.dot_dimension_numbers<[1], [1], [0], [0], [0, 0, 1, 0], [], []>} : vector<64x256xbf16>, vector<64x256xbf16>, vector<64x64xf32> -> vector<64x64xf32>
    %133 = arith.mulf %132, %132 : vector<64x64xf32>
    %cst_68 = arith.constant dense<0.000000e+00> : vector<64xf32>
    %134 = vector.multi_reduction <add>, %133, %cst_68 [1] : vector<64x64xf32> to vector<64xf32>
    %135 = vector.shape_cast %134 : vector<64xf32> to vector<64x1xf32>
    %cst_69 = arith.constant dense<0.000000e+00> : vector<1xf32>
    %136 = vector.multi_reduction <add>, %135, %cst_69 [0] : vector<64x1xf32> to vector<1xf32>
    %137 = vector.shape_cast %136 : vector<1xf32> to vector<1x1xf32>
    %138 = arith.extf %131 : vector<64x256xbf16> to vector<64x256xf32>
    %139 = arith.mulf %138, %138 : vector<64x256xf32>
    %cst_70 = arith.constant dense<0.000000e+00> : vector<64xf32>
    %140 = vector.multi_reduction <add>, %139, %cst_70 [1] : vector<64x256xf32> to vector<64xf32>
    %141 = vector.shape_cast %140 : vector<64xf32> to vector<64x1xf32>
    %cst_71 = arith.constant dense<0.000000e+00> : vector<1xf32>
    %142 = vector.multi_reduction <add>, %141, %cst_71 [0] : vector<64x1xf32> to vector<1xf32>
    %143 = vector.shape_cast %142 : vector<1xf32> to vector<1x1xf32>
    %cst_72 = arith.constant 2.000000e+00 : f32
    %144 = vector.broadcast %cst_72 : f32 to vector<1x1xf32>
    %145 = arith.mulf %144, %143 : vector<1x1xf32>
    %146 = arith.subf %137, %145 : vector<1x1xf32>
    %cst_73 = arith.constant 6.400000e+01 : f32
    %147 = vector.broadcast %cst_73 : f32 to vector<1x1xf32>
    %148 = arith.addf %146, %147 : vector<1x1xf32>
    %cst_74 = arith.constant 2.44140625E-4 : f32
    %149 = vector.broadcast %cst_74 : f32 to vector<1x1xf32>
    %150 = arith.mulf %148, %149 : vector<1x1xf32>
    %151 = arith.addf %129, %150 : vector<1x1xf32>
    %c1_75 = arith.constant 1 : index
    %c0_76 = arith.constant 0 : index
    %c0_77 = arith.constant 0 : index
    %c0_78 = arith.constant 0 : index
    %152 = vector.load %arg1[%c1_75, %c0_76, %c0_77, %c0_78] : memref<2x4x64x64xbf16, #tpu.memory_space<vmem>>, vector<1x1x64x64xbf16>
    %153 = vector.shape_cast %152 : vector<1x1x64x64xbf16> to vector<64x64xbf16>
    %cst_79 = arith.constant dense<0.000000e+00> : vector<64x64xf32>
    %154 = tpu.matmul %153, %153, %cst_79 {dimension_numbers = #tpu.dot_dimension_numbers<[1], [1], [0], [0], [0, 0, 1, 0], [], []>} : vector<64x64xbf16>, vector<64x64xbf16>, vector<64x64xf32> -> vector<64x64xf32>
    %155 = arith.mulf %154, %154 : vector<64x64xf32>
    %cst_80 = arith.constant dense<0.000000e+00> : vector<64xf32>
    %156 = vector.multi_reduction <add>, %155, %cst_80 [1] : vector<64x64xf32> to vector<64xf32>
    %157 = vector.shape_cast %156 : vector<64xf32> to vector<64x1xf32>
    %cst_81 = arith.constant dense<0.000000e+00> : vector<1xf32>
    %158 = vector.multi_reduction <add>, %157, %cst_81 [0] : vector<64x1xf32> to vector<1xf32>
    %159 = vector.shape_cast %158 : vector<1xf32> to vector<1x1xf32>
    %160 = arith.extf %153 : vector<64x64xbf16> to vector<64x64xf32>
    %161 = arith.mulf %160, %160 : vector<64x64xf32>
    %cst_82 = arith.constant dense<0.000000e+00> : vector<64xf32>
    %162 = vector.multi_reduction <add>, %161, %cst_82 [1] : vector<64x64xf32> to vector<64xf32>
    %163 = vector.shape_cast %162 : vector<64xf32> to vector<64x1xf32>
    %cst_83 = arith.constant dense<0.000000e+00> : vector<1xf32>
    %164 = vector.multi_reduction <add>, %163, %cst_83 [0] : vector<64x1xf32> to vector<1xf32>
    %165 = vector.shape_cast %164 : vector<1xf32> to vector<1x1xf32>
    %cst_84 = arith.constant 2.000000e+00 : f32
    %166 = vector.broadcast %cst_84 : f32 to vector<1x1xf32>
    %167 = arith.mulf %166, %165 : vector<1x1xf32>
    %168 = arith.subf %159, %167 : vector<1x1xf32>
    %cst_85 = arith.constant 6.400000e+01 : f32
    %169 = vector.broadcast %cst_85 : f32 to vector<1x1xf32>
    %170 = arith.addf %168, %169 : vector<1x1xf32>
    %cst_86 = arith.constant 2.44140625E-4 : f32
    %171 = vector.broadcast %cst_86 : f32 to vector<1x1xf32>
    %172 = arith.mulf %170, %171 : vector<1x1xf32>
    %173 = arith.addf %151, %172 : vector<1x1xf32>
    %c1_87 = arith.constant 1 : index
    %c1_88 = arith.constant 1 : index
    %c0_89 = arith.constant 0 : index
    %c0_90 = arith.constant 0 : index
    %174 = vector.load %arg1[%c1_87, %c1_88, %c0_89, %c0_90] : memref<2x4x64x64xbf16, #tpu.memory_space<vmem>>, vector<1x1x64x64xbf16>
    %175 = vector.shape_cast %174 : vector<1x1x64x64xbf16> to vector<64x64xbf16>
    %cst_91 = arith.constant dense<0.000000e+00> : vector<64x64xf32>
    %176 = tpu.matmul %175, %175, %cst_91 {dimension_numbers = #tpu.dot_dimension_numbers<[1], [1], [0], [0], [0, 0, 1, 0], [], []>} : vector<64x64xbf16>, vector<64x64xbf16>, vector<64x64xf32> -> vector<64x64xf32>
    %177 = arith.mulf %176, %176 : vector<64x64xf32>
    %cst_92 = arith.constant dense<0.000000e+00> : vector<64xf32>
    %178 = vector.multi_reduction <add>, %177, %cst_92 [1] : vector<64x64xf32> to vector<64xf32>
    %179 = vector.shape_cast %178 : vector<64xf32> to vector<64x1xf32>
    %cst_93 = arith.constant dense<0.000000e+00> : vector<1xf32>
    %180 = vector.multi_reduction <add>, %179, %cst_93 [0] : vector<64x1xf32> to vector<1xf32>
    %181 = vector.shape_cast %180 : vector<1xf32> to vector<1x1xf32>
    %182 = arith.extf %175 : vector<64x64xbf16> to vector<64x64xf32>
    %183 = arith.mulf %182, %182 : vector<64x64xf32>
    %cst_94 = arith.constant dense<0.000000e+00> : vector<64xf32>
    %184 = vector.multi_reduction <add>, %183, %cst_94 [1] : vector<64x64xf32> to vector<64xf32>
    %185 = vector.shape_cast %184 : vector<64xf32> to vector<64x1xf32>
    %cst_95 = arith.constant dense<0.000000e+00> : vector<1xf32>
    %186 = vector.multi_reduction <add>, %185, %cst_95 [0] : vector<64x1xf32> to vector<1xf32>
    %187 = vector.shape_cast %186 : vector<1xf32> to vector<1x1xf32>
    %cst_96 = arith.constant 2.000000e+00 : f32
    %188 = vector.broadcast %cst_96 : f32 to vector<1x1xf32>
    %189 = arith.mulf %188, %187 : vector<1x1xf32>
    %190 = arith.subf %181, %189 : vector<1x1xf32>
    %cst_97 = arith.constant 6.400000e+01 : f32
    %191 = vector.broadcast %cst_97 : f32 to vector<1x1xf32>
    %192 = arith.addf %190, %191 : vector<1x1xf32>
    %cst_98 = arith.constant 2.44140625E-4 : f32
    %193 = vector.broadcast %cst_98 : f32 to vector<1x1xf32>
    %194 = arith.mulf %192, %193 : vector<1x1xf32>
    %195 = arith.addf %173, %194 : vector<1x1xf32>
    %c1_99 = arith.constant 1 : index
    %c2_100 = arith.constant 2 : index
    %c0_101 = arith.constant 0 : index
    %c0_102 = arith.constant 0 : index
    %196 = vector.load %arg1[%c1_99, %c2_100, %c0_101, %c0_102] : memref<2x4x64x64xbf16, #tpu.memory_space<vmem>>, vector<1x1x64x64xbf16>
    %197 = vector.shape_cast %196 : vector<1x1x64x64xbf16> to vector<64x64xbf16>
    %cst_103 = arith.constant dense<0.000000e+00> : vector<64x64xf32>
    %198 = tpu.matmul %197, %197, %cst_103 {dimension_numbers = #tpu.dot_dimension_numbers<[1], [1], [0], [0], [0, 0, 1, 0], [], []>} : vector<64x64xbf16>, vector<64x64xbf16>, vector<64x64xf32> -> vector<64x64xf32>
    %199 = arith.mulf %198, %198 : vector<64x64xf32>
    %cst_104 = arith.constant dense<0.000000e+00> : vector<64xf32>
    %200 = vector.multi_reduction <add>, %199, %cst_104 [1] : vector<64x64xf32> to vector<64xf32>
    %201 = vector.shape_cast %200 : vector<64xf32> to vector<64x1xf32>
    %cst_105 = arith.constant dense<0.000000e+00> : vector<1xf32>
    %202 = vector.multi_reduction <add>, %201, %cst_105 [0] : vector<64x1xf32> to vector<1xf32>
    %203 = vector.shape_cast %202 : vector<1xf32> to vector<1x1xf32>
    %204 = arith.extf %197 : vector<64x64xbf16> to vector<64x64xf32>
    %205 = arith.mulf %204, %204 : vector<64x64xf32>
    %cst_106 = arith.constant dense<0.000000e+00> : vector<64xf32>
    %206 = vector.multi_reduction <add>, %205, %cst_106 [1] : vector<64x64xf32> to vector<64xf32>
    %207 = vector.shape_cast %206 : vector<64xf32> to vector<64x1xf32>
    %cst_107 = arith.constant dense<0.000000e+00> : vector<1xf32>
    %208 = vector.multi_reduction <add>, %207, %cst_107 [0] : vector<64x1xf32> to vector<1xf32>
    %209 = vector.shape_cast %208 : vector<1xf32> to vector<1x1xf32>
    %cst_108 = arith.constant 2.000000e+00 : f32
    %210 = vector.broadcast %cst_108 : f32 to vector<1x1xf32>
    %211 = arith.mulf %210, %209 : vector<1x1xf32>
    %212 = arith.subf %203, %211 : vector<1x1xf32>
    %cst_109 = arith.constant 6.400000e+01 : f32
    %213 = vector.broadcast %cst_109 : f32 to vector<1x1xf32>
    %214 = arith.addf %212, %213 : vector<1x1xf32>
    %cst_110 = arith.constant 2.44140625E-4 : f32
    %215 = vector.broadcast %cst_110 : f32 to vector<1x1xf32>
    %216 = arith.mulf %214, %215 : vector<1x1xf32>
    %217 = arith.addf %195, %216 : vector<1x1xf32>
    %c1_111 = arith.constant 1 : index
    %c3_112 = arith.constant 3 : index
    %c0_113 = arith.constant 0 : index
    %c0_114 = arith.constant 0 : index
    %218 = vector.load %arg1[%c1_111, %c3_112, %c0_113, %c0_114] : memref<2x4x64x64xbf16, #tpu.memory_space<vmem>>, vector<1x1x64x64xbf16>
    %219 = vector.shape_cast %218 : vector<1x1x64x64xbf16> to vector<64x64xbf16>
    %cst_115 = arith.constant dense<0.000000e+00> : vector<64x64xf32>
    %220 = tpu.matmul %219, %219, %cst_115 {dimension_numbers = #tpu.dot_dimension_numbers<[1], [1], [0], [0], [0, 0, 1, 0], [], []>} : vector<64x64xbf16>, vector<64x64xbf16>, vector<64x64xf32> -> vector<64x64xf32>
    %221 = arith.mulf %220, %220 : vector<64x64xf32>
    %cst_116 = arith.constant dense<0.000000e+00> : vector<64xf32>
    %222 = vector.multi_reduction <add>, %221, %cst_116 [1] : vector<64x64xf32> to vector<64xf32>
    %223 = vector.shape_cast %222 : vector<64xf32> to vector<64x1xf32>
    %cst_117 = arith.constant dense<0.000000e+00> : vector<1xf32>
    %224 = vector.multi_reduction <add>, %223, %cst_117 [0] : vector<64x1xf32> to vector<1xf32>
    %225 = vector.shape_cast %224 : vector<1xf32> to vector<1x1xf32>
    %226 = arith.extf %219 : vector<64x64xbf16> to vector<64x64xf32>
    %227 = arith.mulf %226, %226 : vector<64x64xf32>
    %cst_118 = arith.constant dense<0.000000e+00> : vector<64xf32>
    %228 = vector.multi_reduction <add>, %227, %cst_118 [1] : vector<64x64xf32> to vector<64xf32>
    %229 = vector.shape_cast %228 : vector<64xf32> to vector<64x1xf32>
    %cst_119 = arith.constant dense<0.000000e+00> : vector<1xf32>
    %230 = vector.multi_reduction <add>, %229, %cst_119 [0] : vector<64x1xf32> to vector<1xf32>
    %231 = vector.shape_cast %230 : vector<1xf32> to vector<1x1xf32>
    %cst_120 = arith.constant 2.000000e+00 : f32
    %232 = vector.broadcast %cst_120 : f32 to vector<1x1xf32>
    %233 = arith.mulf %232, %231 : vector<1x1xf32>
    %234 = arith.subf %225, %233 : vector<1x1xf32>
    %cst_121 = arith.constant 6.400000e+01 : f32
    %235 = vector.broadcast %cst_121 : f32 to vector<1x1xf32>
    %236 = arith.addf %234, %235 : vector<1x1xf32>
    %cst_122 = arith.constant 2.44140625E-4 : f32
    %237 = vector.broadcast %cst_122 : f32 to vector<1x1xf32>
    %238 = arith.mulf %236, %237 : vector<1x1xf32>
    %239 = arith.addf %217, %238 : vector<1x1xf32>
    %c1_123 = arith.constant 1 : index
    %c0_124 = arith.constant 0 : index
    %c0_125 = arith.constant 0 : index
    %240 = vector.load %arg2[%c1_123, %c0_124, %c0_125] : memref<2x256x64xbf16, #tpu.memory_space<vmem>>, vector<1x256x64xbf16>
    %241 = vector.shape_cast %240 : vector<1x256x64xbf16> to vector<256x64xbf16>
    %cst_126 = arith.constant dense<0.000000e+00> : vector<256x256xf32>
    %242 = tpu.matmul %241, %241, %cst_126 {dimension_numbers = #tpu.dot_dimension_numbers<[1], [1], [0], [0], [0, 0, 1, 0], [], []>} : vector<256x64xbf16>, vector<256x64xbf16>, vector<256x256xf32> -> vector<256x256xf32>
    %243 = arith.mulf %242, %242 : vector<256x256xf32>
    %cst_127 = arith.constant dense<0.000000e+00> : vector<256xf32>
    %244 = vector.multi_reduction <add>, %243, %cst_127 [1] : vector<256x256xf32> to vector<256xf32>
    %245 = vector.shape_cast %244 : vector<256xf32> to vector<256x1xf32>
    %cst_128 = arith.constant dense<0.000000e+00> : vector<1xf32>
    %246 = vector.multi_reduction <add>, %245, %cst_128 [0] : vector<256x1xf32> to vector<1xf32>
    %247 = vector.shape_cast %246 : vector<1xf32> to vector<1x1xf32>
    %248 = arith.extf %241 : vector<256x64xbf16> to vector<256x64xf32>
    %249 = arith.mulf %248, %248 : vector<256x64xf32>
    %cst_129 = arith.constant dense<0.000000e+00> : vector<256xf32>
    %250 = vector.multi_reduction <add>, %249, %cst_129 [1] : vector<256x64xf32> to vector<256xf32>
    %251 = vector.shape_cast %250 : vector<256xf32> to vector<256x1xf32>
    %cst_130 = arith.constant dense<0.000000e+00> : vector<1xf32>
    %252 = vector.multi_reduction <add>, %251, %cst_130 [0] : vector<256x1xf32> to vector<1xf32>
    %253 = vector.shape_cast %252 : vector<1xf32> to vector<1x1xf32>
    %cst_131 = arith.constant 2.000000e+00 : f32
    %254 = vector.broadcast %cst_131 : f32 to vector<1x1xf32>
    %255 = arith.mulf %254, %253 : vector<1x1xf32>
    %256 = arith.subf %247, %255 : vector<1x1xf32>
    %cst_132 = arith.constant 2.560000e+02 : f32
    %257 = vector.broadcast %cst_132 : f32 to vector<1x1xf32>
    %258 = arith.addf %256, %257 : vector<1x1xf32>
    %cst_133 = arith.constant 1.52587891E-5 : f32
    %259 = vector.broadcast %cst_133 : f32 to vector<1x1xf32>
    %260 = arith.mulf %258, %259 : vector<1x1xf32>
    %261 = arith.addf %239, %260 : vector<1x1xf32>
    %c1_134 = arith.constant 1 : index
    %c0_135 = arith.constant 0 : index
    %c0_136 = arith.constant 0 : index
    %262 = vector.load %arg3[%c1_134, %c0_135, %c0_136] : memref<2x64x256xbf16, #tpu.memory_space<vmem>>, vector<1x64x256xbf16>
    %263 = vector.shape_cast %262 : vector<1x64x256xbf16> to vector<64x256xbf16>
    %cst_137 = arith.constant dense<0.000000e+00> : vector<64x64xf32>
    %264 = tpu.matmul %263, %263, %cst_137 {dimension_numbers = #tpu.dot_dimension_numbers<[1], [1], [0], [0], [0, 0, 1, 0], [], []>} : vector<64x256xbf16>, vector<64x256xbf16>, vector<64x64xf32> -> vector<64x64xf32>
    %265 = arith.mulf %264, %264 : vector<64x64xf32>
    %cst_138 = arith.constant dense<0.000000e+00> : vector<64xf32>
    %266 = vector.multi_reduction <add>, %265, %cst_138 [1] : vector<64x64xf32> to vector<64xf32>
    %267 = vector.shape_cast %266 : vector<64xf32> to vector<64x1xf32>
    %cst_139 = arith.constant dense<0.000000e+00> : vector<1xf32>
    %268 = vector.multi_reduction <add>, %267, %cst_139 [0] : vector<64x1xf32> to vector<1xf32>
    %269 = vector.shape_cast %268 : vector<1xf32> to vector<1x1xf32>
    %270 = arith.extf %263 : vector<64x256xbf16> to vector<64x256xf32>
    %271 = arith.mulf %270, %270 : vector<64x256xf32>
    %cst_140 = arith.constant dense<0.000000e+00> : vector<64xf32>
    %272 = vector.multi_reduction <add>, %271, %cst_140 [1] : vector<64x256xf32> to vector<64xf32>
    %273 = vector.shape_cast %272 : vector<64xf32> to vector<64x1xf32>
    %cst_141 = arith.constant dense<0.000000e+00> : vector<1xf32>
    %274 = vector.multi_reduction <add>, %273, %cst_141 [0] : vector<64x1xf32> to vector<1xf32>
    %275 = vector.shape_cast %274 : vector<1xf32> to vector<1x1xf32>
    %cst_142 = arith.constant 2.000000e+00 : f32
    %276 = vector.broadcast %cst_142 : f32 to vector<1x1xf32>
    %277 = arith.mulf %276, %275 : vector<1x1xf32>
    %278 = arith.subf %269, %277 : vector<1x1xf32>
    %cst_143 = arith.constant 6.400000e+01 : f32
    %279 = vector.broadcast %cst_143 : f32 to vector<1x1xf32>
    %280 = arith.addf %278, %279 : vector<1x1xf32>
    %cst_144 = arith.constant 2.44140625E-4 : f32
    %281 = vector.broadcast %cst_144 : f32 to vector<1x1xf32>
    %282 = arith.mulf %280, %281 : vector<1x1xf32>
    %283 = arith.addf %261, %282 : vector<1x1xf32>
    %cst_145 = arith.constant 1.000000e-01 : f32
    %284 = vector.broadcast %cst_145 : f32 to vector<1x1xf32>
    %285 = arith.mulf %283, %284 : vector<1x1xf32>
    %c0_146 = arith.constant 0 : index
    %c0_147 = arith.constant 0 : index
    %286 = vector.load %arg4[%c0_146, %c0_147] : memref<1x1xf32, #tpu.memory_space<vmem>>, vector<1x1xf32>
    tpu.vector_store %arg4[%c0_146, %c0_147], %285 {strides = array<i32>} : memref<1x1xf32, #tpu.memory_space<vmem>>, vector<1x1xf32>,
    return
  }
}

module attributes {stable_mosaic.version = 11 : i64} {
  func.func @fwd_kernel(%arg0: i32, %arg1: memref<8x16xf32, #tpu.memory_space<vmem>>, %arg2: memref<64x16xbf16, #tpu.memory_space<vmem>>, %arg3: memref<1x64xf32, #tpu.memory_space<vmem>>, %arg4: memref<2x768x64xbf16, #tpu.memory_space<vmem>>, %arg5: memref<2x1x768xf32, #tpu.memory_space<vmem>>, %arg6: memref<2x64x64xbf16, #tpu.memory_space<vmem>>, %arg7: memref<2x1x64xf32, #tpu.memory_space<vmem>>, %arg8: memref<2x2x1x64xf32, #tpu.memory_space<vmem>>, %arg9: memref<2x2x1x64xf32, #tpu.memory_space<vmem>>, %arg10: memref<2x256x64xbf16, #tpu.memory_space<vmem>>, %arg11: memref<2x1x256xf32, #tpu.memory_space<vmem>>, %arg12: memref<2x64x256xbf16, #tpu.memory_space<vmem>>, %arg13: memref<2x1x64xf32, #tpu.memory_space<vmem>>, %arg14: memref<1x64xf32, #tpu.memory_space<vmem>>, %arg15: memref<1x1xf32, #tpu.memory_space<vmem>>, %arg16: memref<256x16xbf16, #tpu.memory_space<vmem>>, %arg17: memref<16x16xf32, #tpu.memory_space<vmem>>, %arg18: memref<16x256xbf16, #tpu.memory_space<vmem>>, %arg19: memref<256x64xbf16, #tpu.memory_space<vmem>>, %arg20: memref<1x8xf32, #tpu.memory_space<vmem>>) attributes {dimension_semantics = [#tpu.dimension_semantics<parallel>], iteration_bounds = array<i64: 1>, scalar_prefetch = 0 : i64, scratch_operands = 0 : i64, tpu.core_type = #tpu.core_type<tc>, window_params = [{transform_indices = @transform_0, window_bounds = array<i64: 8, 16>}, {pipeline_mode = #tpu.pipeline_mode<synchronous>, transform_indices = @transform_1, window_bounds = array<i64: 64, 16>}, {pipeline_mode = #tpu.pipeline_mode<synchronous>, transform_indices = @transform_2, window_bounds = array<i64: 1, 64>}, {pipeline_mode = #tpu.pipeline_mode<synchronous>, transform_indices = @transform_3, window_bounds = array<i64: 2, 768, 64>}, {pipeline_mode = #tpu.pipeline_mode<synchronous>, transform_indices = @transform_4, window_bounds = array<i64: 2, 1, 768>}, {pipeline_mode = #tpu.pipeline_mode<synchronous>, transform_indices = @transform_5, window_bounds = array<i64: 2, 64, 64>}, {pipeline_mode = #tpu.pipeline_mode<synchronous>, transform_indices = @transform_6, window_bounds = array<i64: 2, 1, 64>}, {pipeline_mode = #tpu.pipeline_mode<synchronous>, transform_indices = @transform_7, window_bounds = array<i64: 2, 2, 1, 64>}, {pipeline_mode = #tpu.pipeline_mode<synchronous>, transform_indices = @transform_8, window_bounds = array<i64: 2, 2, 1, 64>}, {pipeline_mode = #tpu.pipeline_mode<synchronous>, transform_indices = @transform_9, window_bounds = array<i64: 2, 256, 64>}, {pipeline_mode = #tpu.pipeline_mode<synchronous>, transform_indices = @transform_10, window_bounds = array<i64: 2, 1, 256>}, {pipeline_mode = #tpu.pipeline_mode<synchronous>, transform_indices = @transform_11, window_bounds = array<i64: 2, 64, 256>}, {pipeline_mode = #tpu.pipeline_mode<synchronous>, transform_indices = @transform_12, window_bounds = array<i64: 2, 1, 64>}, {pipeline_mode = #tpu.pipeline_mode<synchronous>, transform_indices = @transform_13, window_bounds = array<i64: 1, 64>}, {pipeline_mode = #tpu.pipeline_mode<synchronous>, transform_indices = @transform_14, window_bounds = array<i64: 1, 1>}, {pipeline_mode = #tpu.pipeline_mode<synchronous>, transform_indices = @transform_15, window_bounds = array<i64: 256, 16>}, {pipeline_mode = #tpu.pipeline_mode<synchronous>, transform_indices = @transform_16, window_bounds = array<i64: 16, 16>}, {pipeline_mode = #tpu.pipeline_mode<synchronous>, transform_indices = @transform_17, window_bounds = array<i64: 16, 256>}, {pipeline_mode = #tpu.pipeline_mode<synchronous>, transform_indices = @transform_18, window_bounds = array<i64: 256, 64>}, {transform_indices = @transform_19, window_bounds = array<i64: 1, 8>}]} {
    %c0 = arith.constant 0 : index
    %c0_0 = arith.constant 0 : index
    %0 = vector.load %arg16[%c0, %c0_0] : memref<256x16xbf16, #tpu.memory_space<vmem>>, vector<256x16xbf16>
    %c0_1 = arith.constant 0 : index
    %c0_2 = arith.constant 0 : index
    %1 = vector.load %arg17[%c0_1, %c0_2] : memref<16x16xf32, #tpu.memory_space<vmem>>, vector<16x16xf32>
    %c0_3 = arith.constant 0 : index
    %c0_4 = arith.constant 0 : index
    %2 = vector.load %arg18[%c0_3, %c0_4] : memref<16x256xbf16, #tpu.memory_space<vmem>>, vector<16x256xbf16>
    %c0_5 = arith.constant 0 : index
    %c0_6 = arith.constant 0 : index
    %3 = vector.load %arg19[%c0_5, %c0_6] : memref<256x64xbf16, #tpu.memory_space<vmem>>, vector<256x64xbf16>
    %c0_7 = arith.constant 0 : index
    %c0_8 = arith.constant 0 : index
    %4 = vector.load %arg1[%c0_7, %c0_8] : memref<8x16xf32, #tpu.memory_space<vmem>>, vector<8x16xf32>
    %c0_9 = arith.constant 0 : index
    %c0_10 = arith.constant 0 : index
    %5 = vector.load %arg2[%c0_9, %c0_10] : memref<64x16xbf16, #tpu.memory_space<vmem>>, vector<64x16xbf16>
    %c0_11 = arith.constant 0 : index
    %c0_12 = arith.constant 0 : index
    %6 = vector.load %arg3[%c0_11, %c0_12] : memref<1x64xf32, #tpu.memory_space<vmem>>, vector<1x64xf32>
    %7 = arith.truncf %4 : vector<8x16xf32> to vector<8x16xbf16>
    %cst = arith.constant dense<0.000000e+00> : vector<8x64xf32>
    %8 = tpu.matmul %7, %5, %cst {dimension_numbers = #tpu.dot_dimension_numbers<[1], [1], [0], [0], [0, 0, 1, 0], [], []>} : vector<8x16xbf16>, vector<64x16xbf16>, vector<8x64xf32> -> vector<8x64xf32>
    %9 = vector.broadcast %6 : vector<1x64xf32> to vector<8x64xf32>
    %10 = arith.addf %8, %9 : vector<8x64xf32>
    %c0_13 = arith.constant 0 : index
    %c0_14 = arith.constant 0 : index
    %c0_15 = arith.constant 0 : index
    %11 = vector.load %arg4[%c0_13, %c0_14, %c0_15] : memref<2x768x64xbf16, #tpu.memory_space<vmem>>, vector<1x768x64xbf16>
    %12 = vector.shape_cast %11 : vector<1x768x64xbf16> to vector<768x64xbf16>
    %c0_16 = arith.constant 0 : index
    %c0_17 = arith.constant 0 : index
    %c0_18 = arith.constant 0 : index
    %13 = vector.load %arg5[%c0_16, %c0_17, %c0_18] : memref<2x1x768xf32, #tpu.memory_space<vmem>>, vector<1x1x768xf32>
    %14 = vector.shape_cast %13 : vector<1x1x768xf32> to vector<1x768xf32>
    %15 = arith.truncf %10 : vector<8x64xf32> to vector<8x64xbf16>
    %cst_19 = arith.constant dense<0.000000e+00> : vector<8x768xf32>
    %16 = tpu.matmul %15, %12, %cst_19 {dimension_numbers = #tpu.dot_dimension_numbers<[1], [1], [0], [0], [0, 0, 1, 0], [], []>} : vector<8x64xbf16>, vector<768x64xbf16>, vector<8x768xf32> -> vector<8x768xf32>
    %17 = vector.broadcast %14 : vector<1x768xf32> to vector<8x768xf32>
    %18 = arith.addf %16, %17 : vector<8x768xf32>
    %19 = vector.extract_strided_slice %18 {offsets = [0, 0], sizes = [8, 256], strides = [1, 1]} : vector<8x768xf32> to vector<8x256xf32>
    %20 = vector.extract_strided_slice %18 {offsets = [0, 256], sizes = [8, 256], strides = [1, 1]} : vector<8x768xf32> to vector<8x256xf32>
    %21 = vector.extract_strided_slice %18 {offsets = [0, 512], sizes = [8, 256], strides = [1, 1]} : vector<8x768xf32> to vector<8x256xf32>
    %22 = arith.mulf %19, %20 : vector<8x256xf32>
    %23 = arith.truncf %22 : vector<8x256xf32> to vector<8x256xbf16>
    %cst_20 = arith.constant dense<0.000000e+00> : vector<8x16xf32>
    %24 = tpu.matmul %23, %0, %cst_20 {dimension_numbers = #tpu.dot_dimension_numbers<[1], [0], [0], [1], [0, 0, 1, 1], [], []>} : vector<8x256xbf16>, vector<256x16xbf16>, vector<8x16xf32> -> vector<8x16xf32>
    %cst_21 = arith.constant dense<0xFF800000> : vector<8xf32>
    %25 = vector.multi_reduction <maximumf>, %24, %cst_21 [1] : vector<8x16xf32> to vector<8xf32>
    %26 = vector.shape_cast %25 : vector<8xf32> to vector<8x1xf32>
    %27 = vector.broadcast %26 : vector<8x1xf32> to vector<8x16xf32>
    %28 = arith.subf %24, %27 : vector<8x16xf32>
    %29 = math.exp %28 : vector<8x16xf32>
    %cst_22 = arith.constant dense<0.000000e+00> : vector<8x16xf32>
    %30 = tpu.matmul %29, %1, %cst_22 {dimension_numbers = #tpu.dot_dimension_numbers<[1], [0], [0], [1], [0, 0, 1, 1], [], []>} : vector<8x16xf32>, vector<16x16xf32>, vector<8x16xf32> -> vector<8x16xf32>
    %31 = tpu.reciprocal %30 {approx = true} : vector<8x16xf32> -> vector<8x16xf32>
    %32 = arith.mulf %29, %31 : vector<8x16xf32>
    %33 = arith.truncf %32 : vector<8x16xf32> to vector<8x16xbf16>
    %cst_23 = arith.constant dense<0.000000e+00> : vector<8x256xf32>
    %34 = tpu.matmul %33, %2, %cst_23 {dimension_numbers = #tpu.dot_dimension_numbers<[1], [0], [0], [1], [0, 0, 1, 1], [], []>} : vector<8x16xbf16>, vector<16x256xbf16>, vector<8x256xf32> -> vector<8x256xf32>
    %35 = arith.mulf %34, %21 : vector<8x256xf32>
    %36 = arith.truncf %35 : vector<8x256xf32> to vector<8x256xbf16>
    %cst_24 = arith.constant dense<0.000000e+00> : vector<8x64xf32>
    %37 = tpu.matmul %36, %3, %cst_24 {dimension_numbers = #tpu.dot_dimension_numbers<[1], [0], [0], [1], [0, 0, 1, 1], [], []>} : vector<8x256xbf16>, vector<256x64xbf16>, vector<8x64xf32> -> vector<8x64xf32>
    %c0_25 = arith.constant 0 : index
    %c0_26 = arith.constant 0 : index
    %c0_27 = arith.constant 0 : index
    %38 = vector.load %arg6[%c0_25, %c0_26, %c0_27] : memref<2x64x64xbf16, #tpu.memory_space<vmem>>, vector<1x64x64xbf16>
    %39 = vector.shape_cast %38 : vector<1x64x64xbf16> to vector<64x64xbf16>
    %c0_28 = arith.constant 0 : index
    %c0_29 = arith.constant 0 : index
    %c0_30 = arith.constant 0 : index
    %40 = vector.load %arg7[%c0_28, %c0_29, %c0_30] : memref<2x1x64xf32, #tpu.memory_space<vmem>>, vector<1x1x64xf32>
    %41 = vector.shape_cast %40 : vector<1x1x64xf32> to vector<1x64xf32>
    %42 = arith.truncf %37 : vector<8x64xf32> to vector<8x64xbf16>
    %cst_31 = arith.constant dense<0.000000e+00> : vector<8x64xf32>
    %43 = tpu.matmul %42, %39, %cst_31 {dimension_numbers = #tpu.dot_dimension_numbers<[1], [1], [0], [0], [0, 0, 1, 0], [], []>} : vector<8x64xbf16>, vector<64x64xbf16>, vector<8x64xf32> -> vector<8x64xf32>
    %44 = vector.broadcast %41 : vector<1x64xf32> to vector<8x64xf32>
    %45 = arith.addf %43, %44 : vector<8x64xf32>
    %46 = arith.addf %10, %45 : vector<8x64xf32>
    %c0_32 = arith.constant 0 : index
    %c0_33 = arith.constant 0 : index
    %c0_34 = arith.constant 0 : index
    %c0_35 = arith.constant 0 : index
    %47 = vector.load %arg8[%c0_32, %c0_33, %c0_34, %c0_35] : memref<2x2x1x64xf32, #tpu.memory_space<vmem>>, vector<1x1x1x64xf32>
    %48 = vector.shape_cast %47 : vector<1x1x1x64xf32> to vector<1x64xf32>
    %c0_36 = arith.constant 0 : index
    %c0_37 = arith.constant 0 : index
    %c0_38 = arith.constant 0 : index
    %c0_39 = arith.constant 0 : index
    %49 = vector.load %arg9[%c0_36, %c0_37, %c0_38, %c0_39] : memref<2x2x1x64xf32, #tpu.memory_space<vmem>>, vector<1x1x1x64xf32>
    %50 = vector.shape_cast %49 : vector<1x1x1x64xf32> to vector<1x64xf32>
    %cst_40 = arith.constant dense<0.000000e+00> : vector<8xf32>
    %51 = vector.multi_reduction <add>, %46, %cst_40 [1] : vector<8x64xf32> to vector<8xf32>
    %52 = vector.shape_cast %51 : vector<8xf32> to vector<8x1xf32>
    %cst_41 = arith.constant 6.400000e+01 : f32
    %53 = vector.broadcast %cst_41 : f32 to vector<8x1xf32>
    %54 = arith.divf %52, %53 : vector<8x1xf32>
    %55 = vector.broadcast %54 : vector<8x1xf32> to vector<8x64xf32>
    %56 = arith.subf %46, %55 : vector<8x64xf32>
    %57 = arith.mulf %56, %56 : vector<8x64xf32>
    %cst_42 = arith.constant dense<0.000000e+00> : vector<8xf32>
    %58 = vector.multi_reduction <add>, %57, %cst_42 [1] : vector<8x64xf32> to vector<8xf32>
    %59 = vector.shape_cast %58 : vector<8xf32> to vector<8x1xf32>
    %cst_43 = arith.constant 6.400000e+01 : f32
    %60 = vector.broadcast %cst_43 : f32 to vector<8x1xf32>
    %61 = arith.divf %59, %60 : vector<8x1xf32>
    %cst_44 = arith.constant 9.99999974E-6 : f32
    %62 = vector.broadcast %cst_44 : f32 to vector<8x1xf32>
    %63 = arith.addf %61, %62 : vector<8x1xf32>
    %64 = math.rsqrt %63 : vector<8x1xf32>
    %65 = vector.broadcast %64 : vector<8x1xf32> to vector<8x64xf32>
    %66 = arith.mulf %56, %65 : vector<8x64xf32>
    %67 = vector.broadcast %48 : vector<1x64xf32> to vector<8x64xf32>
    %68 = arith.mulf %66, %67 : vector<8x64xf32>
    %69 = vector.broadcast %50 : vector<1x64xf32> to vector<8x64xf32>
    %70 = arith.addf %68, %69 : vector<8x64xf32>
    %c0_45 = arith.constant 0 : index
    %c0_46 = arith.constant 0 : index
    %c0_47 = arith.constant 0 : index
    %71 = vector.load %arg10[%c0_45, %c0_46, %c0_47] : memref<2x256x64xbf16, #tpu.memory_space<vmem>>, vector<1x256x64xbf16>
    %72 = vector.shape_cast %71 : vector<1x256x64xbf16> to vector<256x64xbf16>
    %c0_48 = arith.constant 0 : index
    %c0_49 = arith.constant 0 : index
    %c0_50 = arith.constant 0 : index
    %73 = vector.load %arg11[%c0_48, %c0_49, %c0_50] : memref<2x1x256xf32, #tpu.memory_space<vmem>>, vector<1x1x256xf32>
    %74 = vector.shape_cast %73 : vector<1x1x256xf32> to vector<1x256xf32>
    %75 = arith.truncf %70 : vector<8x64xf32> to vector<8x64xbf16>
    %cst_51 = arith.constant dense<0.000000e+00> : vector<8x256xf32>
    %76 = tpu.matmul %75, %72, %cst_51 {dimension_numbers = #tpu.dot_dimension_numbers<[1], [1], [0], [0], [0, 0, 1, 0], [], []>} : vector<8x64xbf16>, vector<256x64xbf16>, vector<8x256xf32> -> vector<8x256xf32>
    %77 = vector.broadcast %74 : vector<1x256xf32> to vector<8x256xf32>
    %78 = arith.addf %76, %77 : vector<8x256xf32>
    %cst_52 = arith.constant 5.000000e-01 : f32
    %79 = vector.broadcast %cst_52 : f32 to vector<8x256xf32>
    %80 = arith.mulf %79, %78 : vector<8x256xf32>
    %cst_53 = arith.constant 4.471500e-02 : f32
    %81 = vector.broadcast %cst_53 : f32 to vector<8x256xf32>
    %82 = arith.mulf %81, %78 : vector<8x256xf32>
    %83 = arith.mulf %82, %78 : vector<8x256xf32>
    %84 = arith.mulf %83, %78 : vector<8x256xf32>
    %85 = arith.addf %78, %84 : vector<8x256xf32>
    %cst_54 = arith.constant 0.797884583 : f32
    %86 = vector.broadcast %cst_54 : f32 to vector<8x256xf32>
    %87 = arith.mulf %86, %85 : vector<8x256xf32>
    %88 = math.tanh %87 : vector<8x256xf32>
    %cst_55 = arith.constant 1.000000e+00 : f32
    %89 = vector.broadcast %cst_55 : f32 to vector<8x256xf32>
    %90 = arith.addf %89, %88 : vector<8x256xf32>
    %91 = arith.mulf %80, %90 : vector<8x256xf32>
    %c0_56 = arith.constant 0 : index
    %c0_57 = arith.constant 0 : index
    %c0_58 = arith.constant 0 : index
    %92 = vector.load %arg12[%c0_56, %c0_57, %c0_58] : memref<2x64x256xbf16, #tpu.memory_space<vmem>>, vector<1x64x256xbf16>
    %93 = vector.shape_cast %92 : vector<1x64x256xbf16> to vector<64x256xbf16>
    %c0_59 = arith.constant 0 : index
    %c0_60 = arith.constant 0 : index
    %c0_61 = arith.constant 0 : index
    %94 = vector.load %arg13[%c0_59, %c0_60, %c0_61] : memref<2x1x64xf32, #tpu.memory_space<vmem>>, vector<1x1x64xf32>
    %95 = vector.shape_cast %94 : vector<1x1x64xf32> to vector<1x64xf32>
    %96 = arith.truncf %91 : vector<8x256xf32> to vector<8x256xbf16>
    %cst_62 = arith.constant dense<0.000000e+00> : vector<8x64xf32>
    %97 = tpu.matmul %96, %93, %cst_62 {dimension_numbers = #tpu.dot_dimension_numbers<[1], [1], [0], [0], [0, 0, 1, 0], [], []>} : vector<8x256xbf16>, vector<64x256xbf16>, vector<8x64xf32> -> vector<8x64xf32>
    %98 = vector.broadcast %95 : vector<1x64xf32> to vector<8x64xf32>
    %99 = arith.addf %97, %98 : vector<8x64xf32>
    %100 = arith.addf %70, %99 : vector<8x64xf32>
    %c0_63 = arith.constant 0 : index
    %c1 = arith.constant 1 : index
    %c0_64 = arith.constant 0 : index
    %c0_65 = arith.constant 0 : index
    %101 = vector.load %arg8[%c0_63, %c1, %c0_64, %c0_65] : memref<2x2x1x64xf32, #tpu.memory_space<vmem>>, vector<1x1x1x64xf32>
    %102 = vector.shape_cast %101 : vector<1x1x1x64xf32> to vector<1x64xf32>
    %c0_66 = arith.constant 0 : index
    %c1_67 = arith.constant 1 : index
    %c0_68 = arith.constant 0 : index
    %c0_69 = arith.constant 0 : index
    %103 = vector.load %arg9[%c0_66, %c1_67, %c0_68, %c0_69] : memref<2x2x1x64xf32, #tpu.memory_space<vmem>>, vector<1x1x1x64xf32>
    %104 = vector.shape_cast %103 : vector<1x1x1x64xf32> to vector<1x64xf32>
    %cst_70 = arith.constant dense<0.000000e+00> : vector<8xf32>
    %105 = vector.multi_reduction <add>, %100, %cst_70 [1] : vector<8x64xf32> to vector<8xf32>
    %106 = vector.shape_cast %105 : vector<8xf32> to vector<8x1xf32>
    %cst_71 = arith.constant 6.400000e+01 : f32
    %107 = vector.broadcast %cst_71 : f32 to vector<8x1xf32>
    %108 = arith.divf %106, %107 : vector<8x1xf32>
    %109 = vector.broadcast %108 : vector<8x1xf32> to vector<8x64xf32>
    %110 = arith.subf %100, %109 : vector<8x64xf32>
    %111 = arith.mulf %110, %110 : vector<8x64xf32>
    %cst_72 = arith.constant dense<0.000000e+00> : vector<8xf32>
    %112 = vector.multi_reduction <add>, %111, %cst_72 [1] : vector<8x64xf32> to vector<8xf32>
    %113 = vector.shape_cast %112 : vector<8xf32> to vector<8x1xf32>
    %cst_73 = arith.constant 6.400000e+01 : f32
    %114 = vector.broadcast %cst_73 : f32 to vector<8x1xf32>
    %115 = arith.divf %113, %114 : vector<8x1xf32>
    %cst_74 = arith.constant 9.99999974E-6 : f32
    %116 = vector.broadcast %cst_74 : f32 to vector<8x1xf32>
    %117 = arith.addf %115, %116 : vector<8x1xf32>
    %118 = math.rsqrt %117 : vector<8x1xf32>
    %119 = vector.broadcast %118 : vector<8x1xf32> to vector<8x64xf32>
    %120 = arith.mulf %110, %119 : vector<8x64xf32>
    %121 = vector.broadcast %102 : vector<1x64xf32> to vector<8x64xf32>
    %122 = arith.mulf %120, %121 : vector<8x64xf32>
    %123 = vector.broadcast %104 : vector<1x64xf32> to vector<8x64xf32>
    %124 = arith.addf %122, %123 : vector<8x64xf32>
    %c1_75 = arith.constant 1 : index
    %c0_76 = arith.constant 0 : index
    %c0_77 = arith.constant 0 : index
    %125 = vector.load %arg4[%c1_75, %c0_76, %c0_77] : memref<2x768x64xbf16, #tpu.memory_space<vmem>>, vector<1x768x64xbf16>
    %126 = vector.shape_cast %125 : vector<1x768x64xbf16> to vector<768x64xbf16>
    %c1_78 = arith.constant 1 : index
    %c0_79 = arith.constant 0 : index
    %c0_80 = arith.constant 0 : index
    %127 = vector.load %arg5[%c1_78, %c0_79, %c0_80] : memref<2x1x768xf32, #tpu.memory_space<vmem>>, vector<1x1x768xf32>
    %128 = vector.shape_cast %127 : vector<1x1x768xf32> to vector<1x768xf32>
    %129 = arith.truncf %124 : vector<8x64xf32> to vector<8x64xbf16>
    %cst_81 = arith.constant dense<0.000000e+00> : vector<8x768xf32>
    %130 = tpu.matmul %129, %126, %cst_81 {dimension_numbers = #tpu.dot_dimension_numbers<[1], [1], [0], [0], [0, 0, 1, 0], [], []>} : vector<8x64xbf16>, vector<768x64xbf16>, vector<8x768xf32> -> vector<8x768xf32>
    %131 = vector.broadcast %128 : vector<1x768xf32> to vector<8x768xf32>
    %132 = arith.addf %130, %131 : vector<8x768xf32>
    %133 = vector.extract_strided_slice %132 {offsets = [0, 0], sizes = [8, 256], strides = [1, 1]} : vector<8x768xf32> to vector<8x256xf32>
    %134 = vector.extract_strided_slice %132 {offsets = [0, 256], sizes = [8, 256], strides = [1, 1]} : vector<8x768xf32> to vector<8x256xf32>
    %135 = vector.extract_strided_slice %132 {offsets = [0, 512], sizes = [8, 256], strides = [1, 1]} : vector<8x768xf32> to vector<8x256xf32>
    %136 = arith.mulf %133, %134 : vector<8x256xf32>
    %137 = arith.truncf %136 : vector<8x256xf32> to vector<8x256xbf16>
    %cst_82 = arith.constant dense<0.000000e+00> : vector<8x16xf32>
    %138 = tpu.matmul %137, %0, %cst_82 {dimension_numbers = #tpu.dot_dimension_numbers<[1], [0], [0], [1], [0, 0, 1, 1], [], []>} : vector<8x256xbf16>, vector<256x16xbf16>, vector<8x16xf32> -> vector<8x16xf32>
    %cst_83 = arith.constant dense<0xFF800000> : vector<8xf32>
    %139 = vector.multi_reduction <maximumf>, %138, %cst_83 [1] : vector<8x16xf32> to vector<8xf32>
    %140 = vector.shape_cast %139 : vector<8xf32> to vector<8x1xf32>
    %141 = vector.broadcast %140 : vector<8x1xf32> to vector<8x16xf32>
    %142 = arith.subf %138, %141 : vector<8x16xf32>
    %143 = math.exp %142 : vector<8x16xf32>
    %cst_84 = arith.constant dense<0.000000e+00> : vector<8x16xf32>
    %144 = tpu.matmul %143, %1, %cst_84 {dimension_numbers = #tpu.dot_dimension_numbers<[1], [0], [0], [1], [0, 0, 1, 1], [], []>} : vector<8x16xf32>, vector<16x16xf32>, vector<8x16xf32> -> vector<8x16xf32>
    %145 = tpu.reciprocal %144 {approx = true} : vector<8x16xf32> -> vector<8x16xf32>
    %146 = arith.mulf %143, %145 : vector<8x16xf32>
    %147 = arith.truncf %146 : vector<8x16xf32> to vector<8x16xbf16>
    %cst_85 = arith.constant dense<0.000000e+00> : vector<8x256xf32>
    %148 = tpu.matmul %147, %2, %cst_85 {dimension_numbers = #tpu.dot_dimension_numbers<[1], [0], [0], [1], [0, 0, 1, 1], [], []>} : vector<8x16xbf16>, vector<16x256xbf16>, vector<8x256xf32> -> vector<8x256xf32>
    %149 = arith.mulf %148, %135 : vector<8x256xf32>
    %150 = arith.truncf %149 : vector<8x256xf32> to vector<8x256xbf16>
    %cst_86 = arith.constant dense<0.000000e+00> : vector<8x64xf32>
    %151 = tpu.matmul %150, %3, %cst_86 {dimension_numbers = #tpu.dot_dimension_numbers<[1], [0], [0], [1], [0, 0, 1, 1], [], []>} : vector<8x256xbf16>, vector<256x64xbf16>, vector<8x64xf32> -> vector<8x64xf32>
    %c1_87 = arith.constant 1 : index
    %c0_88 = arith.constant 0 : index
    %c0_89 = arith.constant 0 : index
    %152 = vector.load %arg6[%c1_87, %c0_88, %c0_89] : memref<2x64x64xbf16, #tpu.memory_space<vmem>>, vector<1x64x64xbf16>
    %153 = vector.shape_cast %152 : vector<1x64x64xbf16> to vector<64x64xbf16>
    %c1_90 = arith.constant 1 : index
    %c0_91 = arith.constant 0 : index
    %c0_92 = arith.constant 0 : index
    %154 = vector.load %arg7[%c1_90, %c0_91, %c0_92] : memref<2x1x64xf32, #tpu.memory_space<vmem>>, vector<1x1x64xf32>
    %155 = vector.shape_cast %154 : vector<1x1x64xf32> to vector<1x64xf32>
    %156 = arith.truncf %151 : vector<8x64xf32> to vector<8x64xbf16>
    %cst_93 = arith.constant dense<0.000000e+00> : vector<8x64xf32>
    %157 = tpu.matmul %156, %153, %cst_93 {dimension_numbers = #tpu.dot_dimension_numbers<[1], [1], [0], [0], [0, 0, 1, 0], [], []>} : vector<8x64xbf16>, vector<64x64xbf16>, vector<8x64xf32> -> vector<8x64xf32>
    %158 = vector.broadcast %155 : vector<1x64xf32> to vector<8x64xf32>
    %159 = arith.addf %157, %158 : vector<8x64xf32>
    %160 = arith.addf %124, %159 : vector<8x64xf32>
    %c1_94 = arith.constant 1 : index
    %c0_95 = arith.constant 0 : index
    %c0_96 = arith.constant 0 : index
    %c0_97 = arith.constant 0 : index
    %161 = vector.load %arg8[%c1_94, %c0_95, %c0_96, %c0_97] : memref<2x2x1x64xf32, #tpu.memory_space<vmem>>, vector<1x1x1x64xf32>
    %162 = vector.shape_cast %161 : vector<1x1x1x64xf32> to vector<1x64xf32>
    %c1_98 = arith.constant 1 : index
    %c0_99 = arith.constant 0 : index
    %c0_100 = arith.constant 0 : index
    %c0_101 = arith.constant 0 : index
    %163 = vector.load %arg9[%c1_98, %c0_99, %c0_100, %c0_101] : memref<2x2x1x64xf32, #tpu.memory_space<vmem>>, vector<1x1x1x64xf32>
    %164 = vector.shape_cast %163 : vector<1x1x1x64xf32> to vector<1x64xf32>
    %cst_102 = arith.constant dense<0.000000e+00> : vector<8xf32>
    %165 = vector.multi_reduction <add>, %160, %cst_102 [1] : vector<8x64xf32> to vector<8xf32>
    %166 = vector.shape_cast %165 : vector<8xf32> to vector<8x1xf32>
    %cst_103 = arith.constant 6.400000e+01 : f32
    %167 = vector.broadcast %cst_103 : f32 to vector<8x1xf32>
    %168 = arith.divf %166, %167 : vector<8x1xf32>
    %169 = vector.broadcast %168 : vector<8x1xf32> to vector<8x64xf32>
    %170 = arith.subf %160, %169 : vector<8x64xf32>
    %171 = arith.mulf %170, %170 : vector<8x64xf32>
    %cst_104 = arith.constant dense<0.000000e+00> : vector<8xf32>
    %172 = vector.multi_reduction <add>, %171, %cst_104 [1] : vector<8x64xf32> to vector<8xf32>
    %173 = vector.shape_cast %172 : vector<8xf32> to vector<8x1xf32>
    %cst_105 = arith.constant 6.400000e+01 : f32
    %174 = vector.broadcast %cst_105 : f32 to vector<8x1xf32>
    %175 = arith.divf %173, %174 : vector<8x1xf32>
    %cst_106 = arith.constant 9.99999974E-6 : f32
    %176 = vector.broadcast %cst_106 : f32 to vector<8x1xf32>
    %177 = arith.addf %175, %176 : vector<8x1xf32>
    %178 = math.rsqrt %177 : vector<8x1xf32>
    %179 = vector.broadcast %178 : vector<8x1xf32> to vector<8x64xf32>
    %180 = arith.mulf %170, %179 : vector<8x64xf32>
    %181 = vector.broadcast %162 : vector<1x64xf32> to vector<8x64xf32>
    %182 = arith.mulf %180, %181 : vector<8x64xf32>
    %183 = vector.broadcast %164 : vector<1x64xf32> to vector<8x64xf32>
    %184 = arith.addf %182, %183 : vector<8x64xf32>
    %c1_107 = arith.constant 1 : index
    %c0_108 = arith.constant 0 : index
    %c0_109 = arith.constant 0 : index
    %185 = vector.load %arg10[%c1_107, %c0_108, %c0_109] : memref<2x256x64xbf16, #tpu.memory_space<vmem>>, vector<1x256x64xbf16>
    %186 = vector.shape_cast %185 : vector<1x256x64xbf16> to vector<256x64xbf16>
    %c1_110 = arith.constant 1 : index
    %c0_111 = arith.constant 0 : index
    %c0_112 = arith.constant 0 : index
    %187 = vector.load %arg11[%c1_110, %c0_111, %c0_112] : memref<2x1x256xf32, #tpu.memory_space<vmem>>, vector<1x1x256xf32>
    %188 = vector.shape_cast %187 : vector<1x1x256xf32> to vector<1x256xf32>
    %189 = arith.truncf %184 : vector<8x64xf32> to vector<8x64xbf16>
    %cst_113 = arith.constant dense<0.000000e+00> : vector<8x256xf32>
    %190 = tpu.matmul %189, %186, %cst_113 {dimension_numbers = #tpu.dot_dimension_numbers<[1], [1], [0], [0], [0, 0, 1, 0], [], []>} : vector<8x64xbf16>, vector<256x64xbf16>, vector<8x256xf32> -> vector<8x256xf32>
    %191 = vector.broadcast %188 : vector<1x256xf32> to vector<8x256xf32>
    %192 = arith.addf %190, %191 : vector<8x256xf32>
    %cst_114 = arith.constant 5.000000e-01 : f32
    %193 = vector.broadcast %cst_114 : f32 to vector<8x256xf32>
    %194 = arith.mulf %193, %192 : vector<8x256xf32>
    %cst_115 = arith.constant 4.471500e-02 : f32
    %195 = vector.broadcast %cst_115 : f32 to vector<8x256xf32>
    %196 = arith.mulf %195, %192 : vector<8x256xf32>
    %197 = arith.mulf %196, %192 : vector<8x256xf32>
    %198 = arith.mulf %197, %192 : vector<8x256xf32>
    %199 = arith.addf %192, %198 : vector<8x256xf32>
    %cst_116 = arith.constant 0.797884583 : f32
    %200 = vector.broadcast %cst_116 : f32 to vector<8x256xf32>
    %201 = arith.mulf %200, %199 : vector<8x256xf32>
    %202 = math.tanh %201 : vector<8x256xf32>
    %cst_117 = arith.constant 1.000000e+00 : f32
    %203 = vector.broadcast %cst_117 : f32 to vector<8x256xf32>
    %204 = arith.addf %203, %202 : vector<8x256xf32>
    %205 = arith.mulf %194, %204 : vector<8x256xf32>
    %c1_118 = arith.constant 1 : index
    %c0_119 = arith.constant 0 : index
    %c0_120 = arith.constant 0 : index
    %206 = vector.load %arg12[%c1_118, %c0_119, %c0_120] : memref<2x64x256xbf16, #tpu.memory_space<vmem>>, vector<1x64x256xbf16>
    %207 = vector.shape_cast %206 : vector<1x64x256xbf16> to vector<64x256xbf16>
    %c1_121 = arith.constant 1 : index
    %c0_122 = arith.constant 0 : index
    %c0_123 = arith.constant 0 : index
    %208 = vector.load %arg13[%c1_121, %c0_122, %c0_123] : memref<2x1x64xf32, #tpu.memory_space<vmem>>, vector<1x1x64xf32>
    %209 = vector.shape_cast %208 : vector<1x1x64xf32> to vector<1x64xf32>
    %210 = arith.truncf %205 : vector<8x256xf32> to vector<8x256xbf16>
    %cst_124 = arith.constant dense<0.000000e+00> : vector<8x64xf32>
    %211 = tpu.matmul %210, %207, %cst_124 {dimension_numbers = #tpu.dot_dimension_numbers<[1], [1], [0], [0], [0, 0, 1, 0], [], []>} : vector<8x256xbf16>, vector<64x256xbf16>, vector<8x64xf32> -> vector<8x64xf32>
    %212 = vector.broadcast %209 : vector<1x64xf32> to vector<8x64xf32>
    %213 = arith.addf %211, %212 : vector<8x64xf32>
    %214 = arith.addf %184, %213 : vector<8x64xf32>
    %c1_125 = arith.constant 1 : index
    %c1_126 = arith.constant 1 : index
    %c0_127 = arith.constant 0 : index
    %c0_128 = arith.constant 0 : index
    %215 = vector.load %arg8[%c1_125, %c1_126, %c0_127, %c0_128] : memref<2x2x1x64xf32, #tpu.memory_space<vmem>>, vector<1x1x1x64xf32>
    %216 = vector.shape_cast %215 : vector<1x1x1x64xf32> to vector<1x64xf32>
    %c1_129 = arith.constant 1 : index
    %c1_130 = arith.constant 1 : index
    %c0_131 = arith.constant 0 : index
    %c0_132 = arith.constant 0 : index
    %217 = vector.load %arg9[%c1_129, %c1_130, %c0_131, %c0_132] : memref<2x2x1x64xf32, #tpu.memory_space<vmem>>, vector<1x1x1x64xf32>
    %218 = vector.shape_cast %217 : vector<1x1x1x64xf32> to vector<1x64xf32>
    %cst_133 = arith.constant dense<0.000000e+00> : vector<8xf32>
    %219 = vector.multi_reduction <add>, %214, %cst_133 [1] : vector<8x64xf32> to vector<8xf32>
    %220 = vector.shape_cast %219 : vector<8xf32> to vector<8x1xf32>
    %cst_134 = arith.constant 6.400000e+01 : f32
    %221 = vector.broadcast %cst_134 : f32 to vector<8x1xf32>
    %222 = arith.divf %220, %221 : vector<8x1xf32>
    %223 = vector.broadcast %222 : vector<8x1xf32> to vector<8x64xf32>
    %224 = arith.subf %214, %223 : vector<8x64xf32>
    %225 = arith.mulf %224, %224 : vector<8x64xf32>
    %cst_135 = arith.constant dense<0.000000e+00> : vector<8xf32>
    %226 = vector.multi_reduction <add>, %225, %cst_135 [1] : vector<8x64xf32> to vector<8xf32>
    %227 = vector.shape_cast %226 : vector<8xf32> to vector<8x1xf32>
    %cst_136 = arith.constant 6.400000e+01 : f32
    %228 = vector.broadcast %cst_136 : f32 to vector<8x1xf32>
    %229 = arith.divf %227, %228 : vector<8x1xf32>
    %cst_137 = arith.constant 9.99999974E-6 : f32
    %230 = vector.broadcast %cst_137 : f32 to vector<8x1xf32>
    %231 = arith.addf %229, %230 : vector<8x1xf32>
    %232 = math.rsqrt %231 : vector<8x1xf32>
    %233 = vector.broadcast %232 : vector<8x1xf32> to vector<8x64xf32>
    %234 = arith.mulf %224, %233 : vector<8x64xf32>
    %235 = vector.broadcast %216 : vector<1x64xf32> to vector<8x64xf32>
    %236 = arith.mulf %234, %235 : vector<8x64xf32>
    %237 = vector.broadcast %218 : vector<1x64xf32> to vector<8x64xf32>
    %238 = arith.addf %236, %237 : vector<8x64xf32>
    %c0_138 = arith.constant 0 : index
    %c0_139 = arith.constant 0 : index
    %239 = vector.load %arg14[%c0_138, %c0_139] : memref<1x64xf32, #tpu.memory_space<vmem>>, vector<1x64xf32>
    %cst_140 = arith.constant dense<0.000000e+00> : vector<1x8xf32>
    %240 = tpu.matmul %239, %238, %cst_140 {dimension_numbers = #tpu.dot_dimension_numbers<[1], [1], [0], [0], [0, 0, 1, 0], [], []>} : vector<1x64xf32>, vector<8x64xf32>, vector<1x8xf32> -> vector<1x8xf32>
    %c0_141 = arith.constant 0 : index
    %c0_142 = arith.constant 0 : index
    %241 = vector.load %arg15[%c0_141, %c0_142] : memref<1x1xf32, #tpu.memory_space<vmem>>, vector<1x1xf32>
    %242 = vector.broadcast %241 : vector<1x1xf32> to vector<1x8xf32>
    %243 = arith.addf %240, %242 : vector<1x8xf32>
    %244 = arith.negf %243 : vector<1x8xf32>
    %245 = math.exp %244 : vector<1x8xf32>
    %cst_143 = arith.constant 1.000000e+00 : f32
    %246 = vector.broadcast %cst_143 : f32 to vector<1x8xf32>
    %247 = arith.addf %246, %245 : vector<1x8xf32>
    %248 = arith.divf %246, %247 : vector<1x8xf32>
    %c0_144 = arith.constant 0 : index
    %c0_145 = arith.constant 0 : index
    %249 = vector.load %arg20[%c0_144, %c0_145] : memref<1x8xf32, #tpu.memory_space<vmem>>, vector<1x8xf32>
    tpu.vector_store %arg20[%c0_144, %c0_145], %248 {strides = array<i32>} : memref<1x8xf32, #tpu.memory_space<vmem>>, vector<1x8xf32>,
    return
  }
  func.func @transform_0(%arg0: i32) -> (i32, i32) {
    %c0_i32 = arith.constant 0 : i32
    %c0_i32_0 = arith.constant 0 : i32
    return %arg0, %c0_i32 : i32, i32
  }
  func.func @transform_1(%arg0: i32) -> (i32, i32) {
    %c0_i32 = arith.constant 0 : i32
    %c0_i32_0 = arith.constant 0 : i32
    %c0_i32_1 = arith.constant 0 : i32
    return %c0_i32, %c0_i32_0 : i32, i32
  }
  func.func @transform_2(%arg0: i32) -> (i32, i32) {
    %c0_i32 = arith.constant 0 : i32
    %c0_i32_0 = arith.constant 0 : i32
    %c0_i32_1 = arith.constant 0 : i32
    return %c0_i32, %c0_i32_0 : i32, i32
  }
  func.func @transform_3(%arg0: i32) -> (i32, i32, i32) {
    %c0_i32 = arith.constant 0 : i32
    %c0_i32_0 = arith.constant 0 : i32
    %c0_i32_1 = arith.constant 0 : i32
    %c0_i32_2 = arith.constant 0 : i32
    return %c0_i32, %c0_i32_0, %c0_i32_1 : i32, i32, i32
  }
  func.func @transform_4(%arg0: i32) -> (i32, i32, i32) {
    %c0_i32 = arith.constant 0 : i32
    %c0_i32_0 = arith.constant 0 : i32
    %c0_i32_1 = arith.constant 0 : i32
    %c0_i32_2 = arith.constant 0 : i32
    return %c0_i32, %c0_i32_0, %c0_i32_1 : i32, i32, i32
  }
  func.func @transform_5(%arg0: i32) -> (i32, i32, i32) {
    %c0_i32 = arith.constant 0 : i32
    %c0_i32_0 = arith.constant 0 : i32
    %c0_i32_1 = arith.constant 0 : i32
    %c0_i32_2 = arith.constant 0 : i32
    return %c0_i32, %c0_i32_0, %c0_i32_1 : i32, i32, i32
  }
  func.func @transform_6(%arg0: i32) -> (i32, i32, i32) {
    %c0_i32 = arith.constant 0 : i32
    %c0_i32_0 = arith.constant 0 : i32
    %c0_i32_1 = arith.constant 0 : i32
    %c0_i32_2 = arith.constant 0 : i32
    return %c0_i32, %c0_i32_0, %c0_i32_1 : i32, i32, i32
  }
  func.func @transform_7(%arg0: i32) -> (i32, i32, i32, i32) {
    %c0_i32 = arith.constant 0 : i32
    %c0_i32_0 = arith.constant 0 : i32
    %c0_i32_1 = arith.constant 0 : i32
    %c0_i32_2 = arith.constant 0 : i32
    %c0_i32_3 = arith.constant 0 : i32
    return %c0_i32, %c0_i32_0, %c0_i32_1, %c0_i32_2 : i32, i32, i32, i32
  }
  func.func @transform_8(%arg0: i32) -> (i32, i32, i32, i32) {
    %c0_i32 = arith.constant 0 : i32
    %c0_i32_0 = arith.constant 0 : i32
    %c0_i32_1 = arith.constant 0 : i32
    %c0_i32_2 = arith.constant 0 : i32
    %c0_i32_3 = arith.constant 0 : i32
    return %c0_i32, %c0_i32_0, %c0_i32_1, %c0_i32_2 : i32, i32, i32, i32
  }
  func.func @transform_9(%arg0: i32) -> (i32, i32, i32) {
    %c0_i32 = arith.constant 0 : i32
    %c0_i32_0 = arith.constant 0 : i32
    %c0_i32_1 = arith.constant 0 : i32
    %c0_i32_2 = arith.constant 0 : i32
    return %c0_i32, %c0_i32_0, %c0_i32_1 : i32, i32, i32
  }
  func.func @transform_10(%arg0: i32) -> (i32, i32, i32) {
    %c0_i32 = arith.constant 0 : i32
    %c0_i32_0 = arith.constant 0 : i32
    %c0_i32_1 = arith.constant 0 : i32
    %c0_i32_2 = arith.constant 0 : i32
    return %c0_i32, %c0_i32_0, %c0_i32_1 : i32, i32, i32
  }
  func.func @transform_11(%arg0: i32) -> (i32, i32, i32) {
    %c0_i32 = arith.constant 0 : i32
    %c0_i32_0 = arith.constant 0 : i32
    %c0_i32_1 = arith.constant 0 : i32
    %c0_i32_2 = arith.constant 0 : i32
    return %c0_i32, %c0_i32_0, %c0_i32_1 : i32, i32, i32
  }
  func.func @transform_12(%arg0: i32) -> (i32, i32, i32) {
    %c0_i32 = arith.constant 0 : i32
    %c0_i32_0 = arith.constant 0 : i32
    %c0_i32_1 = arith.constant 0 : i32
    %c0_i32_2 = arith.constant 0 : i32
    return %c0_i32, %c0_i32_0, %c0_i32_1 : i32, i32, i32
  }
  func.func @transform_13(%arg0: i32) -> (i32, i32) {
    %c0_i32 = arith.constant 0 : i32
    %c0_i32_0 = arith.constant 0 : i32
    %c0_i32_1 = arith.constant 0 : i32
    return %c0_i32, %c0_i32_0 : i32, i32
  }
  func.func @transform_14(%arg0: i32) -> (i32, i32) {
    %c0_i32 = arith.constant 0 : i32
    %c0_i32_0 = arith.constant 0 : i32
    %c0_i32_1 = arith.constant 0 : i32
    return %c0_i32, %c0_i32_0 : i32, i32
  }
  func.func @transform_15(%arg0: i32) -> (i32, i32) {
    %c0_i32 = arith.constant 0 : i32
    %c0_i32_0 = arith.constant 0 : i32
    %c0_i32_1 = arith.constant 0 : i32
    return %c0_i32, %c0_i32_0 : i32, i32
  }
  func.func @transform_16(%arg0: i32) -> (i32, i32) {
    %c0_i32 = arith.constant 0 : i32
    %c0_i32_0 = arith.constant 0 : i32
    %c0_i32_1 = arith.constant 0 : i32
    return %c0_i32, %c0_i32_0 : i32, i32
  }
  func.func @transform_17(%arg0: i32) -> (i32, i32) {
    %c0_i32 = arith.constant 0 : i32
    %c0_i32_0 = arith.constant 0 : i32
    %c0_i32_1 = arith.constant 0 : i32
    return %c0_i32, %c0_i32_0 : i32, i32
  }
  func.func @transform_18(%arg0: i32) -> (i32, i32) {
    %c0_i32 = arith.constant 0 : i32
    %c0_i32_0 = arith.constant 0 : i32
    %c0_i32_1 = arith.constant 0 : i32
    return %c0_i32, %c0_i32_0 : i32, i32
  }
  func.func @transform_19(%arg0: i32) -> (i32, i32) {
    %c0_i32 = arith.constant 0 : i32
    %c0_i32_0 = arith.constant 0 : i32
    return %c0_i32, %arg0 : i32, i32
  }
}

</mosaic_0001>

<llo_original>
// kernel: disentangled_transformer.3
$region0: #{disentangled_transformer.3}
  #allocation0 [shape = 'u32[]', space=smem, size = 0x4, offset = 0x4, fixed_abs, tag = 'smem constant byte address 0x4 - core index']
  #allocation1 [shape = 'u32[72,128]{1,0:T(1,128)}', space=vmem, size = 0x9000, scoped, tag = 'internal scratch']
  %s0 = inlined_call_operand.vmem [shape: bf16[64,16], index: 0, kind: input, shape index: {}]
  %s1 = inlined_call_operand.vmem [shape: bf16[2,4,64,64], index: 1, kind: input, shape index: {}]
  %s2 = inlined_call_operand.vmem [shape: bf16[2,256,64], index: 2, kind: input, shape index: {}]
  %s3 = inlined_call_operand.vmem [shape: bf16[2,64,256], index: 3, kind: input, shape index: {}]
  %s4 = inlined_call_operand.hbm [shape: f32[1,1], index: 4, kind: output, shape index: {}]
  %s5 = sld [smem:[#allocation0]]
  $region26: #{disentangled_transformer.3} parent=0
    _
  %s7 = ssub.s32 1, %s5
  %s8 = scalar_select 0, %s7, %s5
  $region1: #{disentangled_transformer.3} parent=0
    #allocation2 [shape = 'u8[512]{0}', space=vmem, size = 0x400, scoped, tag = 'output window, operand 0, single buffered']
    #allocation3 [shape = 's32[1]{0}', space=sflag, size = 0x4, scoped, tag = 'scoped memory for disentangled_transformer.3']
    %9 = vsyncpa [#allocation3], 0
    // Predicated region
    $region2: #{disentangled_transformer.3} parent=1 // pred_check
      _
    $region3: #{disentangled_transformer.3} parent=1 // pred_check_branch
      %11 = sbr.rel (0) target = $region5
    $region4: #{disentangled_transformer.3} parent=1 // pred_region
      _
    $region5: #{disentangled_transformer.3} parent=1 // pred_fallthru
      _
    // Predicated region
    $region6: #{disentangled_transformer.3} parent=1 // pred_check
      _
    $region7: #{disentangled_transformer.3} parent=1 // pred_check_branch
      %13 = sbr.rel (0) target = $region9
    $region8: #{disentangled_transformer.3} parent=1 // pred_region
      _
    $region9: #{disentangled_transformer.3} parent=1 // pred_fallthru
      _
    // Predicated region
    $region10: #{disentangled_transformer.3} parent=1 // pred_check
      _
    $region11: #{disentangled_transformer.3} parent=1 // pred_check_branch
      %15 = sbr.rel (0) target = $region13
    $region12: #{disentangled_transformer.3} parent=1 // pred_region
      _
    $region13: #{disentangled_transformer.3} parent=1 // pred_fallthru
      _
    // Predicated region
    $region14: #{disentangled_transformer.3} parent=1 // pred_check
      _
    $region15: #{disentangled_transformer.3} parent=1 // pred_check_branch
      %17 = sbr.rel (0) target = $region17
    $region16: #{disentangled_transformer.3} parent=1 // pred_region
      _
    $region17: #{disentangled_transformer.3} parent=1 // pred_fallthru
      _
    %v19 = vld [vmem:[%s0] sm:$0xf]
    %v20 = vld [vmem:[%s0 + $0x4] sm:$0xf]
    %v21 = vld [vmem:[%s0 + $0x8] sm:$0xf]
    %v22 = vld [vmem:[%s0 + $0xc] sm:$0xf]
    %v23 = vld [vmem:[%s0 + $0x10] sm:$0xf]
    %v24 = vld [vmem:[%s0 + $0x14] sm:$0xf]
    %v25 = vld [vmem:[%s0 + $0x18] sm:$0xf]
    %v26 = vld [vmem:[%s0 + $0x1c] sm:$0xf]
    %v35 = vunpack.c.l.b16 %v19
    %v36 = vunpack.c.l.b16 %v20
    %v37 = vunpack.c.l.b16 %v21
    %v38 = vunpack.c.l.b16 %v22
    %v39 = vunpack.c.l.b16 %v23
    %v40 = vunpack.c.l.b16 %v24
    %v41 = vunpack.c.l.b16 %v25
    %v42 = vunpack.c.l.b16 %v26
    %v43 = vpack.c.b16 %v36, %v35
    %v44 = vpack.c.b16 %v38, %v37
    %v45 = vpack.c.b16 %v40, %v39
    %v46 = vpack.c.b16 %v42, %v41
    %vm47 = vcmask 130048
    %v49 = vsel %vm47, %v43, 0
    %v52 = vsel %vm47, %v44, 0
    %v55 = vsel %vm47, %v45, 0
    %v58 = vsel %vm47, %v46, 0
    %60 = vmatpush.bf16.xpose.msra.mxu0 0
    %61 = vmatpush.bf16.xpose.msra.mxu0 0
    %62 = vmatpush.bf16.xpose.msra.mxu0 0
    %63 = vmatpush.bf16.xpose.msra.mxu0 0
    %64 = vmatpush.bf16.xpose.msra.mxu0 %v58
    %65 = vmatpush.bf16.xpose.msra.mxu0 %v55
    %66 = vmatpush.bf16.xpose.msra.mxu0 %v52
    %67 = vmatpush.bf16.xpose.msra.mxu0 %v49
    %68 = vmatmul.bf16.gmra.mxu0 %v49
    %v69 = vpop.f32.mrf.mxu0
    %v70 = vadd.f32 0.0, %v69
    %v71 = vpop.f32.mrf.mxu0
    %v72 = vadd.f32 0.0, %v71
    %73 = vmatmul.bf16.gmra.mxu0 %v52
    %v74 = vpop.f32.mrf.mxu0
    %v75 = vadd.f32 0.0, %v74
    %v76 = vpop.f32.mrf.mxu0
    %v77 = vadd.f32 0.0, %v76
    %78 = vmatmul.bf16.gmra.mxu0 %v55
    %v79 = vpop.f32.mrf.mxu0
    %v80 = vadd.f32 0.0, %v79
    %v81 = vpop.f32.mrf.mxu0
    %v82 = vadd.f32 0.0, %v81
    %83 = vmatmul.bf16.gmra.mxu0 %v58
    %v84 = vpop.f32.mrf.mxu0
    %v85 = vadd.f32 0.0, %v84
    %v86 = vpop.f32.mrf.mxu0
    %v87 = vadd.f32 0.0, %v86
    %88 = vdwg.mxu0
    %v89 = vmul.f32 %v70, %v70
    %v90 = vmul.f32 %v72, %v72
    %v91 = vmul.f32 %v75, %v75
    %v92 = vmul.f32 %v77, %v77
    %v93 = vmul.f32 %v80, %v80
    %v94 = vmul.f32 %v82, %v82
    %v95 = vmul.f32 %v85, %v85
    %v96 = vmul.f32 %v87, %v87
    %vm97 = vcmask 523264
    %v98 = vsel %vm97, %v89, 0.0
    %99 = vadd.xlane.f32.xlu0 %v98
    %v100 = vpop.xlane.xlu0 %99
    %v101 = vsel %vm97, %v90, 0.0
    %102 = vadd.xlane.f32.xlu0 %v101
    %v103 = vpop.xlane.xlu0 %102
    %v104 = vsel %vm97, %v91, 0.0
    %105 = vadd.xlane.f32.xlu0 %v104
    %v106 = vpop.xlane.xlu0 %105
    %v107 = vsel %vm97, %v92, 0.0
    %108 = vadd.xlane.f32.xlu0 %v107
    %v109 = vpop.xlane.xlu0 %108
    %v110 = vsel %vm97, %v93, 0.0
    %111 = vadd.xlane.f32.xlu0 %v110
    %v112 = vpop.xlane.xlu0 %111
    %v113 = vsel %vm97, %v94, 0.0
    %114 = vadd.xlane.f32.xlu0 %v113
    %v115 = vpop.xlane.xlu0 %114
    %v116 = vsel %vm97, %v95, 0.0
    %117 = vadd.xlane.f32.xlu0 %v116
    %v118 = vpop.xlane.xlu0 %117
    %v119 = vsel %vm97, %v96, 0.0
    %120 = vadd.xlane.f32.xlu0 %v119
    %v121 = vpop.xlane.xlu0 %120
    %v122 = vadd.f32 %v100, %v103
    %v123 = vadd.f32 %v122, %v106
    %v124 = vadd.f32 %v123, %v109
    %v125 = vadd.f32 %v124, %v112
    %v126 = vadd.f32 %v125, %v115
    %v127 = vadd.f32 %v126, %v118
    %v128 = vadd.f32 %v127, %v121
    %v129 = vrot.slane %v128, 4
    %v130 = vadd.f32 %v128, %v129
    %v131 = vrot.slane %v130, 2
    %v132 = vadd.f32 %v130, %v131
    %v133 = vrot.slane %v132, 1
    %v134 = vadd.f32 %v132, %v133
    %v135 = vunpack.c.l.bf16 %v19
    %v136 = vunpack.c.l.bf16 %v20
    %v137 = vunpack.c.l.bf16 %v21
    %v138 = vunpack.c.l.bf16 %v22
    %v139 = vunpack.c.l.bf16 %v23
    %v140 = vunpack.c.l.bf16 %v24
    %v141 = vunpack.c.l.bf16 %v25
    %v142 = vunpack.c.l.bf16 %v26
    %v143 = vmul.f32 %v135, %v135
    %v144 = vmul.f32 %v136, %v136
    %v145 = vmul.f32 %v137, %v137
    %v146 = vmul.f32 %v138, %v138
    %v147 = vmul.f32 %v139, %v139
    %v148 = vmul.f32 %v140, %v140
    %v149 = vmul.f32 %v141, %v141
    %v150 = vmul.f32 %v142, %v142
    %v151 = vsel %vm47, %v143, 0.0
    %152 = vadd.xlane.f32.xlu0 %v151
    %v153 = vpop.xlane.xlu0 %152
    %v154 = vsel %vm47, %v144, 0.0
    %155 = vadd.xlane.f32.xlu0 %v154
    %v156 = vpop.xlane.xlu0 %155
    %v157 = vsel %vm47, %v145, 0.0
    %158 = vadd.xlane.f32.xlu0 %v157
    %v159 = vpop.xlane.xlu0 %158
    %v160 = vsel %vm47, %v146, 0.0
    %161 = vadd.xlane.f32.xlu0 %v160
    %v162 = vpop.xlane.xlu0 %161
    %v163 = vsel %vm47, %v147, 0.0
    %164 = vadd.xlane.f32.xlu0 %v163
    %v165 = vpop.xlane.xlu0 %164
    %v166 = vsel %vm47, %v148, 0.0
    %167 = vadd.xlane.f32.xlu0 %v166
    %v168 = vpop.xlane.xlu0 %167
    %v169 = vsel %vm47, %v149, 0.0
    %170 = vadd.xlane.f32.xlu0 %v169
    %v171 = vpop.xlane.xlu0 %170
    %v172 = vsel %vm47, %v150, 0.0
    %173 = vadd.xlane.f32.xlu0 %v172
    %v174 = vpop.xlane.xlu0 %173
    %v175 = vadd.f32 %v153, %v156
    %v176 = vadd.f32 %v175, %v159
    %v177 = vadd.f32 %v176, %v162
    %v178 = vadd.f32 %v177, %v165
    %v179 = vadd.f32 %v178, %v168
    %v180 = vadd.f32 %v179, %v171
    %v181 = vadd.f32 %v180, %v174
    %v182 = vrot.slane %v181, 4
    %v183 = vadd.f32 %v181, %v182
    %v184 = vrot.slane %v183, 2
    %v185 = vadd.f32 %v183, %v184
    %v186 = vrot.slane %v185, 1
    %v187 = vadd.f32 %v185, %v186
    %v188 = vmul.f32 %v187, 2.0
    %v189 = vsub.f32 %v134, %v188
    %v190 = vadd.f32 %v189, 64.0
    %v191 = vmul.f32 %v190, 0.00024414063
    %v192 = vld [vmem:[%s1] sm:$0xf]
    %v193 = vld [vmem:[%s1 + $0x4] sm:$0xf]
    %v194 = vld [vmem:[%s1 + $0x8] sm:$0xf]
    %v195 = vld [vmem:[%s1 + $0xc] sm:$0xf]
    %v196 = vld [vmem:[%s1 + $0x10] sm:$0xf]
    %v197 = vld [vmem:[%s1 + $0x14] sm:$0xf]
    %v198 = vld [vmem:[%s1 + $0x18] sm:$0xf]
    %v199 = vld [vmem:[%s1 + $0x1c] sm:$0xf]
    %v208 = vunpack.c.l.b16 %v192
    %v209 = vunpack.c.l.b16 %v193
    %v210 = vunpack.c.l.b16 %v194
    %v211 = vunpack.c.l.b16 %v195
    %v212 = vunpack.c.l.b16 %v196
    %v213 = vunpack.c.l.b16 %v197
    %v214 = vunpack.c.l.b16 %v198
    %v215 = vunpack.c.l.b16 %v199
    %v216 = vpack.c.b16 %v209, %v208
    %v217 = vpack.c.b16 %v211, %v210
    %v218 = vpack.c.b16 %v213, %v212
    %v219 = vpack.c.b16 %v215, %v214
    %v221 = vsel %vm97, %v216, 0
    %v224 = vsel %vm97, %v217, 0
    %v227 = vsel %vm97, %v218, 0
    %v230 = vsel %vm97, %v219, 0
    %232 = vmatpush.bf16.xpose.msra.mxu0 0
    %233 = vmatpush.bf16.xpose.msra.mxu0 0
    %234 = vmatpush.bf16.xpose.msra.mxu0 0
    %235 = vmatpush.bf16.xpose.msra.mxu0 0
    %236 = vmatpush.bf16.xpose.msra.mxu0 %v230
    %237 = vmatpush.bf16.xpose.msra.mxu0 %v227
    %238 = vmatpush.bf16.xpose.msra.mxu0 %v224
    %239 = vmatpush.bf16.xpose.msra.mxu0 %v221
    %240 = vmatmul.bf16.gmra.mxu0 %v221
    %v241 = vpop.f32.mrf.mxu0
    %v242 = vadd.f32 0.0, %v241
    %v243 = vpop.f32.mrf.mxu0
    %v244 = vadd.f32 0.0, %v243
    %245 = vmatmul.bf16.gmra.mxu0 %v224
    %v246 = vpop.f32.mrf.mxu0
    %v247 = vadd.f32 0.0, %v246
    %v248 = vpop.f32.mrf.mxu0
    %v249 = vadd.f32 0.0, %v248
    %250 = vmatmul.bf16.gmra.mxu0 %v227
    %v251 = vpop.f32.mrf.mxu0
    %v252 = vadd.f32 0.0, %v251
    %v253 = vpop.f32.mrf.mxu0
    %v254 = vadd.f32 0.0, %v253
    %255 = vmatmul.bf16.gmra.mxu0 %v230
    %v256 = vpop.f32.mrf.mxu0
    %v257 = vadd.f32 0.0, %v256
    %v258 = vpop.f32.mrf.mxu0
    %v259 = vadd.f32 0.0, %v258
    %260 = vdwg.mxu0
    %v261 = vmul.f32 %v242, %v242
    %v262 = vmul.f32 %v244, %v244
    %v263 = vmul.f32 %v247, %v247
    %v264 = vmul.f32 %v249, %v249
    %v265 = vmul.f32 %v252, %v252
    %v266 = vmul.f32 %v254, %v254
    %v267 = vmul.f32 %v257, %v257
    %v268 = vmul.f32 %v259, %v259
    %v269 = vsel %vm97, %v261, 0.0
    %270 = vadd.xlane.f32.xlu0 %v269
    %v271 = vpop.xlane.xlu0 %270
    %v272 = vsel %vm97, %v262, 0.0
    %273 = vadd.xlane.f32.xlu0 %v272
    %v274 = vpop.xlane.xlu0 %273
    %v275 = vsel %vm97, %v263, 0.0
    %276 = vadd.xlane.f32.xlu0 %v275
    %v277 = vpop.xlane.xlu0 %276
    %v278 = vsel %vm97, %v264, 0.0
    %279 = vadd.xlane.f32.xlu0 %v278
    %v280 = vpop.xlane.xlu0 %279
    %v281 = vsel %vm97, %v265, 0.0
    %282 = vadd.xlane.f32.xlu0 %v281
    %v283 = vpop.xlane.xlu0 %282
    %v284 = vsel %vm97, %v266, 0.0
    %285 = vadd.xlane.f32.xlu0 %v284
    %v286 = vpop.xlane.xlu0 %285
    %v287 = vsel %vm97, %v267, 0.0
    %288 = vadd.xlane.f32.xlu0 %v287
    %v289 = vpop.xlane.xlu0 %288
    %v290 = vsel %vm97, %v268, 0.0
    %291 = vadd.xlane.f32.xlu0 %v290
    %v292 = vpop.xlane.xlu0 %291
    %v293 = vadd.f32 %v271, %v274
    %v294 = vadd.f32 %v293, %v277
    %v295 = vadd.f32 %v294, %v280
    %v296 = vadd.f32 %v295, %v283
    %v297 = vadd.f32 %v296, %v286
    %v298 = vadd.f32 %v297, %v289
    %v299 = vadd.f32 %v298, %v292
    %v300 = vrot.slane %v299, 4
    %v301 = vadd.f32 %v299, %v300
    %v302 = vrot.slane %v301, 2
    %v303 = vadd.f32 %v301, %v302
    %v304 = vrot.slane %v303, 1
    %v305 = vadd.f32 %v303, %v304
    %v306 = vunpack.c.l.bf16 %v192
    %v307 = vunpack.c.l.bf16 %v193
    %v308 = vunpack.c.l.bf16 %v194
    %v309 = vunpack.c.l.bf16 %v195
    %v310 = vunpack.c.l.bf16 %v196
    %v311 = vunpack.c.l.bf16 %v197
    %v312 = vunpack.c.l.bf16 %v198
    %v313 = vunpack.c.l.bf16 %v199
    %v314 = vmul.f32 %v306, %v306
    %v315 = vmul.f32 %v307, %v307
    %v316 = vmul.f32 %v308, %v308
    %v317 = vmul.f32 %v309, %v309
    %v318 = vmul.f32 %v310, %v310
    %v319 = vmul.f32 %v311, %v311
    %v320 = vmul.f32 %v312, %v312
    %v321 = vmul.f32 %v313, %v313
    %v322 = vsel %vm97, %v314, 0.0
    %323 = vadd.xlane.f32.xlu0 %v322
    %v324 = vpop.xlane.xlu0 %323
    %v325 = vsel %vm97, %v315, 0.0
    %326 = vadd.xlane.f32.xlu0 %v325
    %v327 = vpop.xlane.xlu0 %326
    %v328 = vsel %vm97, %v316, 0.0
    %329 = vadd.xlane.f32.xlu0 %v328
    %v330 = vpop.xlane.xlu0 %329
    %v331 = vsel %vm97, %v317, 0.0
    %332 = vadd.xlane.f32.xlu0 %v331
    %v333 = vpop.xlane.xlu0 %332
    %v334 = vsel %vm97, %v318, 0.0
    %335 = vadd.xlane.f32.xlu0 %v334
    %v336 = vpop.xlane.xlu0 %335
    %v337 = vsel %vm97, %v319, 0.0
    %338 = vadd.xlane.f32.xlu0 %v337
    %v339 = vpop.xlane.xlu0 %338
    %v340 = vsel %vm97, %v320, 0.0
    %341 = vadd.xlane.f32.xlu0 %v340
    %v342 = vpop.xlane.xlu0 %341
    %v343 = vsel %vm97, %v321, 0.0
    %344 = vadd.xlane.f32.xlu0 %v343
    %v345 = vpop.xlane.xlu0 %344
    %v346 = vadd.f32 %v324, %v327
    %v347 = vadd.f32 %v346, %v330
    %v348 = vadd.f32 %v347, %v333
    %v349 = vadd.f32 %v348, %v336
    %v350 = vadd.f32 %v349, %v339
    %v351 = vadd.f32 %v350, %v342
    %v352 = vadd.f32 %v351, %v345
    %v353 = vrot.slane %v352, 4
    %v354 = vadd.f32 %v352, %v353
    %v355 = vrot.slane %v354, 2
    %v356 = vadd.f32 %v354, %v355
    %v357 = vrot.slane %v356, 1
    %v358 = vadd.f32 %v356, %v357
    %v359 = vmul.f32 %v358, 2.0
    %v360 = vsub.f32 %v305, %v359
    %v361 = vadd.f32 %v360, 64.0
    %v362 = vmul.f32 %v361, 0.00024414063
    %v363 = vadd.f32 %v191, %v362
    %s364 = scalar_lea.vmem %s1, 32
    %v365 = vld [vmem:[%s364] sm:$0xf]
    %v366 = vld [vmem:[%s364 + $0x4] sm:$0xf]
    %v367 = vld [vmem:[%s364 + $0x8] sm:$0xf]
    %v368 = vld [vmem:[%s364 + $0xc] sm:$0xf]
    %v369 = vld [vmem:[%s364 + $0x10] sm:$0xf]
    %v370 = vld [vmem:[%s364 + $0x14] sm:$0xf]
    %v371 = vld [vmem:[%s364 + $0x18] sm:$0xf]
    %v372 = vld [vmem:[%s364 + $0x1c] sm:$0xf]
    %v381 = vunpack.c.l.b16 %v365
    %v382 = vunpack.c.l.b16 %v366
    %v383 = vunpack.c.l.b16 %v367
    %v384 = vunpack.c.l.b16 %v368
    %v385 = vunpack.c.l.b16 %v369
    %v386 = vunpack.c.l.b16 %v370
    %v387 = vunpack.c.l.b16 %v371
    %v388 = vunpack.c.l.b16 %v372
    %v389 = vpack.c.b16 %v382, %v381
    %v390 = vpack.c.b16 %v384, %v383
    %v391 = vpack.c.b16 %v386, %v385
    %v392 = vpack.c.b16 %v388, %v387
    %v394 = vsel %vm97, %v389, 0
    %v397 = vsel %vm97, %v390, 0
    %v400 = vsel %vm97, %v391, 0
    %v403 = vsel %vm97, %v392, 0
    %405 = vmatpush.bf16.xpose.msra.mxu0 0
    %406 = vmatpush.bf16.xpose.msra.mxu0 0
    %407 = vmatpush.bf16.xpose.msra.mxu0 0
    %408 = vmatpush.bf16.xpose.msra.mxu0 0
    %409 = vmatpush.bf16.xpose.msra.mxu0 %v403
    %410 = vmatpush.bf16.xpose.msra.mxu0 %v400
    %411 = vmatpush.bf16.xpose.msra.mxu0 %v397
    %412 = vmatpush.bf16.xpose.msra.mxu0 %v394
    %413 = vmatmul.bf16.gmra.mxu0 %v394
    %v414 = vpop.f32.mrf.mxu0
    %v415 = vadd.f32 0.0, %v414
    %v416 = vpop.f32.mrf.mxu0
    %v417 = vadd.f32 0.0, %v416
    %418 = vmatmul.bf16.gmra.mxu0 %v397
    %v419 = vpop.f32.mrf.mxu0
    %v420 = vadd.f32 0.0, %v419
    %v421 = vpop.f32.mrf.mxu0
    %v422 = vadd.f32 0.0, %v421
    %423 = vmatmul.bf16.gmra.mxu0 %v400
    %v424 = vpop.f32.mrf.mxu0
    %v425 = vadd.f32 0.0, %v424
    %v426 = vpop.f32.mrf.mxu0
    %v427 = vadd.f32 0.0, %v426
    %428 = vmatmul.bf16.gmra.mxu0 %v403
    %v429 = vpop.f32.mrf.mxu0
    %v430 = vadd.f32 0.0, %v429
    %v431 = vpop.f32.mrf.mxu0
    %v432 = vadd.f32 0.0, %v431
    %433 = vdwg.mxu0
    %v434 = vmul.f32 %v415, %v415
    %v435 = vmul.f32 %v417, %v417
    %v436 = vmul.f32 %v420, %v420
    %v437 = vmul.f32 %v422, %v422
    %v438 = vmul.f32 %v425, %v425
    %v439 = vmul.f32 %v427, %v427
    %v440 = vmul.f32 %v430, %v430
    %v441 = vmul.f32 %v432, %v432
    %v442 = vsel %vm97, %v434, 0.0
    %443 = vadd.xlane.f32.xlu0 %v442
    %v444 = vpop.xlane.xlu0 %443
    %v445 = vsel %vm97, %v435, 0.0
    %446 = vadd.xlane.f32.xlu0 %v445
    %v447 = vpop.xlane.xlu0 %446
    %v448 = vsel %vm97, %v436, 0.0
    %449 = vadd.xlane.f32.xlu0 %v448
    %v450 = vpop.xlane.xlu0 %449
    %v451 = vsel %vm97, %v437, 0.0
    %452 = vadd.xlane.f32.xlu0 %v451
    %v453 = vpop.xlane.xlu0 %452
    %v454 = vsel %vm97, %v438, 0.0
    %455 = vadd.xlane.f32.xlu0 %v454
    %v456 = vpop.xlane.xlu0 %455
    %v457 = vsel %vm97, %v439, 0.0
    %458 = vadd.xlane.f32.xlu0 %v457
    %v459 = vpop.xlane.xlu0 %458
    %v460 = vsel %vm97, %v440, 0.0
    %461 = vadd.xlane.f32.xlu0 %v460
    %v462 = vpop.xlane.xlu0 %461
    %v463 = vsel %vm97, %v441, 0.0
    %464 = vadd.xlane.f32.xlu0 %v463
    %v465 = vpop.xlane.xlu0 %464
    %v466 = vadd.f32 %v444, %v447
    %v467 = vadd.f32 %v466, %v450
    %v468 = vadd.f32 %v467, %v453
    %v469 = vadd.f32 %v468, %v456
    %v470 = vadd.f32 %v469, %v459
    %v471 = vadd.f32 %v470, %v462
    %v472 = vadd.f32 %v471, %v465
    %v473 = vrot.slane %v472, 4
    %v474 = vadd.f32 %v472, %v473
    %v475 = vrot.slane %v474, 2
    %v476 = vadd.f32 %v474, %v475
    %v477 = vrot.slane %v476, 1
    %v478 = vadd.f32 %v476, %v477
    %v479 = vunpack.c.l.bf16 %v365
    %v480 = vunpack.c.l.bf16 %v366
    %v481 = vunpack.c.l.bf16 %v367
    %v482 = vunpack.c.l.bf16 %v368
    %v483 = vunpack.c.l.bf16 %v369
    %v484 = vunpack.c.l.bf16 %v370
    %v485 = vunpack.c.l.bf16 %v371
    %v486 = vunpack.c.l.bf16 %v372
    %v487 = vmul.f32 %v479, %v479
    %v488 = vmul.f32 %v480, %v480
    %v489 = vmul.f32 %v481, %v481
    %v490 = vmul.f32 %v482, %v482
    %v491 = vmul.f32 %v483, %v483
    %v492 = vmul.f32 %v484, %v484
    %v493 = vmul.f32 %v485, %v485
    %v494 = vmul.f32 %v486, %v486
    %v495 = vsel %vm97, %v487, 0.0
    %496 = vadd.xlane.f32.xlu0 %v495
    %v497 = vpop.xlane.xlu0 %496
    %v498 = vsel %vm97, %v488, 0.0
    %499 = vadd.xlane.f32.xlu0 %v498
    %v500 = vpop.xlane.xlu0 %499
    %v501 = vsel %vm97, %v489, 0.0
    %502 = vadd.xlane.f32.xlu0 %v501
    %v503 = vpop.xlane.xlu0 %502
    %v504 = vsel %vm97, %v490, 0.0
    %505 = vadd.xlane.f32.xlu0 %v504
    %v506 = vpop.xlane.xlu0 %505
    %v507 = vsel %vm97, %v491, 0.0
    %508 = vadd.xlane.f32.xlu0 %v507
    %v509 = vpop.xlane.xlu0 %508
    %v510 = vsel %vm97, %v492, 0.0
    %511 = vadd.xlane.f32.xlu0 %v510
    %v512 = vpop.xlane.xlu0 %511
    %v513 = vsel %vm97, %v493, 0.0
    %514 = vadd.xlane.f32.xlu0 %v513
    %v515 = vpop.xlane.xlu0 %514
    %v516 = vsel %vm97, %v494, 0.0
    %517 = vadd.xlane.f32.xlu0 %v516
    %v518 = vpop.xlane.xlu0 %517
    %v519 = vadd.f32 %v497, %v500
    %v520 = vadd.f32 %v519, %v503
    %v521 = vadd.f32 %v520, %v506
    %v522 = vadd.f32 %v521, %v509
    %v523 = vadd.f32 %v522, %v512
    %v524 = vadd.f32 %v523, %v515
    %v525 = vadd.f32 %v524, %v518
    %v526 = vrot.slane %v525, 4
    %v527 = vadd.f32 %v525, %v526
    %v528 = vrot.slane %v527, 2
    %v529 = vadd.f32 %v527, %v528
    %v530 = vrot.slane %v529, 1
    %v531 = vadd.f32 %v529, %v530
    %v532 = vmul.f32 %v531, 2.0
    %v533 = vsub.f32 %v478, %v532
    %v534 = vadd.f32 %v533, 64.0
    %v535 = vmul.f32 %v534, 0.00024414063
    %v536 = vadd.f32 %v363, %v535
    %s537 = scalar_lea.vmem %s1, 64
    %v538 = vld [vmem:[%s537] sm:$0xf]
    %v539 = vld [vmem:[%s537 + $0x4] sm:$0xf]
    %v540 = vld [vmem:[%s537 + $0x8] sm:$0xf]
    %v541 = vld [vmem:[%s537 + $0xc] sm:$0xf]
    %v542 = vld [vmem:[%s537 + $0x10] sm:$0xf]
    %v543 = vld [vmem:[%s537 + $0x14] sm:$0xf]
    %v544 = vld [vmem:[%s537 + $0x18] sm:$0xf]
    %v545 = vld [vmem:[%s537 + $0x1c] sm:$0xf]
    %v554 = vunpack.c.l.b16 %v538
    %v555 = vunpack.c.l.b16 %v539
    %v556 = vunpack.c.l.b16 %v540
    %v557 = vunpack.c.l.b16 %v541
    %v558 = vunpack.c.l.b16 %v542
    %v559 = vunpack.c.l.b16 %v543
    %v560 = vunpack.c.l.b16 %v544
    %v561 = vunpack.c.l.b16 %v545
    %v562 = vpack.c.b16 %v555, %v554
    %v563 = vpack.c.b16 %v557, %v556
    %v564 = vpack.c.b16 %v559, %v558
    %v565 = vpack.c.b16 %v561, %v560
    %v567 = vsel %vm97, %v562, 0
    %v570 = vsel %vm97, %v563, 0
    %v573 = vsel %vm97, %v564, 0
    %v576 = vsel %vm97, %v565, 0
    %578 = vmatpush.bf16.xpose.msra.mxu0 0
    %579 = vmatpush.bf16.xpose.msra.mxu0 0
    %580 = vmatpush.bf16.xpose.msra.mxu0 0
    %581 = vmatpush.bf16.xpose.msra.mxu0 0
    %582 = vmatpush.bf16.xpose.msra.mxu0 %v576
    %583 = vmatpush.bf16.xpose.msra.mxu0 %v573
    %584 = vmatpush.bf16.xpose.msra.mxu0 %v570
    %585 = vmatpush.bf16.xpose.msra.mxu0 %v567
    %586 = vmatmul.bf16.gmra.mxu0 %v567
    %v587 = vpop.f32.mrf.mxu0
    %v588 = vadd.f32 0.0, %v587
    %v589 = vpop.f32.mrf.mxu0
    %v590 = vadd.f32 0.0, %v589
    %591 = vmatmul.bf16.gmra.mxu0 %v570
    %v592 = vpop.f32.mrf.mxu0
    %v593 = vadd.f32 0.0, %v592
    %v594 = vpop.f32.mrf.mxu0
    %v595 = vadd.f32 0.0, %v594
    %596 = vmatmul.bf16.gmra.mxu0 %v573
    %v597 = vpop.f32.mrf.mxu0
    %v598 = vadd.f32 0.0, %v597
    %v599 = vpop.f32.mrf.mxu0
    %v600 = vadd.f32 0.0, %v599
    %601 = vmatmul.bf16.gmra.mxu0 %v576
    %v602 = vpop.f32.mrf.mxu0
    %v603 = vadd.f32 0.0, %v602
    %v604 = vpop.f32.mrf.mxu0
    %v605 = vadd.f32 0.0, %v604
    %606 = vdwg.mxu0
    %v607 = vmul.f32 %v588, %v588
    %v608 = vmul.f32 %v590, %v590
    %v609 = vmul.f32 %v593, %v593
    %v610 = vmul.f32 %v595, %v595
    %v611 = vmul.f32 %v598, %v598
    %v612 = vmul.f32 %v600, %v600
    %v613 = vmul.f32 %v603, %v603
    %v614 = vmul.f32 %v605, %v605
    %v615 = vsel %vm97, %v607, 0.0
    %616 = vadd.xlane.f32.xlu0 %v615
    %v617 = vpop.xlane.xlu0 %616
    %v618 = vsel %vm97, %v608, 0.0
    %619 = vadd.xlane.f32.xlu0 %v618
    %v620 = vpop.xlane.xlu0 %619
    %v621 = vsel %vm97, %v609, 0.0
    %622 = vadd.xlane.f32.xlu0 %v621
    %v623 = vpop.xlane.xlu0 %622
    %v624 = vsel %vm97, %v610, 0.0
    %625 = vadd.xlane.f32.xlu0 %v624
    %v626 = vpop.xlane.xlu0 %625
    %v627 = vsel %vm97, %v611, 0.0
    %628 = vadd.xlane.f32.xlu0 %v627
    %v629 = vpop.xlane.xlu0 %628
    %v630 = vsel %vm97, %v612, 0.0
    %631 = vadd.xlane.f32.xlu0 %v630
    %v632 = vpop.xlane.xlu0 %631
    %v633 = vsel %vm97, %v613, 0.0
    %634 = vadd.xlane.f32.xlu0 %v633
    %v635 = vpop.xlane.xlu0 %634
    %v636 = vsel %vm97, %v614, 0.0
    %637 = vadd.xlane.f32.xlu0 %v636
    %v638 = vpop.xlane.xlu0 %637
    %v639 = vadd.f32 %v617, %v620
    %v640 = vadd.f32 %v639, %v623
    %v641 = vadd.f32 %v640, %v626
    %v642 = vadd.f32 %v641, %v629
    %v643 = vadd.f32 %v642, %v632
    %v644 = vadd.f32 %v643, %v635
    %v645 = vadd.f32 %v644, %v638
    %v646 = vrot.slane %v645, 4
    %v647 = vadd.f32 %v645, %v646
    %v648 = vrot.slane %v647, 2
    %v649 = vadd.f32 %v647, %v648
    %v650 = vrot.slane %v649, 1
    %v651 = vadd.f32 %v649, %v650
    %v652 = vunpack.c.l.bf16 %v538
    %v653 = vunpack.c.l.bf16 %v539
    %v654 = vunpack.c.l.bf16 %v540
    %v655 = vunpack.c.l.bf16 %v541
    %v656 = vunpack.c.l.bf16 %v542
    %v657 = vunpack.c.l.bf16 %v543
    %v658 = vunpack.c.l.bf16 %v544
    %v659 = vunpack.c.l.bf16 %v545
    %v660 = vmul.f32 %v652, %v652
    %v661 = vmul.f32 %v653, %v653
    %v662 = vmul.f32 %v654, %v654
    %v663 = vmul.f32 %v655, %v655
    %v664 = vmul.f32 %v656, %v656
    %v665 = vmul.f32 %v657, %v657
    %v666 = vmul.f32 %v658, %v658
    %v667 = vmul.f32 %v659, %v659
    %v668 = vsel %vm97, %v660, 0.0
    %669 = vadd.xlane.f32.xlu0 %v668
    %v670 = vpop.xlane.xlu0 %669
    %v671 = vsel %vm97, %v661, 0.0
    %672 = vadd.xlane.f32.xlu0 %v671
    %v673 = vpop.xlane.xlu0 %672
    %v674 = vsel %vm97, %v662, 0.0
    %675 = vadd.xlane.f32.xlu0 %v674
    %v676 = vpop.xlane.xlu0 %675
    %v677 = vsel %vm97, %v663, 0.0
    %678 = vadd.xlane.f32.xlu0 %v677
    %v679 = vpop.xlane.xlu0 %678
    %v680 = vsel %vm97, %v664, 0.0
    %681 = vadd.xlane.f32.xlu0 %v680
    %v682 = vpop.xlane.xlu0 %681
    %v683 = vsel %vm97, %v665, 0.0
    %684 = vadd.xlane.f32.xlu0 %v683
    %v685 = vpop.xlane.xlu0 %684
    %v686 = vsel %vm97, %v666, 0.0
    %687 = vadd.xlane.f32.xlu0 %v686
    %v688 = vpop.xlane.xlu0 %687
    %v689 = vsel %vm97, %v667, 0.0
    %690 = vadd.xlane.f32.xlu0 %v689
    %v691 = vpop.xlane.xlu0 %690
    %v692 = vadd.f32 %v670, %v673
    %v693 = vadd.f32 %v692, %v676
    %v694 = vadd.f32 %v693, %v679
    %v695 = vadd.f32 %v694, %v682
    %v696 = vadd.f32 %v695, %v685
    %v697 = vadd.f32 %v696, %v688
    %v698 = vadd.f32 %v697, %v691
    %v699 = vrot.slane %v698, 4
    %v700 = vadd.f32 %v698, %v699
    %v701 = vrot.slane %v700, 2
    %v702 = vadd.f32 %v700, %v701
    %v703 = vrot.slane %v702, 1
    %v704 = vadd.f32 %v702, %v703
    %v705 = vmul.f32 %v704, 2.0
    %v706 = vsub.f32 %v651, %v705
    %v707 = vadd.f32 %v706, 64.0
    %v708 = vmul.f32 %v707, 0.00024414063
    %v709 = vadd.f32 %v536, %v708
    %s710 = scalar_lea.vmem %s1, 96
    %v711 = vld [vmem:[%s710] sm:$0xf]
    %v712 = vld [vmem:[%s710 + $0x4] sm:$0xf]
    %v713 = vld [vmem:[%s710 + $0x8] sm:$0xf]
    %v714 = vld [vmem:[%s710 + $0xc] sm:$0xf]
    %v715 = vld [vmem:[%s710 + $0x10] sm:$0xf]
    %v716 = vld [vmem:[%s710 + $0x14] sm:$0xf]
    %v717 = vld [vmem:[%s710 + $0x18] sm:$0xf]
    %v718 = vld [vmem:[%s710 + $0x1c] sm:$0xf]
    %v727 = vunpack.c.l.b16 %v711
    %v728 = vunpack.c.l.b16 %v712
    %v729 = vunpack.c.l.b16 %v713
    %v730 = vunpack.c.l.b16 %v714
    %v731 = vunpack.c.l.b16 %v715
    %v732 = vunpack.c.l.b16 %v716
    %v733 = vunpack.c.l.b16 %v717
    %v734 = vunpack.c.l.b16 %v718
    %v735 = vpack.c.b16 %v728, %v727
    %v736 = vpack.c.b16 %v730, %v729
    %v737 = vpack.c.b16 %v732, %v731
    %v738 = vpack.c.b16 %v734, %v733
    %v740 = vsel %vm97, %v735, 0
    %v743 = vsel %vm97, %v736, 0
    %v746 = vsel %vm97, %v737, 0
    %v749 = vsel %vm97, %v738, 0
    %751 = vmatpush.bf16.xpose.msra.mxu0 0
    %752 = vmatpush.bf16.xpose.msra.mxu0 0
    %753 = vmatpush.bf16.xpose.msra.mxu0 0
    %754 = vmatpush.bf16.xpose.msra.mxu0 0
    %755 = vmatpush.bf16.xpose.msra.mxu0 %v749
    %756 = vmatpush.bf16.xpose.msra.mxu0 %v746
    %757 = vmatpush.bf16.xpose.msra.mxu0 %v743
    %758 = vmatpush.bf16.xpose.msra.mxu0 %v740
    %759 = vmatmul.bf16.gmra.mxu0 %v740
    %v760 = vpop.f32.mrf.mxu0
    %v761 = vadd.f32 0.0, %v760
    %v762 = vpop.f32.mrf.mxu0
    %v763 = vadd.f32 0.0, %v762
    %764 = vmatmul.bf16.gmra.mxu0 %v743
    %v765 = vpop.f32.mrf.mxu0
    %v766 = vadd.f32 0.0, %v765
    %v767 = vpop.f32.mrf.mxu0
    %v768 = vadd.f32 0.0, %v767
    %769 = vmatmul.bf16.gmra.mxu0 %v746
    %v770 = vpop.f32.mrf.mxu0
    %v771 = vadd.f32 0.0, %v770
    %v772 = vpop.f32.mrf.mxu0
    %v773 = vadd.f32 0.0, %v772
    %774 = vmatmul.bf16.gmra.mxu0 %v749
    %v775 = vpop.f32.mrf.mxu0
    %v776 = vadd.f32 0.0, %v775
    %v777 = vpop.f32.mrf.mxu0
    %v778 = vadd.f32 0.0, %v777
    %779 = vdwg.mxu0
    %v780 = vmul.f32 %v761, %v761
    %v781 = vmul.f32 %v763, %v763
    %v782 = vmul.f32 %v766, %v766
    %v783 = vmul.f32 %v768, %v768
    %v784 = vmul.f32 %v771, %v771
    %v785 = vmul.f32 %v773, %v773
    %v786 = vmul.f32 %v776, %v776
    %v787 = vmul.f32 %v778, %v778
    %v788 = vsel %vm97, %v780, 0.0
    %789 = vadd.xlane.f32.xlu0 %v788
    %v790 = vpop.xlane.xlu0 %789
    %v791 = vsel %vm97, %v781, 0.0
    %792 = vadd.xlane.f32.xlu0 %v791
    %v793 = vpop.xlane.xlu0 %792
    %v794 = vsel %vm97, %v782, 0.0
    %795 = vadd.xlane.f32.xlu0 %v794
    %v796 = vpop.xlane.xlu0 %795
    %v797 = vsel %vm97, %v783, 0.0
    %798 = vadd.xlane.f32.xlu0 %v797
    %v799 = vpop.xlane.xlu0 %798
    %v800 = vsel %vm97, %v784, 0.0
    %801 = vadd.xlane.f32.xlu0 %v800
    %v802 = vpop.xlane.xlu0 %801
    %v803 = vsel %vm97, %v785, 0.0
    %804 = vadd.xlane.f32.xlu0 %v803
    %v805 = vpop.xlane.xlu0 %804
    %v806 = vsel %vm97, %v786, 0.0
    %807 = vadd.xlane.f32.xlu0 %v806
    %v808 = vpop.xlane.xlu0 %807
    %v809 = vsel %vm97, %v787, 0.0
    %810 = vadd.xlane.f32.xlu0 %v809
    %v811 = vpop.xlane.xlu0 %810
    %v812 = vadd.f32 %v790, %v793
    %v813 = vadd.f32 %v812, %v796
    %v814 = vadd.f32 %v813, %v799
    %v815 = vadd.f32 %v814, %v802
    %v816 = vadd.f32 %v815, %v805
    %v817 = vadd.f32 %v816, %v808
    %v818 = vadd.f32 %v817, %v811
    %v819 = vrot.slane %v818, 4
    %v820 = vadd.f32 %v818, %v819
    %v821 = vrot.slane %v820, 2
    %v822 = vadd.f32 %v820, %v821
    %v823 = vrot.slane %v822, 1
    %v824 = vadd.f32 %v822, %v823
    %v825 = vunpack.c.l.bf16 %v711
    %v826 = vunpack.c.l.bf16 %v712
    %v827 = vunpack.c.l.bf16 %v713
    %v828 = vunpack.c.l.bf16 %v714
    %v829 = vunpack.c.l.bf16 %v715
    %v830 = vunpack.c.l.bf16 %v716
    %v831 = vunpack.c.l.bf16 %v717
    %v832 = vunpack.c.l.bf16 %v718
    %v833 = vmul.f32 %v825, %v825
    %v834 = vmul.f32 %v826, %v826
    %v835 = vmul.f32 %v827, %v827
    %v836 = vmul.f32 %v828, %v828
    %v837 = vmul.f32 %v829, %v829
    %v838 = vmul.f32 %v830, %v830
    %v839 = vmul.f32 %v831, %v831
    %v840 = vmul.f32 %v832, %v832
    %v841 = vsel %vm97, %v833, 0.0
    %842 = vadd.xlane.f32.xlu0 %v841
    %v843 = vpop.xlane.xlu0 %842
    %v844 = vsel %vm97, %v834, 0.0
    %845 = vadd.xlane.f32.xlu0 %v844
    %v846 = vpop.xlane.xlu0 %845
    %v847 = vsel %vm97, %v835, 0.0
    %848 = vadd.xlane.f32.xlu0 %v847
    %v849 = vpop.xlane.xlu0 %848
    %v850 = vsel %vm97, %v836, 0.0
    %851 = vadd.xlane.f32.xlu0 %v850
    %v852 = vpop.xlane.xlu0 %851
    %v853 = vsel %vm97, %v837, 0.0
    %854 = vadd.xlane.f32.xlu0 %v853
    %v855 = vpop.xlane.xlu0 %854
    %v856 = vsel %vm97, %v838, 0.0
    %857 = vadd.xlane.f32.xlu0 %v856
    %v858 = vpop.xlane.xlu0 %857
    %v859 = vsel %vm97, %v839, 0.0
    %860 = vadd.xlane.f32.xlu0 %v859
    %v861 = vpop.xlane.xlu0 %860
    %v862 = vsel %vm97, %v840, 0.0
    %863 = vadd.xlane.f32.xlu0 %v862
    %v864 = vpop.xlane.xlu0 %863
    %v865 = vadd.f32 %v843, %v846
    %v866 = vadd.f32 %v865, %v849
    %v867 = vadd.f32 %v866, %v852
    %v868 = vadd.f32 %v867, %v855
    %v869 = vadd.f32 %v868, %v858
    %v870 = vadd.f32 %v869, %v861
    %v871 = vadd.f32 %v870, %v864
    %v872 = vrot.slane %v871, 4
    %v873 = vadd.f32 %v871, %v872
    %v874 = vrot.slane %v873, 2
    %v875 = vadd.f32 %v873, %v874
    %v876 = vrot.slane %v875, 1
    %v877 = vadd.f32 %v875, %v876
    %v878 = vmul.f32 %v877, 2.0
    %v879 = vsub.f32 %v824, %v878
    %v880 = vadd.f32 %v879, 64.0
    %v881 = vmul.f32 %v880, 0.00024414063
    %v882 = vadd.f32 %v709, %v881
    %v883 = vld [vmem:[%s2] sm:$0xf]
    %v884 = vld [vmem:[%s2 + $0x4] sm:$0xf]
    %v885 = vld [vmem:[%s2 + $0x8] sm:$0xf]
    %v886 = vld [vmem:[%s2 + $0xc] sm:$0xf]
    %v887 = vld [vmem:[%s2 + $0x10] sm:$0xf]
    %v888 = vld [vmem:[%s2 + $0x14] sm:$0xf]
    %v889 = vld [vmem:[%s2 + $0x18] sm:$0xf]
    %v890 = vld [vmem:[%s2 + $0x1c] sm:$0xf]
    %v891 = vld [vmem:[%s2 + $0x20] sm:$0xf]
    %v892 = vld [vmem:[%s2 + $0x24] sm:$0xf]
    %v893 = vld [vmem:[%s2 + $0x28] sm:$0xf]
    %v894 = vld [vmem:[%s2 + $0x2c] sm:$0xf]
    %v895 = vld [vmem:[%s2 + $0x30] sm:$0xf]
    %v896 = vld [vmem:[%s2 + $0x34] sm:$0xf]
    %v897 = vld [vmem:[%s2 + $0x38] sm:$0xf]
    %v898 = vld [vmem:[%s2 + $0x3c] sm:$0xf]
    %v899 = vld [vmem:[%s2 + $0x40] sm:$0xf]
    %v900 = vld [vmem:[%s2 + $0x44] sm:$0xf]
    %v901 = vld [vmem:[%s2 + $0x48] sm:$0xf]
    %v902 = vld [vmem:[%s2 + $0x4c] sm:$0xf]
    %v903 = vld [vmem:[%s2 + $0x50] sm:$0xf]
    %v904 = vld [vmem:[%s2 + $0x54] sm:$0xf]
    %v905 = vld [vmem:[%s2 + $0x58] sm:$0xf]
    %v906 = vld [vmem:[%s2 + $0x5c] sm:$0xf]
    %v907 = vld [vmem:[%s2 + $0x60] sm:$0xf]
    %v908 = vld [vmem:[%s2 + $0x64] sm:$0xf]
    %v909 = vld [vmem:[%s2 + $0x68] sm:$0xf]
    %v910 = vld [vmem:[%s2 + $0x6c] sm:$0xf]
    %v911 = vld [vmem:[%s2 + $0x70] sm:$0xf]
    %v912 = vld [vmem:[%s2 + $0x74] sm:$0xf]
    %v913 = vld [vmem:[%s2 + $0x78] sm:$0xf]
    %v914 = vld [vmem:[%s2 + $0x7c] sm:$0xf]
    %v947 = vunpack.c.l.b16 %v883
    %v948 = vunpack.c.l.b16 %v884
    %v949 = vunpack.c.l.b16 %v885
    %v950 = vunpack.c.l.b16 %v886
    %v951 = vunpack.c.l.b16 %v887
    %v952 = vunpack.c.l.b16 %v888
    %v953 = vunpack.c.l.b16 %v889
    %v954 = vunpack.c.l.b16 %v890
    %v955 = vunpack.c.l.b16 %v891
    %v956 = vunpack.c.l.b16 %v892
    %v957 = vunpack.c.l.b16 %v893
    %v958 = vunpack.c.l.b16 %v894
    %v959 = vunpack.c.l.b16 %v895
    %v960 = vunpack.c.l.b16 %v896
    %v961 = vunpack.c.l.b16 %v897
    %v962 = vunpack.c.l.b16 %v898
    %v963 = vunpack.c.l.b16 %v899
    %v964 = vunpack.c.l.b16 %v900
    %v965 = vunpack.c.l.b16 %v901
    %v966 = vunpack.c.l.b16 %v902
    %v967 = vunpack.c.l.b16 %v903
    %v968 = vunpack.c.l.b16 %v904
    %v969 = vunpack.c.l.b16 %v905
    %v970 = vunpack.c.l.b16 %v906
    %v971 = vunpack.c.l.b16 %v907
    %v972 = vunpack.c.l.b16 %v908
    %v973 = vunpack.c.l.b16 %v909
    %v974 = vunpack.c.l.b16 %v910
    %v975 = vunpack.c.l.b16 %v911
    %v976 = vunpack.c.l.b16 %v912
    %v977 = vunpack.c.l.b16 %v913
    %v978 = vunpack.c.l.b16 %v914
    %v979 = vpack.c.b16 %v948, %v947
    %v980 = vpack.c.b16 %v950, %v949
    %v981 = vpack.c.b16 %v952, %v951
    %v982 = vpack.c.b16 %v954, %v953
    %v983 = vpack.c.b16 %v956, %v955
    %v984 = vpack.c.b16 %v958, %v957
    %v985 = vpack.c.b16 %v960, %v959
    %v986 = vpack.c.b16 %v962, %v961
    %v987 = vpack.c.b16 %v964, %v963
    %v988 = vpack.c.b16 %v966, %v965
    %v989 = vpack.c.b16 %v968, %v967
    %v990 = vpack.c.b16 %v970, %v969
    %v991 = vpack.c.b16 %v972, %v971
    %v992 = vpack.c.b16 %v974, %v973
    %v993 = vpack.c.b16 %v976, %v975
    %v994 = vpack.c.b16 %v978, %v977
    %v996 = vsel %vm97, %v979, 0
    %v999 = vsel %vm97, %v980, 0
    %v1002 = vsel %vm97, %v981, 0
    %v1005 = vsel %vm97, %v982, 0
    %v1008 = vsel %vm97, %v983, 0
    %v1011 = vsel %vm97, %v984, 0
    %v1014 = vsel %vm97, %v985, 0
    %v1017 = vsel %vm97, %v986, 0
    %v1020 = vsel %vm97, %v987, 0
    %v1023 = vsel %vm97, %v988, 0
    %v1026 = vsel %vm97, %v989, 0
    %v1029 = vsel %vm97, %v990, 0
    %v1032 = vsel %vm97, %v991, 0
    %v1035 = vsel %vm97, %v992, 0
    %v1038 = vsel %vm97, %v993, 0
    %v1041 = vsel %vm97, %v994, 0
    %1043 = vmatpush.bf16.xpose.msra.mxu0 %v1017
    %1044 = vmatpush.bf16.xpose.msra.mxu0 %v1014
    %1045 = vmatpush.bf16.xpose.msra.mxu0 %v1011
    %1046 = vmatpush.bf16.xpose.msra.mxu0 %v1008
    %1047 = vmatpush.bf16.xpose.msra.mxu0 %v1005
    %1048 = vmatpush.bf16.xpose.msra.mxu0 %v1002
    %1049 = vmatpush.bf16.xpose.msra.mxu0 %v999
    %1050 = vmatpush.bf16.xpose.msra.mxu0 %v996
    %1051 = vmatmul.bf16.gmra.mxu0 %v996
    %v1052 = vpop.f32.mrf.mxu0
    %v1053 = vadd.f32 0.0, %v1052
    %v1054 = vpop.f32.mrf.mxu0
    %v1055 = vadd.f32 0.0, %v1054
    %1056 = vmatmul.bf16.gmra.mxu0 %v999
    %v1057 = vpop.f32.mrf.mxu0
    %v1058 = vadd.f32 0.0, %v1057
    %v1059 = vpop.f32.mrf.mxu0
    %v1060 = vadd.f32 0.0, %v1059
    %1061 = vmatmul.bf16.gmra.mxu0 %v1002
    %v1062 = vpop.f32.mrf.mxu0
    %v1063 = vadd.f32 0.0, %v1062
    %v1064 = vpop.f32.mrf.mxu0
    %v1065 = vadd.f32 0.0, %v1064
    %1066 = vmatmul.bf16.gmra.mxu0 %v1005
    %v1067 = vpop.f32.mrf.mxu0
    %v1068 = vadd.f32 0.0, %v1067
    %v1069 = vpop.f32.mrf.mxu0
    %v1070 = vadd.f32 0.0, %v1069
    %1071 = vmatmul.bf16.gmra.mxu0 %v1008
    %v1072 = vpop.f32.mrf.mxu0
    %v1073 = vadd.f32 0.0, %v1072
    %v1074 = vpop.f32.mrf.mxu0
    %v1075 = vadd.f32 0.0, %v1074
    %1076 = vmatmul.bf16.gmra.mxu0 %v1011
    %v1077 = vpop.f32.mrf.mxu0
    %v1078 = vadd.f32 0.0, %v1077
    %v1079 = vpop.f32.mrf.mxu0
    %v1080 = vadd.f32 0.0, %v1079
    %1081 = vmatmul.bf16.gmra.mxu0 %v1014
    %v1082 = vpop.f32.mrf.mxu0
    %v1083 = vadd.f32 0.0, %v1082
    %v1084 = vpop.f32.mrf.mxu0
    %v1085 = vadd.f32 0.0, %v1084
    %1086 = vmatmul.bf16.gmra.mxu0 %v1017
    %v1087 = vpop.f32.mrf.mxu0
    %v1088 = vadd.f32 0.0, %v1087
    %v1089 = vpop.f32.mrf.mxu0
    %v1090 = vadd.f32 0.0, %v1089
    %1091 = vmatmul.bf16.gmra.mxu0 %v1020
    %v1092 = vpop.f32.mrf.mxu0
    %v1093 = vadd.f32 0.0, %v1092
    %v1094 = vpop.f32.mrf.mxu0
    %v1095 = vadd.f32 0.0, %v1094
    %1096 = vmatmul.bf16.gmra.mxu0 %v1023
    %v1097 = vpop.f32.mrf.mxu0
    %v1098 = vadd.f32 0.0, %v1097
    %v1099 = vpop.f32.mrf.mxu0
    %v1100 = vadd.f32 0.0, %v1099
    %1101 = vmatmul.bf16.gmra.mxu0 %v1026
    %v1102 = vpop.f32.mrf.mxu0
    %v1103 = vadd.f32 0.0, %v1102
    %v1104 = vpop.f32.mrf.mxu0
    %v1105 = vadd.f32 0.0, %v1104
    %1106 = vmatmul.bf16.gmra.mxu0 %v1029
    %v1107 = vpop.f32.mrf.mxu0
    %v1108 = vadd.f32 0.0, %v1107
    %v1109 = vpop.f32.mrf.mxu0
    %v1110 = vadd.f32 0.0, %v1109
    %1111 = vmatmul.bf16.gmra.mxu0 %v1032
    %v1112 = vpop.f32.mrf.mxu0
    %v1113 = vadd.f32 0.0, %v1112
    %v1114 = vpop.f32.mrf.mxu0
    %v1115 = vadd.f32 0.0, %v1114
    %1116 = vmatmul.bf16.gmra.mxu0 %v1035
    %v1117 = vpop.f32.mrf.mxu0
    %v1118 = vadd.f32 0.0, %v1117
    %v1119 = vpop.f32.mrf.mxu0
    %v1120 = vadd.f32 0.0, %v1119
    %1121 = vmatmul.bf16.gmra.mxu0 %v1038
    %v1122 = vpop.f32.mrf.mxu0
    %v1123 = vadd.f32 0.0, %v1122
    %v1124 = vpop.f32.mrf.mxu0
    %v1125 = vadd.f32 0.0, %v1124
    %1126 = vmatmul.bf16.gmra.mxu0 %v1041
    %v1127 = vpop.f32.mrf.mxu0
    %v1128 = vadd.f32 0.0, %v1127
    %v1129 = vpop.f32.mrf.mxu0
    %v1130 = vadd.f32 0.0, %v1129
    %1131 = vdwg.mxu0
    %1132 = vmatpush.bf16.xpose.msra.mxu0 %v1041
    %1133 = vmatpush.bf16.xpose.msra.mxu0 %v1038
    %1134 = vmatpush.bf16.xpose.msra.mxu0 %v1035
    %1135 = vmatpush.bf16.xpose.msra.mxu0 %v1032
    %1136 = vmatpush.bf16.xpose.msra.mxu0 %v1029
    %1137 = vmatpush.bf16.xpose.msra.mxu0 %v1026
    %1138 = vmatpush.bf16.xpose.msra.mxu0 %v1023
    %1139 = vmatpush.bf16.xpose.msra.mxu0 %v1020
    %1140 = vmatmul.bf16.gmra.mxu0 %v996
    %v1141 = vpop.f32.mrf.mxu0
    %v1142 = vadd.f32 0.0, %v1141
    %v1143 = vpop.f32.mrf.mxu0
    %v1144 = vadd.f32 0.0, %v1143
    %1145 = vmatmul.bf16.gmra.mxu0 %v999
    %v1146 = vpop.f32.mrf.mxu0
    %v1147 = vadd.f32 0.0, %v1146
    %v1148 = vpop.f32.mrf.mxu0
    %v1149 = vadd.f32 0.0, %v1148
    %1150 = vmatmul.bf16.gmra.mxu0 %v1002
    %v1151 = vpop.f32.mrf.mxu0
    %v1152 = vadd.f32 0.0, %v1151
    %v1153 = vpop.f32.mrf.mxu0
    %v1154 = vadd.f32 0.0, %v1153
    %1155 = vmatmul.bf16.gmra.mxu0 %v1005
    %v1156 = vpop.f32.mrf.mxu0
    %v1157 = vadd.f32 0.0, %v1156
    %v1158 = vpop.f32.mrf.mxu0
    %v1159 = vadd.f32 0.0, %v1158
    %1160 = vmatmul.bf16.gmra.mxu0 %v1008
    %v1161 = vpop.f32.mrf.mxu0
    %v1162 = vadd.f32 0.0, %v1161
    %v1163 = vpop.f32.mrf.mxu0
    %v1164 = vadd.f32 0.0, %v1163
    %1165 = vmatmul.bf16.gmra.mxu0 %v1011
    %v1166 = vpop.f32.mrf.mxu0
    %v1167 = vadd.f32 0.0, %v1166
    %v1168 = vpop.f32.mrf.mxu0
    %v1169 = vadd.f32 0.0, %v1168
    %1170 = vmatmul.bf16.gmra.mxu0 %v1014
    %v1171 = vpop.f32.mrf.mxu0
    %v1172 = vadd.f32 0.0, %v1171
    %v1173 = vpop.f32.mrf.mxu0
    %v1174 = vadd.f32 0.0, %v1173
    %1175 = vmatmul.bf16.gmra.mxu0 %v1017
    %v1176 = vpop.f32.mrf.mxu0
    %v1177 = vadd.f32 0.0, %v1176
    %v1178 = vpop.f32.mrf.mxu0
    %v1179 = vadd.f32 0.0, %v1178
    %1180 = vmatmul.bf16.gmra.mxu0 %v1020
    %v1181 = vpop.f32.mrf.mxu0
    %v1182 = vadd.f32 0.0, %v1181
    %v1183 = vpop.f32.mrf.mxu0
    %v1184 = vadd.f32 0.0, %v1183
    %1185 = vmatmul.bf16.gmra.mxu0 %v1023
    %v1186 = vpop.f32.mrf.mxu0
    %v1187 = vadd.f32 0.0, %v1186
    %v1188 = vpop.f32.mrf.mxu0
    %v1189 = vadd.f32 0.0, %v1188
    %1190 = vmatmul.bf16.gmra.mxu0 %v1026
    %v1191 = vpop.f32.mrf.mxu0
    %v1192 = vadd.f32 0.0, %v1191
    %v1193 = vpop.f32.mrf.mxu0
    %v1194 = vadd.f32 0.0, %v1193
    %1195 = vmatmul.bf16.gmra.mxu0 %v1029
    %v1196 = vpop.f32.mrf.mxu0
    %v1197 = vadd.f32 0.0, %v1196
    %v1198 = vpop.f32.mrf.mxu0
    %v1199 = vadd.f32 0.0, %v1198
    %1200 = vmatmul.bf16.gmra.mxu0 %v1032
    %v1201 = vpop.f32.mrf.mxu0
    %v1202 = vadd.f32 0.0, %v1201
    %v1203 = vpop.f32.mrf.mxu0
    %v1204 = vadd.f32 0.0, %v1203
    %1205 = vmatmul.bf16.gmra.mxu0 %v1035
    %v1206 = vpop.f32.mrf.mxu0
    %v1207 = vadd.f32 0.0, %v1206
    %v1208 = vpop.f32.mrf.mxu0
    %v1209 = vadd.f32 0.0, %v1208
    %1210 = vmatmul.bf16.gmra.mxu0 %v1038
    %v1211 = vpop.f32.mrf.mxu0
    %v1212 = vadd.f32 0.0, %v1211
    %v1213 = vpop.f32.mrf.mxu0
    %v1214 = vadd.f32 0.0, %v1213
    %1215 = vmatmul.bf16.gmra.mxu0 %v1041
    %v1216 = vpop.f32.mrf.mxu0
    %v1217 = vadd.f32 0.0, %v1216
    %v1218 = vpop.f32.mrf.mxu0
    %v1219 = vadd.f32 0.0, %v1218
    %1220 = vdwg.mxu0
    %v1221 = vmul.f32 %v1053, %v1053
    %v1222 = vmul.f32 %v1142, %v1142
    %v1223 = vmul.f32 %v1055, %v1055
    %v1224 = vmul.f32 %v1144, %v1144
    %v1225 = vmul.f32 %v1058, %v1058
    %v1226 = vmul.f32 %v1147, %v1147
    %v1227 = vmul.f32 %v1060, %v1060
    %v1228 = vmul.f32 %v1149, %v1149
    %v1229 = vmul.f32 %v1063, %v1063
    %v1230 = vmul.f32 %v1152, %v1152
    %v1231 = vmul.f32 %v1065, %v1065
    %v1232 = vmul.f32 %v1154, %v1154
    %v1233 = vmul.f32 %v1068, %v1068
    %v1234 = vmul.f32 %v1157, %v1157
    %v1235 = vmul.f32 %v1070, %v1070
    %v1236 = vmul.f32 %v1159, %v1159
    %v1237 = vmul.f32 %v1073, %v1073
    %v1238 = vmul.f32 %v1162, %v1162
    %v1239 = vmul.f32 %v1075, %v1075
    %v1240 = vmul.f32 %v1164, %v1164
    %v1241 = vmul.f32 %v1078, %v1078
    %v1242 = vmul.f32 %v1167, %v1167
    %v1243 = vmul.f32 %v1080, %v1080
    %v1244 = vmul.f32 %v1169, %v1169
    %v1245 = vmul.f32 %v1083, %v1083
    %v1246 = vmul.f32 %v1172, %v1172
    %v1247 = vmul.f32 %v1085, %v1085
    %v1248 = vmul.f32 %v1174, %v1174
    %v1249 = vmul.f32 %v1088, %v1088
    %v1250 = vmul.f32 %v1177, %v1177
    %v1251 = vmul.f32 %v1090, %v1090
    %v1252 = vmul.f32 %v1179, %v1179
    %v1253 = vmul.f32 %v1093, %v1093
    %v1254 = vmul.f32 %v1182, %v1182
    %v1255 = vmul.f32 %v1095, %v1095
    %v1256 = vmul.f32 %v1184, %v1184
    %v1257 = vmul.f32 %v1098, %v1098
    %v1258 = vmul.f32 %v1187, %v1187
    %v1259 = vmul.f32 %v1100, %v1100
    %v1260 = vmul.f32 %v1189, %v1189
    %v1261 = vmul.f32 %v1103, %v1103
    %v1262 = vmul.f32 %v1192, %v1192
    %v1263 = vmul.f32 %v1105, %v1105
    %v1264 = vmul.f32 %v1194, %v1194
    %v1265 = vmul.f32 %v1108, %v1108
    %v1266 = vmul.f32 %v1197, %v1197
    %v1267 = vmul.f32 %v1110, %v1110
    %v1268 = vmul.f32 %v1199, %v1199
    %v1269 = vmul.f32 %v1113, %v1113
    %v1270 = vmul.f32 %v1202, %v1202
    %v1271 = vmul.f32 %v1115, %v1115
    %v1272 = vmul.f32 %v1204, %v1204
    %v1273 = vmul.f32 %v1118, %v1118
    %v1274 = vmul.f32 %v1207, %v1207
    %v1275 = vmul.f32 %v1120, %v1120
    %v1276 = vmul.f32 %v1209, %v1209
    %v1277 = vmul.f32 %v1123, %v1123
    %v1278 = vmul.f32 %v1212, %v1212
    %v1279 = vmul.f32 %v1125, %v1125
    %v1280 = vmul.f32 %v1214, %v1214
    %v1281 = vmul.f32 %v1128, %v1128
    %v1282 = vmul.f32 %v1217, %v1217
    %v1283 = vmul.f32 %v1130, %v1130
    %v1284 = vmul.f32 %v1219, %v1219
    %v1285 = vadd.f32 %v1221, %v1222
    %1286 = vadd.xlane.f32.xlu0 %v1285
    %v1287 = vpop.xlane.xlu0 %1286
    %v1288 = vadd.f32 %v1223, %v1224
    %1289 = vadd.xlane.f32.xlu0 %v1288
    %v1290 = vpop.xlane.xlu0 %1289
    %v1291 = vadd.f32 %v1225, %v1226
    %1292 = vadd.xlane.f32.xlu0 %v1291
    %v1293 = vpop.xlane.xlu0 %1292
    %v1294 = vadd.f32 %v1227, %v1228
    %1295 = vadd.xlane.f32.xlu0 %v1294
    %v1296 = vpop.xlane.xlu0 %1295
    %v1297 = vadd.f32 %v1229, %v1230
    %1298 = vadd.xlane.f32.xlu0 %v1297
    %v1299 = vpop.xlane.xlu0 %1298
    %v1300 = vadd.f32 %v1231, %v1232
    %1301 = vadd.xlane.f32.xlu0 %v1300
    %v1302 = vpop.xlane.xlu0 %1301
    %v1303 = vadd.f32 %v1233, %v1234
    %1304 = vadd.xlane.f32.xlu0 %v1303
    %v1305 = vpop.xlane.xlu0 %1304
    %v1306 = vadd.f32 %v1235, %v1236
    %1307 = vadd.xlane.f32.xlu0 %v1306
    %v1308 = vpop.xlane.xlu0 %1307
    %v1309 = vadd.f32 %v1237, %v1238
    %1310 = vadd.xlane.f32.xlu0 %v1309
    %v1311 = vpop.xlane.xlu0 %1310
    %v1312 = vadd.f32 %v1239, %v1240
    %1313 = vadd.xlane.f32.xlu0 %v1312
    %v1314 = vpop.xlane.xlu0 %1313
    %v1315 = vadd.f32 %v1241, %v1242
    %1316 = vadd.xlane.f32.xlu0 %v1315
    %v1317 = vpop.xlane.xlu0 %1316
    %v1318 = vadd.f32 %v1243, %v1244
    %1319 = vadd.xlane.f32.xlu0 %v1318
    %v1320 = vpop.xlane.xlu0 %1319
    %v1321 = vadd.f32 %v1245, %v1246
    %1322 = vadd.xlane.f32.xlu0 %v1321
    %v1323 = vpop.xlane.xlu0 %1322
    %v1324 = vadd.f32 %v1247, %v1248
    %1325 = vadd.xlane.f32.xlu0 %v1324
    %v1326 = vpop.xlane.xlu0 %1325
    %v1327 = vadd.f32 %v1249, %v1250
    %1328 = vadd.xlane.f32.xlu0 %v1327
    %v1329 = vpop.xlane.xlu0 %1328
    %v1330 = vadd.f32 %v1251, %v1252
    %1331 = vadd.xlane.f32.xlu0 %v1330
    %v1332 = vpop.xlane.xlu0 %1331
    %v1333 = vadd.f32 %v1253, %v1254
    %1334 = vadd.xlane.f32.xlu0 %v1333
    %v1335 = vpop.xlane.xlu0 %1334
    %v1336 = vadd.f32 %v1255, %v1256
    %1337 = vadd.xlane.f32.xlu0 %v1336
    %v1338 = vpop.xlane.xlu0 %1337
    %v1339 = vadd.f32 %v1257, %v1258
    %1340 = vadd.xlane.f32.xlu0 %v1339
    %v1341 = vpop.xlane.xlu0 %1340
    %v1342 = vadd.f32 %v1259, %v1260
    %1343 = vadd.xlane.f32.xlu0 %v1342
    %v1344 = vpop.xlane.xlu0 %1343
    %v1345 = vadd.f32 %v1261, %v1262
    %1346 = vadd.xlane.f32.xlu0 %v1345
    %v1347 = vpop.xlane.xlu0 %1346
    %v1348 = vadd.f32 %v1263, %v1264
    %1349 = vadd.xlane.f32.xlu0 %v1348
    %v1350 = vpop.xlane.xlu0 %1349
    %v1351 = vadd.f32 %v1265, %v1266
    %1352 = vadd.xlane.f32.xlu0 %v1351
    %v1353 = vpop.xlane.xlu0 %1352
    %v1354 = vadd.f32 %v1267, %v1268
    %1355 = vadd.xlane.f32.xlu0 %v1354
    %v1356 = vpop.xlane.xlu0 %1355
    %v1357 = vadd.f32 %v1269, %v1270
    %1358 = vadd.xlane.f32.xlu0 %v1357
    %v1359 = vpop.xlane.xlu0 %1358
    %v1360 = vadd.f32 %v1271, %v1272
    %1361 = vadd.xlane.f32.xlu0 %v1360
    %v1362 = vpop.xlane.xlu0 %1361
    %v1363 = vadd.f32 %v1273, %v1274
    %1364 = vadd.xlane.f32.xlu0 %v1363
    %v1365 = vpop.xlane.xlu0 %1364
    %v1366 = vadd.f32 %v1275, %v1276
    %1367 = vadd.xlane.f32.xlu0 %v1366
    %v1368 = vpop.xlane.xlu0 %1367
    %v1369 = vadd.f32 %v1277, %v1278
    %1370 = vadd.xlane.f32.xlu0 %v1369
    %v1371 = vpop.xlane.xlu0 %1370
    %v1372 = vadd.f32 %v1279, %v1280
    %1373 = vadd.xlane.f32.xlu0 %v1372
    %v1374 = vpop.xlane.xlu0 %1373
    %v1375 = vadd.f32 %v1281, %v1282
    %1376 = vadd.xlane.f32.xlu0 %v1375
    %v1377 = vpop.xlane.xlu0 %1376
    %v1378 = vadd.f32 %v1283, %v1284
    %1379 = vadd.xlane.f32.xlu0 %v1378
    %v1380 = vpop.xlane.xlu0 %1379
    %v1381 = vadd.f32 %v1287, %v1290
    %v1382 = vadd.f32 %v1381, %v1293
    %v1383 = vadd.f32 %v1382, %v1296
    %v1384 = vadd.f32 %v1383, %v1299
    %v1385 = vadd.f32 %v1384, %v1302
    %v1386 = vadd.f32 %v1385, %v1305
    %v1387 = vadd.f32 %v1386, %v1308
    %v1388 = vadd.f32 %v1387, %v1311
    %v1389 = vadd.f32 %v1388, %v1314
    %v1390 = vadd.f32 %v1389, %v1317
    %v1391 = vadd.f32 %v1390, %v1320
    %v1392 = vadd.f32 %v1391, %v1323
    %v1393 = vadd.f32 %v1392, %v1326
    %v1394 = vadd.f32 %v1393, %v1329
    %v1395 = vadd.f32 %v1394, %v1332
    %v1396 = vadd.f32 %v1395, %v1335
    %v1397 = vadd.f32 %v1396, %v1338
    %v1398 = vadd.f32 %v1397, %v1341
    %v1399 = vadd.f32 %v1398, %v1344
    %v1400 = vadd.f32 %v1399, %v1347
    %v1401 = vadd.f32 %v1400, %v1350
    %v1402 = vadd.f32 %v1401, %v1353
    %v1403 = vadd.f32 %v1402, %v1356
    %v1404 = vadd.f32 %v1403, %v1359
    %v1405 = vadd.f32 %v1404, %v1362
    %v1406 = vadd.f32 %v1405, %v1365
    %v1407 = vadd.f32 %v1406, %v1368
    %v1408 = vadd.f32 %v1407, %v1371
    %v1409 = vadd.f32 %v1408, %v1374
    %v1410 = vadd.f32 %v1409, %v1377
    %v1411 = vadd.f32 %v1410, %v1380
    %v1412 = vrot.slane %v1411, 4
    %v1413 = vadd.f32 %v1411, %v1412
    %v1414 = vrot.slane %v1413, 2
    %v1415 = vadd.f32 %v1413, %v1414
    %v1416 = vrot.slane %v1415, 1
    %v1417 = vadd.f32 %v1415, %v1416
    %v1418 = vunpack.c.l.bf16 %v883
    %v1419 = vunpack.c.l.bf16 %v884
    %v1420 = vunpack.c.l.bf16 %v885
    %v1421 = vunpack.c.l.bf16 %v886
    %v1422 = vunpack.c.l.bf16 %v887
    %v1423 = vunpack.c.l.bf16 %v888
    %v1424 = vunpack.c.l.bf16 %v889
    %v1425 = vunpack.c.l.bf16 %v890
    %v1426 = vunpack.c.l.bf16 %v891
    %v1427 = vunpack.c.l.bf16 %v892
    %v1428 = vunpack.c.l.bf16 %v893
    %v1429 = vunpack.c.l.bf16 %v894
    %v1430 = vunpack.c.l.bf16 %v895
    %v1431 = vunpack.c.l.bf16 %v896
    %v1432 = vunpack.c.l.bf16 %v897
    %v1433 = vunpack.c.l.bf16 %v898
    %v1434 = vunpack.c.l.bf16 %v899
    %v1435 = vunpack.c.l.bf16 %v900
    %v1436 = vunpack.c.l.bf16 %v901
    %v1437 = vunpack.c.l.bf16 %v902
    %v1438 = vunpack.c.l.bf16 %v903
    %v1439 = vunpack.c.l.bf16 %v904
    %v1440 = vunpack.c.l.bf16 %v905
    %v1441 = vunpack.c.l.bf16 %v906
    %v1442 = vunpack.c.l.bf16 %v907
    %v1443 = vunpack.c.l.bf16 %v908
    %v1444 = vunpack.c.l.bf16 %v909
    %v1445 = vunpack.c.l.bf16 %v910
    %v1446 = vunpack.c.l.bf16 %v911
    %v1447 = vunpack.c.l.bf16 %v912
    %v1448 = vunpack.c.l.bf16 %v913
    %v1449 = vunpack.c.l.bf16 %v914
    %v1450 = vmul.f32 %v1418, %v1418
    %v1451 = vmul.f32 %v1419, %v1419
    %v1452 = vmul.f32 %v1420, %v1420
    %v1453 = vmul.f32 %v1421, %v1421
    %v1454 = vmul.f32 %v1422, %v1422
    %v1455 = vmul.f32 %v1423, %v1423
    %v1456 = vmul.f32 %v1424, %v1424
    %v1457 = vmul.f32 %v1425, %v1425
    %v1458 = vmul.f32 %v1426, %v1426
    %v1459 = vmul.f32 %v1427, %v1427
    %v1460 = vmul.f32 %v1428, %v1428
    %v1461 = vmul.f32 %v1429, %v1429
    %v1462 = vmul.f32 %v1430, %v1430
    %v1463 = vmul.f32 %v1431, %v1431
    %v1464 = vmul.f32 %v1432, %v1432
    %v1465 = vmul.f32 %v1433, %v1433
    %v1466 = vmul.f32 %v1434, %v1434
    %v1467 = vmul.f32 %v1435, %v1435
    %v1468 = vmul.f32 %v1436, %v1436
    %v1469 = vmul.f32 %v1437, %v1437
    %v1470 = vmul.f32 %v1438, %v1438
    %v1471 = vmul.f32 %v1439, %v1439
    %v1472 = vmul.f32 %v1440, %v1440
    %v1473 = vmul.f32 %v1441, %v1441
    %v1474 = vmul.f32 %v1442, %v1442
    %v1475 = vmul.f32 %v1443, %v1443
    %v1476 = vmul.f32 %v1444, %v1444
    %v1477 = vmul.f32 %v1445, %v1445
    %v1478 = vmul.f32 %v1446, %v1446
    %v1479 = vmul.f32 %v1447, %v1447
    %v1480 = vmul.f32 %v1448, %v1448
    %v1481 = vmul.f32 %v1449, %v1449
    %v1482 = vsel %vm97, %v1450, 0.0
    %1483 = vadd.xlane.f32.xlu0 %v1482
    %v1484 = vpop.xlane.xlu0 %1483
    %v1485 = vsel %vm97, %v1451, 0.0
    %1486 = vadd.xlane.f32.xlu0 %v1485
    %v1487 = vpop.xlane.xlu0 %1486
    %v1488 = vsel %vm97, %v1452, 0.0
    %1489 = vadd.xlane.f32.xlu0 %v1488
    %v1490 = vpop.xlane.xlu0 %1489
    %v1491 = vsel %vm97, %v1453, 0.0
    %1492 = vadd.xlane.f32.xlu0 %v1491
    %v1493 = vpop.xlane.xlu0 %1492
    %v1494 = vsel %vm97, %v1454, 0.0
    %1495 = vadd.xlane.f32.xlu0 %v1494
    %v1496 = vpop.xlane.xlu0 %1495
    %v1497 = vsel %vm97, %v1455, 0.0
    %1498 = vadd.xlane.f32.xlu0 %v1497
    %v1499 = vpop.xlane.xlu0 %1498
    %v1500 = vsel %vm97, %v1456, 0.0
    %1501 = vadd.xlane.f32.xlu0 %v1500
    %v1502 = vpop.xlane.xlu0 %1501
    %v1503 = vsel %vm97, %v1457, 0.0
    %1504 = vadd.xlane.f32.xlu0 %v1503
    %v1505 = vpop.xlane.xlu0 %1504
    %v1506 = vsel %vm97, %v1458, 0.0
    %1507 = vadd.xlane.f32.xlu0 %v1506
    %v1508 = vpop.xlane.xlu0 %1507
    %v1509 = vsel %vm97, %v1459, 0.0
    %1510 = vadd.xlane.f32.xlu0 %v1509
    %v1511 = vpop.xlane.xlu0 %1510
    %v1512 = vsel %vm97, %v1460, 0.0
    %1513 = vadd.xlane.f32.xlu0 %v1512
    %v1514 = vpop.xlane.xlu0 %1513
    %v1515 = vsel %vm97, %v1461, 0.0
    %1516 = vadd.xlane.f32.xlu0 %v1515
    %v1517 = vpop.xlane.xlu0 %1516
    %v1518 = vsel %vm97, %v1462, 0.0
    %1519 = vadd.xlane.f32.xlu0 %v1518
    %v1520 = vpop.xlane.xlu0 %1519
    %v1521 = vsel %vm97, %v1463, 0.0
    %1522 = vadd.xlane.f32.xlu0 %v1521
    %v1523 = vpop.xlane.xlu0 %1522
    %v1524 = vsel %vm97, %v1464, 0.0
    %1525 = vadd.xlane.f32.xlu0 %v1524
    %v1526 = vpop.xlane.xlu0 %1525
    %v1527 = vsel %vm97, %v1465, 0.0
    %1528 = vadd.xlane.f32.xlu0 %v1527
    %v1529 = vpop.xlane.xlu0 %1528
    %v1530 = vsel %vm97, %v1466, 0.0
    %1531 = vadd.xlane.f32.xlu0 %v1530
    %v1532 = vpop.xlane.xlu0 %1531
    %v1533 = vsel %vm97, %v1467, 0.0
    %1534 = vadd.xlane.f32.xlu0 %v1533
    %v1535 = vpop.xlane.xlu0 %1534
    %v1536 = vsel %vm97, %v1468, 0.0
    %1537 = vadd.xlane.f32.xlu0 %v1536
    %v1538 = vpop.xlane.xlu0 %1537
    %v1539 = vsel %vm97, %v1469, 0.0
    %1540 = vadd.xlane.f32.xlu0 %v1539
    %v1541 = vpop.xlane.xlu0 %1540
    %v1542 = vsel %vm97, %v1470, 0.0
    %1543 = vadd.xlane.f32.xlu0 %v1542
    %v1544 = vpop.xlane.xlu0 %1543
    %v1545 = vsel %vm97, %v1471, 0.0
    %1546 = vadd.xlane.f32.xlu0 %v1545
    %v1547 = vpop.xlane.xlu0 %1546
    %v1548 = vsel %vm97, %v1472, 0.0
    %1549 = vadd.xlane.f32.xlu0 %v1548
    %v1550 = vpop.xlane.xlu0 %1549
    %v1551 = vsel %vm97, %v1473, 0.0
    %1552 = vadd.xlane.f32.xlu0 %v1551
    %v1553 = vpop.xlane.xlu0 %1552
    %v1554 = vsel %vm97, %v1474, 0.0
    %1555 = vadd.xlane.f32.xlu0 %v1554
    %v1556 = vpop.xlane.xlu0 %1555
    %v1557 = vsel %vm97, %v1475, 0.0
    %1558 = vadd.xlane.f32.xlu0 %v1557
    %v1559 = vpop.xlane.xlu0 %1558
    %v1560 = vsel %vm97, %v1476, 0.0
    %1561 = vadd.xlane.f32.xlu0 %v1560
    %v1562 = vpop.xlane.xlu0 %1561
    %v1563 = vsel %vm97, %v1477, 0.0
    %1564 = vadd.xlane.f32.xlu0 %v1563
    %v1565 = vpop.xlane.xlu0 %1564
    %v1566 = vsel %vm97, %v1478, 0.0
    %1567 = vadd.xlane.f32.xlu0 %v1566
    %v1568 = vpop.xlane.xlu0 %1567
    %v1569 = vsel %vm97, %v1479, 0.0
    %1570 = vadd.xlane.f32.xlu0 %v1569
    %v1571 = vpop.xlane.xlu0 %1570
    %v1572 = vsel %vm97, %v1480, 0.0
    %1573 = vadd.xlane.f32.xlu0 %v1572
    %v1574 = vpop.xlane.xlu0 %1573
    %v1575 = vsel %vm97, %v1481, 0.0
    %1576 = vadd.xlane.f32.xlu0 %v1575
    %v1577 = vpop.xlane.xlu0 %1576
    %v1578 = vadd.f32 %v1484, %v1487
    %v1579 = vadd.f32 %v1578, %v1490
    %v1580 = vadd.f32 %v1579, %v1493
    %v1581 = vadd.f32 %v1580, %v1496
    %v1582 = vadd.f32 %v1581, %v1499
    %v1583 = vadd.f32 %v1582, %v1502
    %v1584 = vadd.f32 %v1583, %v1505
    %v1585 = vadd.f32 %v1584, %v1508
    %v1586 = vadd.f32 %v1585, %v1511
    %v1587 = vadd.f32 %v1586, %v1514
    %v1588 = vadd.f32 %v1587, %v1517
    %v1589 = vadd.f32 %v1588, %v1520
    %v1590 = vadd.f32 %v1589, %v1523
    %v1591 = vadd.f32 %v1590, %v1526
    %v1592 = vadd.f32 %v1591, %v1529
    %v1593 = vadd.f32 %v1592, %v1532
    %v1594 = vadd.f32 %v1593, %v1535
    %v1595 = vadd.f32 %v1594, %v1538
    %v1596 = vadd.f32 %v1595, %v1541
    %v1597 = vadd.f32 %v1596, %v1544
    %v1598 = vadd.f32 %v1597, %v1547
    %v1599 = vadd.f32 %v1598, %v1550
    %v1600 = vadd.f32 %v1599, %v1553
    %v1601 = vadd.f32 %v1600, %v1556
    %v1602 = vadd.f32 %v1601, %v1559
    %v1603 = vadd.f32 %v1602, %v1562
    %v1604 = vadd.f32 %v1603, %v1565
    %v1605 = vadd.f32 %v1604, %v1568
    %v1606 = vadd.f32 %v1605, %v1571
    %v1607 = vadd.f32 %v1606, %v1574
    %v1608 = vadd.f32 %v1607, %v1577
    %v1609 = vrot.slane %v1608, 4
    %v1610 = vadd.f32 %v1608, %v1609
    %v1611 = vrot.slane %v1610, 2
    %v1612 = vadd.f32 %v1610, %v1611
    %v1613 = vrot.slane %v1612, 1
    %v1614 = vadd.f32 %v1612, %v1613
    %v1615 = vmul.f32 %v1614, 2.0
    %v1616 = vsub.f32 %v1417, %v1615
    %v1617 = vadd.f32 %v1616, 256.0
    %v1618 = vmul.f32 %v1617, 1.5258789e-05
    %v1619 = vadd.f32 %v882, %v1618
    %v1620 = vld [vmem:[%s3] sm:$0xff]
    %v1621 = vld [vmem:[%s3 + $0x8] sm:$0xff]
    %v1622 = vld [vmem:[%s3 + $0x10] sm:$0xff]
    %v1623 = vld [vmem:[%s3 + $0x18] sm:$0xff]
    %v1624 = vld [vmem:[%s3 + $0x20] sm:$0xff]
    %v1625 = vld [vmem:[%s3 + $0x28] sm:$0xff]
    %v1626 = vld [vmem:[%s3 + $0x30] sm:$0xff]
    %v1627 = vld [vmem:[%s3 + $0x38] sm:$0xff]
    %v1636 = vunpack.c.l.b16 %v1620
    %v1637 = vunpack.c.h.b16 %v1620
    %v1638 = vunpack.c.l.b16 %v1621
    %v1639 = vunpack.c.h.b16 %v1621
    %v1640 = vunpack.c.l.b16 %v1622
    %v1641 = vunpack.c.h.b16 %v1622
    %v1642 = vunpack.c.l.b16 %v1623
    %v1643 = vunpack.c.h.b16 %v1623
    %v1644 = vunpack.c.l.b16 %v1624
    %v1645 = vunpack.c.h.b16 %v1624
    %v1646 = vunpack.c.l.b16 %v1625
    %v1647 = vunpack.c.h.b16 %v1625
    %v1648 = vunpack.c.l.b16 %v1626
    %v1649 = vunpack.c.h.b16 %v1626
    %v1650 = vunpack.c.l.b16 %v1627
    %v1651 = vunpack.c.h.b16 %v1627
    %v1652 = vpack.c.b16 %v1638, %v1636
    %v1653 = vpack.c.b16 %v1639, %v1637
    %v1654 = vpack.c.b16 %v1642, %v1640
    %v1655 = vpack.c.b16 %v1643, %v1641
    %v1656 = vpack.c.b16 %v1646, %v1644
    %v1657 = vpack.c.b16 %v1647, %v1645
    %v1658 = vpack.c.b16 %v1650, %v1648
    %v1659 = vpack.c.b16 %v1651, %v1649
    %1668 = vmatpush.bf16.xpose.msra.mxu0 0
    %1669 = vmatpush.bf16.xpose.msra.mxu0 0
    %1670 = vmatpush.bf16.xpose.msra.mxu0 0
    %1671 = vmatpush.bf16.xpose.msra.mxu0 0
    %1672 = vmatpush.bf16.xpose.msra.mxu0 %v1658
    %1673 = vmatpush.bf16.xpose.msra.mxu0 %v1656
    %1674 = vmatpush.bf16.xpose.msra.mxu0 %v1654
    %1675 = vmatpush.bf16.xpose.msra.mxu0 %v1652
    %1676 = vmatmul.bf16.gmra.mxu0 %v1652
    %v1677 = vpop.f32.mrf.mxu0
    %v1678 = vadd.f32 0.0, %v1677
    %v1679 = vpop.f32.mrf.mxu0
    %v1680 = vadd.f32 0.0, %v1679
    %1681 = vmatmul.bf16.gmra.mxu0 %v1654
    %v1682 = vpop.f32.mrf.mxu0
    %v1683 = vadd.f32 0.0, %v1682
    %v1684 = vpop.f32.mrf.mxu0
    %v1685 = vadd.f32 0.0, %v1684
    %1686 = vmatmul.bf16.gmra.mxu0 %v1656
    %v1687 = vpop.f32.mrf.mxu0
    %v1688 = vadd.f32 0.0, %v1687
    %v1689 = vpop.f32.mrf.mxu0
    %v1690 = vadd.f32 0.0, %v1689
    %1691 = vmatmul.bf16.gmra.mxu0 %v1658
    %v1692 = vpop.f32.mrf.mxu0
    %v1693 = vadd.f32 0.0, %v1692
    %v1694 = vpop.f32.mrf.mxu0
    %v1695 = vadd.f32 0.0, %v1694
    %1696 = vdwg.mxu0
    %1697 = vmatpush.bf16.xpose.msra.mxu0 0
    %1698 = vmatpush.bf16.xpose.msra.mxu0 0
    %1699 = vmatpush.bf16.xpose.msra.mxu0 0
    %1700 = vmatpush.bf16.xpose.msra.mxu0 0
    %1701 = vmatpush.bf16.xpose.msra.mxu0 %v1659
    %1702 = vmatpush.bf16.xpose.msra.mxu0 %v1657
    %1703 = vmatpush.bf16.xpose.msra.mxu0 %v1655
    %1704 = vmatpush.bf16.xpose.msra.mxu0 %v1653
    %1705 = vmatmul.bf16.gmra.mxu0 %v1653
    %v1706 = vpop.f32.mrf.mxu0
    %v1707 = vadd.f32 %v1678, %v1706
    %v1708 = vpop.f32.mrf.mxu0
    %v1709 = vadd.f32 %v1680, %v1708
    %1710 = vmatmul.bf16.gmra.mxu0 %v1655
    %v1711 = vpop.f32.mrf.mxu0
    %v1712 = vadd.f32 %v1683, %v1711
    %v1713 = vpop.f32.mrf.mxu0
    %v1714 = vadd.f32 %v1685, %v1713
    %1715 = vmatmul.bf16.gmra.mxu0 %v1657
    %v1716 = vpop.f32.mrf.mxu0
    %v1717 = vadd.f32 %v1688, %v1716
    %v1718 = vpop.f32.mrf.mxu0
    %v1719 = vadd.f32 %v1690, %v1718
    %1720 = vmatmul.bf16.gmra.mxu0 %v1659
    %v1721 = vpop.f32.mrf.mxu0
    %v1722 = vadd.f32 %v1693, %v1721
    %v1723 = vpop.f32.mrf.mxu0
    %v1724 = vadd.f32 %v1695, %v1723
    %1725 = vdwg.mxu0
    %v1726 = vmul.f32 %v1707, %v1707
    %v1727 = vmul.f32 %v1709, %v1709
    %v1728 = vmul.f32 %v1712, %v1712
    %v1729 = vmul.f32 %v1714, %v1714
    %v1730 = vmul.f32 %v1717, %v1717
    %v1731 = vmul.f32 %v1719, %v1719
    %v1732 = vmul.f32 %v1722, %v1722
    %v1733 = vmul.f32 %v1724, %v1724
    %v1734 = vsel %vm97, %v1726, 0.0
    %1735 = vadd.xlane.f32.xlu0 %v1734
    %v1736 = vpop.xlane.xlu0 %1735
    %v1737 = vsel %vm97, %v1727, 0.0
    %1738 = vadd.xlane.f32.xlu0 %v1737
    %v1739 = vpop.xlane.xlu0 %1738
    %v1740 = vsel %vm97, %v1728, 0.0
    %1741 = vadd.xlane.f32.xlu0 %v1740
    %v1742 = vpop.xlane.xlu0 %1741
    %v1743 = vsel %vm97, %v1729, 0.0
    %1744 = vadd.xlane.f32.xlu0 %v1743
    %v1745 = vpop.xlane.xlu0 %1744
    %v1746 = vsel %vm97, %v1730, 0.0
    %1747 = vadd.xlane.f32.xlu0 %v1746
    %v1748 = vpop.xlane.xlu0 %1747
    %v1749 = vsel %vm97, %v1731, 0.0
    %1750 = vadd.xlane.f32.xlu0 %v1749
    %v1751 = vpop.xlane.xlu0 %1750
    %v1752 = vsel %vm97, %v1732, 0.0
    %1753 = vadd.xlane.f32.xlu0 %v1752
    %v1754 = vpop.xlane.xlu0 %1753
    %v1755 = vsel %vm97, %v1733, 0.0
    %1756 = vadd.xlane.f32.xlu0 %v1755
    %v1757 = vpop.xlane.xlu0 %1756
    %v1758 = vadd.f32 %v1736, %v1739
    %v1759 = vadd.f32 %v1758, %v1742
    %v1760 = vadd.f32 %v1759, %v1745
    %v1761 = vadd.f32 %v1760, %v1748
    %v1762 = vadd.f32 %v1761, %v1751
    %v1763 = vadd.f32 %v1762, %v1754
    %v1764 = vadd.f32 %v1763, %v1757
    %v1765 = vrot.slane %v1764, 4
    %v1766 = vadd.f32 %v1764, %v1765
    %v1767 = vrot.slane %v1766, 2
    %v1768 = vadd.f32 %v1766, %v1767
    %v1769 = vrot.slane %v1768, 1
    %v1770 = vadd.f32 %v1768, %v1769
    %v1771 = vunpack.c.l.bf16 %v1620
    %v1772 = vunpack.c.h.bf16 %v1620
    %v1773 = vunpack.c.l.bf16 %v1621
    %v1774 = vunpack.c.h.bf16 %v1621
    %v1775 = vunpack.c.l.bf16 %v1622
    %v1776 = vunpack.c.h.bf16 %v1622
    %v1777 = vunpack.c.l.bf16 %v1623
    %v1778 = vunpack.c.h.bf16 %v1623
    %v1779 = vunpack.c.l.bf16 %v1624
    %v1780 = vunpack.c.h.bf16 %v1624
    %v1781 = vunpack.c.l.bf16 %v1625
    %v1782 = vunpack.c.h.bf16 %v1625
    %v1783 = vunpack.c.l.bf16 %v1626
    %v1784 = vunpack.c.h.bf16 %v1626
    %v1785 = vunpack.c.l.bf16 %v1627
    %v1786 = vunpack.c.h.bf16 %v1627
    %v1787 = vmul.f32 %v1771, %v1771
    %v1788 = vmul.f32 %v1772, %v1772
    %v1789 = vmul.f32 %v1773, %v1773
    %v1790 = vmul.f32 %v1774, %v1774
    %v1791 = vmul.f32 %v1775, %v1775
    %v1792 = vmul.f32 %v1776, %v1776
    %v1793 = vmul.f32 %v1777, %v1777
    %v1794 = vmul.f32 %v1778, %v1778
    %v1795 = vmul.f32 %v1779, %v1779
    %v1796 = vmul.f32 %v1780, %v1780
    %v1797 = vmul.f32 %v1781, %v1781
    %v1798 = vmul.f32 %v1782, %v1782
    %v1799 = vmul.f32 %v1783, %v1783
    %v1800 = vmul.f32 %v1784, %v1784
    %v1801 = vmul.f32 %v1785, %v1785
    %v1802 = vmul.f32 %v1786, %v1786
    %v1803 = vadd.f32 %v1787, %v1788
    %1804 = vadd.xlane.f32.xlu0 %v1803
    %v1805 = vpop.xlane.xlu0 %1804
    %v1806 = vadd.f32 %v1789, %v1790
    %1807 = vadd.xlane.f32.xlu0 %v1806
    %v1808 = vpop.xlane.xlu0 %1807
    %v1809 = vadd.f32 %v1791, %v1792
    %1810 = vadd.xlane.f32.xlu0 %v1809
    %v1811 = vpop.xlane.xlu0 %1810
    %v1812 = vadd.f32 %v1793, %v1794
    %1813 = vadd.xlane.f32.xlu0 %v1812
    %v1814 = vpop.xlane.xlu0 %1813
    %v1815 = vadd.f32 %v1795, %v1796
    %1816 = vadd.xlane.f32.xlu0 %v1815
    %v1817 = vpop.xlane.xlu0 %1816
    %v1818 = vadd.f32 %v1797, %v1798
    %1819 = vadd.xlane.f32.xlu0 %v1818
    %v1820 = vpop.xlane.xlu0 %1819
    %v1821 = vadd.f32 %v1799, %v1800
    %1822 = vadd.xlane.f32.xlu0 %v1821
    %v1823 = vpop.xlane.xlu0 %1822
    %v1824 = vadd.f32 %v1801, %v1802
    %1825 = vadd.xlane.f32.xlu0 %v1824
    %v1826 = vpop.xlane.xlu0 %1825
    %v1827 = vadd.f32 %v1805, %v1808
    %v1828 = vadd.f32 %v1827, %v1811
    %v1829 = vadd.f32 %v1828, %v1814
    %v1830 = vadd.f32 %v1829, %v1817
    %v1831 = vadd.f32 %v1830, %v1820
    %v1832 = vadd.f32 %v1831, %v1823
    %v1833 = vadd.f32 %v1832, %v1826
    %v1834 = vrot.slane %v1833, 4
    %v1835 = vadd.f32 %v1833, %v1834
    %v1836 = vrot.slane %v1835, 2
    %v1837 = vadd.f32 %v1835, %v1836
    %v1838 = vrot.slane %v1837, 1
    %v1839 = vadd.f32 %v1837, %v1838
    %v1840 = vmul.f32 %v1839, 2.0
    %v1841 = vsub.f32 %v1770, %v1840
    %v1842 = vadd.f32 %v1841, 64.0
    %v1843 = vmul.f32 %v1842, 0.00024414063
    %v1844 = vadd.f32 %v1619, %v1843
    %s1845 = scalar_lea.vmem %s1, 128
    %v1846 = vld [vmem:[%s1845] sm:$0xf]
    %v1847 = vld [vmem:[%s1845 + $0x4] sm:$0xf]
    %v1848 = vld [vmem:[%s1845 + $0x8] sm:$0xf]
    %v1849 = vld [vmem:[%s1845 + $0xc] sm:$0xf]
    %v1850 = vld [vmem:[%s1845 + $0x10] sm:$0xf]
    %v1851 = vld [vmem:[%s1845 + $0x14] sm:$0xf]
    %v1852 = vld [vmem:[%s1845 + $0x18] sm:$0xf]
    %v1853 = vld [vmem:[%s1845 + $0x1c] sm:$0xf]
    %v1862 = vunpack.c.l.b16 %v1846
    %v1863 = vunpack.c.l.b16 %v1847
    %v1864 = vunpack.c.l.b16 %v1848
    %v1865 = vunpack.c.l.b16 %v1849
    %v1866 = vunpack.c.l.b16 %v1850
    %v1867 = vunpack.c.l.b16 %v1851
    %v1868 = vunpack.c.l.b16 %v1852
    %v1869 = vunpack.c.l.b16 %v1853
    %v1870 = vpack.c.b16 %v1863, %v1862
    %v1871 = vpack.c.b16 %v1865, %v1864
    %v1872 = vpack.c.b16 %v1867, %v1866
    %v1873 = vpack.c.b16 %v1869, %v1868
    %v1875 = vsel %vm97, %v1870, 0
    %v1878 = vsel %vm97, %v1871, 0
    %v1881 = vsel %vm97, %v1872, 0
    %v1884 = vsel %vm97, %v1873, 0
    %1886 = vmatpush.bf16.xpose.msra.mxu0 0
    %1887 = vmatpush.bf16.xpose.msra.mxu0 0
    %1888 = vmatpush.bf16.xpose.msra.mxu0 0
    %1889 = vmatpush.bf16.xpose.msra.mxu0 0
    %1890 = vmatpush.bf16.xpose.msra.mxu0 %v1884
    %1891 = vmatpush.bf16.xpose.msra.mxu0 %v1881
    %1892 = vmatpush.bf16.xpose.msra.mxu0 %v1878
    %1893 = vmatpush.bf16.xpose.msra.mxu0 %v1875
    %1894 = vmatmul.bf16.gmra.mxu0 %v1875
    %v1895 = vpop.f32.mrf.mxu0
    %v1896 = vadd.f32 0.0, %v1895
    %v1897 = vpop.f32.mrf.mxu0
    %v1898 = vadd.f32 0.0, %v1897
    %1899 = vmatmul.bf16.gmra.mxu0 %v1878
    %v1900 = vpop.f32.mrf.mxu0
    %v1901 = vadd.f32 0.0, %v1900
    %v1902 = vpop.f32.mrf.mxu0
    %v1903 = vadd.f32 0.0, %v1902
    %1904 = vmatmul.bf16.gmra.mxu0 %v1881
    %v1905 = vpop.f32.mrf.mxu0
    %v1906 = vadd.f32 0.0, %v1905
    %v1907 = vpop.f32.mrf.mxu0
    %v1908 = vadd.f32 0.0, %v1907
    %1909 = vmatmul.bf16.gmra.mxu0 %v1884
    %v1910 = vpop.f32.mrf.mxu0
    %v1911 = vadd.f32 0.0, %v1910
    %v1912 = vpop.f32.mrf.mxu0
    %v1913 = vadd.f32 0.0, %v1912
    %1914 = vdwg.mxu0
    %v1915 = vmul.f32 %v1896, %v1896
    %v1916 = vmul.f32 %v1898, %v1898
    %v1917 = vmul.f32 %v1901, %v1901
    %v1918 = vmul.f32 %v1903, %v1903
    %v1919 = vmul.f32 %v1906, %v1906
    %v1920 = vmul.f32 %v1908, %v1908
    %v1921 = vmul.f32 %v1911, %v1911
    %v1922 = vmul.f32 %v1913, %v1913
    %v1923 = vsel %vm97, %v1915, 0.0
    %1924 = vadd.xlane.f32.xlu0 %v1923
    %v1925 = vpop.xlane.xlu0 %1924
    %v1926 = vsel %vm97, %v1916, 0.0
    %1927 = vadd.xlane.f32.xlu0 %v1926
    %v1928 = vpop.xlane.xlu0 %1927
    %v1929 = vsel %vm97, %v1917, 0.0
    %1930 = vadd.xlane.f32.xlu0 %v1929
    %v1931 = vpop.xlane.xlu0 %1930
    %v1932 = vsel %vm97, %v1918, 0.0
    %1933 = vadd.xlane.f32.xlu0 %v1932
    %v1934 = vpop.xlane.xlu0 %1933
    %v1935 = vsel %vm97, %v1919, 0.0
    %1936 = vadd.xlane.f32.xlu0 %v1935
    %v1937 = vpop.xlane.xlu0 %1936
    %v1938 = vsel %vm97, %v1920, 0.0
    %1939 = vadd.xlane.f32.xlu0 %v1938
    %v1940 = vpop.xlane.xlu0 %1939
    %v1941 = vsel %vm97, %v1921, 0.0
    %1942 = vadd.xlane.f32.xlu0 %v1941
    %v1943 = vpop.xlane.xlu0 %1942
    %v1944 = vsel %vm97, %v1922, 0.0
    %1945 = vadd.xlane.f32.xlu0 %v1944
    %v1946 = vpop.xlane.xlu0 %1945
    %v1947 = vadd.f32 %v1925, %v1928
    %v1948 = vadd.f32 %v1947, %v1931
    %v1949 = vadd.f32 %v1948, %v1934
    %v1950 = vadd.f32 %v1949, %v1937
    %v1951 = vadd.f32 %v1950, %v1940
    %v1952 = vadd.f32 %v1951, %v1943
    %v1953 = vadd.f32 %v1952, %v1946
    %v1954 = vrot.slane %v1953, 4
    %v1955 = vadd.f32 %v1953, %v1954
    %v1956 = vrot.slane %v1955, 2
    %v1957 = vadd.f32 %v1955, %v1956
    %v1958 = vrot.slane %v1957, 1
    %v1959 = vadd.f32 %v1957, %v1958
    %v1960 = vunpack.c.l.bf16 %v1846
    %v1961 = vunpack.c.l.bf16 %v1847
    %v1962 = vunpack.c.l.bf16 %v1848
    %v1963 = vunpack.c.l.bf16 %v1849
    %v1964 = vunpack.c.l.bf16 %v1850
    %v1965 = vunpack.c.l.bf16 %v1851
    %v1966 = vunpack.c.l.bf16 %v1852
    %v1967 = vunpack.c.l.bf16 %v1853
    %v1968 = vmul.f32 %v1960, %v1960
    %v1969 = vmul.f32 %v1961, %v1961
    %v1970 = vmul.f32 %v1962, %v1962
    %v1971 = vmul.f32 %v1963, %v1963
    %v1972 = vmul.f32 %v1964, %v1964
    %v1973 = vmul.f32 %v1965, %v1965
    %v1974 = vmul.f32 %v1966, %v1966
    %v1975 = vmul.f32 %v1967, %v1967
    %v1976 = vsel %vm97, %v1968, 0.0
    %1977 = vadd.xlane.f32.xlu0 %v1976
    %v1978 = vpop.xlane.xlu0 %1977
    %v1979 = vsel %vm97, %v1969, 0.0
    %1980 = vadd.xlane.f32.xlu0 %v1979
    %v1981 = vpop.xlane.xlu0 %1980
    %v1982 = vsel %vm97, %v1970, 0.0
    %1983 = vadd.xlane.f32.xlu0 %v1982
    %v1984 = vpop.xlane.xlu0 %1983
    %v1985 = vsel %vm97, %v1971, 0.0
    %1986 = vadd.xlane.f32.xlu0 %v1985
    %v1987 = vpop.xlane.xlu0 %1986
    %v1988 = vsel %vm97, %v1972, 0.0
    %1989 = vadd.xlane.f32.xlu0 %v1988
    %v1990 = vpop.xlane.xlu0 %1989
    %v1991 = vsel %vm97, %v1973, 0.0
    %1992 = vadd.xlane.f32.xlu0 %v1991
    %v1993 = vpop.xlane.xlu0 %1992
    %v1994 = vsel %vm97, %v1974, 0.0
    %1995 = vadd.xlane.f32.xlu0 %v1994
    %v1996 = vpop.xlane.xlu0 %1995
    %v1997 = vsel %vm97, %v1975, 0.0
    %1998 = vadd.xlane.f32.xlu0 %v1997
    %v1999 = vpop.xlane.xlu0 %1998
    %v2000 = vadd.f32 %v1978, %v1981
    %v2001 = vadd.f32 %v2000, %v1984
    %v2002 = vadd.f32 %v2001, %v1987
    %v2003 = vadd.f32 %v2002, %v1990
    %v2004 = vadd.f32 %v2003, %v1993
    %v2005 = vadd.f32 %v2004, %v1996
    %v2006 = vadd.f32 %v2005, %v1999
    %v2007 = vrot.slane %v2006, 4
    %v2008 = vadd.f32 %v2006, %v2007
    %v2009 = vrot.slane %v2008, 2
    %v2010 = vadd.f32 %v2008, %v2009
    %v2011 = vrot.slane %v2010, 1
    %v2012 = vadd.f32 %v2010, %v2011
    %v2013 = vmul.f32 %v2012, 2.0
    %v2014 = vsub.f32 %v1959, %v2013
    %v2015 = vadd.f32 %v2014, 64.0
    %v2016 = vmul.f32 %v2015, 0.00024414063
    %v2017 = vadd.f32 %v1844, %v2016
    %s2018 = scalar_lea.vmem %s1, 160
    %v2019 = vld [vmem:[%s2018] sm:$0xf]
    %v2020 = vld [vmem:[%s2018 + $0x4] sm:$0xf]
    %v2021 = vld [vmem:[%s2018 + $0x8] sm:$0xf]
    %v2022 = vld [vmem:[%s2018 + $0xc] sm:$0xf]
    %v2023 = vld [vmem:[%s2018 + $0x10] sm:$0xf]
    %v2024 = vld [vmem:[%s2018 + $0x14] sm:$0xf]
    %v2025 = vld [vmem:[%s2018 + $0x18] sm:$0xf]
    %v2026 = vld [vmem:[%s2018 + $0x1c] sm:$0xf]
    %v2035 = vunpack.c.l.b16 %v2019
    %v2036 = vunpack.c.l.b16 %v2020
    %v2037 = vunpack.c.l.b16 %v2021
    %v2038 = vunpack.c.l.b16 %v2022
    %v2039 = vunpack.c.l.b16 %v2023
    %v2040 = vunpack.c.l.b16 %v2024
    %v2041 = vunpack.c.l.b16 %v2025
    %v2042 = vunpack.c.l.b16 %v2026
    %v2043 = vpack.c.b16 %v2036, %v2035
    %v2044 = vpack.c.b16 %v2038, %v2037
    %v2045 = vpack.c.b16 %v2040, %v2039
    %v2046 = vpack.c.b16 %v2042, %v2041
    %v2048 = vsel %vm97, %v2043, 0
    %v2051 = vsel %vm97, %v2044, 0
    %v2054 = vsel %vm97, %v2045, 0
    %v2057 = vsel %vm97, %v2046, 0
    %2059 = vmatpush.bf16.xpose.msra.mxu0 0
    %2060 = vmatpush.bf16.xpose.msra.mxu0 0
    %2061 = vmatpush.bf16.xpose.msra.mxu0 0
    %2062 = vmatpush.bf16.xpose.msra.mxu0 0
    %2063 = vmatpush.bf16.xpose.msra.mxu0 %v2057
    %2064 = vmatpush.bf16.xpose.msra.mxu0 %v2054
    %2065 = vmatpush.bf16.xpose.msra.mxu0 %v2051
    %2066 = vmatpush.bf16.xpose.msra.mxu0 %v2048
    %2067 = vmatmul.bf16.gmra.mxu0 %v2048
    %v2068 = vpop.f32.mrf.mxu0
    %v2069 = vadd.f32 0.0, %v2068
    %v2070 = vpop.f32.mrf.mxu0
    %v2071 = vadd.f32 0.0, %v2070
    %2072 = vmatmul.bf16.gmra.mxu0 %v2051
    %v2073 = vpop.f32.mrf.mxu0
    %v2074 = vadd.f32 0.0, %v2073
    %v2075 = vpop.f32.mrf.mxu0
    %v2076 = vadd.f32 0.0, %v2075
    %2077 = vmatmul.bf16.gmra.mxu0 %v2054
    %v2078 = vpop.f32.mrf.mxu0
    %v2079 = vadd.f32 0.0, %v2078
    %v2080 = vpop.f32.mrf.mxu0
    %v2081 = vadd.f32 0.0, %v2080
    %2082 = vmatmul.bf16.gmra.mxu0 %v2057
    %v2083 = vpop.f32.mrf.mxu0
    %v2084 = vadd.f32 0.0, %v2083
    %v2085 = vpop.f32.mrf.mxu0
    %v2086 = vadd.f32 0.0, %v2085
    %2087 = vdwg.mxu0
    %v2088 = vmul.f32 %v2069, %v2069
    %v2089 = vmul.f32 %v2071, %v2071
    %v2090 = vmul.f32 %v2074, %v2074
    %v2091 = vmul.f32 %v2076, %v2076
    %v2092 = vmul.f32 %v2079, %v2079
    %v2093 = vmul.f32 %v2081, %v2081
    %v2094 = vmul.f32 %v2084, %v2084
    %v2095 = vmul.f32 %v2086, %v2086
    %v2096 = vsel %vm97, %v2088, 0.0
    %2097 = vadd.xlane.f32.xlu0 %v2096
    %v2098 = vpop.xlane.xlu0 %2097
    %v2099 = vsel %vm97, %v2089, 0.0
    %2100 = vadd.xlane.f32.xlu0 %v2099
    %v2101 = vpop.xlane.xlu0 %2100
    %v2102 = vsel %vm97, %v2090, 0.0
    %2103 = vadd.xlane.f32.xlu0 %v2102
    %v2104 = vpop.xlane.xlu0 %2103
    %v2105 = vsel %vm97, %v2091, 0.0
    %2106 = vadd.xlane.f32.xlu0 %v2105
    %v2107 = vpop.xlane.xlu0 %2106
    %v2108 = vsel %vm97, %v2092, 0.0
    %2109 = vadd.xlane.f32.xlu0 %v2108
    %v2110 = vpop.xlane.xlu0 %2109
    %v2111 = vsel %vm97, %v2093, 0.0
    %2112 = vadd.xlane.f32.xlu0 %v2111
    %v2113 = vpop.xlane.xlu0 %2112
    %v2114 = vsel %vm97, %v2094, 0.0
    %2115 = vadd.xlane.f32.xlu0 %v2114
    %v2116 = vpop.xlane.xlu0 %2115
    %v2117 = vsel %vm97, %v2095, 0.0
    %2118 = vadd.xlane.f32.xlu0 %v2117
    %v2119 = vpop.xlane.xlu0 %2118
    %v2120 = vadd.f32 %v2098, %v2101
    %v2121 = vadd.f32 %v2120, %v2104
    %v2122 = vadd.f32 %v2121, %v2107
    %v2123 = vadd.f32 %v2122, %v2110
    %v2124 = vadd.f32 %v2123, %v2113
    %v2125 = vadd.f32 %v2124, %v2116
    %v2126 = vadd.f32 %v2125, %v2119
    %v2127 = vrot.slane %v2126, 4
    %v2128 = vadd.f32 %v2126, %v2127
    %v2129 = vrot.slane %v2128, 2
    %v2130 = vadd.f32 %v2128, %v2129
    %v2131 = vrot.slane %v2130, 1
    %v2132 = vadd.f32 %v2130, %v2131
    %v2133 = vunpack.c.l.bf16 %v2019
    %v2134 = vunpack.c.l.bf16 %v2020
    %v2135 = vunpack.c.l.bf16 %v2021
    %v2136 = vunpack.c.l.bf16 %v2022
    %v2137 = vunpack.c.l.bf16 %v2023
    %v2138 = vunpack.c.l.bf16 %v2024
    %v2139 = vunpack.c.l.bf16 %v2025
    %v2140 = vunpack.c.l.bf16 %v2026
    %v2141 = vmul.f32 %v2133, %v2133
    %v2142 = vmul.f32 %v2134, %v2134
    %v2143 = vmul.f32 %v2135, %v2135
    %v2144 = vmul.f32 %v2136, %v2136
    %v2145 = vmul.f32 %v2137, %v2137
    %v2146 = vmul.f32 %v2138, %v2138
    %v2147 = vmul.f32 %v2139, %v2139
    %v2148 = vmul.f32 %v2140, %v2140
    %v2149 = vsel %vm97, %v2141, 0.0
    %2150 = vadd.xlane.f32.xlu0 %v2149
    %v2151 = vpop.xlane.xlu0 %2150
    %v2152 = vsel %vm97, %v2142, 0.0
    %2153 = vadd.xlane.f32.xlu0 %v2152
    %v2154 = vpop.xlane.xlu0 %2153
    %v2155 = vsel %vm97, %v2143, 0.0
    %2156 = vadd.xlane.f32.xlu0 %v2155
    %v2157 = vpop.xlane.xlu0 %2156
    %v2158 = vsel %vm97, %v2144, 0.0
    %2159 = vadd.xlane.f32.xlu0 %v2158
    %v2160 = vpop.xlane.xlu0 %2159
    %v2161 = vsel %vm97, %v2145, 0.0
    %2162 = vadd.xlane.f32.xlu0 %v2161
    %v2163 = vpop.xlane.xlu0 %2162
    %v2164 = vsel %vm97, %v2146, 0.0
    %2165 = vadd.xlane.f32.xlu0 %v2164
    %v2166 = vpop.xlane.xlu0 %2165
    %v2167 = vsel %vm97, %v2147, 0.0
    %2168 = vadd.xlane.f32.xlu0 %v2167
    %v2169 = vpop.xlane.xlu0 %2168
    %v2170 = vsel %vm97, %v2148, 0.0
    %2171 = vadd.xlane.f32.xlu0 %v2170
    %v2172 = vpop.xlane.xlu0 %2171
    %v2173 = vadd.f32 %v2151, %v2154
    %v2174 = vadd.f32 %v2173, %v2157
    %v2175 = vadd.f32 %v2174, %v2160
    %v2176 = vadd.f32 %v2175, %v2163
    %v2177 = vadd.f32 %v2176, %v2166
    %v2178 = vadd.f32 %v2177, %v2169
    %v2179 = vadd.f32 %v2178, %v2172
    %v2180 = vrot.slane %v2179, 4
    %v2181 = vadd.f32 %v2179, %v2180
    %v2182 = vrot.slane %v2181, 2
    %v2183 = vadd.f32 %v2181, %v2182
    %v2184 = vrot.slane %v2183, 1
    %v2185 = vadd.f32 %v2183, %v2184
    %v2186 = vmul.f32 %v2185, 2.0
    %v2187 = vsub.f32 %v2132, %v2186
    %v2188 = vadd.f32 %v2187, 64.0
    %v2189 = vmul.f32 %v2188, 0.00024414063
    %v2190 = vadd.f32 %v2017, %v2189
    %s2191 = scalar_lea.vmem %s1, 192
    %v2192 = vld [vmem:[%s2191] sm:$0xf]
    %v2193 = vld [vmem:[%s2191 + $0x4] sm:$0xf]
    %v2194 = vld [vmem:[%s2191 + $0x8] sm:$0xf]
    %v2195 = vld [vmem:[%s2191 + $0xc] sm:$0xf]
    %v2196 = vld [vmem:[%s2191 + $0x10] sm:$0xf]
    %v2197 = vld [vmem:[%s2191 + $0x14] sm:$0xf]
    %v2198 = vld [vmem:[%s2191 + $0x18] sm:$0xf]
    %v2199 = vld [vmem:[%s2191 + $0x1c] sm:$0xf]
    %v2208 = vunpack.c.l.b16 %v2192
    %v2209 = vunpack.c.l.b16 %v2193
    %v2210 = vunpack.c.l.b16 %v2194
    %v2211 = vunpack.c.l.b16 %v2195
    %v2212 = vunpack.c.l.b16 %v2196
    %v2213 = vunpack.c.l.b16 %v2197
    %v2214 = vunpack.c.l.b16 %v2198
    %v2215 = vunpack.c.l.b16 %v2199
    %v2216 = vpack.c.b16 %v2209, %v2208
    %v2217 = vpack.c.b16 %v2211, %v2210
    %v2218 = vpack.c.b16 %v2213, %v2212
    %v2219 = vpack.c.b16 %v2215, %v2214
    %v2221 = vsel %vm97, %v2216, 0
    %v2224 = vsel %vm97, %v2217, 0
    %v2227 = vsel %vm97, %v2218, 0
    %v2230 = vsel %vm97, %v2219, 0
    %2232 = vmatpush.bf16.xpose.msra.mxu0 0
    %2233 = vmatpush.bf16.xpose.msra.mxu0 0
    %2234 = vmatpush.bf16.xpose.msra.mxu0 0
    %2235 = vmatpush.bf16.xpose.msra.mxu0 0
    %2236 = vmatpush.bf16.xpose.msra.mxu0 %v2230
    %2237 = vmatpush.bf16.xpose.msra.mxu0 %v2227
    %2238 = vmatpush.bf16.xpose.msra.mxu0 %v2224
    %2239 = vmatpush.bf16.xpose.msra.mxu0 %v2221
    %2240 = vmatmul.bf16.gmra.mxu0 %v2221
    %v2241 = vpop.f32.mrf.mxu0
    %v2242 = vadd.f32 0.0, %v2241
    %v2243 = vpop.f32.mrf.mxu0
    %v2244 = vadd.f32 0.0, %v2243
    %2245 = vmatmul.bf16.gmra.mxu0 %v2224
    %v2246 = vpop.f32.mrf.mxu0
    %v2247 = vadd.f32 0.0, %v2246
    %v2248 = vpop.f32.mrf.mxu0
    %v2249 = vadd.f32 0.0, %v2248
    %2250 = vmatmul.bf16.gmra.mxu0 %v2227
    %v2251 = vpop.f32.mrf.mxu0
    %v2252 = vadd.f32 0.0, %v2251
    %v2253 = vpop.f32.mrf.mxu0
    %v2254 = vadd.f32 0.0, %v2253
    %2255 = vmatmul.bf16.gmra.mxu0 %v2230
    %v2256 = vpop.f32.mrf.mxu0
    %v2257 = vadd.f32 0.0, %v2256
    %v2258 = vpop.f32.mrf.mxu0
    %v2259 = vadd.f32 0.0, %v2258
    %2260 = vdwg.mxu0
    %v2261 = vmul.f32 %v2242, %v2242
    %v2262 = vmul.f32 %v2244, %v2244
    %v2263 = vmul.f32 %v2247, %v2247
    %v2264 = vmul.f32 %v2249, %v2249
    %v2265 = vmul.f32 %v2252, %v2252
    %v2266 = vmul.f32 %v2254, %v2254
    %v2267 = vmul.f32 %v2257, %v2257
    %v2268 = vmul.f32 %v2259, %v2259
    %v2269 = vsel %vm97, %v2261, 0.0
    %2270 = vadd.xlane.f32.xlu0 %v2269
    %v2271 = vpop.xlane.xlu0 %2270
    %v2272 = vsel %vm97, %v2262, 0.0
    %2273 = vadd.xlane.f32.xlu0 %v2272
    %v2274 = vpop.xlane.xlu0 %2273
    %v2275 = vsel %vm97, %v2263, 0.0
    %2276 = vadd.xlane.f32.xlu0 %v2275
    %v2277 = vpop.xlane.xlu0 %2276
    %v2278 = vsel %vm97, %v2264, 0.0
    %2279 = vadd.xlane.f32.xlu0 %v2278
    %v2280 = vpop.xlane.xlu0 %2279
    %v2281 = vsel %vm97, %v2265, 0.0
    %2282 = vadd.xlane.f32.xlu0 %v2281
    %v2283 = vpop.xlane.xlu0 %2282
    %v2284 = vsel %vm97, %v2266, 0.0
    %2285 = vadd.xlane.f32.xlu0 %v2284
    %v2286 = vpop.xlane.xlu0 %2285
    %v2287 = vsel %vm97, %v2267, 0.0
    %2288 = vadd.xlane.f32.xlu0 %v2287
    %v2289 = vpop.xlane.xlu0 %2288
    %v2290 = vsel %vm97, %v2268, 0.0
    %2291 = vadd.xlane.f32.xlu0 %v2290
    %v2292 = vpop.xlane.xlu0 %2291
    %v2293 = vadd.f32 %v2271, %v2274
    %v2294 = vadd.f32 %v2293, %v2277
    %v2295 = vadd.f32 %v2294, %v2280
    %v2296 = vadd.f32 %v2295, %v2283
    %v2297 = vadd.f32 %v2296, %v2286
    %v2298 = vadd.f32 %v2297, %v2289
    %v2299 = vadd.f32 %v2298, %v2292
    %v2300 = vrot.slane %v2299, 4
    %v2301 = vadd.f32 %v2299, %v2300
    %v2302 = vrot.slane %v2301, 2
    %v2303 = vadd.f32 %v2301, %v2302
    %v2304 = vrot.slane %v2303, 1
    %v2305 = vadd.f32 %v2303, %v2304
    %v2306 = vunpack.c.l.bf16 %v2192
    %v2307 = vunpack.c.l.bf16 %v2193
    %v2308 = vunpack.c.l.bf16 %v2194
    %v2309 = vunpack.c.l.bf16 %v2195
    %v2310 = vunpack.c.l.bf16 %v2196
    %v2311 = vunpack.c.l.bf16 %v2197
    %v2312 = vunpack.c.l.bf16 %v2198
    %v2313 = vunpack.c.l.bf16 %v2199
    %v2314 = vmul.f32 %v2306, %v2306
    %v2315 = vmul.f32 %v2307, %v2307
    %v2316 = vmul.f32 %v2308, %v2308
    %v2317 = vmul.f32 %v2309, %v2309
    %v2318 = vmul.f32 %v2310, %v2310
    %v2319 = vmul.f32 %v2311, %v2311
    %v2320 = vmul.f32 %v2312, %v2312
    %v2321 = vmul.f32 %v2313, %v2313
    %v2322 = vsel %vm97, %v2314, 0.0
    %2323 = vadd.xlane.f32.xlu0 %v2322
    %v2324 = vpop.xlane.xlu0 %2323
    %v2325 = vsel %vm97, %v2315, 0.0
    %2326 = vadd.xlane.f32.xlu0 %v2325
    %v2327 = vpop.xlane.xlu0 %2326
    %v2328 = vsel %vm97, %v2316, 0.0
    %2329 = vadd.xlane.f32.xlu0 %v2328
    %v2330 = vpop.xlane.xlu0 %2329
    %v2331 = vsel %vm97, %v2317, 0.0
    %2332 = vadd.xlane.f32.xlu0 %v2331
    %v2333 = vpop.xlane.xlu0 %2332
    %v2334 = vsel %vm97, %v2318, 0.0
    %2335 = vadd.xlane.f32.xlu0 %v2334
    %v2336 = vpop.xlane.xlu0 %2335
    %v2337 = vsel %vm97, %v2319, 0.0
    %2338 = vadd.xlane.f32.xlu0 %v2337
    %v2339 = vpop.xlane.xlu0 %2338
    %v2340 = vsel %vm97, %v2320, 0.0
    %2341 = vadd.xlane.f32.xlu0 %v2340
    %v2342 = vpop.xlane.xlu0 %2341
    %v2343 = vsel %vm97, %v2321, 0.0
    %2344 = vadd.xlane.f32.xlu0 %v2343
    %v2345 = vpop.xlane.xlu0 %2344
    %v2346 = vadd.f32 %v2324, %v2327
    %v2347 = vadd.f32 %v2346, %v2330
    %v2348 = vadd.f32 %v2347, %v2333
    %v2349 = vadd.f32 %v2348, %v2336
    %v2350 = vadd.f32 %v2349, %v2339
    %v2351 = vadd.f32 %v2350, %v2342
    %v2352 = vadd.f32 %v2351, %v2345
    %v2353 = vrot.slane %v2352, 4
    %v2354 = vadd.f32 %v2352, %v2353
    %v2355 = vrot.slane %v2354, 2
    %v2356 = vadd.f32 %v2354, %v2355
    %v2357 = vrot.slane %v2356, 1
    %v2358 = vadd.f32 %v2356, %v2357
    %v2359 = vmul.f32 %v2358, 2.0
    %v2360 = vsub.f32 %v2305, %v2359
    %v2361 = vadd.f32 %v2360, 64.0
    %v2362 = vmul.f32 %v2361, 0.00024414063
    %v2363 = vadd.f32 %v2190, %v2362
    %s2364 = scalar_lea.vmem %s1, 224
    %v2365 = vld [vmem:[%s2364] sm:$0xf]
    %v2366 = vld [vmem:[%s2364 + $0x4] sm:$0xf]
    %v2367 = vld [vmem:[%s2364 + $0x8] sm:$0xf]
    %v2368 = vld [vmem:[%s2364 + $0xc] sm:$0xf]
    %v2369 = vld [vmem:[%s2364 + $0x10] sm:$0xf]
    %v2370 = vld [vmem:[%s2364 + $0x14] sm:$0xf]
    %v2371 = vld [vmem:[%s2364 + $0x18] sm:$0xf]
    %v2372 = vld [vmem:[%s2364 + $0x1c] sm:$0xf]
    %v2381 = vunpack.c.l.b16 %v2365
    %v2382 = vunpack.c.l.b16 %v2366
    %v2383 = vunpack.c.l.b16 %v2367
    %v2384 = vunpack.c.l.b16 %v2368
    %v2385 = vunpack.c.l.b16 %v2369
    %v2386 = vunpack.c.l.b16 %v2370
    %v2387 = vunpack.c.l.b16 %v2371
    %v2388 = vunpack.c.l.b16 %v2372
    %v2389 = vpack.c.b16 %v2382, %v2381
    %v2390 = vpack.c.b16 %v2384, %v2383
    %v2391 = vpack.c.b16 %v2386, %v2385
    %v2392 = vpack.c.b16 %v2388, %v2387
    %v2394 = vsel %vm97, %v2389, 0
    %v2397 = vsel %vm97, %v2390, 0
    %v2400 = vsel %vm97, %v2391, 0
    %v2403 = vsel %vm97, %v2392, 0
    %2405 = vmatpush.bf16.xpose.msra.mxu0 0
    %2406 = vmatpush.bf16.xpose.msra.mxu0 0
    %2407 = vmatpush.bf16.xpose.msra.mxu0 0
    %2408 = vmatpush.bf16.xpose.msra.mxu0 0
    %2409 = vmatpush.bf16.xpose.msra.mxu0 %v2403
    %2410 = vmatpush.bf16.xpose.msra.mxu0 %v2400
    %2411 = vmatpush.bf16.xpose.msra.mxu0 %v2397
    %2412 = vmatpush.bf16.xpose.msra.mxu0 %v2394
    %2413 = vmatmul.bf16.gmra.mxu0 %v2394
    %v2414 = vpop.f32.mrf.mxu0
    %v2415 = vadd.f32 0.0, %v2414
    %v2416 = vpop.f32.mrf.mxu0
    %v2417 = vadd.f32 0.0, %v2416
    %2418 = vmatmul.bf16.gmra.mxu0 %v2397
    %v2419 = vpop.f32.mrf.mxu0
    %v2420 = vadd.f32 0.0, %v2419
    %v2421 = vpop.f32.mrf.mxu0
    %v2422 = vadd.f32 0.0, %v2421
    %2423 = vmatmul.bf16.gmra.mxu0 %v2400
    %v2424 = vpop.f32.mrf.mxu0
    %v2425 = vadd.f32 0.0, %v2424
    %v2426 = vpop.f32.mrf.mxu0
    %v2427 = vadd.f32 0.0, %v2426
    %2428 = vmatmul.bf16.gmra.mxu0 %v2403
    %v2429 = vpop.f32.mrf.mxu0
    %v2430 = vadd.f32 0.0, %v2429
    %v2431 = vpop.f32.mrf.mxu0
    %v2432 = vadd.f32 0.0, %v2431
    %2433 = vdwg.mxu0
    %v2434 = vmul.f32 %v2415, %v2415
    %v2435 = vmul.f32 %v2417, %v2417
    %v2436 = vmul.f32 %v2420, %v2420
    %v2437 = vmul.f32 %v2422, %v2422
    %v2438 = vmul.f32 %v2425, %v2425
    %v2439 = vmul.f32 %v2427, %v2427
    %v2440 = vmul.f32 %v2430, %v2430
    %v2441 = vmul.f32 %v2432, %v2432
    %v2442 = vsel %vm97, %v2434, 0.0
    %2443 = vadd.xlane.f32.xlu0 %v2442
    %v2444 = vpop.xlane.xlu0 %2443
    %v2445 = vsel %vm97, %v2435, 0.0
    %2446 = vadd.xlane.f32.xlu0 %v2445
    %v2447 = vpop.xlane.xlu0 %2446
    %v2448 = vsel %vm97, %v2436, 0.0
    %2449 = vadd.xlane.f32.xlu0 %v2448
    %v2450 = vpop.xlane.xlu0 %2449
    %v2451 = vsel %vm97, %v2437, 0.0
    %2452 = vadd.xlane.f32.xlu0 %v2451
    %v2453 = vpop.xlane.xlu0 %2452
    %v2454 = vsel %vm97, %v2438, 0.0
    %2455 = vadd.xlane.f32.xlu0 %v2454
    %v2456 = vpop.xlane.xlu0 %2455
    %v2457 = vsel %vm97, %v2439, 0.0
    %2458 = vadd.xlane.f32.xlu0 %v2457
    %v2459 = vpop.xlane.xlu0 %2458
    %v2460 = vsel %vm97, %v2440, 0.0
    %2461 = vadd.xlane.f32.xlu0 %v2460
    %v2462 = vpop.xlane.xlu0 %2461
    %v2463 = vsel %vm97, %v2441, 0.0
    %2464 = vadd.xlane.f32.xlu0 %v2463
    %v2465 = vpop.xlane.xlu0 %2464
    %v2466 = vadd.f32 %v2444, %v2447
    %v2467 = vadd.f32 %v2466, %v2450
    %v2468 = vadd.f32 %v2467, %v2453
    %v2469 = vadd.f32 %v2468, %v2456
    %v2470 = vadd.f32 %v2469, %v2459
    %v2471 = vadd.f32 %v2470, %v2462
    %v2472 = vadd.f32 %v2471, %v2465
    %v2473 = vrot.slane %v2472, 4
    %v2474 = vadd.f32 %v2472, %v2473
    %v2475 = vrot.slane %v2474, 2
    %v2476 = vadd.f32 %v2474, %v2475
    %v2477 = vrot.slane %v2476, 1
    %v2478 = vadd.f32 %v2476, %v2477
    %v2479 = vunpack.c.l.bf16 %v2365
    %v2480 = vunpack.c.l.bf16 %v2366
    %v2481 = vunpack.c.l.bf16 %v2367
    %v2482 = vunpack.c.l.bf16 %v2368
    %v2483 = vunpack.c.l.bf16 %v2369
    %v2484 = vunpack.c.l.bf16 %v2370
    %v2485 = vunpack.c.l.bf16 %v2371
    %v2486 = vunpack.c.l.bf16 %v2372
    %v2487 = vmul.f32 %v2479, %v2479
    %v2488 = vmul.f32 %v2480, %v2480
    %v2489 = vmul.f32 %v2481, %v2481
    %v2490 = vmul.f32 %v2482, %v2482
    %v2491 = vmul.f32 %v2483, %v2483
    %v2492 = vmul.f32 %v2484, %v2484
    %v2493 = vmul.f32 %v2485, %v2485
    %v2494 = vmul.f32 %v2486, %v2486
    %v2495 = vsel %vm97, %v2487, 0.0
    %2496 = vadd.xlane.f32.xlu0 %v2495
    %v2497 = vpop.xlane.xlu0 %2496
    %v2498 = vsel %vm97, %v2488, 0.0
    %2499 = vadd.xlane.f32.xlu0 %v2498
    %v2500 = vpop.xlane.xlu0 %2499
    %v2501 = vsel %vm97, %v2489, 0.0
    %2502 = vadd.xlane.f32.xlu0 %v2501
    %v2503 = vpop.xlane.xlu0 %2502
    %v2504 = vsel %vm97, %v2490, 0.0
    %2505 = vadd.xlane.f32.xlu0 %v2504
    %v2506 = vpop.xlane.xlu0 %2505
    %v2507 = vsel %vm97, %v2491, 0.0
    %2508 = vadd.xlane.f32.xlu0 %v2507
    %v2509 = vpop.xlane.xlu0 %2508
    %v2510 = vsel %vm97, %v2492, 0.0
    %2511 = vadd.xlane.f32.xlu0 %v2510
    %v2512 = vpop.xlane.xlu0 %2511
    %v2513 = vsel %vm97, %v2493, 0.0
    %2514 = vadd.xlane.f32.xlu0 %v2513
    %v2515 = vpop.xlane.xlu0 %2514
    %v2516 = vsel %vm97, %v2494, 0.0
    %2517 = vadd.xlane.f32.xlu0 %v2516
    %v2518 = vpop.xlane.xlu0 %2517
    %v2519 = vadd.f32 %v2497, %v2500
    %v2520 = vadd.f32 %v2519, %v2503
    %v2521 = vadd.f32 %v2520, %v2506
    %v2522 = vadd.f32 %v2521, %v2509
    %v2523 = vadd.f32 %v2522, %v2512
    %v2524 = vadd.f32 %v2523, %v2515
    %v2525 = vadd.f32 %v2524, %v2518
    %v2526 = vrot.slane %v2525, 4
    %v2527 = vadd.f32 %v2525, %v2526
    %v2528 = vrot.slane %v2527, 2
    %v2529 = vadd.f32 %v2527, %v2528
    %v2530 = vrot.slane %v2529, 1
    %v2531 = vadd.f32 %v2529, %v2530
    %v2532 = vmul.f32 %v2531, 2.0
    %v2533 = vsub.f32 %v2478, %v2532
    %v2534 = vadd.f32 %v2533, 64.0
    %v2535 = vmul.f32 %v2534, 0.00024414063
    %v2536 = vadd.f32 %v2363, %v2535
    %s2537 = scalar_lea.vmem %s2, 128
    %v2538 = vld [vmem:[%s2537] sm:$0xf]
    %v2539 = vld [vmem:[%s2537 + $0x4] sm:$0xf]
    %v2540 = vld [vmem:[%s2537 + $0x8] sm:$0xf]
    %v2541 = vld [vmem:[%s2537 + $0xc] sm:$0xf]
    %v2542 = vld [vmem:[%s2537 + $0x10] sm:$0xf]
    %v2543 = vld [vmem:[%s2537 + $0x14] sm:$0xf]
    %v2544 = vld [vmem:[%s2537 + $0x18] sm:$0xf]
    %v2545 = vld [vmem:[%s2537 + $0x1c] sm:$0xf]
    %v2546 = vld [vmem:[%s2537 + $0x20] sm:$0xf]
    %v2547 = vld [vmem:[%s2537 + $0x24] sm:$0xf]
    %v2548 = vld [vmem:[%s2537 + $0x28] sm:$0xf]
    %v2549 = vld [vmem:[%s2537 + $0x2c] sm:$0xf]
    %v2550 = vld [vmem:[%s2537 + $0x30] sm:$0xf]
    %v2551 = vld [vmem:[%s2537 + $0x34] sm:$0xf]
    %v2552 = vld [vmem:[%s2537 + $0x38] sm:$0xf]
    %v2553 = vld [vmem:[%s2537 + $0x3c] sm:$0xf]
    %v2554 = vld [vmem:[%s2537 + $0x40] sm:$0xf]
    %v2555 = vld [vmem:[%s2537 + $0x44] sm:$0xf]
    %v2556 = vld [vmem:[%s2537 + $0x48] sm:$0xf]
    %v2557 = vld [vmem:[%s2537 + $0x4c] sm:$0xf]
    %v2558 = vld [vmem:[%s2537 + $0x50] sm:$0xf]
    %v2559 = vld [vmem:[%s2537 + $0x54] sm:$0xf]
    %v2560 = vld [vmem:[%s2537 + $0x58] sm:$0xf]
    %v2561 = vld [vmem:[%s2537 + $0x5c] sm:$0xf]
    %v2562 = vld [vmem:[%s2537 + $0x60] sm:$0xf]
    %v2563 = vld [vmem:[%s2537 + $0x64] sm:$0xf]
    %v2564 = vld [vmem:[%s2537 + $0x68] sm:$0xf]
    %v2565 = vld [vmem:[%s2537 + $0x6c] sm:$0xf]
    %v2566 = vld [vmem:[%s2537 + $0x70] sm:$0xf]
    %v2567 = vld [vmem:[%s2537 + $0x74] sm:$0xf]
    %v2568 = vld [vmem:[%s2537 + $0x78] sm:$0xf]
    %v2569 = vld [vmem:[%s2537 + $0x7c] sm:$0xf]
    %v2602 = vunpack.c.l.b16 %v2538
    %v2603 = vunpack.c.l.b16 %v2539
    %v2604 = vunpack.c.l.b16 %v2540
    %v2605 = vunpack.c.l.b16 %v2541
    %v2606 = vunpack.c.l.b16 %v2542
    %v2607 = vunpack.c.l.b16 %v2543
    %v2608 = vunpack.c.l.b16 %v2544
    %v2609 = vunpack.c.l.b16 %v2545
    %v2610 = vunpack.c.l.b16 %v2546
    %v2611 = vunpack.c.l.b16 %v2547
    %v2612 = vunpack.c.l.b16 %v2548
    %v2613 = vunpack.c.l.b16 %v2549
    %v2614 = vunpack.c.l.b16 %v2550
    %v2615 = vunpack.c.l.b16 %v2551
    %v2616 = vunpack.c.l.b16 %v2552
    %v2617 = vunpack.c.l.b16 %v2553
    %v2618 = vunpack.c.l.b16 %v2554
    %v2619 = vunpack.c.l.b16 %v2555
    %v2620 = vunpack.c.l.b16 %v2556
    %v2621 = vunpack.c.l.b16 %v2557
    %v2622 = vunpack.c.l.b16 %v2558
    %v2623 = vunpack.c.l.b16 %v2559
    %v2624 = vunpack.c.l.b16 %v2560
    %v2625 = vunpack.c.l.b16 %v2561
    %v2626 = vunpack.c.l.b16 %v2562
    %v2627 = vunpack.c.l.b16 %v2563
    %v2628 = vunpack.c.l.b16 %v2564
    %v2629 = vunpack.c.l.b16 %v2565
    %v2630 = vunpack.c.l.b16 %v2566
    %v2631 = vunpack.c.l.b16 %v2567
    %v2632 = vunpack.c.l.b16 %v2568
    %v2633 = vunpack.c.l.b16 %v2569
    %v2634 = vpack.c.b16 %v2603, %v2602
    %v2635 = vpack.c.b16 %v2605, %v2604
    %v2636 = vpack.c.b16 %v2607, %v2606
    %v2637 = vpack.c.b16 %v2609, %v2608
    %v2638 = vpack.c.b16 %v2611, %v2610
    %v2639 = vpack.c.b16 %v2613, %v2612
    %v2640 = vpack.c.b16 %v2615, %v2614
    %v2641 = vpack.c.b16 %v2617, %v2616
    %v2642 = vpack.c.b16 %v2619, %v2618
    %v2643 = vpack.c.b16 %v2621, %v2620
    %v2644 = vpack.c.b16 %v2623, %v2622
    %v2645 = vpack.c.b16 %v2625, %v2624
    %v2646 = vpack.c.b16 %v2627, %v2626
    %v2647 = vpack.c.b16 %v2629, %v2628
    %v2648 = vpack.c.b16 %v2631, %v2630
    %v2649 = vpack.c.b16 %v2633, %v2632
    %v2651 = vsel %vm97, %v2634, 0
    %v2654 = vsel %vm97, %v2635, 0
    %v2657 = vsel %vm97, %v2636, 0
    %v2660 = vsel %vm97, %v2637, 0
    %v2663 = vsel %vm97, %v2638, 0
    %v2666 = vsel %vm97, %v2639, 0
    %v2669 = vsel %vm97, %v2640, 0
    %v2672 = vsel %vm97, %v2641, 0
    %v2675 = vsel %vm97, %v2642, 0
    %v2678 = vsel %vm97, %v2643, 0
    %v2681 = vsel %vm97, %v2644, 0
    %v2684 = vsel %vm97, %v2645, 0
    %v2687 = vsel %vm97, %v2646, 0
    %v2690 = vsel %vm97, %v2647, 0
    %v2693 = vsel %vm97, %v2648, 0
    %v2696 = vsel %vm97, %v2649, 0
    %2698 = vmatpush.bf16.xpose.msra.mxu0 %v2672
    %2699 = vmatpush.bf16.xpose.msra.mxu0 %v2669
    %2700 = vmatpush.bf16.xpose.msra.mxu0 %v2666
    %2701 = vmatpush.bf16.xpose.msra.mxu0 %v2663
    %2702 = vmatpush.bf16.xpose.msra.mxu0 %v2660
    %2703 = vmatpush.bf16.xpose.msra.mxu0 %v2657
    %2704 = vmatpush.bf16.xpose.msra.mxu0 %v2654
    %2705 = vmatpush.bf16.xpose.msra.mxu0 %v2651
    %2706 = vmatmul.bf16.gmra.mxu0 %v2651
    %v2707 = vpop.f32.mrf.mxu0
    %v2708 = vadd.f32 0.0, %v2707
    %v2709 = vpop.f32.mrf.mxu0
    %v2710 = vadd.f32 0.0, %v2709
    %2711 = vmatmul.bf16.gmra.mxu0 %v2654
    %v2712 = vpop.f32.mrf.mxu0
    %v2713 = vadd.f32 0.0, %v2712
    %v2714 = vpop.f32.mrf.mxu0
    %v2715 = vadd.f32 0.0, %v2714
    %2716 = vmatmul.bf16.gmra.mxu0 %v2657
    %v2717 = vpop.f32.mrf.mxu0
    %v2718 = vadd.f32 0.0, %v2717
    %v2719 = vpop.f32.mrf.mxu0
    %v2720 = vadd.f32 0.0, %v2719
    %2721 = vmatmul.bf16.gmra.mxu0 %v2660
    %v2722 = vpop.f32.mrf.mxu0
    %v2723 = vadd.f32 0.0, %v2722
    %v2724 = vpop.f32.mrf.mxu0
    %v2725 = vadd.f32 0.0, %v2724
    %2726 = vmatmul.bf16.gmra.mxu0 %v2663
    %v2727 = vpop.f32.mrf.mxu0
    %v2728 = vadd.f32 0.0, %v2727
    %v2729 = vpop.f32.mrf.mxu0
    %v2730 = vadd.f32 0.0, %v2729
    %2731 = vmatmul.bf16.gmra.mxu0 %v2666
    %v2732 = vpop.f32.mrf.mxu0
    %v2733 = vadd.f32 0.0, %v2732
    %v2734 = vpop.f32.mrf.mxu0
    %v2735 = vadd.f32 0.0, %v2734
    %2736 = vmatmul.bf16.gmra.mxu0 %v2669
    %v2737 = vpop.f32.mrf.mxu0
    %v2738 = vadd.f32 0.0, %v2737
    %v2739 = vpop.f32.mrf.mxu0
    %v2740 = vadd.f32 0.0, %v2739
    %2741 = vmatmul.bf16.gmra.mxu0 %v2672
    %v2742 = vpop.f32.mrf.mxu0
    %v2743 = vadd.f32 0.0, %v2742
    %v2744 = vpop.f32.mrf.mxu0
    %v2745 = vadd.f32 0.0, %v2744
    %2746 = vmatmul.bf16.gmra.mxu0 %v2675
    %v2747 = vpop.f32.mrf.mxu0
    %v2748 = vadd.f32 0.0, %v2747
    %v2749 = vpop.f32.mrf.mxu0
    %v2750 = vadd.f32 0.0, %v2749
    %2751 = vmatmul.bf16.gmra.mxu0 %v2678
    %v2752 = vpop.f32.mrf.mxu0
    %v2753 = vadd.f32 0.0, %v2752
    %v2754 = vpop.f32.mrf.mxu0
    %v2755 = vadd.f32 0.0, %v2754
    %2756 = vmatmul.bf16.gmra.mxu0 %v2681
    %v2757 = vpop.f32.mrf.mxu0
    %v2758 = vadd.f32 0.0, %v2757
    %v2759 = vpop.f32.mrf.mxu0
    %v2760 = vadd.f32 0.0, %v2759
    %2761 = vmatmul.bf16.gmra.mxu0 %v2684
    %v2762 = vpop.f32.mrf.mxu0
    %v2763 = vadd.f32 0.0, %v2762
    %v2764 = vpop.f32.mrf.mxu0
    %v2765 = vadd.f32 0.0, %v2764
    %2766 = vmatmul.bf16.gmra.mxu0 %v2687
    %v2767 = vpop.f32.mrf.mxu0
    %v2768 = vadd.f32 0.0, %v2767
    %v2769 = vpop.f32.mrf.mxu0
    %v2770 = vadd.f32 0.0, %v2769
    %2771 = vmatmul.bf16.gmra.mxu0 %v2690
    %v2772 = vpop.f32.mrf.mxu0
    %v2773 = vadd.f32 0.0, %v2772
    %v2774 = vpop.f32.mrf.mxu0
    %v2775 = vadd.f32 0.0, %v2774
    %2776 = vmatmul.bf16.gmra.mxu0 %v2693
    %v2777 = vpop.f32.mrf.mxu0
    %v2778 = vadd.f32 0.0, %v2777
    %v2779 = vpop.f32.mrf.mxu0
    %v2780 = vadd.f32 0.0, %v2779
    %2781 = vmatmul.bf16.gmra.mxu0 %v2696
    %v2782 = vpop.f32.mrf.mxu0
    %v2783 = vadd.f32 0.0, %v2782
    %v2784 = vpop.f32.mrf.mxu0
    %v2785 = vadd.f32 0.0, %v2784
    %2786 = vdwg.mxu0
    %2787 = vmatpush.bf16.xpose.msra.mxu0 %v2696
    %2788 = vmatpush.bf16.xpose.msra.mxu0 %v2693
    %2789 = vmatpush.bf16.xpose.msra.mxu0 %v2690
    %2790 = vmatpush.bf16.xpose.msra.mxu0 %v2687
    %2791 = vmatpush.bf16.xpose.msra.mxu0 %v2684
    %2792 = vmatpush.bf16.xpose.msra.mxu0 %v2681
    %2793 = vmatpush.bf16.xpose.msra.mxu0 %v2678
    %2794 = vmatpush.bf16.xpose.msra.mxu0 %v2675
    %2795 = vmatmul.bf16.gmra.mxu0 %v2651
    %v2796 = vpop.f32.mrf.mxu0
    %v2797 = vadd.f32 0.0, %v2796
    %v2798 = vpop.f32.mrf.mxu0
    %v2799 = vadd.f32 0.0, %v2798
    %2800 = vmatmul.bf16.gmra.mxu0 %v2654
    %v2801 = vpop.f32.mrf.mxu0
    %v2802 = vadd.f32 0.0, %v2801
    %v2803 = vpop.f32.mrf.mxu0
    %v2804 = vadd.f32 0.0, %v2803
    %2805 = vmatmul.bf16.gmra.mxu0 %v2657
    %v2806 = vpop.f32.mrf.mxu0
    %v2807 = vadd.f32 0.0, %v2806
    %v2808 = vpop.f32.mrf.mxu0
    %v2809 = vadd.f32 0.0, %v2808
    %2810 = vmatmul.bf16.gmra.mxu0 %v2660
    %v2811 = vpop.f32.mrf.mxu0
    %v2812 = vadd.f32 0.0, %v2811
    %v2813 = vpop.f32.mrf.mxu0
    %v2814 = vadd.f32 0.0, %v2813
    %2815 = vmatmul.bf16.gmra.mxu0 %v2663
    %v2816 = vpop.f32.mrf.mxu0
    %v2817 = vadd.f32 0.0, %v2816
    %v2818 = vpop.f32.mrf.mxu0
    %v2819 = vadd.f32 0.0, %v2818
    %2820 = vmatmul.bf16.gmra.mxu0 %v2666
    %v2821 = vpop.f32.mrf.mxu0
    %v2822 = vadd.f32 0.0, %v2821
    %v2823 = vpop.f32.mrf.mxu0
    %v2824 = vadd.f32 0.0, %v2823
    %2825 = vmatmul.bf16.gmra.mxu0 %v2669
    %v2826 = vpop.f32.mrf.mxu0
    %v2827 = vadd.f32 0.0, %v2826
    %v2828 = vpop.f32.mrf.mxu0
    %v2829 = vadd.f32 0.0, %v2828
    %2830 = vmatmul.bf16.gmra.mxu0 %v2672
    %v2831 = vpop.f32.mrf.mxu0
    %v2832 = vadd.f32 0.0, %v2831
    %v2833 = vpop.f32.mrf.mxu0
    %v2834 = vadd.f32 0.0, %v2833
    %2835 = vmatmul.bf16.gmra.mxu0 %v2675
    %v2836 = vpop.f32.mrf.mxu0
    %v2837 = vadd.f32 0.0, %v2836
    %v2838 = vpop.f32.mrf.mxu0
    %v2839 = vadd.f32 0.0, %v2838
    %2840 = vmatmul.bf16.gmra.mxu0 %v2678
    %v2841 = vpop.f32.mrf.mxu0
    %v2842 = vadd.f32 0.0, %v2841
    %v2843 = vpop.f32.mrf.mxu0
    %v2844 = vadd.f32 0.0, %v2843
    %2845 = vmatmul.bf16.gmra.mxu0 %v2681
    %v2846 = vpop.f32.mrf.mxu0
    %v2847 = vadd.f32 0.0, %v2846
    %v2848 = vpop.f32.mrf.mxu0
    %v2849 = vadd.f32 0.0, %v2848
    %2850 = vmatmul.bf16.gmra.mxu0 %v2684
    %v2851 = vpop.f32.mrf.mxu0
    %v2852 = vadd.f32 0.0, %v2851
    %v2853 = vpop.f32.mrf.mxu0
    %v2854 = vadd.f32 0.0, %v2853
    %2855 = vmatmul.bf16.gmra.mxu0 %v2687
    %v2856 = vpop.f32.mrf.mxu0
    %v2857 = vadd.f32 0.0, %v2856
    %v2858 = vpop.f32.mrf.mxu0
    %v2859 = vadd.f32 0.0, %v2858
    %2860 = vmatmul.bf16.gmra.mxu0 %v2690
    %v2861 = vpop.f32.mrf.mxu0
    %v2862 = vadd.f32 0.0, %v2861
    %v2863 = vpop.f32.mrf.mxu0
    %v2864 = vadd.f32 0.0, %v2863
    %2865 = vmatmul.bf16.gmra.mxu0 %v2693
    %v2866 = vpop.f32.mrf.mxu0
    %v2867 = vadd.f32 0.0, %v2866
    %v2868 = vpop.f32.mrf.mxu0
    %v2869 = vadd.f32 0.0, %v2868
    %2870 = vmatmul.bf16.gmra.mxu0 %v2696
    %v2871 = vpop.f32.mrf.mxu0
    %v2872 = vadd.f32 0.0, %v2871
    %v2873 = vpop.f32.mrf.mxu0
    %v2874 = vadd.f32 0.0, %v2873
    %2875 = vdwg.mxu0
    %v2876 = vmul.f32 %v2708, %v2708
    %v2877 = vmul.f32 %v2797, %v2797
    %v2878 = vmul.f32 %v2710, %v2710
    %v2879 = vmul.f32 %v2799, %v2799
    %v2880 = vmul.f32 %v2713, %v2713
    %v2881 = vmul.f32 %v2802, %v2802
    %v2882 = vmul.f32 %v2715, %v2715
    %v2883 = vmul.f32 %v2804, %v2804
    %v2884 = vmul.f32 %v2718, %v2718
    %v2885 = vmul.f32 %v2807, %v2807
    %v2886 = vmul.f32 %v2720, %v2720
    %v2887 = vmul.f32 %v2809, %v2809
    %v2888 = vmul.f32 %v2723, %v2723
    %v2889 = vmul.f32 %v2812, %v2812
    %v2890 = vmul.f32 %v2725, %v2725
    %v2891 = vmul.f32 %v2814, %v2814
    %v2892 = vmul.f32 %v2728, %v2728
    %v2893 = vmul.f32 %v2817, %v2817
    %v2894 = vmul.f32 %v2730, %v2730
    %v2895 = vmul.f32 %v2819, %v2819
    %v2896 = vmul.f32 %v2733, %v2733
    %v2897 = vmul.f32 %v2822, %v2822
    %v2898 = vmul.f32 %v2735, %v2735
    %v2899 = vmul.f32 %v2824, %v2824
    %v2900 = vmul.f32 %v2738, %v2738
    %v2901 = vmul.f32 %v2827, %v2827
    %v2902 = vmul.f32 %v2740, %v2740
    %v2903 = vmul.f32 %v2829, %v2829
    %v2904 = vmul.f32 %v2743, %v2743
    %v2905 = vmul.f32 %v2832, %v2832
    %v2906 = vmul.f32 %v2745, %v2745
    %v2907 = vmul.f32 %v2834, %v2834
    %v2908 = vmul.f32 %v2748, %v2748
    %v2909 = vmul.f32 %v2837, %v2837
    %v2910 = vmul.f32 %v2750, %v2750
    %v2911 = vmul.f32 %v2839, %v2839
    %v2912 = vmul.f32 %v2753, %v2753
    %v2913 = vmul.f32 %v2842, %v2842
    %v2914 = vmul.f32 %v2755, %v2755
    %v2915 = vmul.f32 %v2844, %v2844
    %v2916 = vmul.f32 %v2758, %v2758
    %v2917 = vmul.f32 %v2847, %v2847
    %v2918 = vmul.f32 %v2760, %v2760
    %v2919 = vmul.f32 %v2849, %v2849
    %v2920 = vmul.f32 %v2763, %v2763
    %v2921 = vmul.f32 %v2852, %v2852
    %v2922 = vmul.f32 %v2765, %v2765
    %v2923 = vmul.f32 %v2854, %v2854
    %v2924 = vmul.f32 %v2768, %v2768
    %v2925 = vmul.f32 %v2857, %v2857
    %v2926 = vmul.f32 %v2770, %v2770
    %v2927 = vmul.f32 %v2859, %v2859
    %v2928 = vmul.f32 %v2773, %v2773
    %v2929 = vmul.f32 %v2862, %v2862
    %v2930 = vmul.f32 %v2775, %v2775
    %v2931 = vmul.f32 %v2864, %v2864
    %v2932 = vmul.f32 %v2778, %v2778
    %v2933 = vmul.f32 %v2867, %v2867
    %v2934 = vmul.f32 %v2780, %v2780
    %v2935 = vmul.f32 %v2869, %v2869
    %v2936 = vmul.f32 %v2783, %v2783
    %v2937 = vmul.f32 %v2872, %v2872
    %v2938 = vmul.f32 %v2785, %v2785
    %v2939 = vmul.f32 %v2874, %v2874
    %v2940 = vadd.f32 %v2876, %v2877
    %2941 = vadd.xlane.f32.xlu0 %v2940
    %v2942 = vpop.xlane.xlu0 %2941
    %v2943 = vadd.f32 %v2878, %v2879
    %2944 = vadd.xlane.f32.xlu0 %v2943
    %v2945 = vpop.xlane.xlu0 %2944
    %v2946 = vadd.f32 %v2880, %v2881
    %2947 = vadd.xlane.f32.xlu0 %v2946
    %v2948 = vpop.xlane.xlu0 %2947
    %v2949 = vadd.f32 %v2882, %v2883
    %2950 = vadd.xlane.f32.xlu0 %v2949
    %v2951 = vpop.xlane.xlu0 %2950
    %v2952 = vadd.f32 %v2884, %v2885
    %2953 = vadd.xlane.f32.xlu0 %v2952
    %v2954 = vpop.xlane.xlu0 %2953
    %v2955 = vadd.f32 %v2886, %v2887
    %2956 = vadd.xlane.f32.xlu0 %v2955
    %v2957 = vpop.xlane.xlu0 %2956
    %v2958 = vadd.f32 %v2888, %v2889
    %2959 = vadd.xlane.f32.xlu0 %v2958
    %v2960 = vpop.xlane.xlu0 %2959
    %v2961 = vadd.f32 %v2890, %v2891
    %2962 = vadd.xlane.f32.xlu0 %v2961
    %v2963 = vpop.xlane.xlu0 %2962
    %v2964 = vadd.f32 %v2892, %v2893
    %2965 = vadd.xlane.f32.xlu0 %v2964
    %v2966 = vpop.xlane.xlu0 %2965
    %v2967 = vadd.f32 %v2894, %v2895
    %2968 = vadd.xlane.f32.xlu0 %v2967
    %v2969 = vpop.xlane.xlu0 %2968
    %v2970 = vadd.f32 %v2896, %v2897
    %2971 = vadd.xlane.f32.xlu0 %v2970
    %v2972 = vpop.xlane.xlu0 %2971
    %v2973 = vadd.f32 %v2898, %v2899
    %2974 = vadd.xlane.f32.xlu0 %v2973
    %v2975 = vpop.xlane.xlu0 %2974
    %v2976 = vadd.f32 %v2900, %v2901
    %2977 = vadd.xlane.f32.xlu0 %v2976
    %v2978 = vpop.xlane.xlu0 %2977
    %v2979 = vadd.f32 %v2902, %v2903
    %2980 = vadd.xlane.f32.xlu0 %v2979
    %v2981 = vpop.xlane.xlu0 %2980
    %v2982 = vadd.f32 %v2904, %v2905
    %2983 = vadd.xlane.f32.xlu0 %v2982
    %v2984 = vpop.xlane.xlu0 %2983
    %v2985 = vadd.f32 %v2906, %v2907
    %2986 = vadd.xlane.f32.xlu0 %v2985
    %v2987 = vpop.xlane.xlu0 %2986
    %v2988 = vadd.f32 %v2908, %v2909
    %2989 = vadd.xlane.f32.xlu0 %v2988
    %v2990 = vpop.xlane.xlu0 %2989
    %v2991 = vadd.f32 %v2910, %v2911
    %2992 = vadd.xlane.f32.xlu0 %v2991
    %v2993 = vpop.xlane.xlu0 %2992
    %v2994 = vadd.f32 %v2912, %v2913
    %2995 = vadd.xlane.f32.xlu0 %v2994
    %v2996 = vpop.xlane.xlu0 %2995
    %v2997 = vadd.f32 %v2914, %v2915
    %2998 = vadd.xlane.f32.xlu0 %v2997
    %v2999 = vpop.xlane.xlu0 %2998
    %v3000 = vadd.f32 %v2916, %v2917
    %3001 = vadd.xlane.f32.xlu0 %v3000
    %v3002 = vpop.xlane.xlu0 %3001
    %v3003 = vadd.f32 %v2918, %v2919
    %3004 = vadd.xlane.f32.xlu0 %v3003
    %v3005 = vpop.xlane.xlu0 %3004
    %v3006 = vadd.f32 %v2920, %v2921
    %3007 = vadd.xlane.f32.xlu0 %v3006
    %v3008 = vpop.xlane.xlu0 %3007
    %v3009 = vadd.f32 %v2922, %v2923
    %3010 = vadd.xlane.f32.xlu0 %v3009
    %v3011 = vpop.xlane.xlu0 %3010
    %v3012 = vadd.f32 %v2924, %v2925
    %3013 = vadd.xlane.f32.xlu0 %v3012
    %v3014 = vpop.xlane.xlu0 %3013
    %v3015 = vadd.f32 %v2926, %v2927
    %3016 = vadd.xlane.f32.xlu0 %v3015
    %v3017 = vpop.xlane.xlu0 %3016
    %v3018 = vadd.f32 %v2928, %v2929
    %3019 = vadd.xlane.f32.xlu0 %v3018
    %v3020 = vpop.xlane.xlu0 %3019
    %v3021 = vadd.f32 %v2930, %v2931
    %3022 = vadd.xlane.f32.xlu0 %v3021
    %v3023 = vpop.xlane.xlu0 %3022
    %v3024 = vadd.f32 %v2932, %v2933
    %3025 = vadd.xlane.f32.xlu0 %v3024
    %v3026 = vpop.xlane.xlu0 %3025
    %v3027 = vadd.f32 %v2934, %v2935
    %3028 = vadd.xlane.f32.xlu0 %v3027
    %v3029 = vpop.xlane.xlu0 %3028
    %v3030 = vadd.f32 %v2936, %v2937
    %3031 = vadd.xlane.f32.xlu0 %v3030
    %v3032 = vpop.xlane.xlu0 %3031
    %v3033 = vadd.f32 %v2938, %v2939
    %3034 = vadd.xlane.f32.xlu0 %v3033
    %v3035 = vpop.xlane.xlu0 %3034
    %v3036 = vadd.f32 %v2942, %v2945
    %v3037 = vadd.f32 %v3036, %v2948
    %v3038 = vadd.f32 %v3037, %v2951
    %v3039 = vadd.f32 %v3038, %v2954
    %v3040 = vadd.f32 %v3039, %v2957
    %v3041 = vadd.f32 %v3040, %v2960
    %v3042 = vadd.f32 %v3041, %v2963
    %v3043 = vadd.f32 %v3042, %v2966
    %v3044 = vadd.f32 %v3043, %v2969
    %v3045 = vadd.f32 %v3044, %v2972
    %v3046 = vadd.f32 %v3045, %v2975
    %v3047 = vadd.f32 %v3046, %v2978
    %v3048 = vadd.f32 %v3047, %v2981
    %v3049 = vadd.f32 %v3048, %v2984
    %v3050 = vadd.f32 %v3049, %v2987
    %v3051 = vadd.f32 %v3050, %v2990
    %v3052 = vadd.f32 %v3051, %v2993
    %v3053 = vadd.f32 %v3052, %v2996
    %v3054 = vadd.f32 %v3053, %v2999
    %v3055 = vadd.f32 %v3054, %v3002
    %v3056 = vadd.f32 %v3055, %v3005
    %v3057 = vadd.f32 %v3056, %v3008
    %v3058 = vadd.f32 %v3057, %v3011
    %v3059 = vadd.f32 %v3058, %v3014
    %v3060 = vadd.f32 %v3059, %v3017
    %v3061 = vadd.f32 %v3060, %v3020
    %v3062 = vadd.f32 %v3061, %v3023
    %v3063 = vadd.f32 %v3062, %v3026
    %v3064 = vadd.f32 %v3063, %v3029
    %v3065 = vadd.f32 %v3064, %v3032
    %v3066 = vadd.f32 %v3065, %v3035
    %v3067 = vrot.slane %v3066, 4
    %v3068 = vadd.f32 %v3066, %v3067
    %v3069 = vrot.slane %v3068, 2
    %v3070 = vadd.f32 %v3068, %v3069
    %v3071 = vrot.slane %v3070, 1
    %v3072 = vadd.f32 %v3070, %v3071
    %v3073 = vunpack.c.l.bf16 %v2538
    %v3074 = vunpack.c.l.bf16 %v2539
    %v3075 = vunpack.c.l.bf16 %v2540
    %v3076 = vunpack.c.l.bf16 %v2541
    %v3077 = vunpack.c.l.bf16 %v2542
    %v3078 = vunpack.c.l.bf16 %v2543
    %v3079 = vunpack.c.l.bf16 %v2544
    %v3080 = vunpack.c.l.bf16 %v2545
    %v3081 = vunpack.c.l.bf16 %v2546
    %v3082 = vunpack.c.l.bf16 %v2547
    %v3083 = vunpack.c.l.bf16 %v2548
    %v3084 = vunpack.c.l.bf16 %v2549
    %v3085 = vunpack.c.l.bf16 %v2550
    %v3086 = vunpack.c.l.bf16 %v2551
    %v3087 = vunpack.c.l.bf16 %v2552
    %v3088 = vunpack.c.l.bf16 %v2553
    %v3089 = vunpack.c.l.bf16 %v2554
    %v3090 = vunpack.c.l.bf16 %v2555
    %v3091 = vunpack.c.l.bf16 %v2556
    %v3092 = vunpack.c.l.bf16 %v2557
    %v3093 = vunpack.c.l.bf16 %v2558
    %v3094 = vunpack.c.l.bf16 %v2559
    %v3095 = vunpack.c.l.bf16 %v2560
    %v3096 = vunpack.c.l.bf16 %v2561
    %v3097 = vunpack.c.l.bf16 %v2562
    %v3098 = vunpack.c.l.bf16 %v2563
    %v3099 = vunpack.c.l.bf16 %v2564
    %v3100 = vunpack.c.l.bf16 %v2565
    %v3101 = vunpack.c.l.bf16 %v2566
    %v3102 = vunpack.c.l.bf16 %v2567
    %v3103 = vunpack.c.l.bf16 %v2568
    %v3104 = vunpack.c.l.bf16 %v2569
    %v3105 = vmul.f32 %v3073, %v3073
    %v3106 = vmul.f32 %v3074, %v3074
    %v3107 = vmul.f32 %v3075, %v3075
    %v3108 = vmul.f32 %v3076, %v3076
    %v3109 = vmul.f32 %v3077, %v3077
    %v3110 = vmul.f32 %v3078, %v3078
    %v3111 = vmul.f32 %v3079, %v3079
    %v3112 = vmul.f32 %v3080, %v3080
    %v3113 = vmul.f32 %v3081, %v3081
    %v3114 = vmul.f32 %v3082, %v3082
    %v3115 = vmul.f32 %v3083, %v3083
    %v3116 = vmul.f32 %v3084, %v3084
    %v3117 = vmul.f32 %v3085, %v3085
    %v3118 = vmul.f32 %v3086, %v3086
    %v3119 = vmul.f32 %v3087, %v3087
    %v3120 = vmul.f32 %v3088, %v3088
    %v3121 = vmul.f32 %v3089, %v3089
    %v3122 = vmul.f32 %v3090, %v3090
    %v3123 = vmul.f32 %v3091, %v3091
    %v3124 = vmul.f32 %v3092, %v3092
    %v3125 = vmul.f32 %v3093, %v3093
    %v3126 = vmul.f32 %v3094, %v3094
    %v3127 = vmul.f32 %v3095, %v3095
    %v3128 = vmul.f32 %v3096, %v3096
    %v3129 = vmul.f32 %v3097, %v3097
    %v3130 = vmul.f32 %v3098, %v3098
    %v3131 = vmul.f32 %v3099, %v3099
    %v3132 = vmul.f32 %v3100, %v3100
    %v3133 = vmul.f32 %v3101, %v3101
    %v3134 = vmul.f32 %v3102, %v3102
    %v3135 = vmul.f32 %v3103, %v3103
    %v3136 = vmul.f32 %v3104, %v3104
    %v3137 = vsel %vm97, %v3105, 0.0
    %3138 = vadd.xlane.f32.xlu0 %v3137
    %v3139 = vpop.xlane.xlu0 %3138
    %v3140 = vsel %vm97, %v3106, 0.0
    %3141 = vadd.xlane.f32.xlu0 %v3140
    %v3142 = vpop.xlane.xlu0 %3141
    %v3143 = vsel %vm97, %v3107, 0.0
    %3144 = vadd.xlane.f32.xlu0 %v3143
    %v3145 = vpop.xlane.xlu0 %3144
    %v3146 = vsel %vm97, %v3108, 0.0
    %3147 = vadd.xlane.f32.xlu0 %v3146
    %v3148 = vpop.xlane.xlu0 %3147
    %v3149 = vsel %vm97, %v3109, 0.0
    %3150 = vadd.xlane.f32.xlu0 %v3149
    %v3151 = vpop.xlane.xlu0 %3150
    %v3152 = vsel %vm97, %v3110, 0.0
    %3153 = vadd.xlane.f32.xlu0 %v3152
    %v3154 = vpop.xlane.xlu0 %3153
    %v3155 = vsel %vm97, %v3111, 0.0
    %3156 = vadd.xlane.f32.xlu0 %v3155
    %v3157 = vpop.xlane.xlu0 %3156
    %v3158 = vsel %vm97, %v3112, 0.0
    %3159 = vadd.xlane.f32.xlu0 %v3158
    %v3160 = vpop.xlane.xlu0 %3159
    %v3161 = vsel %vm97, %v3113, 0.0
    %3162 = vadd.xlane.f32.xlu0 %v3161
    %v3163 = vpop.xlane.xlu0 %3162
    %v3164 = vsel %vm97, %v3114, 0.0
    %3165 = vadd.xlane.f32.xlu0 %v3164
    %v3166 = vpop.xlane.xlu0 %3165
    %v3167 = vsel %vm97, %v3115, 0.0
    %3168 = vadd.xlane.f32.xlu0 %v3167
    %v3169 = vpop.xlane.xlu0 %3168
    %v3170 = vsel %vm97, %v3116, 0.0
    %3171 = vadd.xlane.f32.xlu0 %v3170
    %v3172 = vpop.xlane.xlu0 %3171
    %v3173 = vsel %vm97, %v3117, 0.0
    %3174 = vadd.xlane.f32.xlu0 %v3173
    %v3175 = vpop.xlane.xlu0 %3174
    %v3176 = vsel %vm97, %v3118, 0.0
    %3177 = vadd.xlane.f32.xlu0 %v3176
    %v3178 = vpop.xlane.xlu0 %3177
    %v3179 = vsel %vm97, %v3119, 0.0
    %3180 = vadd.xlane.f32.xlu0 %v3179
    %v3181 = vpop.xlane.xlu0 %3180
    %v3182 = vsel %vm97, %v3120, 0.0
    %3183 = vadd.xlane.f32.xlu0 %v3182
    %v3184 = vpop.xlane.xlu0 %3183
    %v3185 = vsel %vm97, %v3121, 0.0
    %3186 = vadd.xlane.f32.xlu0 %v3185
    %v3187 = vpop.xlane.xlu0 %3186
    %v3188 = vsel %vm97, %v3122, 0.0
    %3189 = vadd.xlane.f32.xlu0 %v3188
    %v3190 = vpop.xlane.xlu0 %3189
    %v3191 = vsel %vm97, %v3123, 0.0
    %3192 = vadd.xlane.f32.xlu0 %v3191
    %v3193 = vpop.xlane.xlu0 %3192
    %v3194 = vsel %vm97, %v3124, 0.0
    %3195 = vadd.xlane.f32.xlu0 %v3194
    %v3196 = vpop.xlane.xlu0 %3195
    %v3197 = vsel %vm97, %v3125, 0.0
    %3198 = vadd.xlane.f32.xlu0 %v3197
    %v3199 = vpop.xlane.xlu0 %3198
    %v3200 = vsel %vm97, %v3126, 0.0
    %3201 = vadd.xlane.f32.xlu0 %v3200
    %v3202 = vpop.xlane.xlu0 %3201
    %v3203 = vsel %vm97, %v3127, 0.0
    %3204 = vadd.xlane.f32.xlu0 %v3203
    %v3205 = vpop.xlane.xlu0 %3204
    %v3206 = vsel %vm97, %v3128, 0.0
    %3207 = vadd.xlane.f32.xlu0 %v3206
    %v3208 = vpop.xlane.xlu0 %3207
    %v3209 = vsel %vm97, %v3129, 0.0
    %3210 = vadd.xlane.f32.xlu0 %v3209
    %v3211 = vpop.xlane.xlu0 %3210
    %v3212 = vsel %vm97, %v3130, 0.0
    %3213 = vadd.xlane.f32.xlu0 %v3212
    %v3214 = vpop.xlane.xlu0 %3213
    %v3215 = vsel %vm97, %v3131, 0.0
    %3216 = vadd.xlane.f32.xlu0 %v3215
    %v3217 = vpop.xlane.xlu0 %3216
    %v3218 = vsel %vm97, %v3132, 0.0
    %3219 = vadd.xlane.f32.xlu0 %v3218
    %v3220 = vpop.xlane.xlu0 %3219
    %v3221 = vsel %vm97, %v3133, 0.0
    %3222 = vadd.xlane.f32.xlu0 %v3221
    %v3223 = vpop.xlane.xlu0 %3222
    %v3224 = vsel %vm97, %v3134, 0.0
    %3225 = vadd.xlane.f32.xlu0 %v3224
    %v3226 = vpop.xlane.xlu0 %3225
    %v3227 = vsel %vm97, %v3135, 0.0
    %3228 = vadd.xlane.f32.xlu0 %v3227
    %v3229 = vpop.xlane.xlu0 %3228
    %v3230 = vsel %vm97, %v3136, 0.0
    %3231 = vadd.xlane.f32.xlu0 %v3230
    %v3232 = vpop.xlane.xlu0 %3231
    %v3233 = vadd.f32 %v3139, %v3142
    %v3234 = vadd.f32 %v3233, %v3145
    %v3235 = vadd.f32 %v3234, %v3148
    %v3236 = vadd.f32 %v3235, %v3151
    %v3237 = vadd.f32 %v3236, %v3154
    %v3238 = vadd.f32 %v3237, %v3157
    %v3239 = vadd.f32 %v3238, %v3160
    %v3240 = vadd.f32 %v3239, %v3163
    %v3241 = vadd.f32 %v3240, %v3166
    %v3242 = vadd.f32 %v3241, %v3169
    %v3243 = vadd.f32 %v3242, %v3172
    %v3244 = vadd.f32 %v3243, %v3175
    %v3245 = vadd.f32 %v3244, %v3178
    %v3246 = vadd.f32 %v3245, %v3181
    %v3247 = vadd.f32 %v3246, %v3184
    %v3248 = vadd.f32 %v3247, %v3187
    %v3249 = vadd.f32 %v3248, %v3190
    %v3250 = vadd.f32 %v3249, %v3193
    %v3251 = vadd.f32 %v3250, %v3196
    %v3252 = vadd.f32 %v3251, %v3199
    %v3253 = vadd.f32 %v3252, %v3202
    %v3254 = vadd.f32 %v3253, %v3205
    %v3255 = vadd.f32 %v3254, %v3208
    %v3256 = vadd.f32 %v3255, %v3211
    %v3257 = vadd.f32 %v3256, %v3214
    %v3258 = vadd.f32 %v3257, %v3217
    %v3259 = vadd.f32 %v3258, %v3220
    %v3260 = vadd.f32 %v3259, %v3223
    %v3261 = vadd.f32 %v3260, %v3226
    %v3262 = vadd.f32 %v3261, %v3229
    %v3263 = vadd.f32 %v3262, %v3232
    %v3264 = vrot.slane %v3263, 4
    %v3265 = vadd.f32 %v3263, %v3264
    %v3266 = vrot.slane %v3265, 2
    %v3267 = vadd.f32 %v3265, %v3266
    %v3268 = vrot.slane %v3267, 1
    %v3269 = vadd.f32 %v3267, %v3268
    %v3270 = vmul.f32 %v3269, 2.0
    %v3271 = vsub.f32 %v3072, %v3270
    %v3272 = vadd.f32 %v3271, 256.0
    %v3273 = vmul.f32 %v3272, 1.5258789e-05
    %v3274 = vadd.f32 %v2536, %v3273
    %s3275 = scalar_lea.vmem %s3, 64
    %v3276 = vld [vmem:[%s3275] sm:$0xff]
    %v3277 = vld [vmem:[%s3275 + $0x8] sm:$0xff]
    %v3278 = vld [vmem:[%s3275 + $0x10] sm:$0xff]
    %v3279 = vld [vmem:[%s3275 + $0x18] sm:$0xff]
    %v3280 = vld [vmem:[%s3275 + $0x20] sm:$0xff]
    %v3281 = vld [vmem:[%s3275 + $0x28] sm:$0xff]
    %v3282 = vld [vmem:[%s3275 + $0x30] sm:$0xff]
    %v3283 = vld [vmem:[%s3275 + $0x38] sm:$0xff]
    %v3292 = vunpack.c.l.b16 %v3276
    %v3293 = vunpack.c.h.b16 %v3276
    %v3294 = vunpack.c.l.b16 %v3277
    %v3295 = vunpack.c.h.b16 %v3277
    %v3296 = vunpack.c.l.b16 %v3278
    %v3297 = vunpack.c.h.b16 %v3278
    %v3298 = vunpack.c.l.b16 %v3279
    %v3299 = vunpack.c.h.b16 %v3279
    %v3300 = vunpack.c.l.b16 %v3280
    %v3301 = vunpack.c.h.b16 %v3280
    %v3302 = vunpack.c.l.b16 %v3281
    %v3303 = vunpack.c.h.b16 %v3281
    %v3304 = vunpack.c.l.b16 %v3282
    %v3305 = vunpack.c.h.b16 %v3282
    %v3306 = vunpack.c.l.b16 %v3283
    %v3307 = vunpack.c.h.b16 %v3283
    %v3308 = vpack.c.b16 %v3294, %v3292
    %v3309 = vpack.c.b16 %v3295, %v3293
    %v3310 = vpack.c.b16 %v3298, %v3296
    %v3311 = vpack.c.b16 %v3299, %v3297
    %v3312 = vpack.c.b16 %v3302, %v3300
    %v3313 = vpack.c.b16 %v3303, %v3301
    %v3314 = vpack.c.b16 %v3306, %v3304
    %v3315 = vpack.c.b16 %v3307, %v3305
    %3324 = vmatpush.bf16.xpose.msra.mxu0 0
    %3325 = vmatpush.bf16.xpose.msra.mxu0 0
    %3326 = vmatpush.bf16.xpose.msra.mxu0 0
    %3327 = vmatpush.bf16.xpose.msra.mxu0 0
    %3328 = vmatpush.bf16.xpose.msra.mxu0 %v3314
    %3329 = vmatpush.bf16.xpose.msra.mxu0 %v3312
    %3330 = vmatpush.bf16.xpose.msra.mxu0 %v3310
    %3331 = vmatpush.bf16.xpose.msra.mxu0 %v3308
    %3332 = vmatmul.bf16.gmra.mxu0 %v3308
    %v3333 = vpop.f32.mrf.mxu0
    %v3334 = vadd.f32 0.0, %v3333
    %v3335 = vpop.f32.mrf.mxu0
    %v3336 = vadd.f32 0.0, %v3335
    %3337 = vmatmul.bf16.gmra.mxu0 %v3310
    %v3338 = vpop.f32.mrf.mxu0
    %v3339 = vadd.f32 0.0, %v3338
    %v3340 = vpop.f32.mrf.mxu0
    %v3341 = vadd.f32 0.0, %v3340
    %3342 = vmatmul.bf16.gmra.mxu0 %v3312
    %v3343 = vpop.f32.mrf.mxu0
    %v3344 = vadd.f32 0.0, %v3343
    %v3345 = vpop.f32.mrf.mxu0
    %v3346 = vadd.f32 0.0, %v3345
    %3347 = vmatmul.bf16.gmra.mxu0 %v3314
    %v3348 = vpop.f32.mrf.mxu0
    %v3349 = vadd.f32 0.0, %v3348
    %v3350 = vpop.f32.mrf.mxu0
    %v3351 = vadd.f32 0.0, %v3350
    %3352 = vdwg.mxu0
    %3353 = vmatpush.bf16.xpose.msra.mxu0 0
    %3354 = vmatpush.bf16.xpose.msra.mxu0 0
    %3355 = vmatpush.bf16.xpose.msra.mxu0 0
    %3356 = vmatpush.bf16.xpose.msra.mxu0 0
    %3357 = vmatpush.bf16.xpose.msra.mxu0 %v3315
    %3358 = vmatpush.bf16.xpose.msra.mxu0 %v3313
    %3359 = vmatpush.bf16.xpose.msra.mxu0 %v3311
    %3360 = vmatpush.bf16.xpose.msra.mxu0 %v3309
    %3361 = vmatmul.bf16.gmra.mxu0 %v3309
    %v3362 = vpop.f32.mrf.mxu0
    %v3363 = vadd.f32 %v3334, %v3362
    %v3364 = vpop.f32.mrf.mxu0
    %v3365 = vadd.f32 %v3336, %v3364
    %3366 = vmatmul.bf16.gmra.mxu0 %v3311
    %v3367 = vpop.f32.mrf.mxu0
    %v3368 = vadd.f32 %v3339, %v3367
    %v3369 = vpop.f32.mrf.mxu0
    %v3370 = vadd.f32 %v3341, %v3369
    %3371 = vmatmul.bf16.gmra.mxu0 %v3313
    %v3372 = vpop.f32.mrf.mxu0
    %v3373 = vadd.f32 %v3344, %v3372
    %v3374 = vpop.f32.mrf.mxu0
    %v3375 = vadd.f32 %v3346, %v3374
    %3376 = vmatmul.bf16.gmra.mxu0 %v3315
    %v3377 = vpop.f32.mrf.mxu0
    %v3378 = vadd.f32 %v3349, %v3377
    %v3379 = vpop.f32.mrf.mxu0
    %v3380 = vadd.f32 %v3351, %v3379
    %3381 = vdwg.mxu0
    %v3382 = vmul.f32 %v3363, %v3363
    %v3383 = vmul.f32 %v3365, %v3365
    %v3384 = vmul.f32 %v3368, %v3368
    %v3385 = vmul.f32 %v3370, %v3370
    %v3386 = vmul.f32 %v3373, %v3373
    %v3387 = vmul.f32 %v3375, %v3375
    %v3388 = vmul.f32 %v3378, %v3378
    %v3389 = vmul.f32 %v3380, %v3380
    %v3390 = vsel %vm97, %v3382, 0.0
    %3391 = vadd.xlane.f32.xlu0 %v3390
    %v3392 = vpop.xlane.xlu0 %3391
    %v3393 = vsel %vm97, %v3383, 0.0
    %3394 = vadd.xlane.f32.xlu0 %v3393
    %v3395 = vpop.xlane.xlu0 %3394
    %v3396 = vsel %vm97, %v3384, 0.0
    %3397 = vadd.xlane.f32.xlu0 %v3396
    %v3398 = vpop.xlane.xlu0 %3397
    %v3399 = vsel %vm97, %v3385, 0.0
    %3400 = vadd.xlane.f32.xlu0 %v3399
    %v3401 = vpop.xlane.xlu0 %3400
    %v3402 = vsel %vm97, %v3386, 0.0
    %3403 = vadd.xlane.f32.xlu0 %v3402
    %v3404 = vpop.xlane.xlu0 %3403
    %v3405 = vsel %vm97, %v3387, 0.0
    %3406 = vadd.xlane.f32.xlu0 %v3405
    %v3407 = vpop.xlane.xlu0 %3406
    %v3408 = vsel %vm97, %v3388, 0.0
    %3409 = vadd.xlane.f32.xlu0 %v3408
    %v3410 = vpop.xlane.xlu0 %3409
    %v3411 = vsel %vm97, %v3389, 0.0
    %3412 = vadd.xlane.f32.xlu0 %v3411
    %v3413 = vpop.xlane.xlu0 %3412
    %v3414 = vadd.f32 %v3392, %v3395
    %v3415 = vadd.f32 %v3414, %v3398
    %v3416 = vadd.f32 %v3415, %v3401
    %v3417 = vadd.f32 %v3416, %v3404
    %v3418 = vadd.f32 %v3417, %v3407
    %v3419 = vadd.f32 %v3418, %v3410
    %v3420 = vadd.f32 %v3419, %v3413
    %v3421 = vrot.slane %v3420, 4
    %v3422 = vadd.f32 %v3420, %v3421
    %v3423 = vrot.slane %v3422, 2
    %v3424 = vadd.f32 %v3422, %v3423
    %v3425 = vrot.slane %v3424, 1
    %v3426 = vadd.f32 %v3424, %v3425
    %v3427 = vunpack.c.l.bf16 %v3276
    %v3428 = vunpack.c.h.bf16 %v3276
    %v3429 = vunpack.c.l.bf16 %v3277
    %v3430 = vunpack.c.h.bf16 %v3277
    %v3431 = vunpack.c.l.bf16 %v3278
    %v3432 = vunpack.c.h.bf16 %v3278
    %v3433 = vunpack.c.l.bf16 %v3279
    %v3434 = vunpack.c.h.bf16 %v3279
    %v3435 = vunpack.c.l.bf16 %v3280
    %v3436 = vunpack.c.h.bf16 %v3280
    %v3437 = vunpack.c.l.bf16 %v3281
    %v3438 = vunpack.c.h.bf16 %v3281
    %v3439 = vunpack.c.l.bf16 %v3282
    %v3440 = vunpack.c.h.bf16 %v3282
    %v3441 = vunpack.c.l.bf16 %v3283
    %v3442 = vunpack.c.h.bf16 %v3283
    %v3443 = vmul.f32 %v3427, %v3427
    %v3444 = vmul.f32 %v3428, %v3428
    %v3445 = vmul.f32 %v3429, %v3429
    %v3446 = vmul.f32 %v3430, %v3430
    %v3447 = vmul.f32 %v3431, %v3431
    %v3448 = vmul.f32 %v3432, %v3432
    %v3449 = vmul.f32 %v3433, %v3433
    %v3450 = vmul.f32 %v3434, %v3434
    %v3451 = vmul.f32 %v3435, %v3435
    %v3452 = vmul.f32 %v3436, %v3436
    %v3453 = vmul.f32 %v3437, %v3437
    %v3454 = vmul.f32 %v3438, %v3438
    %v3455 = vmul.f32 %v3439, %v3439
    %v3456 = vmul.f32 %v3440, %v3440
    %v3457 = vmul.f32 %v3441, %v3441
    %v3458 = vmul.f32 %v3442, %v3442
    %v3459 = vadd.f32 %v3443, %v3444
    %3460 = vadd.xlane.f32.xlu0 %v3459
    %v3461 = vpop.xlane.xlu0 %3460
    %v3462 = vadd.f32 %v3445, %v3446
    %3463 = vadd.xlane.f32.xlu0 %v3462
    %v3464 = vpop.xlane.xlu0 %3463
    %v3465 = vadd.f32 %v3447, %v3448
    %3466 = vadd.xlane.f32.xlu0 %v3465
    %v3467 = vpop.xlane.xlu0 %3466
    %v3468 = vadd.f32 %v3449, %v3450
    %3469 = vadd.xlane.f32.xlu0 %v3468
    %v3470 = vpop.xlane.xlu0 %3469
    %v3471 = vadd.f32 %v3451, %v3452
    %3472 = vadd.xlane.f32.xlu0 %v3471
    %v3473 = vpop.xlane.xlu0 %3472
    %v3474 = vadd.f32 %v3453, %v3454
    %3475 = vadd.xlane.f32.xlu0 %v3474
    %v3476 = vpop.xlane.xlu0 %3475
    %v3477 = vadd.f32 %v3455, %v3456
    %3478 = vadd.xlane.f32.xlu0 %v3477
    %v3479 = vpop.xlane.xlu0 %3478
    %v3480 = vadd.f32 %v3457, %v3458
    %3481 = vadd.xlane.f32.xlu0 %v3480
    %v3482 = vpop.xlane.xlu0 %3481
    %v3483 = vadd.f32 %v3461, %v3464
    %v3484 = vadd.f32 %v3483, %v3467
    %v3485 = vadd.f32 %v3484, %v3470
    %v3486 = vadd.f32 %v3485, %v3473
    %v3487 = vadd.f32 %v3486, %v3476
    %v3488 = vadd.f32 %v3487, %v3479
    %v3489 = vadd.f32 %v3488, %v3482
    %v3490 = vrot.slane %v3489, 4
    %v3491 = vadd.f32 %v3489, %v3490
    %v3492 = vrot.slane %v3491, 2
    %v3493 = vadd.f32 %v3491, %v3492
    %v3494 = vrot.slane %v3493, 1
    %v3495 = vadd.f32 %v3493, %v3494
    %v3496 = vmul.f32 %v3495, 2.0
    %v3497 = vsub.f32 %v3426, %v3496
    %v3498 = vadd.f32 %v3497, 64.0
    %v3499 = vmul.f32 %v3498, 0.00024414063
    %v3500 = vadd.f32 %v3274, %v3499
    %v3501 = vmul.f32 %v3500, 0.1
    %vm3502 = vcmask 0
    %3503 = vst.msk [vmem:[#allocation2] sm:$0x1] %vm3502, %v3501
    // Predicated region
    $region18: #{disentangled_transformer.3} parent=1 // pred_check
      _
    $region19: #{disentangled_transformer.3} parent=1 // pred_check_branch
      %3505 = sbr.rel (0) target = $region21
    $region20: #{disentangled_transformer.3} parent=1 // pred_region
      %3507 = vsyncadd [#allocation3], 0
      %s3509 = sshll.u32 [#allocation2], 4
      %s3510 = int_to_ptr.vmem [resolvable:$true] %s3509
      %s3511 = sshll.u32 %s4, 4
      %s3512 = int_to_ptr.hbm [resolvable:$true] %s3511
      %3514 = dma.vmem_to_hbm [thread:$0]  %s3510, 16, %s3512, [#allocation3]
    $region21: #{disentangled_transformer.3} parent=1 // pred_fallthru
      _
    // Predicated region
    $region22: #{disentangled_transformer.3} parent=1 // pred_check
      _
    $region23: #{disentangled_transformer.3} parent=1 // pred_check_branch
      %3516 = sbr.rel (0) target = $region25
    $region24: #{disentangled_transformer.3} parent=1 // pred_region
      %3518 = dma.done [#allocation3], 16
    $region25: #{disentangled_transformer.3} parent=1 // pred_fallthru
      _
    %3519 = vsyncpa [#allocation3], 1

// kernel: disentangled_transformer.2
$region0: #{disentangled_transformer.2}
  #allocation0 [shape = 'u32[]', space=smem, size = 0x4, offset = 0x4, fixed_abs, tag = 'smem constant byte address 0x4 - core index']
  #allocation1 [shape = 'u32[72,128]{1,0:T(1,128)}', space=vmem, size = 0x9000, scoped, tag = 'internal scratch']
  #allocation2 [shape = 'f32[1,1]{1,0:T(1,128)S(1)}', space=vmem, size = 0x200, scoped, tag = 'scoped memory for disentangled_transformer.2']
  %s0 = inlined_call_operand.vmem [shape: f32[8,16], index: 0, kind: input, shape index: {}]
  %s1 = inlined_call_operand.vmem [shape: bf16[64,16], index: 1, kind: input, shape index: {}]
  %s2 = inlined_call_operand.vmem [shape: f32[1,64], index: 2, kind: input, shape index: {}]
  %s3 = inlined_call_operand.vmem [shape: bf16[2,768,64], index: 3, kind: input, shape index: {}]
  %s4 = inlined_call_operand.vmem [shape: f32[2,1,768], index: 4, kind: input, shape index: {}]
  %s5 = inlined_call_operand.vmem [shape: bf16[2,64,64], index: 5, kind: input, shape index: {}]
  %s6 = inlined_call_operand.vmem [shape: f32[2,1,64], index: 6, kind: input, shape index: {}]
  %s7 = inlined_call_operand.vmem [shape: f32[2,2,1,64], index: 7, kind: input, shape index: {}]
  %s8 = inlined_call_operand.vmem [shape: f32[2,2,1,64], index: 8, kind: input, shape index: {}]
  %s9 = inlined_call_operand.vmem [shape: bf16[2,256,64], index: 9, kind: input, shape index: {}]
  %s10 = inlined_call_operand.vmem [shape: f32[2,1,256], index: 10, kind: input, shape index: {}]
  %s11 = inlined_call_operand.vmem [shape: bf16[2,64,256], index: 11, kind: input, shape index: {}]
  %s12 = inlined_call_operand.vmem [shape: f32[2,1,64], index: 12, kind: input, shape index: {}]
  %s13 = inlined_call_operand.vmem [shape: f32[1,64], index: 13, kind: input, shape index: {}]
  %s14 = inlined_call_operand.<no memory space> [shape: f32[1,1], index: 14, kind: input, shape index: {}]
  %s15 = inlined_call_operand.vmem [shape: bf16[256,16], index: 15, kind: input, shape index: {}]
  %s16 = inlined_call_operand.vmem [shape: f32[16,16], index: 16, kind: input, shape index: {}]
  %s17 = inlined_call_operand.vmem [shape: bf16[16,256], index: 17, kind: input, shape index: {}]
  %s18 = inlined_call_operand.vmem [shape: bf16[256,64], index: 18, kind: input, shape index: {}]
  %s19 = inlined_call_operand.vmem [shape: f32[1,8], index: 19, kind: output, shape index: {}]
  %s20 = sld [smem:[#allocation0]]
  $region86: #{disentangled_transformer.2} parent=0
    _
  %s22 = ssub.s32 1, %s20
  %s23 = scalar_select 0, %s22, %s20
  %v24 = vstv %s14
  %25 = vst [vmem:[#allocation2] sm:$0x1] %v24
  // Predicated region
  $region2: #{disentangled_transformer.2} parent=0 // pred_check
    _
  $region3: #{disentangled_transformer.2} parent=0 // pred_check_branch
    %27 = sbr.rel (0) target = $region5
  $region4: #{disentangled_transformer.2} parent=0 // pred_region
    _
  $region5: #{disentangled_transformer.2} parent=0 // pred_fallthru
    _
  // Predicated region
  $region6: #{disentangled_transformer.2} parent=0 // pred_check
    _
  $region7: #{disentangled_transformer.2} parent=0 // pred_check_branch
    %29 = sbr.rel (0) target = $region9
  $region8: #{disentangled_transformer.2} parent=0 // pred_region
    _
  $region9: #{disentangled_transformer.2} parent=0 // pred_fallthru
    _
  // Predicated region
  $region10: #{disentangled_transformer.2} parent=0 // pred_check
    _
  $region11: #{disentangled_transformer.2} parent=0 // pred_check_branch
    %31 = sbr.rel (0) target = $region13
  $region12: #{disentangled_transformer.2} parent=0 // pred_region
    _
  $region13: #{disentangled_transformer.2} parent=0 // pred_fallthru
    _
  // Predicated region
  $region14: #{disentangled_transformer.2} parent=0 // pred_check
    _
  $region15: #{disentangled_transformer.2} parent=0 // pred_check_branch
    %33 = sbr.rel (0) target = $region17
  $region16: #{disentangled_transformer.2} parent=0 // pred_region
    _
  $region17: #{disentangled_transformer.2} parent=0 // pred_fallthru
    _
  // Predicated region
  $region18: #{disentangled_transformer.2} parent=0 // pred_check
    _
  $region19: #{disentangled_transformer.2} parent=0 // pred_check_branch
    %35 = sbr.rel (0) target = $region21
  $region20: #{disentangled_transformer.2} parent=0 // pred_region
    _
  $region21: #{disentangled_transformer.2} parent=0 // pred_fallthru
    _
  // Predicated region
  $region22: #{disentangled_transformer.2} parent=0 // pred_check
    _
  $region23: #{disentangled_transformer.2} parent=0 // pred_check_branch
    %37 = sbr.rel (0) target = $region25
  $region24: #{disentangled_transformer.2} parent=0 // pred_region
    _
  $region25: #{disentangled_transformer.2} parent=0 // pred_fallthru
    _
  // Predicated region
  $region26: #{disentangled_transformer.2} parent=0 // pred_check
    _
  $region27: #{disentangled_transformer.2} parent=0 // pred_check_branch
    %39 = sbr.rel (0) target = $region29
  $region28: #{disentangled_transformer.2} parent=0 // pred_region
    _
  $region29: #{disentangled_transformer.2} parent=0 // pred_fallthru
    _
  // Predicated region
  $region30: #{disentangled_transformer.2} parent=0 // pred_check
    _
  $region31: #{disentangled_transformer.2} parent=0 // pred_check_branch
    %41 = sbr.rel (0) target = $region33
  $region32: #{disentangled_transformer.2} parent=0 // pred_region
    _
  $region33: #{disentangled_transformer.2} parent=0 // pred_fallthru
    _
  // Predicated region
  $region34: #{disentangled_transformer.2} parent=0 // pred_check
    _
  $region35: #{disentangled_transformer.2} parent=0 // pred_check_branch
    %43 = sbr.rel (0) target = $region37
  $region36: #{disentangled_transformer.2} parent=0 // pred_region
    _
  $region37: #{disentangled_transformer.2} parent=0 // pred_fallthru
    _
  // Predicated region
  $region38: #{disentangled_transformer.2} parent=0 // pred_check
    _
  $region39: #{disentangled_transformer.2} parent=0 // pred_check_branch
    %45 = sbr.rel (0) target = $region41
  $region40: #{disentangled_transformer.2} parent=0 // pred_region
    _
  $region41: #{disentangled_transformer.2} parent=0 // pred_fallthru
    _
  // Predicated region
  $region42: #{disentangled_transformer.2} parent=0 // pred_check
    _
  $region43: #{disentangled_transformer.2} parent=0 // pred_check_branch
    %47 = sbr.rel (0) target = $region45
  $region44: #{disentangled_transformer.2} parent=0 // pred_region
    _
  $region45: #{disentangled_transformer.2} parent=0 // pred_fallthru
    _
  // Predicated region
  $region46: #{disentangled_transformer.2} parent=0 // pred_check
    _
  $region47: #{disentangled_transformer.2} parent=0 // pred_check_branch
    %49 = sbr.rel (0) target = $region49
  $region48: #{disentangled_transformer.2} parent=0 // pred_region
    _
  $region49: #{disentangled_transformer.2} parent=0 // pred_fallthru
    _
  // Predicated region
  $region50: #{disentangled_transformer.2} parent=0 // pred_check
    _
  $region51: #{disentangled_transformer.2} parent=0 // pred_check_branch
    %51 = sbr.rel (0) target = $region53
  $region52: #{disentangled_transformer.2} parent=0 // pred_region
    _
  $region53: #{disentangled_transformer.2} parent=0 // pred_fallthru
    _
  // Predicated region
  $region54: #{disentangled_transformer.2} parent=0 // pred_check
    _
  $region55: #{disentangled_transformer.2} parent=0 // pred_check_branch
    %53 = sbr.rel (0) target = $region57
  $region56: #{disentangled_transformer.2} parent=0 // pred_region
    _
  $region57: #{disentangled_transformer.2} parent=0 // pred_fallthru
    _
  // Predicated region
  $region58: #{disentangled_transformer.2} parent=0 // pred_check
    _
  $region59: #{disentangled_transformer.2} parent=0 // pred_check_branch
    %55 = sbr.rel (0) target = $region61
  $region60: #{disentangled_transformer.2} parent=0 // pred_region
    _
  $region61: #{disentangled_transformer.2} parent=0 // pred_fallthru
    _
  // Predicated region
  $region62: #{disentangled_transformer.2} parent=0 // pred_check
    _
  $region63: #{disentangled_transformer.2} parent=0 // pred_check_branch
    %57 = sbr.rel (0) target = $region65
  $region64: #{disentangled_transformer.2} parent=0 // pred_region
    _
  $region65: #{disentangled_transformer.2} parent=0 // pred_fallthru
    _
  // Predicated region
  $region66: #{disentangled_transformer.2} parent=0 // pred_check
    _
  $region67: #{disentangled_transformer.2} parent=0 // pred_check_branch
    %59 = sbr.rel (0) target = $region69
  $region68: #{disentangled_transformer.2} parent=0 // pred_region
    _
  $region69: #{disentangled_transformer.2} parent=0 // pred_fallthru
    _
  // Predicated region
  $region70: #{disentangled_transformer.2} parent=0 // pred_check
    _
  $region71: #{disentangled_transformer.2} parent=0 // pred_check_branch
    %61 = sbr.rel (0) target = $region73
  $region72: #{disentangled_transformer.2} parent=0 // pred_region
    _
  $region73: #{disentangled_transformer.2} parent=0 // pred_fallthru
    _
  // Predicated region
  $region74: #{disentangled_transformer.2} parent=0 // pred_check
    _
  $region75: #{disentangled_transformer.2} parent=0 // pred_check_branch
    %63 = sbr.rel (0) target = $region77
  $region76: #{disentangled_transformer.2} parent=0 // pred_region
    _
  $region77: #{disentangled_transformer.2} parent=0 // pred_fallthru
    _
  %v65 = vld [vmem:[%s15] sm:$0xf]
  %v66 = vld [vmem:[%s15 + $0x4] sm:$0xf]
  %v67 = vld [vmem:[%s15 + $0x8] sm:$0xf]
  %v68 = vld [vmem:[%s15 + $0xc] sm:$0xf]
  %v69 = vld [vmem:[%s15 + $0x10] sm:$0xf]
  %v70 = vld [vmem:[%s15 + $0x14] sm:$0xf]
  %v71 = vld [vmem:[%s15 + $0x18] sm:$0xf]
  %v72 = vld [vmem:[%s15 + $0x1c] sm:$0xf]
  %v73 = vld [vmem:[%s15 + $0x20] sm:$0xf]
  %v74 = vld [vmem:[%s15 + $0x24] sm:$0xf]
  %v75 = vld [vmem:[%s15 + $0x28] sm:$0xf]
  %v76 = vld [vmem:[%s15 + $0x2c] sm:$0xf]
  %v77 = vld [vmem:[%s15 + $0x30] sm:$0xf]
  %v78 = vld [vmem:[%s15 + $0x34] sm:$0xf]
  %v79 = vld [vmem:[%s15 + $0x38] sm:$0xf]
  %v80 = vld [vmem:[%s15 + $0x3c] sm:$0xf]
  %v81 = vld [vmem:[%s15 + $0x40] sm:$0xf]
  %v82 = vld [vmem:[%s15 + $0x44] sm:$0xf]
  %v83 = vld [vmem:[%s15 + $0x48] sm:$0xf]
  %v84 = vld [vmem:[%s15 + $0x4c] sm:$0xf]
  %v85 = vld [vmem:[%s15 + $0x50] sm:$0xf]
  %v86 = vld [vmem:[%s15 + $0x54] sm:$0xf]
  %v87 = vld [vmem:[%s15 + $0x58] sm:$0xf]
  %v88 = vld [vmem:[%s15 + $0x5c] sm:$0xf]
  %v89 = vld [vmem:[%s15 + $0x60] sm:$0xf]
  %v90 = vld [vmem:[%s15 + $0x64] sm:$0xf]
  %v91 = vld [vmem:[%s15 + $0x68] sm:$0xf]
  %v92 = vld [vmem:[%s15 + $0x6c] sm:$0xf]
  %v93 = vld [vmem:[%s15 + $0x70] sm:$0xf]
  %v94 = vld [vmem:[%s15 + $0x74] sm:$0xf]
  %v95 = vld [vmem:[%s15 + $0x78] sm:$0xf]
  %v96 = vld [vmem:[%s15 + $0x7c] sm:$0xf]
  %v97 = vld [vmem:[%s16] sm:$0xff]
  %v98 = vld [vmem:[%s16 + $0x8] sm:$0xff]
  %v99 = vld [vmem:[%s17] sm:$0xff]
  %v100 = vld [vmem:[%s17 + $0x8] sm:$0xff]
  %v101 = vld [vmem:[%s18] sm:$0xf]
  %v102 = vld [vmem:[%s18 + $0x4] sm:$0xf]
  %v103 = vld [vmem:[%s18 + $0x8] sm:$0xf]
  %v104 = vld [vmem:[%s18 + $0xc] sm:$0xf]
  %v105 = vld [vmem:[%s18 + $0x10] sm:$0xf]
  %v106 = vld [vmem:[%s18 + $0x14] sm:$0xf]
  %v107 = vld [vmem:[%s18 + $0x18] sm:$0xf]
  %v108 = vld [vmem:[%s18 + $0x1c] sm:$0xf]
  %v109 = vld [vmem:[%s18 + $0x20] sm:$0xf]
  %v110 = vld [vmem:[%s18 + $0x24] sm:$0xf]
  %v111 = vld [vmem:[%s18 + $0x28] sm:$0xf]
  %v112 = vld [vmem:[%s18 + $0x2c] sm:$0xf]
  %v113 = vld [vmem:[%s18 + $0x30] sm:$0xf]
  %v114 = vld [vmem:[%s18 + $0x34] sm:$0xf]
  %v115 = vld [vmem:[%s18 + $0x38] sm:$0xf]
  %v116 = vld [vmem:[%s18 + $0x3c] sm:$0xf]
  %v117 = vld [vmem:[%s18 + $0x40] sm:$0xf]
  %v118 = vld [vmem:[%s18 + $0x44] sm:$0xf]
  %v119 = vld [vmem:[%s18 + $0x48] sm:$0xf]
  %v120 = vld [vmem:[%s18 + $0x4c] sm:$0xf]
  %v121 = vld [vmem:[%s18 + $0x50] sm:$0xf]
  %v122 = vld [vmem:[%s18 + $0x54] sm:$0xf]
  %v123 = vld [vmem:[%s18 + $0x58] sm:$0xf]
  %v124 = vld [vmem:[%s18 + $0x5c] sm:$0xf]
  %v125 = vld [vmem:[%s18 + $0x60] sm:$0xf]
  %v126 = vld [vmem:[%s18 + $0x64] sm:$0xf]
  %v127 = vld [vmem:[%s18 + $0x68] sm:$0xf]
  %v128 = vld [vmem:[%s18 + $0x6c] sm:$0xf]
  %v129 = vld [vmem:[%s18 + $0x70] sm:$0xf]
  %v130 = vld [vmem:[%s18 + $0x74] sm:$0xf]
  %v131 = vld [vmem:[%s18 + $0x78] sm:$0xf]
  %v132 = vld [vmem:[%s18 + $0x7c] sm:$0xf]
  %v133 = vld [vmem:[%s0] sm:$0xff]
  %v134 = vld [vmem:[%s1] sm:$0xf]
  %v135 = vld [vmem:[%s1 + $0x4] sm:$0xf]
  %v136 = vld [vmem:[%s1 + $0x8] sm:$0xf]
  %v137 = vld [vmem:[%s1 + $0xc] sm:$0xf]
  %v138 = vld [vmem:[%s1 + $0x10] sm:$0xf]
  %v139 = vld [vmem:[%s1 + $0x14] sm:$0xf]
  %v140 = vld [vmem:[%s1 + $0x18] sm:$0xf]
  %v141 = vld [vmem:[%s1 + $0x1c] sm:$0xf]
  %v142 = vld [vmem:[%s2] sm:$0x1]
  %v143 = vpack.c.bf16 %v133, %v133
  %v145 = vperm.slane %v142, 0
  %v155 = vunpack.c.l.b16 %v134
  %v156 = vunpack.c.l.b16 %v135
  %v157 = vunpack.c.l.b16 %v136
  %v158 = vunpack.c.l.b16 %v137
  %v159 = vunpack.c.l.b16 %v138
  %v160 = vunpack.c.l.b16 %v139
  %v161 = vunpack.c.l.b16 %v140
  %v162 = vunpack.c.l.b16 %v141
  %v163 = vpack.c.b16 %v156, %v155
  %v164 = vpack.c.b16 %v158, %v157
  %v165 = vpack.c.b16 %v160, %v159
  %v166 = vpack.c.b16 %v162, %v161
  %vm167 = vcmask 130048
  %v169 = vsel %vm167, %v143, 0
  %v172 = vsel %vm167, %v163, 0
  %v175 = vsel %vm167, %v164, 0
  %v178 = vsel %vm167, %v165, 0
  %v181 = vsel %vm167, %v166, 0
  %183 = vmatpush.bf16.xpose.msra.mxu0 0
  %184 = vmatpush.bf16.xpose.msra.mxu0 0
  %185 = vmatpush.bf16.xpose.msra.mxu0 0
  %186 = vmatpush.bf16.xpose.msra.mxu0 0
  %187 = vmatpush.bf16.xpose.msra.mxu0 %v181
  %188 = vmatpush.bf16.xpose.msra.mxu0 %v178
  %189 = vmatpush.bf16.xpose.msra.mxu0 %v175
  %190 = vmatpush.bf16.xpose.msra.mxu0 %v172
  %191 = vmatmul.bf16.gmra.mxu0 %v169
  %v192 = vpop.f32.mrf.mxu0
  %v193 = vadd.f32 %v145, %v192
  %v194 = vpop.f32.mrf.mxu0
  %195 = vdwg.mxu0
  %v196 = vld [vmem:[%s3] sm:$0xf]
  %v197 = vld [vmem:[%s3 + $0x4] sm:$0xf]
  %v198 = vld [vmem:[%s3 + $0x8] sm:$0xf]
  %v199 = vld [vmem:[%s3 + $0xc] sm:$0xf]
  %v200 = vld [vmem:[%s3 + $0x10] sm:$0xf]
  %v201 = vld [vmem:[%s3 + $0x14] sm:$0xf]
  %v202 = vld [vmem:[%s3 + $0x18] sm:$0xf]
  %v203 = vld [vmem:[%s3 + $0x1c] sm:$0xf]
  %v204 = vld [vmem:[%s3 + $0x20] sm:$0xf]
  %v205 = vld [vmem:[%s3 + $0x24] sm:$0xf]
  %v206 = vld [vmem:[%s3 + $0x28] sm:$0xf]
  %v207 = vld [vmem:[%s3 + $0x2c] sm:$0xf]
  %v208 = vld [vmem:[%s3 + $0x30] sm:$0xf]
  %v209 = vld [vmem:[%s3 + $0x34] sm:$0xf]
  %v210 = vld [vmem:[%s3 + $0x38] sm:$0xf]
  %v211 = vld [vmem:[%s3 + $0x3c] sm:$0xf]
  %v212 = vld [vmem:[%s3 + $0x40] sm:$0xf]
  %v213 = vld [vmem:[%s3 + $0x44] sm:$0xf]
  %v214 = vld [vmem:[%s3 + $0x48] sm:$0xf]
  %v215 = vld [vmem:[%s3 + $0x4c] sm:$0xf]
  %v216 = vld [vmem:[%s3 + $0x50] sm:$0xf]
  %v217 = vld [vmem:[%s3 + $0x54] sm:$0xf]
  %v218 = vld [vmem:[%s3 + $0x58] sm:$0xf]
  %v219 = vld [vmem:[%s3 + $0x5c] sm:$0xf]
  %v220 = vld [vmem:[%s3 + $0x60] sm:$0xf]
  %v221 = vld [vmem:[%s3 + $0x64] sm:$0xf]
  %v222 = vld [vmem:[%s3 + $0x68] sm:$0xf]
  %v223 = vld [vmem:[%s3 + $0x6c] sm:$0xf]
  %v224 = vld [vmem:[%s3 + $0x70] sm:$0xf]
  %v225 = vld [vmem:[%s3 + $0x74] sm:$0xf]
  %v226 = vld [vmem:[%s3 + $0x78] sm:$0xf]
  %v227 = vld [vmem:[%s3 + $0x7c] sm:$0xf]
  %v228 = vld [vmem:[%s3 + $0x80] sm:$0xf]
  %v229 = vld [vmem:[%s3 + $0x84] sm:$0xf]
  %v230 = vld [vmem:[%s3 + $0x88] sm:$0xf]
  %v231 = vld [vmem:[%s3 + $0x8c] sm:$0xf]
  %v232 = vld [vmem:[%s3 + $0x90] sm:$0xf]
  %v233 = vld [vmem:[%s3 + $0x94] sm:$0xf]
  %v234 = vld [vmem:[%s3 + $0x98] sm:$0xf]
  %v235 = vld [vmem:[%s3 + $0x9c] sm:$0xf]
  %v236 = vld [vmem:[%s3 + $0xa0] sm:$0xf]
  %v237 = vld [vmem:[%s3 + $0xa4] sm:$0xf]
  %v238 = vld [vmem:[%s3 + $0xa8] sm:$0xf]
  %v239 = vld [vmem:[%s3 + $0xac] sm:$0xf]
  %v240 = vld [vmem:[%s3 + $0xb0] sm:$0xf]
  %v241 = vld [vmem:[%s3 + $0xb4] sm:$0xf]
  %v242 = vld [vmem:[%s3 + $0xb8] sm:$0xf]
  %v243 = vld [vmem:[%s3 + $0xbc] sm:$0xf]
  %v244 = vld [vmem:[%s3 + $0xc0] sm:$0xf]
  %v245 = vld [vmem:[%s3 + $0xc4] sm:$0xf]
  %v246 = vld [vmem:[%s3 + $0xc8] sm:$0xf]
  %v247 = vld [vmem:[%s3 + $0xcc] sm:$0xf]
  %v248 = vld [vmem:[%s3 + $0xd0] sm:$0xf]
  %v249 = vld [vmem:[%s3 + $0xd4] sm:$0xf]
  %v250 = vld [vmem:[%s3 + $0xd8] sm:$0xf]
  %v251 = vld [vmem:[%s3 + $0xdc] sm:$0xf]
  %v252 = vld [vmem:[%s3 + $0xe0] sm:$0xf]
  %v253 = vld [vmem:[%s3 + $0xe4] sm:$0xf]
  %v254 = vld [vmem:[%s3 + $0xe8] sm:$0xf]
  %v255 = vld [vmem:[%s3 + $0xec] sm:$0xf]
  %v256 = vld [vmem:[%s3 + $0xf0] sm:$0xf]
  %v257 = vld [vmem:[%s3 + $0xf4] sm:$0xf]
  %v258 = vld [vmem:[%s3 + $0xf8] sm:$0xf]
  %v259 = vld [vmem:[%s3 + $0xfc] sm:$0xf]
  %v260 = vld [vmem:[%s3 + $0x100] sm:$0xf]
  %v261 = vld [vmem:[%s3 + $0x104] sm:$0xf]
  %v262 = vld [vmem:[%s3 + $0x108] sm:$0xf]
  %v263 = vld [vmem:[%s3 + $0x10c] sm:$0xf]
  %v264 = vld [vmem:[%s3 + $0x110] sm:$0xf]
  %v265 = vld [vmem:[%s3 + $0x114] sm:$0xf]
  %v266 = vld [vmem:[%s3 + $0x118] sm:$0xf]
  %v267 = vld [vmem:[%s3 + $0x11c] sm:$0xf]
  %v268 = vld [vmem:[%s3 + $0x120] sm:$0xf]
  %v269 = vld [vmem:[%s3 + $0x124] sm:$0xf]
  %v270 = vld [vmem:[%s3 + $0x128] sm:$0xf]
  %v271 = vld [vmem:[%s3 + $0x12c] sm:$0xf]
  %v272 = vld [vmem:[%s3 + $0x130] sm:$0xf]
  %v273 = vld [vmem:[%s3 + $0x134] sm:$0xf]
  %v274 = vld [vmem:[%s3 + $0x138] sm:$0xf]
  %v275 = vld [vmem:[%s3 + $0x13c] sm:$0xf]
  %v276 = vld [vmem:[%s3 + $0x140] sm:$0xf]
  %v277 = vld [vmem:[%s3 + $0x144] sm:$0xf]
  %v278 = vld [vmem:[%s3 + $0x148] sm:$0xf]
  %v279 = vld [vmem:[%s3 + $0x14c] sm:$0xf]
  %v280 = vld [vmem:[%s3 + $0x150] sm:$0xf]
  %v281 = vld [vmem:[%s3 + $0x154] sm:$0xf]
  %v282 = vld [vmem:[%s3 + $0x158] sm:$0xf]
  %v283 = vld [vmem:[%s3 + $0x15c] sm:$0xf]
  %v284 = vld [vmem:[%s3 + $0x160] sm:$0xf]
  %v285 = vld [vmem:[%s3 + $0x164] sm:$0xf]
  %v286 = vld [vmem:[%s3 + $0x168] sm:$0xf]
  %v287 = vld [vmem:[%s3 + $0x16c] sm:$0xf]
  %v288 = vld [vmem:[%s3 + $0x170] sm:$0xf]
  %v289 = vld [vmem:[%s3 + $0x174] sm:$0xf]
  %v290 = vld [vmem:[%s3 + $0x178] sm:$0xf]
  %v291 = vld [vmem:[%s3 + $0x17c] sm:$0xf]
  %v292 = vld [vmem:[%s4] sm:$0x3f]
  %v293 = vpack.c.bf16 %v193, %v193
  %v295 = vperm.slane %v292, 0
  %v296 = vperm.slane %v292, 1
  %v297 = vperm.slane %v292, 2
  %v298 = vperm.slane %v292, 3
  %v299 = vperm.slane %v292, 4
  %v300 = vperm.slane %v292, 5
  %v403 = vunpack.c.l.b16 %v196
  %v404 = vunpack.c.l.b16 %v197
  %v405 = vunpack.c.l.b16 %v198
  %v406 = vunpack.c.l.b16 %v199
  %v407 = vunpack.c.l.b16 %v200
  %v408 = vunpack.c.l.b16 %v201
  %v409 = vunpack.c.l.b16 %v202
  %v410 = vunpack.c.l.b16 %v203
  %v411 = vunpack.c.l.b16 %v204
  %v412 = vunpack.c.l.b16 %v205
  %v413 = vunpack.c.l.b16 %v206
  %v414 = vunpack.c.l.b16 %v207
  %v415 = vunpack.c.l.b16 %v208
  %v416 = vunpack.c.l.b16 %v209
  %v417 = vunpack.c.l.b16 %v210
  %v418 = vunpack.c.l.b16 %v211
  %v419 = vunpack.c.l.b16 %v212
  %v420 = vunpack.c.l.b16 %v213
  %v421 = vunpack.c.l.b16 %v214
  %v422 = vunpack.c.l.b16 %v215
  %v423 = vunpack.c.l.b16 %v216
  %v424 = vunpack.c.l.b16 %v217
  %v425 = vunpack.c.l.b16 %v218
  %v426 = vunpack.c.l.b16 %v219
  %v427 = vunpack.c.l.b16 %v220
  %v428 = vunpack.c.l.b16 %v221
  %v429 = vunpack.c.l.b16 %v222
  %v430 = vunpack.c.l.b16 %v223
  %v431 = vunpack.c.l.b16 %v224
  %v432 = vunpack.c.l.b16 %v225
  %v433 = vunpack.c.l.b16 %v226
  %v434 = vunpack.c.l.b16 %v227
  %v435 = vunpack.c.l.b16 %v228
  %v436 = vunpack.c.l.b16 %v229
  %v437 = vunpack.c.l.b16 %v230
  %v438 = vunpack.c.l.b16 %v231
  %v439 = vunpack.c.l.b16 %v232
  %v440 = vunpack.c.l.b16 %v233
  %v441 = vunpack.c.l.b16 %v234
  %v442 = vunpack.c.l.b16 %v235
  %v443 = vunpack.c.l.b16 %v236
  %v444 = vunpack.c.l.b16 %v237
  %v445 = vunpack.c.l.b16 %v238
  %v446 = vunpack.c.l.b16 %v239
  %v447 = vunpack.c.l.b16 %v240
  %v448 = vunpack.c.l.b16 %v241
  %v449 = vunpack.c.l.b16 %v242
  %v450 = vunpack.c.l.b16 %v243
  %v451 = vunpack.c.l.b16 %v244
  %v452 = vunpack.c.l.b16 %v245
  %v453 = vunpack.c.l.b16 %v246
  %v454 = vunpack.c.l.b16 %v247
  %v455 = vunpack.c.l.b16 %v248
  %v456 = vunpack.c.l.b16 %v249
  %v457 = vunpack.c.l.b16 %v250
  %v458 = vunpack.c.l.b16 %v251
  %v459 = vunpack.c.l.b16 %v252
  %v460 = vunpack.c.l.b16 %v253
  %v461 = vunpack.c.l.b16 %v254
  %v462 = vunpack.c.l.b16 %v255
  %v463 = vunpack.c.l.b16 %v256
  %v464 = vunpack.c.l.b16 %v257
  %v465 = vunpack.c.l.b16 %v258
  %v466 = vunpack.c.l.b16 %v259
  %v467 = vunpack.c.l.b16 %v260
  %v468 = vunpack.c.l.b16 %v261
  %v469 = vunpack.c.l.b16 %v262
  %v470 = vunpack.c.l.b16 %v263
  %v471 = vunpack.c.l.b16 %v264
  %v472 = vunpack.c.l.b16 %v265
  %v473 = vunpack.c.l.b16 %v266
  %v474 = vunpack.c.l.b16 %v267
  %v475 = vunpack.c.l.b16 %v268
  %v476 = vunpack.c.l.b16 %v269
  %v477 = vunpack.c.l.b16 %v270
  %v478 = vunpack.c.l.b16 %v271
  %v479 = vunpack.c.l.b16 %v272
  %v480 = vunpack.c.l.b16 %v273
  %v481 = vunpack.c.l.b16 %v274
  %v482 = vunpack.c.l.b16 %v275
  %v483 = vunpack.c.l.b16 %v276
  %v484 = vunpack.c.l.b16 %v277
  %v485 = vunpack.c.l.b16 %v278
  %v486 = vunpack.c.l.b16 %v279
  %v487 = vunpack.c.l.b16 %v280
  %v488 = vunpack.c.l.b16 %v281
  %v489 = vunpack.c.l.b16 %v282
  %v490 = vunpack.c.l.b16 %v283
  %v491 = vunpack.c.l.b16 %v284
  %v492 = vunpack.c.l.b16 %v285
  %v493 = vunpack.c.l.b16 %v286
  %v494 = vunpack.c.l.b16 %v287
  %v495 = vunpack.c.l.b16 %v288
  %v496 = vunpack.c.l.b16 %v289
  %v497 = vunpack.c.l.b16 %v290
  %v498 = vunpack.c.l.b16 %v291
  %v499 = vpack.c.b16 %v404, %v403
  %v500 = vpack.c.b16 %v406, %v405
  %v501 = vpack.c.b16 %v408, %v407
  %v502 = vpack.c.b16 %v410, %v409
  %v503 = vpack.c.b16 %v412, %v411
  %v504 = vpack.c.b16 %v414, %v413
  %v505 = vpack.c.b16 %v416, %v415
  %v506 = vpack.c.b16 %v418, %v417
  %v507 = vpack.c.b16 %v420, %v419
  %v508 = vpack.c.b16 %v422, %v421
  %v509 = vpack.c.b16 %v424, %v423
  %v510 = vpack.c.b16 %v426, %v425
  %v511 = vpack.c.b16 %v428, %v427
  %v512 = vpack.c.b16 %v430, %v429
  %v513 = vpack.c.b16 %v432, %v431
  %v514 = vpack.c.b16 %v434, %v433
  %v515 = vpack.c.b16 %v436, %v435
  %v516 = vpack.c.b16 %v438, %v437
  %v517 = vpack.c.b16 %v440, %v439
  %v518 = vpack.c.b16 %v442, %v441
  %v519 = vpack.c.b16 %v444, %v443
  %v520 = vpack.c.b16 %v446, %v445
  %v521 = vpack.c.b16 %v448, %v447
  %v522 = vpack.c.b16 %v450, %v449
  %v523 = vpack.c.b16 %v452, %v451
  %v524 = vpack.c.b16 %v454, %v453
  %v525 = vpack.c.b16 %v456, %v455
  %v526 = vpack.c.b16 %v458, %v457
  %v527 = vpack.c.b16 %v460, %v459
  %v528 = vpack.c.b16 %v462, %v461
  %v529 = vpack.c.b16 %v464, %v463
  %v530 = vpack.c.b16 %v466, %v465
  %v531 = vpack.c.b16 %v468, %v467
  %v532 = vpack.c.b16 %v470, %v469
  %v533 = vpack.c.b16 %v472, %v471
  %v534 = vpack.c.b16 %v474, %v473
  %v535 = vpack.c.b16 %v476, %v475
  %v536 = vpack.c.b16 %v478, %v477
  %v537 = vpack.c.b16 %v480, %v479
  %v538 = vpack.c.b16 %v482, %v481
  %v539 = vpack.c.b16 %v484, %v483
  %v540 = vpack.c.b16 %v486, %v485
  %v541 = vpack.c.b16 %v488, %v487
  %v542 = vpack.c.b16 %v490, %v489
  %v543 = vpack.c.b16 %v492, %v491
  %v544 = vpack.c.b16 %v494, %v493
  %v545 = vpack.c.b16 %v496, %v495
  %v546 = vpack.c.b16 %v498, %v497
  %vm547 = vcmask 523264
  %v549 = vsel %vm547, %v293, 0
  %v552 = vsel %vm547, %v499, 0
  %v555 = vsel %vm547, %v500, 0
  %v558 = vsel %vm547, %v501, 0
  %v561 = vsel %vm547, %v502, 0
  %v564 = vsel %vm547, %v503, 0
  %v567 = vsel %vm547, %v504, 0
  %v570 = vsel %vm547, %v505, 0
  %v573 = vsel %vm547, %v506, 0
  %v576 = vsel %vm547, %v507, 0
  %v579 = vsel %vm547, %v508, 0
  %v582 = vsel %vm547, %v509, 0
  %v585 = vsel %vm547, %v510, 0
  %v588 = vsel %vm547, %v511, 0
  %v591 = vsel %vm547, %v512, 0
  %v594 = vsel %vm547, %v513, 0
  %v597 = vsel %vm547, %v514, 0
  %v600 = vsel %vm547, %v515, 0
  %v603 = vsel %vm547, %v516, 0
  %v606 = vsel %vm547, %v517, 0
  %v609 = vsel %vm547, %v518, 0
  %v612 = vsel %vm547, %v519, 0
  %v615 = vsel %vm547, %v520, 0
  %v618 = vsel %vm547, %v521, 0
  %v621 = vsel %vm547, %v522, 0
  %v624 = vsel %vm547, %v523, 0
  %v627 = vsel %vm547, %v524, 0
  %v630 = vsel %vm547, %v525, 0
  %v633 = vsel %vm547, %v526, 0
  %v636 = vsel %vm547, %v527, 0
  %v639 = vsel %vm547, %v528, 0
  %v642 = vsel %vm547, %v529, 0
  %v645 = vsel %vm547, %v530, 0
  %v648 = vsel %vm547, %v531, 0
  %v651 = vsel %vm547, %v532, 0
  %v654 = vsel %vm547, %v533, 0
  %v657 = vsel %vm547, %v534, 0
  %v660 = vsel %vm547, %v535, 0
  %v663 = vsel %vm547, %v536, 0
  %v666 = vsel %vm547, %v537, 0
  %v669 = vsel %vm547, %v538, 0
  %v672 = vsel %vm547, %v539, 0
  %v675 = vsel %vm547, %v540, 0
  %v678 = vsel %vm547, %v541, 0
  %v681 = vsel %vm547, %v542, 0
  %v684 = vsel %vm547, %v543, 0
  %v687 = vsel %vm547, %v544, 0
  %v690 = vsel %vm547, %v545, 0
  %v693 = vsel %vm547, %v546, 0
  %695 = vmatpush.bf16.xpose.msra.mxu0 %v573
  %696 = vmatpush.bf16.xpose.msra.mxu0 %v570
  %697 = vmatpush.bf16.xpose.msra.mxu0 %v567
  %698 = vmatpush.bf16.xpose.msra.mxu0 %v564
  %699 = vmatpush.bf16.xpose.msra.mxu0 %v561
  %700 = vmatpush.bf16.xpose.msra.mxu0 %v558
  %701 = vmatpush.bf16.xpose.msra.mxu0 %v555
  %702 = vmatpush.bf16.xpose.msra.mxu0 %v552
  %703 = vmatmul.bf16.gmra.mxu0 %v549
  %v704 = vpop.f32.mrf.mxu0
  %v705 = vadd.f32 %v295, %v704
  %v706 = vpop.f32.mrf.mxu0
  %707 = vdwg.mxu0
  %708 = vmatpush.bf16.xpose.msra.mxu0 %v597
  %709 = vmatpush.bf16.xpose.msra.mxu0 %v594
  %710 = vmatpush.bf16.xpose.msra.mxu0 %v591
  %711 = vmatpush.bf16.xpose.msra.mxu0 %v588
  %712 = vmatpush.bf16.xpose.msra.mxu0 %v585
  %713 = vmatpush.bf16.xpose.msra.mxu0 %v582
  %714 = vmatpush.bf16.xpose.msra.mxu0 %v579
  %715 = vmatpush.bf16.xpose.msra.mxu0 %v576
  %716 = vmatmul.bf16.gmra.mxu0 %v549
  %v717 = vpop.f32.mrf.mxu0
  %v718 = vadd.f32 %v296, %v717
  %v719 = vpop.f32.mrf.mxu0
  %720 = vdwg.mxu0
  %721 = vmatpush.bf16.xpose.msra.mxu0 %v621
  %722 = vmatpush.bf16.xpose.msra.mxu0 %v618
  %723 = vmatpush.bf16.xpose.msra.mxu0 %v615
  %724 = vmatpush.bf16.xpose.msra.mxu0 %v612
  %725 = vmatpush.bf16.xpose.msra.mxu0 %v609
  %726 = vmatpush.bf16.xpose.msra.mxu0 %v606
  %727 = vmatpush.bf16.xpose.msra.mxu0 %v603
  %728 = vmatpush.bf16.xpose.msra.mxu0 %v600
  %729 = vmatmul.bf16.gmra.mxu0 %v549
  %v730 = vpop.f32.mrf.mxu0
  %v731 = vadd.f32 %v297, %v730
  %v732 = vpop.f32.mrf.mxu0
  %733 = vdwg.mxu0
  %734 = vmatpush.bf16.xpose.msra.mxu0 %v645
  %735 = vmatpush.bf16.xpose.msra.mxu0 %v642
  %736 = vmatpush.bf16.xpose.msra.mxu0 %v639
  %737 = vmatpush.bf16.xpose.msra.mxu0 %v636
  %738 = vmatpush.bf16.xpose.msra.mxu0 %v633
  %739 = vmatpush.bf16.xpose.msra.mxu0 %v630
  %740 = vmatpush.bf16.xpose.msra.mxu0 %v627
  %741 = vmatpush.bf16.xpose.msra.mxu0 %v624
  %742 = vmatmul.bf16.gmra.mxu0 %v549
  %v743 = vpop.f32.mrf.mxu0
  %v744 = vadd.f32 %v298, %v743
  %v745 = vpop.f32.mrf.mxu0
  %746 = vdwg.mxu0
  %747 = vmatpush.bf16.xpose.msra.mxu0 %v669
  %748 = vmatpush.bf16.xpose.msra.mxu0 %v666
  %749 = vmatpush.bf16.xpose.msra.mxu0 %v663
  %750 = vmatpush.bf16.xpose.msra.mxu0 %v660
  %751 = vmatpush.bf16.xpose.msra.mxu0 %v657
  %752 = vmatpush.bf16.xpose.msra.mxu0 %v654
  %753 = vmatpush.bf16.xpose.msra.mxu0 %v651
  %754 = vmatpush.bf16.xpose.msra.mxu0 %v648
  %755 = vmatmul.bf16.gmra.mxu0 %v549
  %v756 = vpop.f32.mrf.mxu0
  %v757 = vadd.f32 %v299, %v756
  %v758 = vpop.f32.mrf.mxu0
  %759 = vdwg.mxu0
  %760 = vmatpush.bf16.xpose.msra.mxu0 %v693
  %761 = vmatpush.bf16.xpose.msra.mxu0 %v690
  %762 = vmatpush.bf16.xpose.msra.mxu0 %v687
  %763 = vmatpush.bf16.xpose.msra.mxu0 %v684
  %764 = vmatpush.bf16.xpose.msra.mxu0 %v681
  %765 = vmatpush.bf16.xpose.msra.mxu0 %v678
  %766 = vmatpush.bf16.xpose.msra.mxu0 %v675
  %767 = vmatpush.bf16.xpose.msra.mxu0 %v672
  %768 = vmatmul.bf16.gmra.mxu0 %v549
  %v769 = vpop.f32.mrf.mxu0
  %v770 = vadd.f32 %v300, %v769
  %v771 = vpop.f32.mrf.mxu0
  %772 = vdwg.mxu0
  %v773 = vmul.f32 %v705, %v731
  %v774 = vmul.f32 %v718, %v744
  %v775 = vpack.c.bf16 %v773, %v773
  %v776 = vpack.c.bf16 %v774, %v774
  %v809 = vunpack.c.l.b16 %v65
  %v810 = vunpack.c.l.b16 %v66
  %v811 = vunpack.c.l.b16 %v67
  %v812 = vunpack.c.l.b16 %v68
  %v813 = vunpack.c.l.b16 %v69
  %v814 = vunpack.c.l.b16 %v70
  %v815 = vunpack.c.l.b16 %v71
  %v816 = vunpack.c.l.b16 %v72
  %v817 = vunpack.c.l.b16 %v73
  %v818 = vunpack.c.l.b16 %v74
  %v819 = vunpack.c.l.b16 %v75
  %v820 = vunpack.c.l.b16 %v76
  %v821 = vunpack.c.l.b16 %v77
  %v822 = vunpack.c.l.b16 %v78
  %v823 = vunpack.c.l.b16 %v79
  %v824 = vunpack.c.l.b16 %v80
  %v825 = vunpack.c.l.b16 %v81
  %v826 = vunpack.c.l.b16 %v82
  %v827 = vunpack.c.l.b16 %v83
  %v828 = vunpack.c.l.b16 %v84
  %v829 = vunpack.c.l.b16 %v85
  %v830 = vunpack.c.l.b16 %v86
  %v831 = vunpack.c.l.b16 %v87
  %v832 = vunpack.c.l.b16 %v88
  %v833 = vunpack.c.l.b16 %v89
  %v834 = vunpack.c.l.b16 %v90
  %v835 = vunpack.c.l.b16 %v91
  %v836 = vunpack.c.l.b16 %v92
  %v837 = vunpack.c.l.b16 %v93
  %v838 = vunpack.c.l.b16 %v94
  %v839 = vunpack.c.l.b16 %v95
  %v840 = vunpack.c.l.b16 %v96
  %v841 = vpack.c.b16 %v810, %v809
  %v842 = vpack.c.b16 %v812, %v811
  %v843 = vpack.c.b16 %v814, %v813
  %v844 = vpack.c.b16 %v816, %v815
  %v845 = vpack.c.b16 %v818, %v817
  %v846 = vpack.c.b16 %v820, %v819
  %v847 = vpack.c.b16 %v822, %v821
  %v848 = vpack.c.b16 %v824, %v823
  %v849 = vpack.c.b16 %v826, %v825
  %v850 = vpack.c.b16 %v828, %v827
  %v851 = vpack.c.b16 %v830, %v829
  %v852 = vpack.c.b16 %v832, %v831
  %v853 = vpack.c.b16 %v834, %v833
  %v854 = vpack.c.b16 %v836, %v835
  %v855 = vpack.c.b16 %v838, %v837
  %v856 = vpack.c.b16 %v840, %v839
  %873 = vmatpush.bf16.msra.mxu0 %v848
  %874 = vmatpush.bf16.msra.mxu0 %v847
  %875 = vmatpush.bf16.msra.mxu0 %v846
  %876 = vmatpush.bf16.msra.mxu0 %v845
  %877 = vmatpush.bf16.msra.mxu0 %v844
  %878 = vmatpush.bf16.msra.mxu0 %v843
  %879 = vmatpush.bf16.msra.mxu0 %v842
  %880 = vmatpush.bf16.msra.mxu0 %v841
  %881 = vmatmul.bf16.gmra.mxu0 %v775
  %v882 = vpop.f32.mrf.mxu0
  %v883 = vadd.f32 0.0, %v882
  %v884 = vpop.f32.mrf.mxu0
  %885 = vdwg.mxu0
  %886 = vmatpush.bf16.msra.mxu0 %v856
  %887 = vmatpush.bf16.msra.mxu0 %v855
  %888 = vmatpush.bf16.msra.mxu0 %v854
  %889 = vmatpush.bf16.msra.mxu0 %v853
  %890 = vmatpush.bf16.msra.mxu0 %v852
  %891 = vmatpush.bf16.msra.mxu0 %v851
  %892 = vmatpush.bf16.msra.mxu0 %v850
  %893 = vmatpush.bf16.msra.mxu0 %v849
  %894 = vmatmul.bf16.gmra.mxu0 %v776
  %v895 = vpop.f32.mrf.mxu0
  %v896 = vadd.f32 %v883, %v895
  %v897 = vpop.f32.mrf.mxu0
  %898 = vdwg.mxu0
  %v899 = vsel %vm167, %v896, -inf
  %900 = vmax.xlane.f32.xlu0 %v899
  %v901 = vpop.xlane.xlu0 %900
  %v902 = vsub.f32 %v896, %v901
  %v903 = vmul.f32 %v902, 1.442695
  %v904 = vpow.pop %v903
  %v906 = vsel %vm167, %v904, 0
  %908 = vmatpush.msra.mxu0 0.0
  %909 = vmatpush.msra.mxu0 0.0
  %910 = vmatpush.msra.mxu0 0.0
  %911 = vmatpush.msra.mxu0 0.0
  %912 = vmatpush.msra.mxu0 0.0
  %913 = vmatpush.msra.mxu0 0.0
  %914 = vmatpush.msra.mxu0 0.0
  %915 = vmatpush.msra.mxu0 0.0
  %916 = vmatpush.msra.mxu0 0.0
  %917 = vmatpush.msra.mxu0 0.0
  %918 = vmatpush.msra.mxu0 0.0
  %919 = vmatpush.msra.mxu0 0.0
  %920 = vmatpush.msra.mxu0 0.0
  %921 = vmatpush.msra.mxu0 0.0
  %922 = vmatpush.msra.mxu0 %v98
  %923 = vmatpush.msra.mxu0 %v97
  %924 = vmatmul.f32.gmra.mxu0 %v906
  %v925 = vpop.f32.mrf.mxu0
  %v926 = vadd.f32 0.0, %v925
  %927 = vdwg.mxu0
  %v928 = vrcp.pop %v926
  %v929 = vmul.f32 %v904, %v928
  %v930 = vpack.c.bf16 %v929, %v929
  %v933 = vunpack.c.l.b16 %v99
  %v934 = vunpack.c.h.b16 %v99
  %v935 = vunpack.c.l.b16 %v100
  %v936 = vunpack.c.h.b16 %v100
  %v937 = vpack.c.b16 %v935, %v933
  %v938 = vpack.c.b16 %v936, %v934
  %v942 = vsel %vm167, %v930, 0
  %944 = vmatpush.bf16.msra.mxu0 0
  %945 = vmatpush.bf16.msra.mxu0 0
  %946 = vmatpush.bf16.msra.mxu0 0
  %947 = vmatpush.bf16.msra.mxu0 0
  %948 = vmatpush.bf16.msra.mxu0 0
  %949 = vmatpush.bf16.msra.mxu0 0
  %950 = vmatpush.bf16.msra.mxu0 0
  %951 = vmatpush.bf16.msra.mxu0 %v937
  %952 = vmatmul.bf16.gmra.mxu0 %v942
  %v953 = vpop.f32.mrf.mxu0
  %v954 = vadd.f32 0.0, %v953
  %v955 = vpop.f32.mrf.mxu0
  %956 = vdwg.mxu0
  %957 = vmatpush.bf16.msra.mxu0 0
  %958 = vmatpush.bf16.msra.mxu0 0
  %959 = vmatpush.bf16.msra.mxu0 0
  %960 = vmatpush.bf16.msra.mxu0 0
  %961 = vmatpush.bf16.msra.mxu0 0
  %962 = vmatpush.bf16.msra.mxu0 0
  %963 = vmatpush.bf16.msra.mxu0 0
  %964 = vmatpush.bf16.msra.mxu0 %v938
  %965 = vmatmul.bf16.gmra.mxu0 %v942
  %v966 = vpop.f32.mrf.mxu0
  %v967 = vadd.f32 0.0, %v966
  %v968 = vpop.f32.mrf.mxu0
  %969 = vdwg.mxu0
  %v970 = vmul.f32 %v954, %v757
  %v971 = vmul.f32 %v967, %v770
  %v972 = vpack.c.bf16 %v970, %v970
  %v973 = vpack.c.bf16 %v971, %v971
  %v1006 = vunpack.c.l.b16 %v101
  %v1007 = vunpack.c.l.b16 %v102
  %v1008 = vunpack.c.l.b16 %v103
  %v1009 = vunpack.c.l.b16 %v104
  %v1010 = vunpack.c.l.b16 %v105
  %v1011 = vunpack.c.l.b16 %v106
  %v1012 = vunpack.c.l.b16 %v107
  %v1013 = vunpack.c.l.b16 %v108
  %v1014 = vunpack.c.l.b16 %v109
  %v1015 = vunpack.c.l.b16 %v110
  %v1016 = vunpack.c.l.b16 %v111
  %v1017 = vunpack.c.l.b16 %v112
  %v1018 = vunpack.c.l.b16 %v113
  %v1019 = vunpack.c.l.b16 %v114
  %v1020 = vunpack.c.l.b16 %v115
  %v1021 = vunpack.c.l.b16 %v116
  %v1022 = vunpack.c.l.b16 %v117
  %v1023 = vunpack.c.l.b16 %v118
  %v1024 = vunpack.c.l.b16 %v119
  %v1025 = vunpack.c.l.b16 %v120
  %v1026 = vunpack.c.l.b16 %v121
  %v1027 = vunpack.c.l.b16 %v122
  %v1028 = vunpack.c.l.b16 %v123
  %v1029 = vunpack.c.l.b16 %v124
  %v1030 = vunpack.c.l.b16 %v125
  %v1031 = vunpack.c.l.b16 %v126
  %v1032 = vunpack.c.l.b16 %v127
  %v1033 = vunpack.c.l.b16 %v128
  %v1034 = vunpack.c.l.b16 %v129
  %v1035 = vunpack.c.l.b16 %v130
  %v1036 = vunpack.c.l.b16 %v131
  %v1037 = vunpack.c.l.b16 %v132
  %v1038 = vpack.c.b16 %v1007, %v1006
  %v1039 = vpack.c.b16 %v1009, %v1008
  %v1040 = vpack.c.b16 %v1011, %v1010
  %v1041 = vpack.c.b16 %v1013, %v1012
  %v1042 = vpack.c.b16 %v1015, %v1014
  %v1043 = vpack.c.b16 %v1017, %v1016
  %v1044 = vpack.c.b16 %v1019, %v1018
  %v1045 = vpack.c.b16 %v1021, %v1020
  %v1046 = vpack.c.b16 %v1023, %v1022
  %v1047 = vpack.c.b16 %v1025, %v1024
  %v1048 = vpack.c.b16 %v1027, %v1026
  %v1049 = vpack.c.b16 %v1029, %v1028
  %v1050 = vpack.c.b16 %v1031, %v1030
  %v1051 = vpack.c.b16 %v1033, %v1032
  %v1052 = vpack.c.b16 %v1035, %v1034
  %v1053 = vpack.c.b16 %v1037, %v1036
  %1070 = vmatpush.bf16.msra.mxu0 %v1045
  %1071 = vmatpush.bf16.msra.mxu0 %v1044
  %1072 = vmatpush.bf16.msra.mxu0 %v1043
  %1073 = vmatpush.bf16.msra.mxu0 %v1042
  %1074 = vmatpush.bf16.msra.mxu0 %v1041
  %1075 = vmatpush.bf16.msra.mxu0 %v1040
  %1076 = vmatpush.bf16.msra.mxu0 %v1039
  %1077 = vmatpush.bf16.msra.mxu0 %v1038
  %1078 = vmatmul.bf16.gmra.mxu0 %v972
  %v1079 = vpop.f32.mrf.mxu0
  %v1080 = vadd.f32 0.0, %v1079
  %v1081 = vpop.f32.mrf.mxu0
  %1082 = vdwg.mxu0
  %1083 = vmatpush.bf16.msra.mxu0 %v1053
  %1084 = vmatpush.bf16.msra.mxu0 %v1052
  %1085 = vmatpush.bf16.msra.mxu0 %v1051
  %1086 = vmatpush.bf16.msra.mxu0 %v1050
  %1087 = vmatpush.bf16.msra.mxu0 %v1049
  %1088 = vmatpush.bf16.msra.mxu0 %v1048
  %1089 = vmatpush.bf16.msra.mxu0 %v1047
  %1090 = vmatpush.bf16.msra.mxu0 %v1046
  %1091 = vmatmul.bf16.gmra.mxu0 %v973
  %v1092 = vpop.f32.mrf.mxu0
  %v1093 = vadd.f32 %v1080, %v1092
  %v1094 = vpop.f32.mrf.mxu0
  %1095 = vdwg.mxu0
  %v1096 = vld [vmem:[%s5] sm:$0xf]
  %v1097 = vld [vmem:[%s5 + $0x4] sm:$0xf]
  %v1098 = vld [vmem:[%s5 + $0x8] sm:$0xf]
  %v1099 = vld [vmem:[%s5 + $0xc] sm:$0xf]
  %v1100 = vld [vmem:[%s5 + $0x10] sm:$0xf]
  %v1101 = vld [vmem:[%s5 + $0x14] sm:$0xf]
  %v1102 = vld [vmem:[%s5 + $0x18] sm:$0xf]
  %v1103 = vld [vmem:[%s5 + $0x1c] sm:$0xf]
  %v1104 = vld [vmem:[%s6] sm:$0x1]
  %v1105 = vpack.c.bf16 %v1093, %v1093
  %v1107 = vperm.slane %v1104, 0
  %v1117 = vunpack.c.l.b16 %v1096
  %v1118 = vunpack.c.l.b16 %v1097
  %v1119 = vunpack.c.l.b16 %v1098
  %v1120 = vunpack.c.l.b16 %v1099
  %v1121 = vunpack.c.l.b16 %v1100
  %v1122 = vunpack.c.l.b16 %v1101
  %v1123 = vunpack.c.l.b16 %v1102
  %v1124 = vunpack.c.l.b16 %v1103
  %v1125 = vpack.c.b16 %v1118, %v1117
  %v1126 = vpack.c.b16 %v1120, %v1119
  %v1127 = vpack.c.b16 %v1122, %v1121
  %v1128 = vpack.c.b16 %v1124, %v1123
  %v1130 = vsel %vm547, %v1105, 0
  %v1133 = vsel %vm547, %v1125, 0
  %v1136 = vsel %vm547, %v1126, 0
  %v1139 = vsel %vm547, %v1127, 0
  %v1142 = vsel %vm547, %v1128, 0
  %1144 = vmatpush.bf16.xpose.msra.mxu0 0
  %1145 = vmatpush.bf16.xpose.msra.mxu0 0
  %1146 = vmatpush.bf16.xpose.msra.mxu0 0
  %1147 = vmatpush.bf16.xpose.msra.mxu0 0
  %1148 = vmatpush.bf16.xpose.msra.mxu0 %v1142
  %1149 = vmatpush.bf16.xpose.msra.mxu0 %v1139
  %1150 = vmatpush.bf16.xpose.msra.mxu0 %v1136
  %1151 = vmatpush.bf16.xpose.msra.mxu0 %v1133
  %1152 = vmatmul.bf16.gmra.mxu0 %v1130
  %v1153 = vpop.f32.mrf.mxu0
  %v1154 = vadd.f32 %v1107, %v1153
  %v1155 = vpop.f32.mrf.mxu0
  %1156 = vdwg.mxu0
  %v1157 = vadd.f32 %v193, %v1154
  %v1158 = vld [vmem:[%s7] sm:$0x1]
  %v1159 = vld [vmem:[%s8] sm:$0x1]
  %v1160 = vsel %vm547, %v1157, 0.0
  %1161 = vadd.xlane.f32.xlu0 %v1160
  %v1162 = vpop.xlane.xlu0 %1161
  %v1163 = vrcp.pop 64.0
  %v1164 = vmul.f32 64.0, %v1163
  %v1165 = vsub.f32 1.0, %v1164
  %v1166 = vmul.f32 %v1163, %v1165
  %v1167 = vadd.f32 %v1163, %v1166
  %vm1168 = vweird.f32 %v1163
  %v1169 = vsel %vm1168, %v1163, %v1167
  %v1170 = vmul.f32 %v1162, %v1169
  %v1171 = vsub.f32 %v1157, %v1170
  %v1172 = vmul.f32 %v1171, %v1171
  %v1173 = vsel %vm547, %v1172, 0.0
  %1174 = vadd.xlane.f32.xlu0 %v1173
  %v1175 = vpop.xlane.xlu0 %1174
  %v1176 = vmul.f32 %v1175, %v1169
  %v1177 = vadd.f32 %v1176, 1e-05
  %v1178 = vrsqrt.pop %v1177
  %v1179 = vmul.f32 %v1178, %v1177
  %v1180 = vmul.f32 %v1179, %v1178
  %v1181 = vmul.f32 0.5, %v1180
  %v1182 = vsub.f32 1.5, %v1181
  %v1183 = vmul.f32 %v1178, %v1182
  %vm1184 = vweird.f32 %v1177
  %vm1185 = vweird.f32 %v1178
  %vm1186 = vmor %vm1184, %vm1185
  %v1187 = vsel %vm1186, %v1178, %v1183
  %v1188 = vmul.f32 %v1171, %v1187
  %v1190 = vperm.slane %v1158, 0
  %v1192 = vmul.f32 %v1188, %v1190
  %v1194 = vperm.slane %v1159, 0
  %v1196 = vadd.f32 %v1192, %v1194
  %v1197 = vld [vmem:[%s9] sm:$0xf]
  %v1198 = vld [vmem:[%s9 + $0x4] sm:$0xf]
  %v1199 = vld [vmem:[%s9 + $0x8] sm:$0xf]
  %v1200 = vld [vmem:[%s9 + $0xc] sm:$0xf]
  %v1201 = vld [vmem:[%s9 + $0x10] sm:$0xf]
  %v1202 = vld [vmem:[%s9 + $0x14] sm:$0xf]
  %v1203 = vld [vmem:[%s9 + $0x18] sm:$0xf]
  %v1204 = vld [vmem:[%s9 + $0x1c] sm:$0xf]
  %v1205 = vld [vmem:[%s9 + $0x20] sm:$0xf]
  %v1206 = vld [vmem:[%s9 + $0x24] sm:$0xf]
  %v1207 = vld [vmem:[%s9 + $0x28] sm:$0xf]
  %v1208 = vld [vmem:[%s9 + $0x2c] sm:$0xf]
  %v1209 = vld [vmem:[%s9 + $0x30] sm:$0xf]
  %v1210 = vld [vmem:[%s9 + $0x34] sm:$0xf]
  %v1211 = vld [vmem:[%s9 + $0x38] sm:$0xf]
  %v1212 = vld [vmem:[%s9 + $0x3c] sm:$0xf]
  %v1213 = vld [vmem:[%s9 + $0x40] sm:$0xf]
  %v1214 = vld [vmem:[%s9 + $0x44] sm:$0xf]
  %v1215 = vld [vmem:[%s9 + $0x48] sm:$0xf]
  %v1216 = vld [vmem:[%s9 + $0x4c] sm:$0xf]
  %v1217 = vld [vmem:[%s9 + $0x50] sm:$0xf]
  %v1218 = vld [vmem:[%s9 + $0x54] sm:$0xf]
  %v1219 = vld [vmem:[%s9 + $0x58] sm:$0xf]
  %v1220 = vld [vmem:[%s9 + $0x5c] sm:$0xf]
  %v1221 = vld [vmem:[%s9 + $0x60] sm:$0xf]
  %v1222 = vld [vmem:[%s9 + $0x64] sm:$0xf]
  %v1223 = vld [vmem:[%s9 + $0x68] sm:$0xf]
  %v1224 = vld [vmem:[%s9 + $0x6c] sm:$0xf]
  %v1225 = vld [vmem:[%s9 + $0x70] sm:$0xf]
  %v1226 = vld [vmem:[%s9 + $0x74] sm:$0xf]
  %v1227 = vld [vmem:[%s9 + $0x78] sm:$0xf]
  %v1228 = vld [vmem:[%s9 + $0x7c] sm:$0xf]
  %v1229 = vld [vmem:[%s10] sm:$0x3]
  %v1230 = vpack.c.bf16 %v1196, %v1196
  %v1232 = vperm.slane %v1229, 0
  %v1233 = vperm.slane %v1229, 1
  %v1268 = vunpack.c.l.b16 %v1197
  %v1269 = vunpack.c.l.b16 %v1198
  %v1270 = vunpack.c.l.b16 %v1199
  %v1271 = vunpack.c.l.b16 %v1200
  %v1272 = vunpack.c.l.b16 %v1201
  %v1273 = vunpack.c.l.b16 %v1202
  %v1274 = vunpack.c.l.b16 %v1203
  %v1275 = vunpack.c.l.b16 %v1204
  %v1276 = vunpack.c.l.b16 %v1205
  %v1277 = vunpack.c.l.b16 %v1206
  %v1278 = vunpack.c.l.b16 %v1207
  %v1279 = vunpack.c.l.b16 %v1208
  %v1280 = vunpack.c.l.b16 %v1209
  %v1281 = vunpack.c.l.b16 %v1210
  %v1282 = vunpack.c.l.b16 %v1211
  %v1283 = vunpack.c.l.b16 %v1212
  %v1284 = vunpack.c.l.b16 %v1213
  %v1285 = vunpack.c.l.b16 %v1214
  %v1286 = vunpack.c.l.b16 %v1215
  %v1287 = vunpack.c.l.b16 %v1216
  %v1288 = vunpack.c.l.b16 %v1217
  %v1289 = vunpack.c.l.b16 %v1218
  %v1290 = vunpack.c.l.b16 %v1219
  %v1291 = vunpack.c.l.b16 %v1220
  %v1292 = vunpack.c.l.b16 %v1221
  %v1293 = vunpack.c.l.b16 %v1222
  %v1294 = vunpack.c.l.b16 %v1223
  %v1295 = vunpack.c.l.b16 %v1224
  %v1296 = vunpack.c.l.b16 %v1225
  %v1297 = vunpack.c.l.b16 %v1226
  %v1298 = vunpack.c.l.b16 %v1227
  %v1299 = vunpack.c.l.b16 %v1228
  %v1300 = vpack.c.b16 %v1269, %v1268
  %v1301 = vpack.c.b16 %v1271, %v1270
  %v1302 = vpack.c.b16 %v1273, %v1272
  %v1303 = vpack.c.b16 %v1275, %v1274
  %v1304 = vpack.c.b16 %v1277, %v1276
  %v1305 = vpack.c.b16 %v1279, %v1278
  %v1306 = vpack.c.b16 %v1281, %v1280
  %v1307 = vpack.c.b16 %v1283, %v1282
  %v1308 = vpack.c.b16 %v1285, %v1284
  %v1309 = vpack.c.b16 %v1287, %v1286
  %v1310 = vpack.c.b16 %v1289, %v1288
  %v1311 = vpack.c.b16 %v1291, %v1290
  %v1312 = vpack.c.b16 %v1293, %v1292
  %v1313 = vpack.c.b16 %v1295, %v1294
  %v1314 = vpack.c.b16 %v1297, %v1296
  %v1315 = vpack.c.b16 %v1299, %v1298
  %v1317 = vsel %vm547, %v1230, 0
  %v1320 = vsel %vm547, %v1300, 0
  %v1323 = vsel %vm547, %v1301, 0
  %v1326 = vsel %vm547, %v1302, 0
  %v1329 = vsel %vm547, %v1303, 0
  %v1332 = vsel %vm547, %v1304, 0
  %v1335 = vsel %vm547, %v1305, 0
  %v1338 = vsel %vm547, %v1306, 0
  %v1341 = vsel %vm547, %v1307, 0
  %v1344 = vsel %vm547, %v1308, 0
  %v1347 = vsel %vm547, %v1309, 0
  %v1350 = vsel %vm547, %v1310, 0
  %v1353 = vsel %vm547, %v1311, 0
  %v1356 = vsel %vm547, %v1312, 0
  %v1359 = vsel %vm547, %v1313, 0
  %v1362 = vsel %vm547, %v1314, 0
  %v1365 = vsel %vm547, %v1315, 0
  %1367 = vmatpush.bf16.xpose.msra.mxu0 %v1341
  %1368 = vmatpush.bf16.xpose.msra.mxu0 %v1338
  %1369 = vmatpush.bf16.xpose.msra.mxu0 %v1335
  %1370 = vmatpush.bf16.xpose.msra.mxu0 %v1332
  %1371 = vmatpush.bf16.xpose.msra.mxu0 %v1329
  %1372 = vmatpush.bf16.xpose.msra.mxu0 %v1326
  %1373 = vmatpush.bf16.xpose.msra.mxu0 %v1323
  %1374 = vmatpush.bf16.xpose.msra.mxu0 %v1320
  %1375 = vmatmul.bf16.gmra.mxu0 %v1317
  %v1376 = vpop.f32.mrf.mxu0
  %v1377 = vadd.f32 %v1232, %v1376
  %v1378 = vpop.f32.mrf.mxu0
  %1379 = vdwg.mxu0
  %1380 = vmatpush.bf16.xpose.msra.mxu0 %v1365
  %1381 = vmatpush.bf16.xpose.msra.mxu0 %v1362
  %1382 = vmatpush.bf16.xpose.msra.mxu0 %v1359
  %1383 = vmatpush.bf16.xpose.msra.mxu0 %v1356
  %1384 = vmatpush.bf16.xpose.msra.mxu0 %v1353
  %1385 = vmatpush.bf16.xpose.msra.mxu0 %v1350
  %1386 = vmatpush.bf16.xpose.msra.mxu0 %v1347
  %1387 = vmatpush.bf16.xpose.msra.mxu0 %v1344
  %1388 = vmatmul.bf16.gmra.mxu0 %v1317
  %v1389 = vpop.f32.mrf.mxu0
  %v1390 = vadd.f32 %v1233, %v1389
  %v1391 = vpop.f32.mrf.mxu0
  %1392 = vdwg.mxu0
  %v1393 = vmul.f32 %v1377, 0.5
  %v1394 = vmul.f32 %v1390, 0.5
  %v1395 = vmul.f32 %v1377, 0.044715
  %v1396 = vmul.f32 %v1390, 0.044715
  %v1397 = vmul.f32 %v1395, %v1377
  %v1398 = vmul.f32 %v1396, %v1390
  %v1399 = vmul.f32 %v1397, %v1377
  %v1400 = vmul.f32 %v1398, %v1390
  %v1401 = vadd.f32 %v1377, %v1399
  %v1402 = vadd.f32 %v1390, %v1400
  %v1403 = vmul.f32 %v1401, 0.7978846
  %v1404 = vmul.f32 %v1402, 0.7978846
  %v1405 = vtanh.pop %v1403
  %v1406 = vtanh.pop %v1404
  %v1407 = vadd.f32 %v1405, 1.0
  %v1408 = vadd.f32 %v1406, 1.0
  %v1409 = vmul.f32 %v1393, %v1407
  %v1410 = vmul.f32 %v1394, %v1408
  %v1411 = vld [vmem:[%s11] sm:$0xff]
  %v1412 = vld [vmem:[%s11 + $0x8] sm:$0xff]
  %v1413 = vld [vmem:[%s11 + $0x10] sm:$0xff]
  %v1414 = vld [vmem:[%s11 + $0x18] sm:$0xff]
  %v1415 = vld [vmem:[%s11 + $0x20] sm:$0xff]
  %v1416 = vld [vmem:[%s11 + $0x28] sm:$0xff]
  %v1417 = vld [vmem:[%s11 + $0x30] sm:$0xff]
  %v1418 = vld [vmem:[%s11 + $0x38] sm:$0xff]
  %v1419 = vld [vmem:[%s12] sm:$0x1]
  %v1420 = vpack.c.bf16 %v1409, %v1409
  %v1421 = vpack.c.bf16 %v1410, %v1410
  %v1423 = vperm.slane %v1419, 0
  %v1433 = vunpack.c.l.b16 %v1411
  %v1434 = vunpack.c.h.b16 %v1411
  %v1435 = vunpack.c.l.b16 %v1412
  %v1436 = vunpack.c.h.b16 %v1412
  %v1437 = vunpack.c.l.b16 %v1413
  %v1438 = vunpack.c.h.b16 %v1413
  %v1439 = vunpack.c.l.b16 %v1414
  %v1440 = vunpack.c.h.b16 %v1414
  %v1441 = vunpack.c.l.b16 %v1415
  %v1442 = vunpack.c.h.b16 %v1415
  %v1443 = vunpack.c.l.b16 %v1416
  %v1444 = vunpack.c.h.b16 %v1416
  %v1445 = vunpack.c.l.b16 %v1417
  %v1446 = vunpack.c.h.b16 %v1417
  %v1447 = vunpack.c.l.b16 %v1418
  %v1448 = vunpack.c.h.b16 %v1418
  %v1449 = vpack.c.b16 %v1435, %v1433
  %v1450 = vpack.c.b16 %v1436, %v1434
  %v1451 = vpack.c.b16 %v1439, %v1437
  %v1452 = vpack.c.b16 %v1440, %v1438
  %v1453 = vpack.c.b16 %v1443, %v1441
  %v1454 = vpack.c.b16 %v1444, %v1442
  %v1455 = vpack.c.b16 %v1447, %v1445
  %v1456 = vpack.c.b16 %v1448, %v1446
  %1465 = vmatpush.bf16.xpose.msra.mxu0 0
  %1466 = vmatpush.bf16.xpose.msra.mxu0 0
  %1467 = vmatpush.bf16.xpose.msra.mxu0 0
  %1468 = vmatpush.bf16.xpose.msra.mxu0 0
  %1469 = vmatpush.bf16.xpose.msra.mxu0 %v1455
  %1470 = vmatpush.bf16.xpose.msra.mxu0 %v1453
  %1471 = vmatpush.bf16.xpose.msra.mxu0 %v1451
  %1472 = vmatpush.bf16.xpose.msra.mxu0 %v1449
  %1473 = vmatmul.bf16.gmra.mxu0 %v1420
  %v1474 = vpop.f32.mrf.mxu0
  %v1475 = vadd.f32 %v1423, %v1474
  %v1476 = vpop.f32.mrf.mxu0
  %1477 = vdwg.mxu0
  %1478 = vmatpush.bf16.xpose.msra.mxu0 0
  %1479 = vmatpush.bf16.xpose.msra.mxu0 0
  %1480 = vmatpush.bf16.xpose.msra.mxu0 0
  %1481 = vmatpush.bf16.xpose.msra.mxu0 0
  %1482 = vmatpush.bf16.xpose.msra.mxu0 %v1456
  %1483 = vmatpush.bf16.xpose.msra.mxu0 %v1454
  %1484 = vmatpush.bf16.xpose.msra.mxu0 %v1452
  %1485 = vmatpush.bf16.xpose.msra.mxu0 %v1450
  %1486 = vmatmul.bf16.gmra.mxu0 %v1421
  %v1487 = vpop.f32.mrf.mxu0
  %v1488 = vadd.f32 %v1475, %v1487
  %v1489 = vpop.f32.mrf.mxu0
  %1490 = vdwg.mxu0
  %v1491 = vadd.f32 %v1196, %v1488
  %s1492 = scalar_lea.vmem %s7, 1
  %v1493 = vld [vmem:[%s1492] sm:$0x1]
  %s1494 = scalar_lea.vmem %s8, 1
  %v1495 = vld [vmem:[%s1494] sm:$0x1]
  %v1496 = vsel %vm547, %v1491, 0.0
  %1497 = vadd.xlane.f32.xlu0 %v1496
  %v1498 = vpop.xlane.xlu0 %1497
  %v1499 = vmul.f32 %v1498, %v1169
  %v1500 = vsub.f32 %v1491, %v1499
  %v1501 = vmul.f32 %v1500, %v1500
  %v1502 = vsel %vm547, %v1501, 0.0
  %1503 = vadd.xlane.f32.xlu0 %v1502
  %v1504 = vpop.xlane.xlu0 %1503
  %v1505 = vmul.f32 %v1504, %v1169
  %v1506 = vadd.f32 %v1505, 1e-05
  %v1507 = vrsqrt.pop %v1506
  %v1508 = vmul.f32 %v1507, %v1506
  %v1509 = vmul.f32 %v1508, %v1507
  %v1510 = vmul.f32 0.5, %v1509
  %v1511 = vsub.f32 1.5, %v1510
  %v1512 = vmul.f32 %v1507, %v1511
  %vm1513 = vweird.f32 %v1506
  %vm1514 = vweird.f32 %v1507
  %vm1515 = vmor %vm1513, %vm1514
  %v1516 = vsel %vm1515, %v1507, %v1512
  %v1517 = vmul.f32 %v1500, %v1516
  %v1519 = vperm.slane %v1493, 0
  %v1521 = vmul.f32 %v1517, %v1519
  %v1523 = vperm.slane %v1495, 0
  %v1525 = vadd.f32 %v1521, %v1523
  %s1526 = scalar_lea.vmem %s3, 384
  %v1527 = vld [vmem:[%s1526] sm:$0xf]
  %v1528 = vld [vmem:[%s1526 + $0x4] sm:$0xf]
  %v1529 = vld [vmem:[%s1526 + $0x8] sm:$0xf]
  %v1530 = vld [vmem:[%s1526 + $0xc] sm:$0xf]
  %v1531 = vld [vmem:[%s1526 + $0x10] sm:$0xf]
  %v1532 = vld [vmem:[%s1526 + $0x14] sm:$0xf]
  %v1533 = vld [vmem:[%s1526 + $0x18] sm:$0xf]
  %v1534 = vld [vmem:[%s1526 + $0x1c] sm:$0xf]
  %v1535 = vld [vmem:[%s1526 + $0x20] sm:$0xf]
  %v1536 = vld [vmem:[%s1526 + $0x24] sm:$0xf]
  %v1537 = vld [vmem:[%s1526 + $0x28] sm:$0xf]
  %v1538 = vld [vmem:[%s1526 + $0x2c] sm:$0xf]
  %v1539 = vld [vmem:[%s1526 + $0x30] sm:$0xf]
  %v1540 = vld [vmem:[%s1526 + $0x34] sm:$0xf]
  %v1541 = vld [vmem:[%s1526 + $0x38] sm:$0xf]
  %v1542 = vld [vmem:[%s1526 + $0x3c] sm:$0xf]
  %v1543 = vld [vmem:[%s1526 + $0x40] sm:$0xf]
  %v1544 = vld [vmem:[%s1526 + $0x44] sm:$0xf]
  %v1545 = vld [vmem:[%s1526 + $0x48] sm:$0xf]
  %v1546 = vld [vmem:[%s1526 + $0x4c] sm:$0xf]
  %v1547 = vld [vmem:[%s1526 + $0x50] sm:$0xf]
  %v1548 = vld [vmem:[%s1526 + $0x54] sm:$0xf]
  %v1549 = vld [vmem:[%s1526 + $0x58] sm:$0xf]
  %v1550 = vld [vmem:[%s1526 + $0x5c] sm:$0xf]
  %v1551 = vld [vmem:[%s1526 + $0x60] sm:$0xf]
  %v1552 = vld [vmem:[%s1526 + $0x64] sm:$0xf]
  %v1553 = vld [vmem:[%s1526 + $0x68] sm:$0xf]
  %v1554 = vld [vmem:[%s1526 + $0x6c] sm:$0xf]
  %v1555 = vld [vmem:[%s1526 + $0x70] sm:$0xf]
  %v1556 = vld [vmem:[%s1526 + $0x74] sm:$0xf]
  %v1557 = vld [vmem:[%s1526 + $0x78] sm:$0xf]
  %v1558 = vld [vmem:[%s1526 + $0x7c] sm:$0xf]
  %v1559 = vld [vmem:[%s1526 + $0x80] sm:$0xf]
  %v1560 = vld [vmem:[%s1526 + $0x84] sm:$0xf]
  %v1561 = vld [vmem:[%s1526 + $0x88] sm:$0xf]
  %v1562 = vld [vmem:[%s1526 + $0x8c] sm:$0xf]
  %v1563 = vld [vmem:[%s1526 + $0x90] sm:$0xf]
  %v1564 = vld [vmem:[%s1526 + $0x94] sm:$0xf]
  %v1565 = vld [vmem:[%s1526 + $0x98] sm:$0xf]
  %v1566 = vld [vmem:[%s1526 + $0x9c] sm:$0xf]
  %v1567 = vld [vmem:[%s1526 + $0xa0] sm:$0xf]
  %v1568 = vld [vmem:[%s1526 + $0xa4] sm:$0xf]
  %v1569 = vld [vmem:[%s1526 + $0xa8] sm:$0xf]
  %v1570 = vld [vmem:[%s1526 + $0xac] sm:$0xf]
  %v1571 = vld [vmem:[%s1526 + $0xb0] sm:$0xf]
  %v1572 = vld [vmem:[%s1526 + $0xb4] sm:$0xf]
  %v1573 = vld [vmem:[%s1526 + $0xb8] sm:$0xf]
  %v1574 = vld [vmem:[%s1526 + $0xbc] sm:$0xf]
  %v1575 = vld [vmem:[%s1526 + $0xc0] sm:$0xf]
  %v1576 = vld [vmem:[%s1526 + $0xc4] sm:$0xf]
  %v1577 = vld [vmem:[%s1526 + $0xc8] sm:$0xf]
  %v1578 = vld [vmem:[%s1526 + $0xcc] sm:$0xf]
  %v1579 = vld [vmem:[%s1526 + $0xd0] sm:$0xf]
  %v1580 = vld [vmem:[%s1526 + $0xd4] sm:$0xf]
  %v1581 = vld [vmem:[%s1526 + $0xd8] sm:$0xf]
  %v1582 = vld [vmem:[%s1526 + $0xdc] sm:$0xf]
  %v1583 = vld [vmem:[%s1526 + $0xe0] sm:$0xf]
  %v1584 = vld [vmem:[%s1526 + $0xe4] sm:$0xf]
  %v1585 = vld [vmem:[%s1526 + $0xe8] sm:$0xf]
  %v1586 = vld [vmem:[%s1526 + $0xec] sm:$0xf]
  %v1587 = vld [vmem:[%s1526 + $0xf0] sm:$0xf]
  %v1588 = vld [vmem:[%s1526 + $0xf4] sm:$0xf]
  %v1589 = vld [vmem:[%s1526 + $0xf8] sm:$0xf]
  %v1590 = vld [vmem:[%s1526 + $0xfc] sm:$0xf]
  %v1591 = vld [vmem:[%s1526 + $0x100] sm:$0xf]
  %v1592 = vld [vmem:[%s1526 + $0x104] sm:$0xf]
  %v1593 = vld [vmem:[%s1526 + $0x108] sm:$0xf]
  %v1594 = vld [vmem:[%s1526 + $0x10c] sm:$0xf]
  %v1595 = vld [vmem:[%s1526 + $0x110] sm:$0xf]
  %v1596 = vld [vmem:[%s1526 + $0x114] sm:$0xf]
  %v1597 = vld [vmem:[%s1526 + $0x118] sm:$0xf]
  %v1598 = vld [vmem:[%s1526 + $0x11c] sm:$0xf]
  %v1599 = vld [vmem:[%s1526 + $0x120] sm:$0xf]
  %v1600 = vld [vmem:[%s1526 + $0x124] sm:$0xf]
  %v1601 = vld [vmem:[%s1526 + $0x128] sm:$0xf]
  %v1602 = vld [vmem:[%s1526 + $0x12c] sm:$0xf]
  %v1603 = vld [vmem:[%s1526 + $0x130] sm:$0xf]
  %v1604 = vld [vmem:[%s1526 + $0x134] sm:$0xf]
  %v1605 = vld [vmem:[%s1526 + $0x138] sm:$0xf]
  %v1606 = vld [vmem:[%s1526 + $0x13c] sm:$0xf]
  %v1607 = vld [vmem:[%s1526 + $0x140] sm:$0xf]
  %v1608 = vld [vmem:[%s1526 + $0x144] sm:$0xf]
  %v1609 = vld [vmem:[%s1526 + $0x148] sm:$0xf]
  %v1610 = vld [vmem:[%s1526 + $0x14c] sm:$0xf]
  %v1611 = vld [vmem:[%s1526 + $0x150] sm:$0xf]
  %v1612 = vld [vmem:[%s1526 + $0x154] sm:$0xf]
  %v1613 = vld [vmem:[%s1526 + $0x158] sm:$0xf]
  %v1614 = vld [vmem:[%s1526 + $0x15c] sm:$0xf]
  %v1615 = vld [vmem:[%s1526 + $0x160] sm:$0xf]
  %v1616 = vld [vmem:[%s1526 + $0x164] sm:$0xf]
  %v1617 = vld [vmem:[%s1526 + $0x168] sm:$0xf]
  %v1618 = vld [vmem:[%s1526 + $0x16c] sm:$0xf]
  %v1619 = vld [vmem:[%s1526 + $0x170] sm:$0xf]
  %v1620 = vld [vmem:[%s1526 + $0x174] sm:$0xf]
  %v1621 = vld [vmem:[%s1526 + $0x178] sm:$0xf]
  %v1622 = vld [vmem:[%s1526 + $0x17c] sm:$0xf]
  %s1623 = scalar_lea.vmem %s4, 6
  %v1624 = vld [vmem:[%s1623] sm:$0x3f]
  %v1625 = vpack.c.bf16 %v1525, %v1525
  %v1627 = vperm.slane %v1624, 0
  %v1628 = vperm.slane %v1624, 1
  %v1629 = vperm.slane %v1624, 2
  %v1630 = vperm.slane %v1624, 3
  %v1631 = vperm.slane %v1624, 4
  %v1632 = vperm.slane %v1624, 5
  %v1735 = vunpack.c.l.b16 %v1527
  %v1736 = vunpack.c.l.b16 %v1528
  %v1737 = vunpack.c.l.b16 %v1529
  %v1738 = vunpack.c.l.b16 %v1530
  %v1739 = vunpack.c.l.b16 %v1531
  %v1740 = vunpack.c.l.b16 %v1532
  %v1741 = vunpack.c.l.b16 %v1533
  %v1742 = vunpack.c.l.b16 %v1534
  %v1743 = vunpack.c.l.b16 %v1535
  %v1744 = vunpack.c.l.b16 %v1536
  %v1745 = vunpack.c.l.b16 %v1537
  %v1746 = vunpack.c.l.b16 %v1538
  %v1747 = vunpack.c.l.b16 %v1539
  %v1748 = vunpack.c.l.b16 %v1540
  %v1749 = vunpack.c.l.b16 %v1541
  %v1750 = vunpack.c.l.b16 %v1542
  %v1751 = vunpack.c.l.b16 %v1543
  %v1752 = vunpack.c.l.b16 %v1544
  %v1753 = vunpack.c.l.b16 %v1545
  %v1754 = vunpack.c.l.b16 %v1546
  %v1755 = vunpack.c.l.b16 %v1547
  %v1756 = vunpack.c.l.b16 %v1548
  %v1757 = vunpack.c.l.b16 %v1549
  %v1758 = vunpack.c.l.b16 %v1550
  %v1759 = vunpack.c.l.b16 %v1551
  %v1760 = vunpack.c.l.b16 %v1552
  %v1761 = vunpack.c.l.b16 %v1553
  %v1762 = vunpack.c.l.b16 %v1554
  %v1763 = vunpack.c.l.b16 %v1555
  %v1764 = vunpack.c.l.b16 %v1556
  %v1765 = vunpack.c.l.b16 %v1557
  %v1766 = vunpack.c.l.b16 %v1558
  %v1767 = vunpack.c.l.b16 %v1559
  %v1768 = vunpack.c.l.b16 %v1560
  %v1769 = vunpack.c.l.b16 %v1561
  %v1770 = vunpack.c.l.b16 %v1562
  %v1771 = vunpack.c.l.b16 %v1563
  %v1772 = vunpack.c.l.b16 %v1564
  %v1773 = vunpack.c.l.b16 %v1565
  %v1774 = vunpack.c.l.b16 %v1566
  %v1775 = vunpack.c.l.b16 %v1567
  %v1776 = vunpack.c.l.b16 %v1568
  %v1777 = vunpack.c.l.b16 %v1569
  %v1778 = vunpack.c.l.b16 %v1570
  %v1779 = vunpack.c.l.b16 %v1571
  %v1780 = vunpack.c.l.b16 %v1572
  %v1781 = vunpack.c.l.b16 %v1573
  %v1782 = vunpack.c.l.b16 %v1574
  %v1783 = vunpack.c.l.b16 %v1575
  %v1784 = vunpack.c.l.b16 %v1576
  %v1785 = vunpack.c.l.b16 %v1577
  %v1786 = vunpack.c.l.b16 %v1578
  %v1787 = vunpack.c.l.b16 %v1579
  %v1788 = vunpack.c.l.b16 %v1580
  %v1789 = vunpack.c.l.b16 %v1581
  %v1790 = vunpack.c.l.b16 %v1582
  %v1791 = vunpack.c.l.b16 %v1583
  %v1792 = vunpack.c.l.b16 %v1584
  %v1793 = vunpack.c.l.b16 %v1585
  %v1794 = vunpack.c.l.b16 %v1586
  %v1795 = vunpack.c.l.b16 %v1587
  %v1796 = vunpack.c.l.b16 %v1588
  %v1797 = vunpack.c.l.b16 %v1589
  %v1798 = vunpack.c.l.b16 %v1590
  %v1799 = vunpack.c.l.b16 %v1591
  %v1800 = vunpack.c.l.b16 %v1592
  %v1801 = vunpack.c.l.b16 %v1593
  %v1802 = vunpack.c.l.b16 %v1594
  %v1803 = vunpack.c.l.b16 %v1595
  %v1804 = vunpack.c.l.b16 %v1596
  %v1805 = vunpack.c.l.b16 %v1597
  %v1806 = vunpack.c.l.b16 %v1598
  %v1807 = vunpack.c.l.b16 %v1599
  %v1808 = vunpack.c.l.b16 %v1600
  %v1809 = vunpack.c.l.b16 %v1601
  %v1810 = vunpack.c.l.b16 %v1602
  %v1811 = vunpack.c.l.b16 %v1603
  %v1812 = vunpack.c.l.b16 %v1604
  %v1813 = vunpack.c.l.b16 %v1605
  %v1814 = vunpack.c.l.b16 %v1606
  %v1815 = vunpack.c.l.b16 %v1607
  %v1816 = vunpack.c.l.b16 %v1608
  %v1817 = vunpack.c.l.b16 %v1609
  %v1818 = vunpack.c.l.b16 %v1610
  %v1819 = vunpack.c.l.b16 %v1611
  %v1820 = vunpack.c.l.b16 %v1612
  %v1821 = vunpack.c.l.b16 %v1613
  %v1822 = vunpack.c.l.b16 %v1614
  %v1823 = vunpack.c.l.b16 %v1615
  %v1824 = vunpack.c.l.b16 %v1616
  %v1825 = vunpack.c.l.b16 %v1617
  %v1826 = vunpack.c.l.b16 %v1618
  %v1827 = vunpack.c.l.b16 %v1619
  %v1828 = vunpack.c.l.b16 %v1620
  %v1829 = vunpack.c.l.b16 %v1621
  %v1830 = vunpack.c.l.b16 %v1622
  %v1831 = vpack.c.b16 %v1736, %v1735
  %v1832 = vpack.c.b16 %v1738, %v1737
  %v1833 = vpack.c.b16 %v1740, %v1739
  %v1834 = vpack.c.b16 %v1742, %v1741
  %v1835 = vpack.c.b16 %v1744, %v1743
  %v1836 = vpack.c.b16 %v1746, %v1745
  %v1837 = vpack.c.b16 %v1748, %v1747
  %v1838 = vpack.c.b16 %v1750, %v1749
  %v1839 = vpack.c.b16 %v1752, %v1751
  %v1840 = vpack.c.b16 %v1754, %v1753
  %v1841 = vpack.c.b16 %v1756, %v1755
  %v1842 = vpack.c.b16 %v1758, %v1757
  %v1843 = vpack.c.b16 %v1760, %v1759
  %v1844 = vpack.c.b16 %v1762, %v1761
  %v1845 = vpack.c.b16 %v1764, %v1763
  %v1846 = vpack.c.b16 %v1766, %v1765
  %v1847 = vpack.c.b16 %v1768, %v1767
  %v1848 = vpack.c.b16 %v1770, %v1769
  %v1849 = vpack.c.b16 %v1772, %v1771
  %v1850 = vpack.c.b16 %v1774, %v1773
  %v1851 = vpack.c.b16 %v1776, %v1775
  %v1852 = vpack.c.b16 %v1778, %v1777
  %v1853 = vpack.c.b16 %v1780, %v1779
  %v1854 = vpack.c.b16 %v1782, %v1781
  %v1855 = vpack.c.b16 %v1784, %v1783
  %v1856 = vpack.c.b16 %v1786, %v1785
  %v1857 = vpack.c.b16 %v1788, %v1787
  %v1858 = vpack.c.b16 %v1790, %v1789
  %v1859 = vpack.c.b16 %v1792, %v1791
  %v1860 = vpack.c.b16 %v1794, %v1793
  %v1861 = vpack.c.b16 %v1796, %v1795
  %v1862 = vpack.c.b16 %v1798, %v1797
  %v1863 = vpack.c.b16 %v1800, %v1799
  %v1864 = vpack.c.b16 %v1802, %v1801
  %v1865 = vpack.c.b16 %v1804, %v1803
  %v1866 = vpack.c.b16 %v1806, %v1805
  %v1867 = vpack.c.b16 %v1808, %v1807
  %v1868 = vpack.c.b16 %v1810, %v1809
  %v1869 = vpack.c.b16 %v1812, %v1811
  %v1870 = vpack.c.b16 %v1814, %v1813
  %v1871 = vpack.c.b16 %v1816, %v1815
  %v1872 = vpack.c.b16 %v1818, %v1817
  %v1873 = vpack.c.b16 %v1820, %v1819
  %v1874 = vpack.c.b16 %v1822, %v1821
  %v1875 = vpack.c.b16 %v1824, %v1823
  %v1876 = vpack.c.b16 %v1826, %v1825
  %v1877 = vpack.c.b16 %v1828, %v1827
  %v1878 = vpack.c.b16 %v1830, %v1829
  %v1880 = vsel %vm547, %v1625, 0
  %v1883 = vsel %vm547, %v1831, 0
  %v1886 = vsel %vm547, %v1832, 0
  %v1889 = vsel %vm547, %v1833, 0
  %v1892 = vsel %vm547, %v1834, 0
  %v1895 = vsel %vm547, %v1835, 0
  %v1898 = vsel %vm547, %v1836, 0
  %v1901 = vsel %vm547, %v1837, 0
  %v1904 = vsel %vm547, %v1838, 0
  %v1907 = vsel %vm547, %v1839, 0
  %v1910 = vsel %vm547, %v1840, 0
  %v1913 = vsel %vm547, %v1841, 0
  %v1916 = vsel %vm547, %v1842, 0
  %v1919 = vsel %vm547, %v1843, 0
  %v1922 = vsel %vm547, %v1844, 0
  %v1925 = vsel %vm547, %v1845, 0
  %v1928 = vsel %vm547, %v1846, 0
  %v1931 = vsel %vm547, %v1847, 0
  %v1934 = vsel %vm547, %v1848, 0
  %v1937 = vsel %vm547, %v1849, 0
  %v1940 = vsel %vm547, %v1850, 0
  %v1943 = vsel %vm547, %v1851, 0
  %v1946 = vsel %vm547, %v1852, 0
  %v1949 = vsel %vm547, %v1853, 0
  %v1952 = vsel %vm547, %v1854, 0
  %v1955 = vsel %vm547, %v1855, 0
  %v1958 = vsel %vm547, %v1856, 0
  %v1961 = vsel %vm547, %v1857, 0
  %v1964 = vsel %vm547, %v1858, 0
  %v1967 = vsel %vm547, %v1859, 0
  %v1970 = vsel %vm547, %v1860, 0
  %v1973 = vsel %vm547, %v1861, 0
  %v1976 = vsel %vm547, %v1862, 0
  %v1979 = vsel %vm547, %v1863, 0
  %v1982 = vsel %vm547, %v1864, 0
  %v1985 = vsel %vm547, %v1865, 0
  %v1988 = vsel %vm547, %v1866, 0
  %v1991 = vsel %vm547, %v1867, 0
  %v1994 = vsel %vm547, %v1868, 0
  %v1997 = vsel %vm547, %v1869, 0
  %v2000 = vsel %vm547, %v1870, 0
  %v2003 = vsel %vm547, %v1871, 0
  %v2006 = vsel %vm547, %v1872, 0
  %v2009 = vsel %vm547, %v1873, 0
  %v2012 = vsel %vm547, %v1874, 0
  %v2015 = vsel %vm547, %v1875, 0
  %v2018 = vsel %vm547, %v1876, 0
  %v2021 = vsel %vm547, %v1877, 0
  %v2024 = vsel %vm547, %v1878, 0
  %2026 = vmatpush.bf16.xpose.msra.mxu0 %v1904
  %2027 = vmatpush.bf16.xpose.msra.mxu0 %v1901
  %2028 = vmatpush.bf16.xpose.msra.mxu0 %v1898
  %2029 = vmatpush.bf16.xpose.msra.mxu0 %v1895
  %2030 = vmatpush.bf16.xpose.msra.mxu0 %v1892
  %2031 = vmatpush.bf16.xpose.msra.mxu0 %v1889
  %2032 = vmatpush.bf16.xpose.msra.mxu0 %v1886
  %2033 = vmatpush.bf16.xpose.msra.mxu0 %v1883
  %2034 = vmatmul.bf16.gmra.mxu0 %v1880
  %v2035 = vpop.f32.mrf.mxu0
  %v2036 = vadd.f32 %v1627, %v2035
  %v2037 = vpop.f32.mrf.mxu0
  %2038 = vdwg.mxu0
  %2039 = vmatpush.bf16.xpose.msra.mxu0 %v1928
  %2040 = vmatpush.bf16.xpose.msra.mxu0 %v1925
  %2041 = vmatpush.bf16.xpose.msra.mxu0 %v1922
  %2042 = vmatpush.bf16.xpose.msra.mxu0 %v1919
  %2043 = vmatpush.bf16.xpose.msra.mxu0 %v1916
  %2044 = vmatpush.bf16.xpose.msra.mxu0 %v1913
  %2045 = vmatpush.bf16.xpose.msra.mxu0 %v1910
  %2046 = vmatpush.bf16.xpose.msra.mxu0 %v1907
  %2047 = vmatmul.bf16.gmra.mxu0 %v1880
  %v2048 = vpop.f32.mrf.mxu0
  %v2049 = vadd.f32 %v1628, %v2048
  %v2050 = vpop.f32.mrf.mxu0
  %2051 = vdwg.mxu0
  %2052 = vmatpush.bf16.xpose.msra.mxu0 %v1952
  %2053 = vmatpush.bf16.xpose.msra.mxu0 %v1949
  %2054 = vmatpush.bf16.xpose.msra.mxu0 %v1946
  %2055 = vmatpush.bf16.xpose.msra.mxu0 %v1943
  %2056 = vmatpush.bf16.xpose.msra.mxu0 %v1940
  %2057 = vmatpush.bf16.xpose.msra.mxu0 %v1937
  %2058 = vmatpush.bf16.xpose.msra.mxu0 %v1934
  %2059 = vmatpush.bf16.xpose.msra.mxu0 %v1931
  %2060 = vmatmul.bf16.gmra.mxu0 %v1880
  %v2061 = vpop.f32.mrf.mxu0
  %v2062 = vadd.f32 %v1629, %v2061
  %v2063 = vpop.f32.mrf.mxu0
  %2064 = vdwg.mxu0
  %2065 = vmatpush.bf16.xpose.msra.mxu0 %v1976
  %2066 = vmatpush.bf16.xpose.msra.mxu0 %v1973
  %2067 = vmatpush.bf16.xpose.msra.mxu0 %v1970
  %2068 = vmatpush.bf16.xpose.msra.mxu0 %v1967
  %2069 = vmatpush.bf16.xpose.msra.mxu0 %v1964
  %2070 = vmatpush.bf16.xpose.msra.mxu0 %v1961
  %2071 = vmatpush.bf16.xpose.msra.mxu0 %v1958
  %2072 = vmatpush.bf16.xpose.msra.mxu0 %v1955
  %2073 = vmatmul.bf16.gmra.mxu0 %v1880
  %v2074 = vpop.f32.mrf.mxu0
  %v2075 = vadd.f32 %v1630, %v2074
  %v2076 = vpop.f32.mrf.mxu0
  %2077 = vdwg.mxu0
  %2078 = vmatpush.bf16.xpose.msra.mxu0 %v2000
  %2079 = vmatpush.bf16.xpose.msra.mxu0 %v1997
  %2080 = vmatpush.bf16.xpose.msra.mxu0 %v1994
  %2081 = vmatpush.bf16.xpose.msra.mxu0 %v1991
  %2082 = vmatpush.bf16.xpose.msra.mxu0 %v1988
  %2083 = vmatpush.bf16.xpose.msra.mxu0 %v1985
  %2084 = vmatpush.bf16.xpose.msra.mxu0 %v1982
  %2085 = vmatpush.bf16.xpose.msra.mxu0 %v1979
  %2086 = vmatmul.bf16.gmra.mxu0 %v1880
  %v2087 = vpop.f32.mrf.mxu0
  %v2088 = vadd.f32 %v1631, %v2087
  %v2089 = vpop.f32.mrf.mxu0
  %2090 = vdwg.mxu0
  %2091 = vmatpush.bf16.xpose.msra.mxu0 %v2024
  %2092 = vmatpush.bf16.xpose.msra.mxu0 %v2021
  %2093 = vmatpush.bf16.xpose.msra.mxu0 %v2018
  %2094 = vmatpush.bf16.xpose.msra.mxu0 %v2015
  %2095 = vmatpush.bf16.xpose.msra.mxu0 %v2012
  %2096 = vmatpush.bf16.xpose.msra.mxu0 %v2009
  %2097 = vmatpush.bf16.xpose.msra.mxu0 %v2006
  %2098 = vmatpush.bf16.xpose.msra.mxu0 %v2003
  %2099 = vmatmul.bf16.gmra.mxu0 %v1880
  %v2100 = vpop.f32.mrf.mxu0
  %v2101 = vadd.f32 %v1632, %v2100
  %v2102 = vpop.f32.mrf.mxu0
  %2103 = vdwg.mxu0
  %v2104 = vmul.f32 %v2036, %v2062
  %v2105 = vmul.f32 %v2049, %v2075
  %v2106 = vpack.c.bf16 %v2104, %v2104
  %v2107 = vpack.c.bf16 %v2105, %v2105
  %2108 = vmatpush.bf16.msra.mxu0 %v848
  %2109 = vmatpush.bf16.msra.mxu0 %v847
  %2110 = vmatpush.bf16.msra.mxu0 %v846
  %2111 = vmatpush.bf16.msra.mxu0 %v845
  %2112 = vmatpush.bf16.msra.mxu0 %v844
  %2113 = vmatpush.bf16.msra.mxu0 %v843
  %2114 = vmatpush.bf16.msra.mxu0 %v842
  %2115 = vmatpush.bf16.msra.mxu0 %v841
  %2116 = vmatmul.bf16.gmra.mxu0 %v2106
  %v2117 = vpop.f32.mrf.mxu0
  %v2118 = vadd.f32 0.0, %v2117
  %v2119 = vpop.f32.mrf.mxu0
  %2120 = vdwg.mxu0
  %2121 = vmatpush.bf16.msra.mxu0 %v856
  %2122 = vmatpush.bf16.msra.mxu0 %v855
  %2123 = vmatpush.bf16.msra.mxu0 %v854
  %2124 = vmatpush.bf16.msra.mxu0 %v853
  %2125 = vmatpush.bf16.msra.mxu0 %v852
  %2126 = vmatpush.bf16.msra.mxu0 %v851
  %2127 = vmatpush.bf16.msra.mxu0 %v850
  %2128 = vmatpush.bf16.msra.mxu0 %v849
  %2129 = vmatmul.bf16.gmra.mxu0 %v2107
  %v2130 = vpop.f32.mrf.mxu0
  %v2131 = vadd.f32 %v2118, %v2130
  %v2132 = vpop.f32.mrf.mxu0
  %2133 = vdwg.mxu0
  %v2134 = vsel %vm167, %v2131, -inf
  %2135 = vmax.xlane.f32.xlu0 %v2134
  %v2136 = vpop.xlane.xlu0 %2135
  %v2137 = vsub.f32 %v2131, %v2136
  %v2138 = vmul.f32 %v2137, 1.442695
  %v2139 = vpow.pop %v2138
  %v2141 = vsel %vm167, %v2139, 0
  %2143 = vmatpush.msra.mxu0 0.0
  %2144 = vmatpush.msra.mxu0 0.0
  %2145 = vmatpush.msra.mxu0 0.0
  %2146 = vmatpush.msra.mxu0 0.0
  %2147 = vmatpush.msra.mxu0 0.0
  %2148 = vmatpush.msra.mxu0 0.0
  %2149 = vmatpush.msra.mxu0 0.0
  %2150 = vmatpush.msra.mxu0 0.0
  %2151 = vmatpush.msra.mxu0 0.0
  %2152 = vmatpush.msra.mxu0 0.0
  %2153 = vmatpush.msra.mxu0 0.0
  %2154 = vmatpush.msra.mxu0 0.0
  %2155 = vmatpush.msra.mxu0 0.0
  %2156 = vmatpush.msra.mxu0 0.0
  %2157 = vmatpush.msra.mxu0 %v98
  %2158 = vmatpush.msra.mxu0 %v97
  %2159 = vmatmul.f32.gmra.mxu0 %v2141
  %v2160 = vpop.f32.mrf.mxu0
  %v2161 = vadd.f32 0.0, %v2160
  %2162 = vdwg.mxu0
  %v2163 = vrcp.pop %v2161
  %v2164 = vmul.f32 %v2139, %v2163
  %v2165 = vpack.c.bf16 %v2164, %v2164
  %v2167 = vsel %vm167, %v2165, 0
  %2169 = vmatpush.bf16.msra.mxu0 0
  %2170 = vmatpush.bf16.msra.mxu0 0
  %2171 = vmatpush.bf16.msra.mxu0 0
  %2172 = vmatpush.bf16.msra.mxu0 0
  %2173 = vmatpush.bf16.msra.mxu0 0
  %2174 = vmatpush.bf16.msra.mxu0 0
  %2175 = vmatpush.bf16.msra.mxu0 0
  %2176 = vmatpush.bf16.msra.mxu0 %v937
  %2177 = vmatmul.bf16.gmra.mxu0 %v2167
  %v2178 = vpop.f32.mrf.mxu0
  %v2179 = vadd.f32 0.0, %v2178
  %v2180 = vpop.f32.mrf.mxu0
  %2181 = vdwg.mxu0
  %2182 = vmatpush.bf16.msra.mxu0 0
  %2183 = vmatpush.bf16.msra.mxu0 0
  %2184 = vmatpush.bf16.msra.mxu0 0
  %2185 = vmatpush.bf16.msra.mxu0 0
  %2186 = vmatpush.bf16.msra.mxu0 0
  %2187 = vmatpush.bf16.msra.mxu0 0
  %2188 = vmatpush.bf16.msra.mxu0 0
  %2189 = vmatpush.bf16.msra.mxu0 %v938
  %2190 = vmatmul.bf16.gmra.mxu0 %v2167
  %v2191 = vpop.f32.mrf.mxu0
  %v2192 = vadd.f32 0.0, %v2191
  %v2193 = vpop.f32.mrf.mxu0
  %2194 = vdwg.mxu0
  %v2195 = vmul.f32 %v2179, %v2088
  %v2196 = vmul.f32 %v2192, %v2101
  %v2197 = vpack.c.bf16 %v2195, %v2195
  %v2198 = vpack.c.bf16 %v2196, %v2196
  %2199 = vmatpush.bf16.msra.mxu0 %v1045
  %2200 = vmatpush.bf16.msra.mxu0 %v1044
  %2201 = vmatpush.bf16.msra.mxu0 %v1043
  %2202 = vmatpush.bf16.msra.mxu0 %v1042
  %2203 = vmatpush.bf16.msra.mxu0 %v1041
  %2204 = vmatpush.bf16.msra.mxu0 %v1040
  %2205 = vmatpush.bf16.msra.mxu0 %v1039
  %2206 = vmatpush.bf16.msra.mxu0 %v1038
  %2207 = vmatmul.bf16.gmra.mxu0 %v2197
  %v2208 = vpop.f32.mrf.mxu0
  %v2209 = vadd.f32 0.0, %v2208
  %v2210 = vpop.f32.mrf.mxu0
  %2211 = vdwg.mxu0
  %2212 = vmatpush.bf16.msra.mxu0 %v1053
  %2213 = vmatpush.bf16.msra.mxu0 %v1052
  %2214 = vmatpush.bf16.msra.mxu0 %v1051
  %2215 = vmatpush.bf16.msra.mxu0 %v1050
  %2216 = vmatpush.bf16.msra.mxu0 %v1049
  %2217 = vmatpush.bf16.msra.mxu0 %v1048
  %2218 = vmatpush.bf16.msra.mxu0 %v1047
  %2219 = vmatpush.bf16.msra.mxu0 %v1046
  %2220 = vmatmul.bf16.gmra.mxu0 %v2198
  %v2221 = vpop.f32.mrf.mxu0
  %v2222 = vadd.f32 %v2209, %v2221
  %v2223 = vpop.f32.mrf.mxu0
  %2224 = vdwg.mxu0
  %s2225 = scalar_lea.vmem %s5, 32
  %v2226 = vld [vmem:[%s2225] sm:$0xf]
  %v2227 = vld [vmem:[%s2225 + $0x4] sm:$0xf]
  %v2228 = vld [vmem:[%s2225 + $0x8] sm:$0xf]
  %v2229 = vld [vmem:[%s2225 + $0xc] sm:$0xf]
  %v2230 = vld [vmem:[%s2225 + $0x10] sm:$0xf]
  %v2231 = vld [vmem:[%s2225 + $0x14] sm:$0xf]
  %v2232 = vld [vmem:[%s2225 + $0x18] sm:$0xf]
  %v2233 = vld [vmem:[%s2225 + $0x1c] sm:$0xf]
  %s2234 = scalar_lea.vmem %s6, 1
  %v2235 = vld [vmem:[%s2234] sm:$0x1]
  %v2236 = vpack.c.bf16 %v2222, %v2222
  %v2238 = vperm.slane %v2235, 0
  %v2248 = vunpack.c.l.b16 %v2226
  %v2249 = vunpack.c.l.b16 %v2227
  %v2250 = vunpack.c.l.b16 %v2228
  %v2251 = vunpack.c.l.b16 %v2229
  %v2252 = vunpack.c.l.b16 %v2230
  %v2253 = vunpack.c.l.b16 %v2231
  %v2254 = vunpack.c.l.b16 %v2232
  %v2255 = vunpack.c.l.b16 %v2233
  %v2256 = vpack.c.b16 %v2249, %v2248
  %v2257 = vpack.c.b16 %v2251, %v2250
  %v2258 = vpack.c.b16 %v2253, %v2252
  %v2259 = vpack.c.b16 %v2255, %v2254
  %v2261 = vsel %vm547, %v2236, 0
  %v2264 = vsel %vm547, %v2256, 0
  %v2267 = vsel %vm547, %v2257, 0
  %v2270 = vsel %vm547, %v2258, 0
  %v2273 = vsel %vm547, %v2259, 0
  %2275 = vmatpush.bf16.xpose.msra.mxu0 0
  %2276 = vmatpush.bf16.xpose.msra.mxu0 0
  %2277 = vmatpush.bf16.xpose.msra.mxu0 0
  %2278 = vmatpush.bf16.xpose.msra.mxu0 0
  %2279 = vmatpush.bf16.xpose.msra.mxu0 %v2273
  %2280 = vmatpush.bf16.xpose.msra.mxu0 %v2270
  %2281 = vmatpush.bf16.xpose.msra.mxu0 %v2267
  %2282 = vmatpush.bf16.xpose.msra.mxu0 %v2264
  %2283 = vmatmul.bf16.gmra.mxu0 %v2261
  %v2284 = vpop.f32.mrf.mxu0
  %v2285 = vadd.f32 %v2238, %v2284
  %v2286 = vpop.f32.mrf.mxu0
  %2287 = vdwg.mxu0
  %v2288 = vadd.f32 %v1525, %v2285
  %s2289 = scalar_lea.vmem %s7, 2
  %v2290 = vld [vmem:[%s2289] sm:$0x1]
  %s2291 = scalar_lea.vmem %s8, 2
  %v2292 = vld [vmem:[%s2291] sm:$0x1]
  %v2293 = vsel %vm547, %v2288, 0.0
  %2294 = vadd.xlane.f32.xlu0 %v2293
  %v2295 = vpop.xlane.xlu0 %2294
  %v2296 = vmul.f32 %v2295, %v1169
  %v2297 = vsub.f32 %v2288, %v2296
  %v2298 = vmul.f32 %v2297, %v2297
  %v2299 = vsel %vm547, %v2298, 0.0
  %2300 = vadd.xlane.f32.xlu0 %v2299
  %v2301 = vpop.xlane.xlu0 %2300
  %v2302 = vmul.f32 %v2301, %v1169
  %v2303 = vadd.f32 %v2302, 1e-05
  %v2304 = vrsqrt.pop %v2303
  %v2305 = vmul.f32 %v2304, %v2303
  %v2306 = vmul.f32 %v2305, %v2304
  %v2307 = vmul.f32 0.5, %v2306
  %v2308 = vsub.f32 1.5, %v2307
  %v2309 = vmul.f32 %v2304, %v2308
  %vm2310 = vweird.f32 %v2303
  %vm2311 = vweird.f32 %v2304
  %vm2312 = vmor %vm2310, %vm2311
  %v2313 = vsel %vm2312, %v2304, %v2309
  %v2314 = vmul.f32 %v2297, %v2313
  %v2316 = vperm.slane %v2290, 0
  %v2318 = vmul.f32 %v2314, %v2316
  %v2320 = vperm.slane %v2292, 0
  %v2322 = vadd.f32 %v2318, %v2320
  %s2323 = scalar_lea.vmem %s9, 128
  %v2324 = vld [vmem:[%s2323] sm:$0xf]
  %v2325 = vld [vmem:[%s2323 + $0x4] sm:$0xf]
  %v2326 = vld [vmem:[%s2323 + $0x8] sm:$0xf]
  %v2327 = vld [vmem:[%s2323 + $0xc] sm:$0xf]
  %v2328 = vld [vmem:[%s2323 + $0x10] sm:$0xf]
  %v2329 = vld [vmem:[%s2323 + $0x14] sm:$0xf]
  %v2330 = vld [vmem:[%s2323 + $0x18] sm:$0xf]
  %v2331 = vld [vmem:[%s2323 + $0x1c] sm:$0xf]
  %v2332 = vld [vmem:[%s2323 + $0x20] sm:$0xf]
  %v2333 = vld [vmem:[%s2323 + $0x24] sm:$0xf]
  %v2334 = vld [vmem:[%s2323 + $0x28] sm:$0xf]
  %v2335 = vld [vmem:[%s2323 + $0x2c] sm:$0xf]
  %v2336 = vld [vmem:[%s2323 + $0x30] sm:$0xf]
  %v2337 = vld [vmem:[%s2323 + $0x34] sm:$0xf]
  %v2338 = vld [vmem:[%s2323 + $0x38] sm:$0xf]
  %v2339 = vld [vmem:[%s2323 + $0x3c] sm:$0xf]
  %v2340 = vld [vmem:[%s2323 + $0x40] sm:$0xf]
  %v2341 = vld [vmem:[%s2323 + $0x44] sm:$0xf]
  %v2342 = vld [vmem:[%s2323 + $0x48] sm:$0xf]
  %v2343 = vld [vmem:[%s2323 + $0x4c] sm:$0xf]
  %v2344 = vld [vmem:[%s2323 + $0x50] sm:$0xf]
  %v2345 = vld [vmem:[%s2323 + $0x54] sm:$0xf]
  %v2346 = vld [vmem:[%s2323 + $0x58] sm:$0xf]
  %v2347 = vld [vmem:[%s2323 + $0x5c] sm:$0xf]
  %v2348 = vld [vmem:[%s2323 + $0x60] sm:$0xf]
  %v2349 = vld [vmem:[%s2323 + $0x64] sm:$0xf]
  %v2350 = vld [vmem:[%s2323 + $0x68] sm:$0xf]
  %v2351 = vld [vmem:[%s2323 + $0x6c] sm:$0xf]
  %v2352 = vld [vmem:[%s2323 + $0x70] sm:$0xf]
  %v2353 = vld [vmem:[%s2323 + $0x74] sm:$0xf]
  %v2354 = vld [vmem:[%s2323 + $0x78] sm:$0xf]
  %v2355 = vld [vmem:[%s2323 + $0x7c] sm:$0xf]
  %s2356 = scalar_lea.vmem %s10, 2
  %v2357 = vld [vmem:[%s2356] sm:$0x3]
  %v2358 = vpack.c.bf16 %v2322, %v2322
  %v2360 = vperm.slane %v2357, 0
  %v2361 = vperm.slane %v2357, 1
  %v2396 = vunpack.c.l.b16 %v2324
  %v2397 = vunpack.c.l.b16 %v2325
  %v2398 = vunpack.c.l.b16 %v2326
  %v2399 = vunpack.c.l.b16 %v2327
  %v2400 = vunpack.c.l.b16 %v2328
  %v2401 = vunpack.c.l.b16 %v2329
  %v2402 = vunpack.c.l.b16 %v2330
  %v2403 = vunpack.c.l.b16 %v2331
  %v2404 = vunpack.c.l.b16 %v2332
  %v2405 = vunpack.c.l.b16 %v2333
  %v2406 = vunpack.c.l.b16 %v2334
  %v2407 = vunpack.c.l.b16 %v2335
  %v2408 = vunpack.c.l.b16 %v2336
  %v2409 = vunpack.c.l.b16 %v2337
  %v2410 = vunpack.c.l.b16 %v2338
  %v2411 = vunpack.c.l.b16 %v2339
  %v2412 = vunpack.c.l.b16 %v2340
  %v2413 = vunpack.c.l.b16 %v2341
  %v2414 = vunpack.c.l.b16 %v2342
  %v2415 = vunpack.c.l.b16 %v2343
  %v2416 = vunpack.c.l.b16 %v2344
  %v2417 = vunpack.c.l.b16 %v2345
  %v2418 = vunpack.c.l.b16 %v2346
  %v2419 = vunpack.c.l.b16 %v2347
  %v2420 = vunpack.c.l.b16 %v2348
  %v2421 = vunpack.c.l.b16 %v2349
  %v2422 = vunpack.c.l.b16 %v2350
  %v2423 = vunpack.c.l.b16 %v2351
  %v2424 = vunpack.c.l.b16 %v2352
  %v2425 = vunpack.c.l.b16 %v2353
  %v2426 = vunpack.c.l.b16 %v2354
  %v2427 = vunpack.c.l.b16 %v2355
  %v2428 = vpack.c.b16 %v2397, %v2396
  %v2429 = vpack.c.b16 %v2399, %v2398
  %v2430 = vpack.c.b16 %v2401, %v2400
  %v2431 = vpack.c.b16 %v2403, %v2402
  %v2432 = vpack.c.b16 %v2405, %v2404
  %v2433 = vpack.c.b16 %v2407, %v2406
  %v2434 = vpack.c.b16 %v2409, %v2408
  %v2435 = vpack.c.b16 %v2411, %v2410
  %v2436 = vpack.c.b16 %v2413, %v2412
  %v2437 = vpack.c.b16 %v2415, %v2414
  %v2438 = vpack.c.b16 %v2417, %v2416
  %v2439 = vpack.c.b16 %v2419, %v2418
  %v2440 = vpack.c.b16 %v2421, %v2420
  %v2441 = vpack.c.b16 %v2423, %v2422
  %v2442 = vpack.c.b16 %v2425, %v2424
  %v2443 = vpack.c.b16 %v2427, %v2426
  %v2445 = vsel %vm547, %v2358, 0
  %v2448 = vsel %vm547, %v2428, 0
  %v2451 = vsel %vm547, %v2429, 0
  %v2454 = vsel %vm547, %v2430, 0
  %v2457 = vsel %vm547, %v2431, 0
  %v2460 = vsel %vm547, %v2432, 0
  %v2463 = vsel %vm547, %v2433, 0
  %v2466 = vsel %vm547, %v2434, 0
  %v2469 = vsel %vm547, %v2435, 0
  %v2472 = vsel %vm547, %v2436, 0
  %v2475 = vsel %vm547, %v2437, 0
  %v2478 = vsel %vm547, %v2438, 0
  %v2481 = vsel %vm547, %v2439, 0
  %v2484 = vsel %vm547, %v2440, 0
  %v2487 = vsel %vm547, %v2441, 0
  %v2490 = vsel %vm547, %v2442, 0
  %v2493 = vsel %vm547, %v2443, 0
  %2495 = vmatpush.bf16.xpose.msra.mxu0 %v2469
  %2496 = vmatpush.bf16.xpose.msra.mxu0 %v2466
  %2497 = vmatpush.bf16.xpose.msra.mxu0 %v2463
  %2498 = vmatpush.bf16.xpose.msra.mxu0 %v2460
  %2499 = vmatpush.bf16.xpose.msra.mxu0 %v2457
  %2500 = vmatpush.bf16.xpose.msra.mxu0 %v2454
  %2501 = vmatpush.bf16.xpose.msra.mxu0 %v2451
  %2502 = vmatpush.bf16.xpose.msra.mxu0 %v2448
  %2503 = vmatmul.bf16.gmra.mxu0 %v2445
  %v2504 = vpop.f32.mrf.mxu0
  %v2505 = vadd.f32 %v2360, %v2504
  %v2506 = vpop.f32.mrf.mxu0
  %2507 = vdwg.mxu0
  %2508 = vmatpush.bf16.xpose.msra.mxu0 %v2493
  %2509 = vmatpush.bf16.xpose.msra.mxu0 %v2490
  %2510 = vmatpush.bf16.xpose.msra.mxu0 %v2487
  %2511 = vmatpush.bf16.xpose.msra.mxu0 %v2484
  %2512 = vmatpush.bf16.xpose.msra.mxu0 %v2481
  %2513 = vmatpush.bf16.xpose.msra.mxu0 %v2478
  %2514 = vmatpush.bf16.xpose.msra.mxu0 %v2475
  %2515 = vmatpush.bf16.xpose.msra.mxu0 %v2472
  %2516 = vmatmul.bf16.gmra.mxu0 %v2445
  %v2517 = vpop.f32.mrf.mxu0
  %v2518 = vadd.f32 %v2361, %v2517
  %v2519 = vpop.f32.mrf.mxu0
  %2520 = vdwg.mxu0
  %v2521 = vmul.f32 %v2505, 0.5
  %v2522 = vmul.f32 %v2518, 0.5
  %v2523 = vmul.f32 %v2505, 0.044715
  %v2524 = vmul.f32 %v2518, 0.044715
  %v2525 = vmul.f32 %v2523, %v2505
  %v2526 = vmul.f32 %v2524, %v2518
  %v2527 = vmul.f32 %v2525, %v2505
  %v2528 = vmul.f32 %v2526, %v2518
  %v2529 = vadd.f32 %v2505, %v2527
  %v2530 = vadd.f32 %v2518, %v2528
  %v2531 = vmul.f32 %v2529, 0.7978846
  %v2532 = vmul.f32 %v2530, 0.7978846
  %v2533 = vtanh.pop %v2531
  %v2534 = vtanh.pop %v2532
  %v2535 = vadd.f32 %v2533, 1.0
  %v2536 = vadd.f32 %v2534, 1.0
  %v2537 = vmul.f32 %v2521, %v2535
  %v2538 = vmul.f32 %v2522, %v2536
  %s2539 = scalar_lea.vmem %s11, 64
  %v2540 = vld [vmem:[%s2539] sm:$0xff]
  %v2541 = vld [vmem:[%s2539 + $0x8] sm:$0xff]
  %v2542 = vld [vmem:[%s2539 + $0x10] sm:$0xff]
  %v2543 = vld [vmem:[%s2539 + $0x18] sm:$0xff]
  %v2544 = vld [vmem:[%s2539 + $0x20] sm:$0xff]
  %v2545 = vld [vmem:[%s2539 + $0x28] sm:$0xff]
  %v2546 = vld [vmem:[%s2539 + $0x30] sm:$0xff]
  %v2547 = vld [vmem:[%s2539 + $0x38] sm:$0xff]
  %s2548 = scalar_lea.vmem %s12, 1
  %v2549 = vld [vmem:[%s2548] sm:$0x1]
  %v2550 = vpack.c.bf16 %v2537, %v2537
  %v2551 = vpack.c.bf16 %v2538, %v2538
  %v2553 = vperm.slane %v2549, 0
  %v2563 = vunpack.c.l.b16 %v2540
  %v2564 = vunpack.c.h.b16 %v2540
  %v2565 = vunpack.c.l.b16 %v2541
  %v2566 = vunpack.c.h.b16 %v2541
  %v2567 = vunpack.c.l.b16 %v2542
  %v2568 = vunpack.c.h.b16 %v2542
  %v2569 = vunpack.c.l.b16 %v2543
  %v2570 = vunpack.c.h.b16 %v2543
  %v2571 = vunpack.c.l.b16 %v2544
  %v2572 = vunpack.c.h.b16 %v2544
  %v2573 = vunpack.c.l.b16 %v2545
  %v2574 = vunpack.c.h.b16 %v2545
  %v2575 = vunpack.c.l.b16 %v2546
  %v2576 = vunpack.c.h.b16 %v2546
  %v2577 = vunpack.c.l.b16 %v2547
  %v2578 = vunpack.c.h.b16 %v2547
  %v2579 = vpack.c.b16 %v2565, %v2563
  %v2580 = vpack.c.b16 %v2566, %v2564
  %v2581 = vpack.c.b16 %v2569, %v2567
  %v2582 = vpack.c.b16 %v2570, %v2568
  %v2583 = vpack.c.b16 %v2573, %v2571
  %v2584 = vpack.c.b16 %v2574, %v2572
  %v2585 = vpack.c.b16 %v2577, %v2575
  %v2586 = vpack.c.b16 %v2578, %v2576
  %2595 = vmatpush.bf16.xpose.msra.mxu0 0
  %2596 = vmatpush.bf16.xpose.msra.mxu0 0
  %2597 = vmatpush.bf16.xpose.msra.mxu0 0
  %2598 = vmatpush.bf16.xpose.msra.mxu0 0
  %2599 = vmatpush.bf16.xpose.msra.mxu0 %v2585
  %2600 = vmatpush.bf16.xpose.msra.mxu0 %v2583
  %2601 = vmatpush.bf16.xpose.msra.mxu0 %v2581
  %2602 = vmatpush.bf16.xpose.msra.mxu0 %v2579
  %2603 = vmatmul.bf16.gmra.mxu0 %v2550
  %v2604 = vpop.f32.mrf.mxu0
  %v2605 = vadd.f32 %v2553, %v2604
  %v2606 = vpop.f32.mrf.mxu0
  %2607 = vdwg.mxu0
  %2608 = vmatpush.bf16.xpose.msra.mxu0 0
  %2609 = vmatpush.bf16.xpose.msra.mxu0 0
  %2610 = vmatpush.bf16.xpose.msra.mxu0 0
  %2611 = vmatpush.bf16.xpose.msra.mxu0 0
  %2612 = vmatpush.bf16.xpose.msra.mxu0 %v2586
  %2613 = vmatpush.bf16.xpose.msra.mxu0 %v2584
  %2614 = vmatpush.bf16.xpose.msra.mxu0 %v2582
  %2615 = vmatpush.bf16.xpose.msra.mxu0 %v2580
  %2616 = vmatmul.bf16.gmra.mxu0 %v2551
  %v2617 = vpop.f32.mrf.mxu0
  %v2618 = vadd.f32 %v2605, %v2617
  %v2619 = vpop.f32.mrf.mxu0
  %2620 = vdwg.mxu0
  %v2621 = vadd.f32 %v2322, %v2618
  %s2622 = scalar_lea.vmem %s7, 3
  %v2623 = vld [vmem:[%s2622] sm:$0x1]
  %s2624 = scalar_lea.vmem %s8, 3
  %v2625 = vld [vmem:[%s2624] sm:$0x1]
  %v2626 = vsel %vm547, %v2621, 0.0
  %2627 = vadd.xlane.f32.xlu0 %v2626
  %v2628 = vpop.xlane.xlu0 %2627
  %v2629 = vmul.f32 %v2628, %v1169
  %v2630 = vsub.f32 %v2621, %v2629
  %v2631 = vmul.f32 %v2630, %v2630
  %v2632 = vsel %vm547, %v2631, 0.0
  %2633 = vadd.xlane.f32.xlu0 %v2632
  %v2634 = vpop.xlane.xlu0 %2633
  %v2635 = vmul.f32 %v2634, %v1169
  %v2636 = vadd.f32 %v2635, 1e-05
  %v2637 = vrsqrt.pop %v2636
  %v2638 = vmul.f32 %v2637, %v2636
  %v2639 = vmul.f32 %v2638, %v2637
  %v2640 = vmul.f32 0.5, %v2639
  %v2641 = vsub.f32 1.5, %v2640
  %v2642 = vmul.f32 %v2637, %v2641
  %vm2643 = vweird.f32 %v2636
  %vm2644 = vweird.f32 %v2637
  %vm2645 = vmor %vm2643, %vm2644
  %v2646 = vsel %vm2645, %v2637, %v2642
  %v2647 = vmul.f32 %v2630, %v2646
  %v2649 = vperm.slane %v2623, 0
  %v2651 = vmul.f32 %v2647, %v2649
  %v2653 = vperm.slane %v2625, 0
  %v2655 = vadd.f32 %v2651, %v2653
  %v2656 = vld [vmem:[%s13] sm:$0x1]
  %v2657 = vld [vmem:[#allocation2] sm:$0x1]
  %2659 = vset.pattern.permute.xlu0 0
  %2660 = vperm.xlu0 %2659, %v2657
  %v2661 = vpop.permute.xlu0 %2660
  %v2663 = vperm.slane %v2661, 0
  %v2665 = vsel %vm547, %v2656, 0
  %v2668 = vsel %vm547, %v2655, 0
  %2670 = vmatpush.xpose.msra.mxu0 0.0
  %2671 = vmatpush.xpose.msra.mxu0 0.0
  %2672 = vmatpush.xpose.msra.mxu0 0.0
  %2673 = vmatpush.xpose.msra.mxu0 0.0
  %2674 = vmatpush.xpose.msra.mxu0 0.0
  %2675 = vmatpush.xpose.msra.mxu0 0.0
  %2676 = vmatpush.xpose.msra.mxu0 0.0
  %2677 = vmatpush.xpose.msra.mxu0 0.0
  %2678 = vmatpush.xpose.msra.mxu0 0.0
  %2679 = vmatpush.xpose.msra.mxu0 0.0
  %2680 = vmatpush.xpose.msra.mxu0 0.0
  %2681 = vmatpush.xpose.msra.mxu0 0.0
  %2682 = vmatpush.xpose.msra.mxu0 0.0
  %2683 = vmatpush.xpose.msra.mxu0 0.0
  %2684 = vmatpush.xpose.msra.mxu0 0.0
  %2685 = vmatpush.xpose.msra.mxu0 %v2668
  %2686 = vmatmul.f32.gmra.mxu0 %v2665
  %v2687 = vpop.f32.mrf.mxu0
  %v2688 = vadd.f32 %v2663, %v2687
  %2689 = vdwg.mxu0
  %v2690 = vxor.u32 %v2688, 2147483648
  %v2691 = vmul.f32 %v2690, 1.442695
  %v2692 = vpow.pop %v2691
  %v2693 = vadd.f32 %v2692, 1.0
  %v2694 = vrcp.pop %v2693
  %v2695 = vmul.f32 %v2693, %v2694
  %v2696 = vsub.f32 1.0, %v2695
  %v2697 = vmul.f32 %v2694, %v2696
  %v2698 = vadd.f32 %v2694, %v2697
  %vm2699 = vweird.f32 %v2693
  %vm2700 = vweird.f32 %v2694
  %vm2701 = vmor %vm2699, %vm2700
  %v2702 = vsel %vm2701, %v2694, %v2698
  %v2703 = vand.u32 2147483647, %v2693
  %vm2704 = vcmp.eq.f32.partialorder %v2703, 8.507059e+37
  %v2705 = vand.u32 %v2693, 2147483648
  %v2706 = vor.u32 1.1754944e-38, %v2705
  %v2707 = vsel %vm2704, %v2706, %v2702
  %v2708 = vmul.f32 1.0, %v2707
  %vm2709 = vcmask 57344
  %2710 = vst.msk [vmem:[%s19] sm:$0x1] %vm2709, %v2708
  // Predicated region
  $region78: #{disentangled_transformer.2} parent=0 // pred_check
    _
  $region79: #{disentangled_transformer.2} parent=0 // pred_check_branch
    %2712 = sbr.rel (0) target = $region81
  $region80: #{disentangled_transformer.2} parent=0 // pred_region
    _
  $region81: #{disentangled_transformer.2} parent=0 // pred_fallthru
    _
  // Predicated region
  $region82: #{disentangled_transformer.2} parent=0 // pred_check
    _
  $region83: #{disentangled_transformer.2} parent=0 // pred_check_branch
    %2714 = sbr.rel (0) target = $region85
  $region84: #{disentangled_transformer.2} parent=0 // pred_region
    _
  $region85: #{disentangled_transformer.2} parent=0 // pred_fallthru
    _

</llo_original>
